<compile_context>
chip_gen: v5e
topology: v5e:2x2
jax: 0.10.0
libtpu: 0.0.40
codegen_flags: <defaults>
</compile_context>

<pallas_src>
import functools

import jax
import jax.numpy as jnp
import numpy as np
from jax.experimental import pallas as pl
from jax.experimental.pallas import tpu as pltpu

K = 3            # kernel size of every ConvTranspose2d in the module
NUM_LAYERS = 3   # conv_t1, conv_t2, conv_t3


# ---------------------------------------------------------------------------
# Kernel
# ---------------------------------------------------------------------------
def _convt_layer(a, w_ref, b_ref, t_ref, m):
    """One ConvTranspose2d(k=3, s=2, p=1, op=1) step in polyphase form.

    a     : (nph, npw, m, Cin); a[ph, pw, W0*p + q, :] is the logical input
            activation at spatial (nph*p + ph, npw*q + pw).
    w_ref : (3, 3, Cin, Cout) ref, w_ref[kh, kw] == torch_weight[:, :, kh, kw]
    b_ref : (1, Cout) ref
    t_ref : (2, nph*m, nph*m) ref of 0/1 row-shift matrices (q+1, p+1)
    returns (2*nph, 2*npw, m, Cout) planes of the 2x-upsampled output.
    """
    nph, npw, _, cin = a.shape
    cout = w_ref.shape[-1]
    s = nph * npw * m
    bias = b_ref[...]

    def row_shift(block, which):
        d0, d1, _, c = block.shape
        flat = block.reshape(d0 * d1 * m, c)
        shifted = jnp.dot(t_ref[which], flat, preferred_element_type=jnp.float32)
        return shifted.reshape(d0, d1, m, c)

    def shift_w(arr):                       # logical x[h, w + 1] (zero past edge)
        edge = row_shift(arr[:, :1], 0)
        if arr.shape[1] == 1:
            return edge
        return jnp.concatenate([arr[:, 1:], edge], axis=1)

    def shift_h(arr):                       # logical x[h + 1, w] (zero past edge)
        edge = row_shift(arr[:1], 1)
        if arr.shape[0] == 1:
            return edge
        return jnp.concatenate([arr[1:], edge], axis=0)

    aw = shift_w(a)
    ah = shift_h(a)
    ahw = shift_h(aw)

    x00 = a.reshape(s, cin)
    xw = aw.reshape(s, cin)
    xh = ah.reshape(s, cin)
    xhw = ahw.reshape(s, cin)

    def mm(x, kh, kw):
        return jnp.dot(x, w_ref[kh, kw], preferred_element_type=jnp.float32)

    # Output parity (a, b): out[2u + a, 2v + b] for input position (u, v).
    o00 = mm(x00, 1, 1) + bias
    o01 = mm(x00, 1, 2) + mm(xw, 1, 0) + bias
    o10 = mm(x00, 2, 1) + mm(xh, 0, 1) + bias
    o11 = mm(x00, 2, 2) + mm(xw, 2, 0) + mm(xh, 0, 2) + mm(xhw, 0, 0) + bias

    def planes(o):
        return o.reshape(nph, npw, m, cout)

    # Interleave: new phase index = 2*old_phase + parity bit (outer dims only).
    row0 = jnp.stack([planes(o00), planes(o01)], axis=2)
    row0 = row0.reshape(nph, 2 * npw, m, cout)
    row1 = jnp.stack([planes(o10), planes(o11)], axis=2)
    row1 = row1.reshape(nph, 2 * npw, m, cout)
    out = jnp.stack([row0, row1], axis=1)
    return out.reshape(2 * nph, 2 * npw, m, cout)


def _fused_kernel(x_ref, w1, b1, t1, w2, b2, t2, w3, b3, t3, o_ref, *, h0, w0):
    m = h0 * w0
    a = x_ref[...].reshape(1, 1, m, x_ref.shape[-1])
    a = _convt_layer(a, w1, b1, t1, m)          # (2, 2, m, 20)  -> 16x16x20
    a = _convt_layer(a, w2, b2, t2, m)          # (4, 4, m, 30)  -> 32x32x30
    a = _convt_layer(a, w3, b3, t3, m)          # (8, 8, m, 10)  -> 64x64x10
    nph, npw, _, cf = a.shape
    o_ref[...] = a.reshape(1, nph * npw * m, cf)


# ---------------------------------------------------------------------------
# Host-side packing + wrapper
# ---------------------------------------------------------------------------
def _shift_matrices(nphi, h0, w0):
    """0/1 matrices applying within-plane (q+1) / (p+1) shifts with zero fill
    at the image boundary, on a stack of nphi row-major (h0, w0) planes."""
    m = h0 * w0
    rows = nphi * m
    r = np.arange(rows)
    tq = np.zeros((rows, rows), np.float32)
    keep = (r % w0) != (w0 - 1)
    tq[r[keep], r[keep] + 1] = 1.0
    tp = np.zeros((rows, rows), np.float32)
    keep = (r % m) < (m - w0)
    tp[r[keep], r[keep] + w0] = 1.0
    return jnp.asarray(np.stack([tq, tp]))


def pack_params(params, h0, w0):
    """Pre-pack torch-layout ConvTranspose2d params once (done outside the hot path)."""
    packed = []
    for idx, (w_t, bias) in enumerate(params):
        w_pack = jnp.transpose(w_t, (2, 3, 0, 1))           # (K, K, Cin, Cout)
        b_pack = bias.reshape(1, -1)
        t_pack = _shift_matrices(2 ** idx, h0, w0)
        packed.append((w_pack, b_pack, t_pack))
    return tuple(packed)


@jax.jit
def model_forward(x_nchw, packed):
    (w1, b1, t1), (w2, b2, t2), (w3, b3, t3) = packed
    n, cin, h0, w0 = x_nchw.shape
    cout = w3.shape[-1]
    nphi = 2 ** NUM_LAYERS
    total = nphi * nphi * h0 * w0

    x_nhwc = jnp.transpose(x_nchw, (0, 2, 3, 1)).astype(jnp.float32)

    kernel = functools.partial(_fused_kernel, h0=h0, w0=w0)

    def full(shape):
        return pl.BlockSpec(shape, lambda i: (0,) * len(shape))

    out = pl.pallas_call(
        kernel,
        out_shape=jax.ShapeDtypeStruct((n, total, cout), jnp.float32),
        grid=(n,),
        in_specs=[
            pl.BlockSpec((1, h0, w0, cin), lambda i: (i, 0, 0, 0)),
            full(w1.shape), full(b1.shape), full(t1.shape),
            full(w2.shape), full(b2.shape), full(t2.shape),
            full(w3.shape), full(b3.shape), full(t3.shape),
        ],
        out_specs=pl.BlockSpec((1, total, cout), lambda i: (i, 0, 0)),
        compiler_params=pltpu.CompilerParams(
            dimension_semantics=("parallel",)),
    )(x_nhwc, w1, b1, t1, w2, b2, t2, w3, b3, t3)

    # Undo the polyphase layout.  Rows are ordered (ph, pw, p, q) with logical
    # (h, w) = (nphi*p + ph, nphi*q + pw); target layout is NCHW.
    out = out.reshape(n, nphi, nphi, h0, w0, cout)
    out = jnp.transpose(out, (0, 5, 3, 1, 4, 2))
    return out.reshape(n, cout, nphi * h0, nphi * w0)


# ---------------------------------------------------------------------------
# Reference + test
# ---------------------------------------------------------------------------
def init_params(key):
    """Deterministic synthetic params with PyTorch ConvTranspose2d shapes."""
    ks = jax.random.split(key, 6)

    def w(k, cin, cout):
        bound = 1.0 / np.sqrt(cin * K * K)
        return jax.random.uniform(k, (cin, cout, K, K), jnp.float32, -bound, bound)

    def b(k, cin, cout):
        bound = 1.0 / np.sqrt(cin * K * K)
        return jax.random.uniform(k, (cout,), jnp.float32, -bound, bound)

    return [
        (w(ks[0], 10, 20), b(ks[1], 10, 20)),
        (w(ks[2], 20, 30), b(ks[3], 20, 30)),
        (w(ks[4], 30, 10), b(ks[5], 30, 10)),
    ]


def reference_forward(x_nchw, params):
    """Pure-JAX reference: transposed conv = dilated conv with flipped kernel."""
    x = jnp.transpose(x_nchw, (0, 2, 3, 1)).astype(jnp.float32)
    for (w_t, bias) in params:
        w_conv = jnp.flip(w_t, axis=(2, 3)).transpose(2, 3, 0, 1)   # HWIO
        x = jax.lax.conv_general_dilated(
            x, w_conv, window_strides=(1, 1),
            padding=((1, 2), (1, 2)), lhs_dilation=(2, 2),
            dimension_numbers=("NHWC", "HWIO", "NHWC")) + bias
    return jnp.transpose(x, (0, 3, 1, 2))


if __name__ == "__main__":
    key = jax.random.PRNGKey(0)
    kx, kp = jax.random.split(key)
    # Shapes from the torch spec: x4 = torch.randn(6, 10, 8, 8)  (NCHW)
    x = jax.random.normal(kx, (6, 10, 8, 8), jnp.float32)
    params = init_params(kp)
    packed = pack_params(params, h0=x.shape[2], w0=x.shape[3])

    out = jax.block_until_ready(model_forward(x, packed))
    assert out.shape == (6, 10, 64, 64), out.shape

    ref = jax.block_until_ready(reference_forward(x, params))
    np.testing.assert_allclose(np.asarray(out), np.asarray(ref),
                               rtol=1e-3, atol=1e-3)
    print("KERNEL_OK")
</pallas_src>

<mosaic_0001>
module attributes {stable_mosaic.version = 11 : i64} {
  func.func @_fused_kernel(%arg0: i32, %arg1: memref<1x8x8x10xf32, #tpu.memory_space<vmem>>, %arg2: memref<3x3x10x20xf32, #tpu.memory_space<vmem>>, %arg3: memref<1x20xf32, #tpu.memory_space<vmem>>, %arg4: memref<2x64x64xf32, #tpu.memory_space<vmem>>, %arg5: memref<3x3x20x30xf32, #tpu.memory_space<vmem>>, %arg6: memref<1x30xf32, #tpu.memory_space<vmem>>, %arg7: memref<2x128x128xf32, #tpu.memory_space<vmem>>, %arg8: memref<3x3x30x10xf32, #tpu.memory_space<vmem>>, %arg9: memref<1x10xf32, #tpu.memory_space<vmem>>, %arg10: memref<2x256x256xf32, #tpu.memory_space<vmem>>, %arg11: memref<1x4096x10xf32, #tpu.memory_space<vmem>>) attributes {dimension_semantics = [#tpu.dimension_semantics<parallel>], iteration_bounds = array<i64: 6>, scalar_prefetch = 0 : i64, scratch_operands = 0 : i64, tpu.core_type = #tpu.core_type<tc>, window_params = [{transform_indices = @transform_0, window_bounds = array<i64: 1, 8, 8, 10>}, {pipeline_mode = #tpu.pipeline_mode<synchronous>, transform_indices = @transform_1, window_bounds = array<i64: 3, 3, 10, 20>}, {pipeline_mode = #tpu.pipeline_mode<synchronous>, transform_indices = @transform_2, window_bounds = array<i64: 1, 20>}, {pipeline_mode = #tpu.pipeline_mode<synchronous>, transform_indices = @transform_3, window_bounds = array<i64: 2, 64, 64>}, {pipeline_mode = #tpu.pipeline_mode<synchronous>, transform_indices = @transform_4, window_bounds = array<i64: 3, 3, 20, 30>}, {pipeline_mode = #tpu.pipeline_mode<synchronous>, transform_indices = @transform_5, window_bounds = array<i64: 1, 30>}, {pipeline_mode = #tpu.pipeline_mode<synchronous>, transform_indices = @transform_6, window_bounds = array<i64: 2, 128, 128>}, {pipeline_mode = #tpu.pipeline_mode<synchronous>, transform_indices = @transform_7, window_bounds = array<i64: 3, 3, 30, 10>}, {pipeline_mode = #tpu.pipeline_mode<synchronous>, transform_indices = @transform_8, window_bounds = array<i64: 1, 10>}, {pipeline_mode = #tpu.pipeline_mode<synchronous>, transform_indices = @transform_9, window_bounds = array<i64: 2, 256, 256>}, {transform_indices = @transform_10, window_bounds = array<i64: 1, 4096, 10>}]} {
    %c0 = arith.constant 0 : index
    %c0_0 = arith.constant 0 : index
    %c0_1 = arith.constant 0 : index
    %c0_2 = arith.constant 0 : index
    %0 = vector.load %arg1[%c0, %c0_0, %c0_1, %c0_2] : memref<1x8x8x10xf32, #tpu.memory_space<vmem>>, vector<1x8x8x10xf32>
    %1 = vector.shape_cast %0 : vector<1x8x8x10xf32> to vector<1x1x64x10xf32>
    %c0_3 = arith.constant 0 : index
    %c0_4 = arith.constant 0 : index
    %2 = vector.load %arg3[%c0_3, %c0_4] : memref<1x20xf32, #tpu.memory_space<vmem>>, vector<1x20xf32>
    %3 = vector.shape_cast %1 : vector<1x1x64x10xf32> to vector<64x10xf32>
    %c0_5 = arith.constant 0 : index
    %c0_6 = arith.constant 0 : index
    %c0_7 = arith.constant 0 : index
    %4 = vector.load %arg4[%c0_5, %c0_6, %c0_7] : memref<2x64x64xf32, #tpu.memory_space<vmem>>, vector<1x64x64xf32>
    %5 = vector.shape_cast %4 : vector<1x64x64xf32> to vector<64x64xf32>
    %cst = arith.constant dense<0.000000e+00> : vector<64x10xf32>
    %6 = tpu.matmul %5, %3, %cst {dimension_numbers = #tpu.dot_dimension_numbers<[1], [0], [0], [1], [0, 0, 1, 1], [], []>} : vector<64x64xf32>, vector<64x10xf32>, vector<64x10xf32> -> vector<64x10xf32>
    %7 = vector.shape_cast %6 : vector<64x10xf32> to vector<1x1x64x10xf32>
    %8 = vector.shape_cast %1 : vector<1x1x64x10xf32> to vector<64x10xf32>
    %c1 = arith.constant 1 : index
    %c0_8 = arith.constant 0 : index
    %c0_9 = arith.constant 0 : index
    %9 = vector.load %arg4[%c1, %c0_8, %c0_9] : memref<2x64x64xf32, #tpu.memory_space<vmem>>, vector<1x64x64xf32>
    %10 = vector.shape_cast %9 : vector<1x64x64xf32> to vector<64x64xf32>
    %cst_10 = arith.constant dense<0.000000e+00> : vector<64x10xf32>
    %11 = tpu.matmul %10, %8, %cst_10 {dimension_numbers = #tpu.dot_dimension_numbers<[1], [0], [0], [1], [0, 0, 1, 1], [], []>} : vector<64x64xf32>, vector<64x10xf32>, vector<64x10xf32> -> vector<64x10xf32>
    %12 = vector.shape_cast %11 : vector<64x10xf32> to vector<1x1x64x10xf32>
    %13 = vector.shape_cast %7 : vector<1x1x64x10xf32> to vector<64x10xf32>
    %c1_11 = arith.constant 1 : index
    %c0_12 = arith.constant 0 : index
    %c0_13 = arith.constant 0 : index
    %14 = vector.load %arg4[%c1_11, %c0_12, %c0_13] : memref<2x64x64xf32, #tpu.memory_space<vmem>>, vector<1x64x64xf32>
    %15 = vector.shape_cast %14 : vector<1x64x64xf32> to vector<64x64xf32>
    %cst_14 = arith.constant dense<0.000000e+00> : vector<64x10xf32>
    %16 = tpu.matmul %15, %13, %cst_14 {dimension_numbers = #tpu.dot_dimension_numbers<[1], [0], [0], [1], [0, 0, 1, 1], [], []>} : vector<64x64xf32>, vector<64x10xf32>, vector<64x10xf32> -> vector<64x10xf32>
    %17 = vector.shape_cast %16 : vector<64x10xf32> to vector<1x1x64x10xf32>
    %18 = vector.shape_cast %1 : vector<1x1x64x10xf32> to vector<64x10xf32>
    %19 = vector.shape_cast %7 : vector<1x1x64x10xf32> to vector<64x10xf32>
    %20 = vector.shape_cast %12 : vector<1x1x64x10xf32> to vector<64x10xf32>
    %21 = vector.shape_cast %17 : vector<1x1x64x10xf32> to vector<64x10xf32>
    %c1_15 = arith.constant 1 : index
    %c1_16 = arith.constant 1 : index
    %c0_17 = arith.constant 0 : index
    %c0_18 = arith.constant 0 : index
    %22 = vector.load %arg2[%c1_15, %c1_16, %c0_17, %c0_18] : memref<3x3x10x20xf32, #tpu.memory_space<vmem>>, vector<1x1x10x20xf32>
    %23 = vector.shape_cast %22 : vector<1x1x10x20xf32> to vector<10x20xf32>
    %cst_19 = arith.constant dense<0.000000e+00> : vector<64x20xf32>
    %24 = tpu.matmul %18, %23, %cst_19 {dimension_numbers = #tpu.dot_dimension_numbers<[1], [0], [0], [1], [0, 0, 1, 1], [], []>} : vector<64x10xf32>, vector<10x20xf32>, vector<64x20xf32> -> vector<64x20xf32>
    %25 = vector.broadcast %2 : vector<1x20xf32> to vector<64x20xf32>
    %26 = arith.addf %24, %25 : vector<64x20xf32>
    %c1_20 = arith.constant 1 : index
    %c2 = arith.constant 2 : index
    %c0_21 = arith.constant 0 : index
    %c0_22 = arith.constant 0 : index
    %27 = vector.load %arg2[%c1_20, %c2, %c0_21, %c0_22] : memref<3x3x10x20xf32, #tpu.memory_space<vmem>>, vector<1x1x10x20xf32>
    %28 = vector.shape_cast %27 : vector<1x1x10x20xf32> to vector<10x20xf32>
    %cst_23 = arith.constant dense<0.000000e+00> : vector<64x20xf32>
    %29 = tpu.matmul %18, %28, %cst_23 {dimension_numbers = #tpu.dot_dimension_numbers<[1], [0], [0], [1], [0, 0, 1, 1], [], []>} : vector<64x10xf32>, vector<10x20xf32>, vector<64x20xf32> -> vector<64x20xf32>
    %c1_24 = arith.constant 1 : index
    %c0_25 = arith.constant 0 : index
    %c0_26 = arith.constant 0 : index
    %c0_27 = arith.constant 0 : index
    %30 = vector.load %arg2[%c1_24, %c0_25, %c0_26, %c0_27] : memref<3x3x10x20xf32, #tpu.memory_space<vmem>>, vector<1x1x10x20xf32>
    %31 = vector.shape_cast %30 : vector<1x1x10x20xf32> to vector<10x20xf32>
    %cst_28 = arith.constant dense<0.000000e+00> : vector<64x20xf32>
    %32 = tpu.matmul %19, %31, %cst_28 {dimension_numbers = #tpu.dot_dimension_numbers<[1], [0], [0], [1], [0, 0, 1, 1], [], []>} : vector<64x10xf32>, vector<10x20xf32>, vector<64x20xf32> -> vector<64x20xf32>
    %33 = arith.addf %29, %32 : vector<64x20xf32>
    %34 = vector.broadcast %2 : vector<1x20xf32> to vector<64x20xf32>
    %35 = arith.addf %33, %34 : vector<64x20xf32>
    %c2_29 = arith.constant 2 : index
    %c1_30 = arith.constant 1 : index
    %c0_31 = arith.constant 0 : index
    %c0_32 = arith.constant 0 : index
    %36 = vector.load %arg2[%c2_29, %c1_30, %c0_31, %c0_32] : memref<3x3x10x20xf32, #tpu.memory_space<vmem>>, vector<1x1x10x20xf32>
    %37 = vector.shape_cast %36 : vector<1x1x10x20xf32> to vector<10x20xf32>
    %cst_33 = arith.constant dense<0.000000e+00> : vector<64x20xf32>
    %38 = tpu.matmul %18, %37, %cst_33 {dimension_numbers = #tpu.dot_dimension_numbers<[1], [0], [0], [1], [0, 0, 1, 1], [], []>} : vector<64x10xf32>, vector<10x20xf32>, vector<64x20xf32> -> vector<64x20xf32>
    %c0_34 = arith.constant 0 : index
    %c1_35 = arith.constant 1 : index
    %c0_36 = arith.constant 0 : index
    %c0_37 = arith.constant 0 : index
    %39 = vector.load %arg2[%c0_34, %c1_35, %c0_36, %c0_37] : memref<3x3x10x20xf32, #tpu.memory_space<vmem>>, vector<1x1x10x20xf32>
    %40 = vector.shape_cast %39 : vector<1x1x10x20xf32> to vector<10x20xf32>
    %cst_38 = arith.constant dense<0.000000e+00> : vector<64x20xf32>
    %41 = tpu.matmul %20, %40, %cst_38 {dimension_numbers = #tpu.dot_dimension_numbers<[1], [0], [0], [1], [0, 0, 1, 1], [], []>} : vector<64x10xf32>, vector<10x20xf32>, vector<64x20xf32> -> vector<64x20xf32>
    %42 = arith.addf %38, %41 : vector<64x20xf32>
    %43 = vector.broadcast %2 : vector<1x20xf32> to vector<64x20xf32>
    %44 = arith.addf %42, %43 : vector<64x20xf32>
    %c2_39 = arith.constant 2 : index
    %c2_40 = arith.constant 2 : index
    %c0_41 = arith.constant 0 : index
    %c0_42 = arith.constant 0 : index
    %45 = vector.load %arg2[%c2_39, %c2_40, %c0_41, %c0_42] : memref<3x3x10x20xf32, #tpu.memory_space<vmem>>, vector<1x1x10x20xf32>
    %46 = vector.shape_cast %45 : vector<1x1x10x20xf32> to vector<10x20xf32>
    %cst_43 = arith.constant dense<0.000000e+00> : vector<64x20xf32>
    %47 = tpu.matmul %18, %46, %cst_43 {dimension_numbers = #tpu.dot_dimension_numbers<[1], [0], [0], [1], [0, 0, 1, 1], [], []>} : vector<64x10xf32>, vector<10x20xf32>, vector<64x20xf32> -> vector<64x20xf32>
    %c2_44 = arith.constant 2 : index
    %c0_45 = arith.constant 0 : index
    %c0_46 = arith.constant 0 : index
    %c0_47 = arith.constant 0 : index
    %48 = vector.load %arg2[%c2_44, %c0_45, %c0_46, %c0_47] : memref<3x3x10x20xf32, #tpu.memory_space<vmem>>, vector<1x1x10x20xf32>
    %49 = vector.shape_cast %48 : vector<1x1x10x20xf32> to vector<10x20xf32>
    %cst_48 = arith.constant dense<0.000000e+00> : vector<64x20xf32>
    %50 = tpu.matmul %19, %49, %cst_48 {dimension_numbers = #tpu.dot_dimension_numbers<[1], [0], [0], [1], [0, 0, 1, 1], [], []>} : vector<64x10xf32>, vector<10x20xf32>, vector<64x20xf32> -> vector<64x20xf32>
    %51 = arith.addf %47, %50 : vector<64x20xf32>
    %c0_49 = arith.constant 0 : index
    %c2_50 = arith.constant 2 : index
    %c0_51 = arith.constant 0 : index
    %c0_52 = arith.constant 0 : index
    %52 = vector.load %arg2[%c0_49, %c2_50, %c0_51, %c0_52] : memref<3x3x10x20xf32, #tpu.memory_space<vmem>>, vector<1x1x10x20xf32>
    %53 = vector.shape_cast %52 : vector<1x1x10x20xf32> to vector<10x20xf32>
    %cst_53 = arith.constant dense<0.000000e+00> : vector<64x20xf32>
    %54 = tpu.matmul %20, %53, %cst_53 {dimension_numbers = #tpu.dot_dimension_numbers<[1], [0], [0], [1], [0, 0, 1, 1], [], []>} : vector<64x10xf32>, vector<10x20xf32>, vector<64x20xf32> -> vector<64x20xf32>
    %55 = arith.addf %51, %54 : vector<64x20xf32>
    %c0_54 = arith.constant 0 : index
    %c0_55 = arith.constant 0 : index
    %c0_56 = arith.constant 0 : index
    %c0_57 = arith.constant 0 : index
    %56 = vector.load %arg2[%c0_54, %c0_55, %c0_56, %c0_57] : memref<3x3x10x20xf32, #tpu.memory_space<vmem>>, vector<1x1x10x20xf32>
    %57 = vector.shape_cast %56 : vector<1x1x10x20xf32> to vector<10x20xf32>
    %cst_58 = arith.constant dense<0.000000e+00> : vector<64x20xf32>
    %58 = tpu.matmul %21, %57, %cst_58 {dimension_numbers = #tpu.dot_dimension_numbers<[1], [0], [0], [1], [0, 0, 1, 1], [], []>} : vector<64x10xf32>, vector<10x20xf32>, vector<64x20xf32> -> vector<64x20xf32>
    %59 = arith.addf %55, %58 : vector<64x20xf32>
    %60 = vector.broadcast %2 : vector<1x20xf32> to vector<64x20xf32>
    %61 = arith.addf %59, %60 : vector<64x20xf32>
    %62 = vector.shape_cast %26 : vector<64x20xf32> to vector<1x1x64x20xf32>
    %63 = vector.shape_cast %35 : vector<64x20xf32> to vector<1x1x64x20xf32>
    %64 = vector.shape_cast %62 : vector<1x1x64x20xf32> to vector<1x1x1x64x20xf32>
    %65 = vector.shape_cast %63 : vector<1x1x64x20xf32> to vector<1x1x1x64x20xf32>
    %66 = tpu.concatenate %64, %65 in 2 : vector<1x1x1x64x20xf32>, vector<1x1x1x64x20xf32> -> vector<1x1x2x64x20xf32>
    %67 = vector.shape_cast %66 : vector<1x1x2x64x20xf32> to vector<1x2x64x20xf32>
    %68 = vector.shape_cast %44 : vector<64x20xf32> to vector<1x1x64x20xf32>
    %69 = vector.shape_cast %61 : vector<64x20xf32> to vector<1x1x64x20xf32>
    %70 = vector.shape_cast %68 : vector<1x1x64x20xf32> to vector<1x1x1x64x20xf32>
    %71 = vector.shape_cast %69 : vector<1x1x64x20xf32> to vector<1x1x1x64x20xf32>
    %72 = tpu.concatenate %70, %71 in 2 : vector<1x1x1x64x20xf32>, vector<1x1x1x64x20xf32> -> vector<1x1x2x64x20xf32>
    %73 = vector.shape_cast %72 : vector<1x1x2x64x20xf32> to vector<1x2x64x20xf32>
    %74 = vector.shape_cast %67 : vector<1x2x64x20xf32> to vector<1x1x2x64x20xf32>
    %75 = vector.shape_cast %73 : vector<1x2x64x20xf32> to vector<1x1x2x64x20xf32>
    %76 = tpu.concatenate %74, %75 in 1 : vector<1x1x2x64x20xf32>, vector<1x1x2x64x20xf32> -> vector<1x2x2x64x20xf32>
    %77 = vector.shape_cast %76 : vector<1x2x2x64x20xf32> to vector<2x2x64x20xf32>
    %c0_59 = arith.constant 0 : index
    %c0_60 = arith.constant 0 : index
    %78 = vector.load %arg6[%c0_59, %c0_60] : memref<1x30xf32, #tpu.memory_space<vmem>>, vector<1x30xf32>
    %79 = vector.extract_strided_slice %77 {offsets = [0, 0, 0, 0], sizes = [2, 1, 64, 20], strides = [1, 1, 1, 1]} : vector<2x2x64x20xf32> to vector<2x1x64x20xf32>
    %80 = vector.shape_cast %79 : vector<2x1x64x20xf32> to vector<128x20xf32>
    %c0_61 = arith.constant 0 : index
    %c0_62 = arith.constant 0 : index
    %c0_63 = arith.constant 0 : index
    %81 = vector.load %arg7[%c0_61, %c0_62, %c0_63] : memref<2x128x128xf32, #tpu.memory_space<vmem>>, vector<1x128x128xf32>
    %82 = vector.shape_cast %81 : vector<1x128x128xf32> to vector<128x128xf32>
    %cst_64 = arith.constant dense<0.000000e+00> : vector<128x20xf32>
    %83 = tpu.matmul %82, %80, %cst_64 {dimension_numbers = #tpu.dot_dimension_numbers<[1], [0], [0], [1], [0, 0, 1, 1], [], []>} : vector<128x128xf32>, vector<128x20xf32>, vector<128x20xf32> -> vector<128x20xf32>
    %84 = vector.shape_cast %83 : vector<128x20xf32> to vector<2x1x64x20xf32>
    %85 = vector.extract_strided_slice %77 {offsets = [0, 1, 0, 0], sizes = [2, 1, 64, 20], strides = [1, 1, 1, 1]} : vector<2x2x64x20xf32> to vector<2x1x64x20xf32>
    %86 = tpu.concatenate %85, %84 in 1 : vector<2x1x64x20xf32>, vector<2x1x64x20xf32> -> vector<2x2x64x20xf32>
    %87 = vector.extract_strided_slice %77 {offsets = [0, 0, 0, 0], sizes = [1, 2, 64, 20], strides = [1, 1, 1, 1]} : vector<2x2x64x20xf32> to vector<1x2x64x20xf32>
    %88 = vector.shape_cast %87 : vector<1x2x64x20xf32> to vector<128x20xf32>
    %c1_65 = arith.constant 1 : index
    %c0_66 = arith.constant 0 : index
    %c0_67 = arith.constant 0 : index
    %89 = vector.load %arg7[%c1_65, %c0_66, %c0_67] : memref<2x128x128xf32, #tpu.memory_space<vmem>>, vector<1x128x128xf32>
    %90 = vector.shape_cast %89 : vector<1x128x128xf32> to vector<128x128xf32>
    %cst_68 = arith.constant dense<0.000000e+00> : vector<128x20xf32>
    %91 = tpu.matmul %90, %88, %cst_68 {dimension_numbers = #tpu.dot_dimension_numbers<[1], [0], [0], [1], [0, 0, 1, 1], [], []>} : vector<128x128xf32>, vector<128x20xf32>, vector<128x20xf32> -> vector<128x20xf32>
    %92 = vector.shape_cast %91 : vector<128x20xf32> to vector<1x2x64x20xf32>
    %93 = vector.extract_strided_slice %77 {offsets = [1, 0, 0, 0], sizes = [1, 2, 64, 20], strides = [1, 1, 1, 1]} : vector<2x2x64x20xf32> to vector<1x2x64x20xf32>
    %94 = tpu.concatenate %93, %92 in 0 : vector<1x2x64x20xf32>, vector<1x2x64x20xf32> -> vector<2x2x64x20xf32>
    %95 = vector.extract_strided_slice %86 {offsets = [0, 0, 0, 0], sizes = [1, 2, 64, 20], strides = [1, 1, 1, 1]} : vector<2x2x64x20xf32> to vector<1x2x64x20xf32>
    %96 = vector.shape_cast %95 : vector<1x2x64x20xf32> to vector<128x20xf32>
    %c1_69 = arith.constant 1 : index
    %c0_70 = arith.constant 0 : index
    %c0_71 = arith.constant 0 : index
    %97 = vector.load %arg7[%c1_69, %c0_70, %c0_71] : memref<2x128x128xf32, #tpu.memory_space<vmem>>, vector<1x128x128xf32>
    %98 = vector.shape_cast %97 : vector<1x128x128xf32> to vector<128x128xf32>
    %cst_72 = arith.constant dense<0.000000e+00> : vector<128x20xf32>
    %99 = tpu.matmul %98, %96, %cst_72 {dimension_numbers = #tpu.dot_dimension_numbers<[1], [0], [0], [1], [0, 0, 1, 1], [], []>} : vector<128x128xf32>, vector<128x20xf32>, vector<128x20xf32> -> vector<128x20xf32>
    %100 = vector.shape_cast %99 : vector<128x20xf32> to vector<1x2x64x20xf32>
    %101 = vector.extract_strided_slice %86 {offsets = [1, 0, 0, 0], sizes = [1, 2, 64, 20], strides = [1, 1, 1, 1]} : vector<2x2x64x20xf32> to vector<1x2x64x20xf32>
    %102 = tpu.concatenate %101, %100 in 0 : vector<1x2x64x20xf32>, vector<1x2x64x20xf32> -> vector<2x2x64x20xf32>
    %103 = vector.shape_cast %77 : vector<2x2x64x20xf32> to vector<256x20xf32>
    %104 = vector.shape_cast %86 : vector<2x2x64x20xf32> to vector<256x20xf32>
    %105 = vector.shape_cast %94 : vector<2x2x64x20xf32> to vector<256x20xf32>
    %106 = vector.shape_cast %102 : vector<2x2x64x20xf32> to vector<256x20xf32>
    %c1_73 = arith.constant 1 : index
    %c1_74 = arith.constant 1 : index
    %c0_75 = arith.constant 0 : index
    %c0_76 = arith.constant 0 : index
    %107 = vector.load %arg5[%c1_73, %c1_74, %c0_75, %c0_76] : memref<3x3x20x30xf32, #tpu.memory_space<vmem>>, vector<1x1x20x30xf32>
    %108 = vector.shape_cast %107 : vector<1x1x20x30xf32> to vector<20x30xf32>
    %cst_77 = arith.constant dense<0.000000e+00> : vector<256x30xf32>
    %109 = tpu.matmul %103, %108, %cst_77 {dimension_numbers = #tpu.dot_dimension_numbers<[1], [0], [0], [1], [0, 0, 1, 1], [], []>} : vector<256x20xf32>, vector<20x30xf32>, vector<256x30xf32> -> vector<256x30xf32>
    %110 = vector.broadcast %78 : vector<1x30xf32> to vector<256x30xf32>
    %111 = arith.addf %109, %110 : vector<256x30xf32>
    %c1_78 = arith.constant 1 : index
    %c2_79 = arith.constant 2 : index
    %c0_80 = arith.constant 0 : index
    %c0_81 = arith.constant 0 : index
    %112 = vector.load %arg5[%c1_78, %c2_79, %c0_80, %c0_81] : memref<3x3x20x30xf32, #tpu.memory_space<vmem>>, vector<1x1x20x30xf32>
    %113 = vector.shape_cast %112 : vector<1x1x20x30xf32> to vector<20x30xf32>
    %cst_82 = arith.constant dense<0.000000e+00> : vector<256x30xf32>
    %114 = tpu.matmul %103, %113, %cst_82 {dimension_numbers = #tpu.dot_dimension_numbers<[1], [0], [0], [1], [0, 0, 1, 1], [], []>} : vector<256x20xf32>, vector<20x30xf32>, vector<256x30xf32> -> vector<256x30xf32>
    %c1_83 = arith.constant 1 : index
    %c0_84 = arith.constant 0 : index
    %c0_85 = arith.constant 0 : index
    %c0_86 = arith.constant 0 : index
    %115 = vector.load %arg5[%c1_83, %c0_84, %c0_85, %c0_86] : memref<3x3x20x30xf32, #tpu.memory_space<vmem>>, vector<1x1x20x30xf32>
    %116 = vector.shape_cast %115 : vector<1x1x20x30xf32> to vector<20x30xf32>
    %cst_87 = arith.constant dense<0.000000e+00> : vector<256x30xf32>
    %117 = tpu.matmul %104, %116, %cst_87 {dimension_numbers = #tpu.dot_dimension_numbers<[1], [0], [0], [1], [0, 0, 1, 1], [], []>} : vector<256x20xf32>, vector<20x30xf32>, vector<256x30xf32> -> vector<256x30xf32>
    %118 = arith.addf %114, %117 : vector<256x30xf32>
    %119 = vector.broadcast %78 : vector<1x30xf32> to vector<256x30xf32>
    %120 = arith.addf %118, %119 : vector<256x30xf32>
    %c2_88 = arith.constant 2 : index
    %c1_89 = arith.constant 1 : index
    %c0_90 = arith.constant 0 : index
    %c0_91 = arith.constant 0 : index
    %121 = vector.load %arg5[%c2_88, %c1_89, %c0_90, %c0_91] : memref<3x3x20x30xf32, #tpu.memory_space<vmem>>, vector<1x1x20x30xf32>
    %122 = vector.shape_cast %121 : vector<1x1x20x30xf32> to vector<20x30xf32>
    %cst_92 = arith.constant dense<0.000000e+00> : vector<256x30xf32>
    %123 = tpu.matmul %103, %122, %cst_92 {dimension_numbers = #tpu.dot_dimension_numbers<[1], [0], [0], [1], [0, 0, 1, 1], [], []>} : vector<256x20xf32>, vector<20x30xf32>, vector<256x30xf32> -> vector<256x30xf32>
    %c0_93 = arith.constant 0 : index
    %c1_94 = arith.constant 1 : index
    %c0_95 = arith.constant 0 : index
    %c0_96 = arith.constant 0 : index
    %124 = vector.load %arg5[%c0_93, %c1_94, %c0_95, %c0_96] : memref<3x3x20x30xf32, #tpu.memory_space<vmem>>, vector<1x1x20x30xf32>
    %125 = vector.shape_cast %124 : vector<1x1x20x30xf32> to vector<20x30xf32>
    %cst_97 = arith.constant dense<0.000000e+00> : vector<256x30xf32>
    %126 = tpu.matmul %105, %125, %cst_97 {dimension_numbers = #tpu.dot_dimension_numbers<[1], [0], [0], [1], [0, 0, 1, 1], [], []>} : vector<256x20xf32>, vector<20x30xf32>, vector<256x30xf32> -> vector<256x30xf32>
    %127 = arith.addf %123, %126 : vector<256x30xf32>
    %128 = vector.broadcast %78 : vector<1x30xf32> to vector<256x30xf32>
    %129 = arith.addf %127, %128 : vector<256x30xf32>
    %c2_98 = arith.constant 2 : index
    %c2_99 = arith.constant 2 : index
    %c0_100 = arith.constant 0 : index
    %c0_101 = arith.constant 0 : index
    %130 = vector.load %arg5[%c2_98, %c2_99, %c0_100, %c0_101] : memref<3x3x20x30xf32, #tpu.memory_space<vmem>>, vector<1x1x20x30xf32>
    %131 = vector.shape_cast %130 : vector<1x1x20x30xf32> to vector<20x30xf32>
    %cst_102 = arith.constant dense<0.000000e+00> : vector<256x30xf32>
    %132 = tpu.matmul %103, %131, %cst_102 {dimension_numbers = #tpu.dot_dimension_numbers<[1], [0], [0], [1], [0, 0, 1, 1], [], []>} : vector<256x20xf32>, vector<20x30xf32>, vector<256x30xf32> -> vector<256x30xf32>
    %c2_103 = arith.constant 2 : index
    %c0_104 = arith.constant 0 : index
    %c0_105 = arith.constant 0 : index
    %c0_106 = arith.constant 0 : index
    %133 = vector.load %arg5[%c2_103, %c0_104, %c0_105, %c0_106] : memref<3x3x20x30xf32, #tpu.memory_space<vmem>>, vector<1x1x20x30xf32>
    %134 = vector.shape_cast %133 : vector<1x1x20x30xf32> to vector<20x30xf32>
    %cst_107 = arith.constant dense<0.000000e+00> : vector<256x30xf32>
    %135 = tpu.matmul %104, %134, %cst_107 {dimension_numbers = #tpu.dot_dimension_numbers<[1], [0], [0], [1], [0, 0, 1, 1], [], []>} : vector<256x20xf32>, vector<20x30xf32>, vector<256x30xf32> -> vector<256x30xf32>
    %136 = arith.addf %132, %135 : vector<256x30xf32>
    %c0_108 = arith.constant 0 : index
    %c2_109 = arith.constant 2 : index
    %c0_110 = arith.constant 0 : index
    %c0_111 = arith.constant 0 : index
    %137 = vector.load %arg5[%c0_108, %c2_109, %c0_110, %c0_111] : memref<3x3x20x30xf32, #tpu.memory_space<vmem>>, vector<1x1x20x30xf32>
    %138 = vector.shape_cast %137 : vector<1x1x20x30xf32> to vector<20x30xf32>
    %cst_112 = arith.constant dense<0.000000e+00> : vector<256x30xf32>
    %139 = tpu.matmul %105, %138, %cst_112 {dimension_numbers = #tpu.dot_dimension_numbers<[1], [0], [0], [1], [0, 0, 1, 1], [], []>} : vector<256x20xf32>, vector<20x30xf32>, vector<256x30xf32> -> vector<256x30xf32>
    %140 = arith.addf %136, %139 : vector<256x30xf32>
    %c0_113 = arith.constant 0 : index
    %c0_114 = arith.constant 0 : index
    %c0_115 = arith.constant 0 : index
    %c0_116 = arith.constant 0 : index
    %141 = vector.load %arg5[%c0_113, %c0_114, %c0_115, %c0_116] : memref<3x3x20x30xf32, #tpu.memory_space<vmem>>, vector<1x1x20x30xf32>
    %142 = vector.shape_cast %141 : vector<1x1x20x30xf32> to vector<20x30xf32>
    %cst_117 = arith.constant dense<0.000000e+00> : vector<256x30xf32>
    %143 = tpu.matmul %106, %142, %cst_117 {dimension_numbers = #tpu.dot_dimension_numbers<[1], [0], [0], [1], [0, 0, 1, 1], [], []>} : vector<256x20xf32>, vector<20x30xf32>, vector<256x30xf32> -> vector<256x30xf32>
    %144 = arith.addf %140, %143 : vector<256x30xf32>
    %145 = vector.broadcast %78 : vector<1x30xf32> to vector<256x30xf32>
    %146 = arith.addf %144, %145 : vector<256x30xf32>
    %147 = vector.shape_cast %111 : vector<256x30xf32> to vector<2x2x64x30xf32>
    %148 = vector.shape_cast %120 : vector<256x30xf32> to vector<2x2x64x30xf32>
    %149 = vector.shape_cast %147 : vector<2x2x64x30xf32> to vector<2x2x1x64x30xf32>
    %150 = vector.shape_cast %148 : vector<2x2x64x30xf32> to vector<2x2x1x64x30xf32>
    %151 = tpu.concatenate %149, %150 in 2 : vector<2x2x1x64x30xf32>, vector<2x2x1x64x30xf32> -> vector<2x2x2x64x30xf32>
    %152 = vector.shape_cast %151 : vector<2x2x2x64x30xf32> to vector<2x4x64x30xf32>
    %153 = vector.shape_cast %129 : vector<256x30xf32> to vector<2x2x64x30xf32>
    %154 = vector.shape_cast %146 : vector<256x30xf32> to vector<2x2x64x30xf32>
    %155 = vector.shape_cast %153 : vector<2x2x64x30xf32> to vector<2x2x1x64x30xf32>
    %156 = vector.shape_cast %154 : vector<2x2x64x30xf32> to vector<2x2x1x64x30xf32>
    %157 = tpu.concatenate %155, %156 in 2 : vector<2x2x1x64x30xf32>, vector<2x2x1x64x30xf32> -> vector<2x2x2x64x30xf32>
    %158 = vector.shape_cast %157 : vector<2x2x2x64x30xf32> to vector<2x4x64x30xf32>
    %159 = vector.shape_cast %152 : vector<2x4x64x30xf32> to vector<2x1x4x64x30xf32>
    %160 = vector.shape_cast %158 : vector<2x4x64x30xf32> to vector<2x1x4x64x30xf32>
    %161 = tpu.concatenate %159, %160 in 1 : vector<2x1x4x64x30xf32>, vector<2x1x4x64x30xf32> -> vector<2x2x4x64x30xf32>
    %162 = vector.shape_cast %161 : vector<2x2x4x64x30xf32> to vector<4x4x64x30xf32>
    %c0_118 = arith.constant 0 : index
    %c0_119 = arith.constant 0 : index
    %163 = vector.load %arg9[%c0_118, %c0_119] : memref<1x10xf32, #tpu.memory_space<vmem>>, vector<1x10xf32>
    %164 = vector.extract_strided_slice %162 {offsets = [0, 0, 0, 0], sizes = [4, 1, 64, 30], strides = [1, 1, 1, 1]} : vector<4x4x64x30xf32> to vector<4x1x64x30xf32>
    %165 = vector.shape_cast %164 : vector<4x1x64x30xf32> to vector<256x30xf32>
    %c0_120 = arith.constant 0 : index
    %c0_121 = arith.constant 0 : index
    %c0_122 = arith.constant 0 : index
    %166 = vector.load %arg10[%c0_120, %c0_121, %c0_122] : memref<2x256x256xf32, #tpu.memory_space<vmem>>, vector<1x256x256xf32>
    %167 = vector.shape_cast %166 : vector<1x256x256xf32> to vector<256x256xf32>
    %cst_123 = arith.constant dense<0.000000e+00> : vector<256x30xf32>
    %168 = tpu.matmul %167, %165, %cst_123 {dimension_numbers = #tpu.dot_dimension_numbers<[1], [0], [0], [1], [0, 0, 1, 1], [], []>} : vector<256x256xf32>, vector<256x30xf32>, vector<256x30xf32> -> vector<256x30xf32>
    %169 = vector.shape_cast %168 : vector<256x30xf32> to vector<4x1x64x30xf32>
    %170 = vector.extract_strided_slice %162 {offsets = [0, 1, 0, 0], sizes = [4, 3, 64, 30], strides = [1, 1, 1, 1]} : vector<4x4x64x30xf32> to vector<4x3x64x30xf32>
    %171 = tpu.concatenate %170, %169 in 1 : vector<4x3x64x30xf32>, vector<4x1x64x30xf32> -> vector<4x4x64x30xf32>
    %172 = vector.extract_strided_slice %162 {offsets = [0, 0, 0, 0], sizes = [1, 4, 64, 30], strides = [1, 1, 1, 1]} : vector<4x4x64x30xf32> to vector<1x4x64x30xf32>
    %173 = vector.shape_cast %172 : vector<1x4x64x30xf32> to vector<256x30xf32>
    %c1_124 = arith.constant 1 : index
    %c0_125 = arith.constant 0 : index
    %c0_126 = arith.constant 0 : index
    %174 = vector.load %arg10[%c1_124, %c0_125, %c0_126] : memref<2x256x256xf32, #tpu.memory_space<vmem>>, vector<1x256x256xf32>
    %175 = vector.shape_cast %174 : vector<1x256x256xf32> to vector<256x256xf32>
    %cst_127 = arith.constant dense<0.000000e+00> : vector<256x30xf32>
    %176 = tpu.matmul %175, %173, %cst_127 {dimension_numbers = #tpu.dot_dimension_numbers<[1], [0], [0], [1], [0, 0, 1, 1], [], []>} : vector<256x256xf32>, vector<256x30xf32>, vector<256x30xf32> -> vector<256x30xf32>
    %177 = vector.shape_cast %176 : vector<256x30xf32> to vector<1x4x64x30xf32>
    %178 = vector.extract_strided_slice %162 {offsets = [1, 0, 0, 0], sizes = [3, 4, 64, 30], strides = [1, 1, 1, 1]} : vector<4x4x64x30xf32> to vector<3x4x64x30xf32>
    %179 = tpu.concatenate %178, %177 in 0 : vector<3x4x64x30xf32>, vector<1x4x64x30xf32> -> vector<4x4x64x30xf32>
    %180 = vector.extract_strided_slice %171 {offsets = [0, 0, 0, 0], sizes = [1, 4, 64, 30], strides = [1, 1, 1, 1]} : vector<4x4x64x30xf32> to vector<1x4x64x30xf32>
    %181 = vector.shape_cast %180 : vector<1x4x64x30xf32> to vector<256x30xf32>
    %c1_128 = arith.constant 1 : index
    %c0_129 = arith.constant 0 : index
    %c0_130 = arith.constant 0 : index
    %182 = vector.load %arg10[%c1_128, %c0_129, %c0_130] : memref<2x256x256xf32, #tpu.memory_space<vmem>>, vector<1x256x256xf32>
    %183 = vector.shape_cast %182 : vector<1x256x256xf32> to vector<256x256xf32>
    %cst_131 = arith.constant dense<0.000000e+00> : vector<256x30xf32>
    %184 = tpu.matmul %183, %181, %cst_131 {dimension_numbers = #tpu.dot_dimension_numbers<[1], [0], [0], [1], [0, 0, 1, 1], [], []>} : vector<256x256xf32>, vector<256x30xf32>, vector<256x30xf32> -> vector<256x30xf32>
    %185 = vector.shape_cast %184 : vector<256x30xf32> to vector<1x4x64x30xf32>
    %186 = vector.extract_strided_slice %171 {offsets = [1, 0, 0, 0], sizes = [3, 4, 64, 30], strides = [1, 1, 1, 1]} : vector<4x4x64x30xf32> to vector<3x4x64x30xf32>
    %187 = tpu.concatenate %186, %185 in 0 : vector<3x4x64x30xf32>, vector<1x4x64x30xf32> -> vector<4x4x64x30xf32>
    %188 = vector.shape_cast %162 : vector<4x4x64x30xf32> to vector<1024x30xf32>
    %189 = vector.shape_cast %171 : vector<4x4x64x30xf32> to vector<1024x30xf32>
    %190 = vector.shape_cast %179 : vector<4x4x64x30xf32> to vector<1024x30xf32>
    %191 = vector.shape_cast %187 : vector<4x4x64x30xf32> to vector<1024x30xf32>
    %c1_132 = arith.constant 1 : index
    %c1_133 = arith.constant 1 : index
    %c0_134 = arith.constant 0 : index
    %c0_135 = arith.constant 0 : index
    %192 = vector.load %arg8[%c1_132, %c1_133, %c0_134, %c0_135] : memref<3x3x30x10xf32, #tpu.memory_space<vmem>>, vector<1x1x30x10xf32>
    %193 = vector.shape_cast %192 : vector<1x1x30x10xf32> to vector<30x10xf32>
    %cst_136 = arith.constant dense<0.000000e+00> : vector<1024x10xf32>
    %194 = tpu.matmul %188, %193, %cst_136 {dimension_numbers = #tpu.dot_dimension_numbers<[1], [0], [0], [1], [0, 0, 1, 1], [], []>} : vector<1024x30xf32>, vector<30x10xf32>, vector<1024x10xf32> -> vector<1024x10xf32>
    %195 = vector.broadcast %163 : vector<1x10xf32> to vector<1024x10xf32>
    %196 = arith.addf %194, %195 : vector<1024x10xf32>
    %c1_137 = arith.constant 1 : index
    %c2_138 = arith.constant 2 : index
    %c0_139 = arith.constant 0 : index
    %c0_140 = arith.constant 0 : index
    %197 = vector.load %arg8[%c1_137, %c2_138, %c0_139, %c0_140] : memref<3x3x30x10xf32, #tpu.memory_space<vmem>>, vector<1x1x30x10xf32>
    %198 = vector.shape_cast %197 : vector<1x1x30x10xf32> to vector<30x10xf32>
    %cst_141 = arith.constant dense<0.000000e+00> : vector<1024x10xf32>
    %199 = tpu.matmul %188, %198, %cst_141 {dimension_numbers = #tpu.dot_dimension_numbers<[1], [0], [0], [1], [0, 0, 1, 1], [], []>} : vector<1024x30xf32>, vector<30x10xf32>, vector<1024x10xf32> -> vector<1024x10xf32>
    %c1_142 = arith.constant 1 : index
    %c0_143 = arith.constant 0 : index
    %c0_144 = arith.constant 0 : index
    %c0_145 = arith.constant 0 : index
    %200 = vector.load %arg8[%c1_142, %c0_143, %c0_144, %c0_145] : memref<3x3x30x10xf32, #tpu.memory_space<vmem>>, vector<1x1x30x10xf32>
    %201 = vector.shape_cast %200 : vector<1x1x30x10xf32> to vector<30x10xf32>
    %cst_146 = arith.constant dense<0.000000e+00> : vector<1024x10xf32>
    %202 = tpu.matmul %189, %201, %cst_146 {dimension_numbers = #tpu.dot_dimension_numbers<[1], [0], [0], [1], [0, 0, 1, 1], [], []>} : vector<1024x30xf32>, vector<30x10xf32>, vector<1024x10xf32> -> vector<1024x10xf32>
    %203 = arith.addf %199, %202 : vector<1024x10xf32>
    %204 = vector.broadcast %163 : vector<1x10xf32> to vector<1024x10xf32>
    %205 = arith.addf %203, %204 : vector<1024x10xf32>
    %c2_147 = arith.constant 2 : index
    %c1_148 = arith.constant 1 : index
    %c0_149 = arith.constant 0 : index
    %c0_150 = arith.constant 0 : index
    %206 = vector.load %arg8[%c2_147, %c1_148, %c0_149, %c0_150] : memref<3x3x30x10xf32, #tpu.memory_space<vmem>>, vector<1x1x30x10xf32>
    %207 = vector.shape_cast %206 : vector<1x1x30x10xf32> to vector<30x10xf32>
    %cst_151 = arith.constant dense<0.000000e+00> : vector<1024x10xf32>
    %208 = tpu.matmul %188, %207, %cst_151 {dimension_numbers = #tpu.dot_dimension_numbers<[1], [0], [0], [1], [0, 0, 1, 1], [], []>} : vector<1024x30xf32>, vector<30x10xf32>, vector<1024x10xf32> -> vector<1024x10xf32>
    %c0_152 = arith.constant 0 : index
    %c1_153 = arith.constant 1 : index
    %c0_154 = arith.constant 0 : index
    %c0_155 = arith.constant 0 : index
    %209 = vector.load %arg8[%c0_152, %c1_153, %c0_154, %c0_155] : memref<3x3x30x10xf32, #tpu.memory_space<vmem>>, vector<1x1x30x10xf32>
    %210 = vector.shape_cast %209 : vector<1x1x30x10xf32> to vector<30x10xf32>
    %cst_156 = arith.constant dense<0.000000e+00> : vector<1024x10xf32>
    %211 = tpu.matmul %190, %210, %cst_156 {dimension_numbers = #tpu.dot_dimension_numbers<[1], [0], [0], [1], [0, 0, 1, 1], [], []>} : vector<1024x30xf32>, vector<30x10xf32>, vector<1024x10xf32> -> vector<1024x10xf32>
    %212 = arith.addf %208, %211 : vector<1024x10xf32>
    %213 = vector.broadcast %163 : vector<1x10xf32> to vector<1024x10xf32>
    %214 = arith.addf %212, %213 : vector<1024x10xf32>
    %c2_157 = arith.constant 2 : index
    %c2_158 = arith.constant 2 : index
    %c0_159 = arith.constant 0 : index
    %c0_160 = arith.constant 0 : index
    %215 = vector.load %arg8[%c2_157, %c2_158, %c0_159, %c0_160] : memref<3x3x30x10xf32, #tpu.memory_space<vmem>>, vector<1x1x30x10xf32>
    %216 = vector.shape_cast %215 : vector<1x1x30x10xf32> to vector<30x10xf32>
    %cst_161 = arith.constant dense<0.000000e+00> : vector<1024x10xf32>
    %217 = tpu.matmul %188, %216, %cst_161 {dimension_numbers = #tpu.dot_dimension_numbers<[1], [0], [0], [1], [0, 0, 1, 1], [], []>} : vector<1024x30xf32>, vector<30x10xf32>, vector<1024x10xf32> -> vector<1024x10xf32>
    %c2_162 = arith.constant 2 : index
    %c0_163 = arith.constant 0 : index
    %c0_164 = arith.constant 0 : index
    %c0_165 = arith.constant 0 : index
    %218 = vector.load %arg8[%c2_162, %c0_163, %c0_164, %c0_165] : memref<3x3x30x10xf32, #tpu.memory_space<vmem>>, vector<1x1x30x10xf32>
    %219 = vector.shape_cast %218 : vector<1x1x30x10xf32> to vector<30x10xf32>
    %cst_166 = arith.constant dense<0.000000e+00> : vector<1024x10xf32>
    %220 = tpu.matmul %189, %219, %cst_166 {dimension_numbers = #tpu.dot_dimension_numbers<[1], [0], [0], [1], [0, 0, 1, 1], [], []>} : vector<1024x30xf32>, vector<30x10xf32>, vector<1024x10xf32> -> vector<1024x10xf32>
    %221 = arith.addf %217, %220 : vector<1024x10xf32>
    %c0_167 = arith.constant 0 : index
    %c2_168 = arith.constant 2 : index
    %c0_169 = arith.constant 0 : index
    %c0_170 = arith.constant 0 : index
    %222 = vector.load %arg8[%c0_167, %c2_168, %c0_169, %c0_170] : memref<3x3x30x10xf32, #tpu.memory_space<vmem>>, vector<1x1x30x10xf32>
    %223 = vector.shape_cast %222 : vector<1x1x30x10xf32> to vector<30x10xf32>
    %cst_171 = arith.constant dense<0.000000e+00> : vector<1024x10xf32>
    %224 = tpu.matmul %190, %223, %cst_171 {dimension_numbers = #tpu.dot_dimension_numbers<[1], [0], [0], [1], [0, 0, 1, 1], [], []>} : vector<1024x30xf32>, vector<30x10xf32>, vector<1024x10xf32> -> vector<1024x10xf32>
    %225 = arith.addf %221, %224 : vector<1024x10xf32>
    %c0_172 = arith.constant 0 : index
    %c0_173 = arith.constant 0 : index
    %c0_174 = arith.constant 0 : index
    %c0_175 = arith.constant 0 : index
    %226 = vector.load %arg8[%c0_172, %c0_173, %c0_174, %c0_175] : memref<3x3x30x10xf32, #tpu.memory_space<vmem>>, vector<1x1x30x10xf32>
    %227 = vector.shape_cast %226 : vector<1x1x30x10xf32> to vector<30x10xf32>
    %cst_176 = arith.constant dense<0.000000e+00> : vector<1024x10xf32>
    %228 = tpu.matmul %191, %227, %cst_176 {dimension_numbers = #tpu.dot_dimension_numbers<[1], [0], [0], [1], [0, 0, 1, 1], [], []>} : vector<1024x30xf32>, vector<30x10xf32>, vector<1024x10xf32> -> vector<1024x10xf32>
    %229 = arith.addf %225, %228 : vector<1024x10xf32>
    %230 = vector.broadcast %163 : vector<1x10xf32> to vector<1024x10xf32>
    %231 = arith.addf %229, %230 : vector<1024x10xf32>
    %232 = vector.shape_cast %196 : vector<1024x10xf32> to vector<4x4x64x10xf32>
    %233 = vector.shape_cast %205 : vector<1024x10xf32> to vector<4x4x64x10xf32>
    %234 = vector.shape_cast %232 : vector<4x4x64x10xf32> to vector<4x4x1x64x10xf32>
    %235 = vector.shape_cast %233 : vector<4x4x64x10xf32> to vector<4x4x1x64x10xf32>
    %236 = tpu.concatenate %234, %235 in 2 : vector<4x4x1x64x10xf32>, vector<4x4x1x64x10xf32> -> vector<4x4x2x64x10xf32>
    %237 = vector.shape_cast %236 : vector<4x4x2x64x10xf32> to vector<4x8x64x10xf32>
    %238 = vector.shape_cast %214 : vector<1024x10xf32> to vector<4x4x64x10xf32>
    %239 = vector.shape_cast %231 : vector<1024x10xf32> to vector<4x4x64x10xf32>
    %240 = vector.shape_cast %238 : vector<4x4x64x10xf32> to vector<4x4x1x64x10xf32>
    %241 = vector.shape_cast %239 : vector<4x4x64x10xf32> to vector<4x4x1x64x10xf32>
    %242 = tpu.concatenate %240, %241 in 2 : vector<4x4x1x64x10xf32>, vector<4x4x1x64x10xf32> -> vector<4x4x2x64x10xf32>
    %243 = vector.shape_cast %242 : vector<4x4x2x64x10xf32> to vector<4x8x64x10xf32>
    %244 = vector.shape_cast %237 : vector<4x8x64x10xf32> to vector<4x1x8x64x10xf32>
    %245 = vector.shape_cast %243 : vector<4x8x64x10xf32> to vector<4x1x8x64x10xf32>
    %246 = tpu.concatenate %244, %245 in 1 : vector<4x1x8x64x10xf32>, vector<4x1x8x64x10xf32> -> vector<4x2x8x64x10xf32>
    %247 = vector.shape_cast %246 : vector<4x2x8x64x10xf32> to vector<8x8x64x10xf32>
    %248 = vector.shape_cast %247 : vector<8x8x64x10xf32> to vector<1x4096x10xf32>
    %c0_177 = arith.constant 0 : index
    %c0_178 = arith.constant 0 : index
    %c0_179 = arith.constant 0 : index
    %249 = vector.load %arg11[%c0_177, %c0_178, %c0_179] : memref<1x4096x10xf32, #tpu.memory_space<vmem>>, vector<1x4096x10xf32>
    tpu.vector_store %arg11[%c0_177, %c0_178, %c0_179], %248 {strides = array<i32>} : memref<1x4096x10xf32, #tpu.memory_space<vmem>>, vector<1x4096x10xf32>,
    return
  }
  func.func @transform_0(%arg0: i32) -> (i32, i32, i32, i32) {
    %c0_i32 = arith.constant 0 : i32
    %c0_i32_0 = arith.constant 0 : i32
    %c0_i32_1 = arith.constant 0 : i32
    %c0_i32_2 = arith.constant 0 : i32
    return %arg0, %c0_i32, %c0_i32_0, %c0_i32_1 : i32, i32, i32, i32
  }
  func.func @transform_1(%arg0: i32) -> (i32, i32, i32, i32) {
    %c0_i32 = arith.constant 0 : i32
    %c0_i32_0 = arith.constant 0 : i32
    %c0_i32_1 = arith.constant 0 : i32
    %c0_i32_2 = arith.constant 0 : i32
    %c0_i32_3 = arith.constant 0 : i32
    return %c0_i32, %c0_i32_0, %c0_i32_1, %c0_i32_2 : i32, i32, i32, i32
  }
  func.func @transform_2(%arg0: i32) -> (i32, i32) {
    %c0_i32 = arith.constant 0 : i32
    %c0_i32_0 = arith.constant 0 : i32
    %c0_i32_1 = arith.constant 0 : i32
    return %c0_i32, %c0_i32_0 : i32, i32
  }
  func.func @transform_3(%arg0: i32) -> (i32, i32, i32) {
    %c0_i32 = arith.constant 0 : i32
    %c0_i32_0 = arith.constant 0 : i32
    %c0_i32_1 = arith.constant 0 : i32
    %c0_i32_2 = arith.constant 0 : i32
    return %c0_i32, %c0_i32_0, %c0_i32_1 : i32, i32, i32
  }
  func.func @transform_4(%arg0: i32) -> (i32, i32, i32, i32) {
    %c0_i32 = arith.constant 0 : i32
    %c0_i32_0 = arith.constant 0 : i32
    %c0_i32_1 = arith.constant 0 : i32
    %c0_i32_2 = arith.constant 0 : i32
    %c0_i32_3 = arith.constant 0 : i32
    return %c0_i32, %c0_i32_0, %c0_i32_1, %c0_i32_2 : i32, i32, i32, i32
  }
  func.func @transform_5(%arg0: i32) -> (i32, i32) {
    %c0_i32 = arith.constant 0 : i32
    %c0_i32_0 = arith.constant 0 : i32
    %c0_i32_1 = arith.constant 0 : i32
    return %c0_i32, %c0_i32_0 : i32, i32
  }
  func.func @transform_6(%arg0: i32) -> (i32, i32, i32) {
    %c0_i32 = arith.constant 0 : i32
    %c0_i32_0 = arith.constant 0 : i32
    %c0_i32_1 = arith.constant 0 : i32
    %c0_i32_2 = arith.constant 0 : i32
    return %c0_i32, %c0_i32_0, %c0_i32_1 : i32, i32, i32
  }
  func.func @transform_7(%arg0: i32) -> (i32, i32, i32, i32) {
    %c0_i32 = arith.constant 0 : i32
    %c0_i32_0 = arith.constant 0 : i32
    %c0_i32_1 = arith.constant 0 : i32
    %c0_i32_2 = arith.constant 0 : i32
    %c0_i32_3 = arith.constant 0 : i32
    return %c0_i32, %c0_i32_0, %c0_i32_1, %c0_i32_2 : i32, i32, i32, i32
  }
  func.func @transform_8(%arg0: i32) -> (i32, i32) {
    %c0_i32 = arith.constant 0 : i32
    %c0_i32_0 = arith.constant 0 : i32
    %c0_i32_1 = arith.constant 0 : i32
    return %c0_i32, %c0_i32_0 : i32, i32
  }
  func.func @transform_9(%arg0: i32) -> (i32, i32, i32) {
    %c0_i32 = arith.constant 0 : i32
    %c0_i32_0 = arith.constant 0 : i32
    %c0_i32_1 = arith.constant 0 : i32
    %c0_i32_2 = arith.constant 0 : i32
    return %c0_i32, %c0_i32_0, %c0_i32_1 : i32, i32, i32
  }
  func.func @transform_10(%arg0: i32) -> (i32, i32, i32) {
    %c0_i32 = arith.constant 0 : i32
    %c0_i32_0 = arith.constant 0 : i32
    %c0_i32_1 = arith.constant 0 : i32
    return %arg0, %c0_i32, %c0_i32_0 : i32, i32, i32
  }
}

</mosaic_0001>

<llo_original>
// kernel: model_forward.1
$region0: #{model_forward.1}
  #allocation0 [shape = 'u32[]', space=smem, size = 0x4, offset = 0x4, fixed_abs, tag = 'smem constant byte address 0x4 - core index']
  #allocation1 [shape = 'u32[72,128]{1,0:T(1,128)}', space=vmem, size = 0x9000, scoped, tag = 'internal scratch']
  %s0 = inlined_call_operand.hbm [shape: f32[6,8,8,10], index: 0, kind: input, shape index: {}]
  %s1 = inlined_call_operand.vmem [shape: f32[3,3,10,20], index: 1, kind: input, shape index: {}]
  %s2 = inlined_call_operand.hbm [shape: f32[1,20], index: 2, kind: input, shape index: {}]
  %s3 = inlined_call_operand.hbm [shape: f32[2,64,64], index: 3, kind: input, shape index: {}]
  %s4 = inlined_call_operand.hbm [shape: f32[3,3,20,30], index: 4, kind: input, shape index: {}]
  %s5 = inlined_call_operand.hbm [shape: f32[1,30], index: 5, kind: input, shape index: {}]
  %s6 = inlined_call_operand.hbm [shape: f32[2,128,128], index: 6, kind: input, shape index: {}]
  %s7 = inlined_call_operand.vmem [shape: f32[3,3,30,10], index: 7, kind: input, shape index: {}]
  %s8 = inlined_call_operand.hbm [shape: f32[1,10], index: 8, kind: input, shape index: {}]
  %s9 = inlined_call_operand.hbm [shape: f32[2,256,256], index: 9, kind: input, shape index: {}]
  %s10 = inlined_call_operand.vmem [shape: f32[6,4096,10], index: 10, kind: output, shape index: {}]
  %s11 = sld [smem:[#allocation0]]
  $region105: #{model_forward.1} parent=0
    _
  %s13 = ssub.s32 1, %s11
  %s14 = scalar_select 0, %s13, %s11
  $region1: #{model_forward.1} parent=0
    #allocation2 [shape = 'u8[65536]{0}', space=vmem, size = 0x10000, scoped, tag = 'input window, operand 0']
    #allocation3 [shape = 's32[2]{0}', space=sflag, size = 0x8, scoped, tag = 'scoped memory for model_forward.1']
    #allocation4 [shape = 'u8[512]{0}', space=vmem, size = 0x400, scoped, tag = 'input window, operand 2, single buffered']
    #allocation5 [shape = 's32[1]{0}', space=sflag, size = 0x4, scoped, tag = 'scoped memory for model_forward.1']
    #allocation6 [shape = 'u8[65536]{0}', space=vmem, size = 0x10000, scoped, tag = 'input window, operand 3, single buffered']
    #allocation7 [shape = 'u8[110592]{0}', space=vmem, size = 0x1b000, scoped, tag = 'input window, operand 4, single buffered']
    #allocation8 [shape = 's32[1]{0}', space=sflag, size = 0x4, scoped, tag = 'scoped memory for model_forward.1']
    #allocation9 [shape = 'u8[512]{0}', space=vmem, size = 0x400, scoped, tag = 'input window, operand 5, single buffered']
    #allocation10 [shape = 'u8[131072]{0}', space=vmem, size = 0x20000, scoped, tag = 'input window, operand 6, single buffered']
    #allocation11 [shape = 's32[1]{0}', space=sflag, size = 0x4, scoped, tag = 'scoped memory for model_forward.1']
    #allocation12 [shape = 'u8[512]{0}', space=vmem, size = 0x400, scoped, tag = 'input window, operand 8, single buffered']
    #allocation13 [shape = 'u8[524288]{0}', space=vmem, size = 0x80000, scoped, tag = 'input window, operand 9, single buffered']
    #allocation14 [shape = 's32[1]{0}', space=sflag, size = 0x4, scoped, tag = 'scoped memory for model_forward.1']
    %15 = vsyncpa [#allocation3], 0
    %s16 = scalar_lea.sflag [#allocation3], 1
    %17 = vsyncpa %s16, 0
    %18 = vsyncpa [#allocation5], 0
    %19 = vsyncpa [#allocation8], 0
    %20 = vsyncpa [#allocation11], 0
    %21 = vsyncpa [#allocation14], 0
    loop: start=0, step=1, limit=8
    $region2: #{model_forward.1} parent=1 // loop_pre_header
      _
    $region3: #{model_forward.1} parent=1 // loop_header
      %s23 = sphi 0, %s27
      %p24 = scmp.ge.s32.totalorder %s23, 8
      %s33 = sphi 0, %s35
      %s36 = sphi 0, %s33
      %s37 = sphi 0, %s36
      %s53 = sphi 0, %s37
      %s57 = sphi 0, %s57
      %s59 = sphi 0, %s57
      %s60 = sphi 0, %s59
      %s74 = sphi 0, %s60
      %s78 = sphi 0, %s78
      %s80 = sphi 0, %s78
      %s81 = sphi 0, %s80
      %s95 = sphi 0, %s81
      %s99 = sphi 0, %s99
      %s101 = sphi 0, %s99
      %s102 = sphi 0, %s101
      %s116 = sphi 0, %s102
      %s120 = sphi 0, %s120
      %s122 = sphi 0, %s120
      %s123 = sphi 0, %s122
      %s137 = sphi 0, %s123
      %s141 = sphi 0, %s141
      %s143 = sphi 0, %s141
      %s144 = sphi 0, %s143
      %s158 = sphi 0, %s144
      %s162 = sphi 0, %s162
      %s164 = sphi 0, %s162
      %s165 = sphi 0, %s164
      %s179 = sphi 0, %s165
      %s183 = sphi 0, %s183
      %s185 = sphi 0, %s183
      %s186 = sphi 0, %s185
      %s200 = sphi 0, %s186
      %s204 = sphi 0, %s204
      %s206 = sphi 0, %s204
      %s207 = sphi 0, %s206
      %s221 = sphi 0, %s207
      %s225 = sphi 0, %s225
      %s227 = sphi 0, %s225
      %s228 = sphi 0, %s227
      %s242 = sphi 0, %s228
      %s248 = sphi 0, %s250
      %s251 = sphi 0, %s248
      %s252 = sphi 0, %s251
      %s268 = sphi 0, %s252
    $region4: #{model_forward.1} parent=1 // loop_header_branch
      %26 = sbr.rel (%p24) target = $region8
    $region5: #{model_forward.1} parent=1 // loop_body
      %s28 = ssub.s32 %s23, 1
      %s29 = ssub.s32 %s23, 2
      %s30 = sadd.s32 %s23, 1
      %s31 = ssub.s32 %s23, %s30
      %p32 = scmp.eq.s32.totalorder %s31, 0
      %s34 = sadd.s32 %s33, 1
      %s35 = scalar_select %p32, %s33, %s34
      %p38 = pneg %p32
      %p39 = scmp.eq.s32.totalorder %s23, 5
      %p40 = por %p38, %p39
      %p41 = scmp.ne.s32.totalorder %s33, %s36
      %p42 = scmp.eq.s32.totalorder %s23, 0
      %p43 = por %p41, %p42
      %p44 = scmp.ne.s32.totalorder %s33, %s36
      %p45 = scmp.eq.s32.totalorder %s28, 5
      %p46 = por %p44, %p45
      %p47 = scmp.ne.s32.totalorder %s36, %s37
      %p48 = scmp.eq.s32.totalorder %s28, 0
      %p49 = por %p47, %p48
      %p50 = scmp.ne.s32.totalorder %s36, %s37
      %p51 = scmp.eq.s32.totalorder %s29, 5
      %p52 = por %p50, %p51
      %p54 = scmp.ne.s32.totalorder %s37, %s53
      %p55 = scmp.eq.s32.totalorder %s29, 0
      %p56 = por %p54, %p55
      %s58 = sadd.s32 %s57, 1
      %p61 = scmp.eq.s32.totalorder %s23, 5
      %p62 = scmp.ne.s32.totalorder %s57, %s59
      %p63 = scmp.eq.s32.totalorder %s23, 0
      %p64 = por %p62, %p63
      %p65 = scmp.ne.s32.totalorder %s57, %s59
      %p66 = scmp.eq.s32.totalorder %s28, 5
      %p67 = por %p65, %p66
      %p68 = scmp.ne.s32.totalorder %s59, %s60
      %p69 = scmp.eq.s32.totalorder %s28, 0
      %p70 = por %p68, %p69
      %p71 = scmp.ne.s32.totalorder %s59, %s60
      %p72 = scmp.eq.s32.totalorder %s29, 5
      %p73 = por %p71, %p72
      %p75 = scmp.ne.s32.totalorder %s60, %s74
      %p76 = scmp.eq.s32.totalorder %s29, 0
      %p77 = por %p75, %p76
      %s79 = sadd.s32 %s78, 1
      %p82 = scmp.eq.s32.totalorder %s23, 5
      %p83 = scmp.ne.s32.totalorder %s78, %s80
      %p84 = scmp.eq.s32.totalorder %s23, 0
      %p85 = por %p83, %p84
      %p86 = scmp.ne.s32.totalorder %s78, %s80
      %p87 = scmp.eq.s32.totalorder %s28, 5
      %p88 = por %p86, %p87
      %p89 = scmp.ne.s32.totalorder %s80, %s81
      %p90 = scmp.eq.s32.totalorder %s28, 0
      %p91 = por %p89, %p90
      %p92 = scmp.ne.s32.totalorder %s80, %s81
      %p93 = scmp.eq.s32.totalorder %s29, 5
      %p94 = por %p92, %p93
      %p96 = scmp.ne.s32.totalorder %s81, %s95
      %p97 = scmp.eq.s32.totalorder %s29, 0
      %p98 = por %p96, %p97
      %s100 = sadd.s32 %s99, 1
      %p103 = scmp.eq.s32.totalorder %s23, 5
      %p104 = scmp.ne.s32.totalorder %s99, %s101
      %p105 = scmp.eq.s32.totalorder %s23, 0
      %p106 = por %p104, %p105
      %p107 = scmp.ne.s32.totalorder %s99, %s101
      %p108 = scmp.eq.s32.totalorder %s28, 5
      %p109 = por %p107, %p108
      %p110 = scmp.ne.s32.totalorder %s101, %s102
      %p111 = scmp.eq.s32.totalorder %s28, 0
      %p112 = por %p110, %p111
      %p113 = scmp.ne.s32.totalorder %s101, %s102
      %p114 = scmp.eq.s32.totalorder %s29, 5
      %p115 = por %p113, %p114
      %p117 = scmp.ne.s32.totalorder %s102, %s116
      %p118 = scmp.eq.s32.totalorder %s29, 0
      %p119 = por %p117, %p118
      %s121 = sadd.s32 %s120, 1
      %p124 = scmp.eq.s32.totalorder %s23, 5
      %p125 = scmp.ne.s32.totalorder %s120, %s122
      %p126 = scmp.eq.s32.totalorder %s23, 0
      %p127 = por %p125, %p126
      %p128 = scmp.ne.s32.totalorder %s120, %s122
      %p129 = scmp.eq.s32.totalorder %s28, 5
      %p130 = por %p128, %p129
      %p131 = scmp.ne.s32.totalorder %s122, %s123
      %p132 = scmp.eq.s32.totalorder %s28, 0
      %p133 = por %p131, %p132
      %p134 = scmp.ne.s32.totalorder %s122, %s123
      %p135 = scmp.eq.s32.totalorder %s29, 5
      %p136 = por %p134, %p135
      %p138 = scmp.ne.s32.totalorder %s123, %s137
      %p139 = scmp.eq.s32.totalorder %s29, 0
      %p140 = por %p138, %p139
      %s142 = sadd.s32 %s141, 1
      %p145 = scmp.eq.s32.totalorder %s23, 5
      %p146 = scmp.ne.s32.totalorder %s141, %s143
      %p147 = scmp.eq.s32.totalorder %s23, 0
      %p148 = por %p146, %p147
      %p149 = scmp.ne.s32.totalorder %s141, %s143
      %p150 = scmp.eq.s32.totalorder %s28, 5
      %p151 = por %p149, %p150
      %p152 = scmp.ne.s32.totalorder %s143, %s144
      %p153 = scmp.eq.s32.totalorder %s28, 0
      %p154 = por %p152, %p153
      %p155 = scmp.ne.s32.totalorder %s143, %s144
      %p156 = scmp.eq.s32.totalorder %s29, 5
      %p157 = por %p155, %p156
      %p159 = scmp.ne.s32.totalorder %s144, %s158
      %p160 = scmp.eq.s32.totalorder %s29, 0
      %p161 = por %p159, %p160
      %s163 = sadd.s32 %s162, 1
      %p166 = scmp.eq.s32.totalorder %s23, 5
      %p167 = scmp.ne.s32.totalorder %s162, %s164
      %p168 = scmp.eq.s32.totalorder %s23, 0
      %p169 = por %p167, %p168
      %p170 = scmp.ne.s32.totalorder %s162, %s164
      %p171 = scmp.eq.s32.totalorder %s28, 5
      %p172 = por %p170, %p171
      %p173 = scmp.ne.s32.totalorder %s164, %s165
      %p174 = scmp.eq.s32.totalorder %s28, 0
      %p175 = por %p173, %p174
      %p176 = scmp.ne.s32.totalorder %s164, %s165
      %p177 = scmp.eq.s32.totalorder %s29, 5
      %p178 = por %p176, %p177
      %p180 = scmp.ne.s32.totalorder %s165, %s179
      %p181 = scmp.eq.s32.totalorder %s29, 0
      %p182 = por %p180, %p181
      %s184 = sadd.s32 %s183, 1
      %p187 = scmp.eq.s32.totalorder %s23, 5
      %p188 = scmp.ne.s32.totalorder %s183, %s185
      %p189 = scmp.eq.s32.totalorder %s23, 0
      %p190 = por %p188, %p189
      %p191 = scmp.ne.s32.totalorder %s183, %s185
      %p192 = scmp.eq.s32.totalorder %s28, 5
      %p193 = por %p191, %p192
      %p194 = scmp.ne.s32.totalorder %s185, %s186
      %p195 = scmp.eq.s32.totalorder %s28, 0
      %p196 = por %p194, %p195
      %p197 = scmp.ne.s32.totalorder %s185, %s186
      %p198 = scmp.eq.s32.totalorder %s29, 5
      %p199 = por %p197, %p198
      %p201 = scmp.ne.s32.totalorder %s186, %s200
      %p202 = scmp.eq.s32.totalorder %s29, 0
      %p203 = por %p201, %p202
      %s205 = sadd.s32 %s204, 1
      %p208 = scmp.eq.s32.totalorder %s23, 5
      %p209 = scmp.ne.s32.totalorder %s204, %s206
      %p210 = scmp.eq.s32.totalorder %s23, 0
      %p211 = por %p209, %p210
      %p212 = scmp.ne.s32.totalorder %s204, %s206
      %p213 = scmp.eq.s32.totalorder %s28, 5
      %p214 = por %p212, %p213
      %p215 = scmp.ne.s32.totalorder %s206, %s207
      %p216 = scmp.eq.s32.totalorder %s28, 0
      %p217 = por %p215, %p216
      %p218 = scmp.ne.s32.totalorder %s206, %s207
      %p219 = scmp.eq.s32.totalorder %s29, 5
      %p220 = por %p218, %p219
      %p222 = scmp.ne.s32.totalorder %s207, %s221
      %p223 = scmp.eq.s32.totalorder %s29, 0
      %p224 = por %p222, %p223
      %s226 = sadd.s32 %s225, 1
      %p229 = scmp.eq.s32.totalorder %s23, 5
      %p230 = scmp.ne.s32.totalorder %s225, %s227
      %p231 = scmp.eq.s32.totalorder %s23, 0
      %p232 = por %p230, %p231
      %p233 = scmp.ne.s32.totalorder %s225, %s227
      %p234 = scmp.eq.s32.totalorder %s28, 5
      %p235 = por %p233, %p234
      %p236 = scmp.ne.s32.totalorder %s227, %s228
      %p237 = scmp.eq.s32.totalorder %s28, 0
      %p238 = por %p236, %p237
      %p239 = scmp.ne.s32.totalorder %s227, %s228
      %p240 = scmp.eq.s32.totalorder %s29, 5
      %p241 = por %p239, %p240
      %p243 = scmp.ne.s32.totalorder %s228, %s242
      %p244 = scmp.eq.s32.totalorder %s29, 0
      %p245 = por %p243, %p244
      %s246 = ssub.s32 %s23, %s30
      %p247 = scmp.eq.s32.totalorder %s246, 0
      %s249 = sadd.s32 %s248, 1
      %s250 = scalar_select %p247, %s248, %s249
      %p253 = pneg %p247
      %p254 = scmp.eq.s32.totalorder %s23, 5
      %p255 = por %p253, %p254
      %p256 = scmp.ne.s32.totalorder %s248, %s251
      %p257 = scmp.eq.s32.totalorder %s23, 0
      %p258 = por %p256, %p257
      %p259 = scmp.ne.s32.totalorder %s248, %s251
      %p260 = scmp.eq.s32.totalorder %s28, 5
      %p261 = por %p259, %p260
      %p262 = scmp.ne.s32.totalorder %s251, %s252
      %p263 = scmp.eq.s32.totalorder %s28, 0
      %p264 = por %p262, %p263
      %p265 = scmp.ne.s32.totalorder %s251, %s252
      %p266 = scmp.eq.s32.totalorder %s29, 5
      %p267 = por %p265, %p266
      %p269 = scmp.ne.s32.totalorder %s252, %s268
      %p270 = scmp.eq.s32.totalorder %s29, 0
      %p271 = por %p269, %p270
      %p272 = scmp.le.s32.totalorder 1, %s23
      %p273 = scmp.lt.s32.totalorder %s23, 7
      %p274 = pnand %p272, %p273
      %p275 = pneg %p274
      // Predicated region
      $region9: #{model_forward.1} parent=5 // pred_check
        _
      $region10: #{model_forward.1} parent=5 // pred_check_branch
        %277 = sbr.rel (%p274) target = $region12
      $region11: #{model_forward.1} parent=5 // pred_region
        %s278 = ssub.s32 %s23, 1
        // Predicated region
        $region13: #{model_forward.1} parent=11 // pred_check
          %p279 = pneg %p70
        $region14: #{model_forward.1} parent=11 // pred_check_branch
          %281 = sbr.rel (%p279) target = $region16
        $region15: #{model_forward.1} parent=11 // pred_region
          _
        $region16: #{model_forward.1} parent=11 // pred_fallthru
          _
        // Predicated region
        $region17: #{model_forward.1} parent=11 // pred_check
          %p282 = pneg %p91
        $region18: #{model_forward.1} parent=11 // pred_check_branch
          %284 = sbr.rel (%p282) target = $region20
        $region19: #{model_forward.1} parent=11 // pred_region
          %286 = vsyncadd [#allocation5], 0
          %s288 = sshll.u32 %s2, 4
          %s289 = int_to_ptr.hbm [resolvable:$true] %s288
          %s290 = sshll.u32 [#allocation4], 4
          %s291 = int_to_ptr.vmem [resolvable:$true] %s290
          %293 = dma.hbm_to_vmem [thread:$0]  %s289, 16, %s291, [#allocation5]
        $region20: #{model_forward.1} parent=11 // pred_fallthru
          _
        // Predicated region
        $region21: #{model_forward.1} parent=11 // pred_check
          %p294 = pneg %p112
        $region22: #{model_forward.1} parent=11 // pred_check_branch
          %296 = sbr.rel (%p294) target = $region24
        $region23: #{model_forward.1} parent=11 // pred_region
          %298 = vsyncadd [#allocation5], 0
          %s299 = sshll.u32 %s3, 4
          %s300 = int_to_ptr.hbm [resolvable:$true] %s299
          %s301 = sshll.u32 [#allocation6], 4
          %s302 = int_to_ptr.vmem [resolvable:$true] %s301
          %307 = dma.hbm_to_vmem [thread:$0]  %s300, 2048, %s302, [#allocation5], 128, 128, 8
        $region24: #{model_forward.1} parent=11 // pred_fallthru
          _
        // Predicated region
        $region25: #{model_forward.1} parent=11 // pred_check
          %p308 = pneg %p133
        $region26: #{model_forward.1} parent=11 // pred_check_branch
          %310 = sbr.rel (%p308) target = $region28
        $region27: #{model_forward.1} parent=11 // pred_region
          %312 = vsyncadd [#allocation8], 0
          %s313 = sshll.u32 %s4, 4
          %s314 = int_to_ptr.hbm [resolvable:$true] %s313
          %s315 = sshll.u32 [#allocation7], 4
          %s316 = int_to_ptr.vmem [resolvable:$true] %s315
          %321 = dma.hbm_to_vmem [thread:$0]  %s314, 3456, %s316, [#allocation8], 128, 128, 8
        $region28: #{model_forward.1} parent=11 // pred_fallthru
          _
        // Predicated region
        $region29: #{model_forward.1} parent=11 // pred_check
          %p322 = pneg %p154
        $region30: #{model_forward.1} parent=11 // pred_check_branch
          %324 = sbr.rel (%p322) target = $region32
        $region31: #{model_forward.1} parent=11 // pred_region
          %326 = vsyncadd [#allocation8], 0
          %s328 = sshll.u32 %s5, 4
          %s329 = int_to_ptr.hbm [resolvable:$true] %s328
          %s330 = sshll.u32 [#allocation9], 4
          %s331 = int_to_ptr.vmem [resolvable:$true] %s330
          %333 = dma.hbm_to_vmem [thread:$0]  %s329, 16, %s331, [#allocation8]
        $region32: #{model_forward.1} parent=11 // pred_fallthru
          _
        // Predicated region
        $region33: #{model_forward.1} parent=11 // pred_check
          %p334 = pneg %p175
        $region34: #{model_forward.1} parent=11 // pred_check_branch
          %336 = sbr.rel (%p334) target = $region36
        $region35: #{model_forward.1} parent=11 // pred_region
          %338 = vsyncadd [#allocation11], 0
          %s339 = sshll.u32 %s6, 4
          %s340 = int_to_ptr.hbm [resolvable:$true] %s339
          %s341 = sshll.u32 [#allocation10], 4
          %s342 = int_to_ptr.vmem [resolvable:$true] %s341
          %347 = dma.hbm_to_vmem [thread:$0]  %s340, 4096, %s342, [#allocation11], 128, 128, 8
        $region36: #{model_forward.1} parent=11 // pred_fallthru
          _
        // Predicated region
        $region37: #{model_forward.1} parent=11 // pred_check
          %p348 = pneg %p196
        $region38: #{model_forward.1} parent=11 // pred_check_branch
          %350 = sbr.rel (%p348) target = $region40
        $region39: #{model_forward.1} parent=11 // pred_region
          _
        $region40: #{model_forward.1} parent=11 // pred_fallthru
          _
        // Predicated region
        $region41: #{model_forward.1} parent=11 // pred_check
          %p351 = pneg %p217
        $region42: #{model_forward.1} parent=11 // pred_check_branch
          %353 = sbr.rel (%p351) target = $region44
        $region43: #{model_forward.1} parent=11 // pred_region
          %355 = vsyncadd [#allocation11], 0
          %s357 = sshll.u32 %s8, 4
          %s358 = int_to_ptr.hbm [resolvable:$true] %s357
          %s359 = sshll.u32 [#allocation12], 4
          %s360 = int_to_ptr.vmem [resolvable:$true] %s359
          %362 = dma.hbm_to_vmem [thread:$0]  %s358, 16, %s360, [#allocation11]
        $region44: #{model_forward.1} parent=11 // pred_fallthru
          _
        // Predicated region
        $region45: #{model_forward.1} parent=11 // pred_check
          %p363 = pneg %p238
        $region46: #{model_forward.1} parent=11 // pred_check_branch
          %365 = sbr.rel (%p363) target = $region48
        $region47: #{model_forward.1} parent=11 // pred_region
          %367 = vsyncadd [#allocation14], 0
          %s368 = sshll.u32 %s9, 4
          %s369 = int_to_ptr.hbm [resolvable:$true] %s368
          %s370 = sshll.u32 [#allocation13], 4
          %s371 = int_to_ptr.vmem [resolvable:$true] %s370
          %376 = dma.hbm_to_vmem [thread:$0]  %s369, 16384, %s371, [#allocation14], 256, 256, 16
        $region48: #{model_forward.1} parent=11 // pred_fallthru
          _
      $region12: #{model_forward.1} parent=5 // pred_fallthru
        _
      %p377 = scmp.lt.s32.totalorder %s23, 6
      // Predicated region
      $region49: #{model_forward.1} parent=5 // pred_check
        %p378 = pneg %p377
      $region50: #{model_forward.1} parent=5 // pred_check_branch
        %380 = sbr.rel (%p378) target = $region52
      $region51: #{model_forward.1} parent=5 // pred_region
        // Predicated region
        $region53: #{model_forward.1} parent=51 // pred_check
          %p381 = pneg %p43
        $region54: #{model_forward.1} parent=51 // pred_check_branch
          %383 = sbr.rel (%p381) target = $region56
        $region55: #{model_forward.1} parent=51 // pred_region
          %s384 = sand.u32 %s33, 1
          %s385 = scalar_lea.sflag [#allocation3], %s384
          %s386 = sand.u32 %s33, 1
          %s387 = smul.addr %s386, 64
          %s388 = scalar_lea.vmem [#allocation2], %s387
          %390 = vsyncadd %s385, 0
          %s391 = smul.addr %s23, 8
          %s392 = smul.addr %s391, 8
          %s393 = scalar_lea.hbm %s0, %s392
          %s394 = sshll.u32 %s393, 4
          %s395 = int_to_ptr.hbm [resolvable:$true] %s394
          %s396 = sshll.u32 %s388, 4
          %s397 = int_to_ptr.vmem [resolvable:$true] %s396
          %402 = dma.hbm_to_vmem [thread:$0]  %s395, 1024, %s397, %s385, 128, 128, 8
        $region56: #{model_forward.1} parent=51 // pred_fallthru
          _
      $region52: #{model_forward.1} parent=5 // pred_fallthru
        _
      %p403 = scmp.le.s32.totalorder 1, %s23
      %p404 = scmp.lt.s32.totalorder %s23, 7
      %p405 = pnand %p403, %p404
      %p406 = pneg %p405
      // Predicated region
      $region57: #{model_forward.1} parent=5 // pred_check
        _
      $region58: #{model_forward.1} parent=5 // pred_check_branch
        %408 = sbr.rel (%p405) target = $region60
      $region59: #{model_forward.1} parent=5 // pred_region
        %s409 = ssub.s32 %s23, 1
        %s410 = sand.u32 %s36, 1
        %s411 = scalar_lea.sflag [#allocation3], %s410
        %s412 = sand.u32 %s36, 1
        %s413 = smul.addr %s412, 64
        %s414 = scalar_lea.vmem [#allocation2], %s413
        // Predicated region
        $region61: #{model_forward.1} parent=59 // pred_check
          %p415 = pneg %p49
        $region62: #{model_forward.1} parent=59 // pred_check_branch
          %417 = sbr.rel (%p415) target = $region64
        $region63: #{model_forward.1} parent=59 // pred_region
          %419 = dma.done %s411, 1024
        $region64: #{model_forward.1} parent=59 // pred_fallthru
          _
        // Predicated region
        $region65: #{model_forward.1} parent=59 // pred_check
          %p420 = pneg %p91
        $region66: #{model_forward.1} parent=59 // pred_check_branch
          %422 = sbr.rel (%p420) target = $region68
        $region67: #{model_forward.1} parent=59 // pred_region
          %424 = dma.done [#allocation5], 16
        $region68: #{model_forward.1} parent=59 // pred_fallthru
          _
        // Predicated region
        $region69: #{model_forward.1} parent=59 // pred_check
          %p425 = pneg %p112
        $region70: #{model_forward.1} parent=59 // pred_check_branch
          %427 = sbr.rel (%p425) target = $region72
        $region71: #{model_forward.1} parent=59 // pred_region
          %429 = dma.done [#allocation5], 2048
        $region72: #{model_forward.1} parent=59 // pred_fallthru
          _
        // Predicated region
        $region73: #{model_forward.1} parent=59 // pred_check
          %p430 = pneg %p133
        $region74: #{model_forward.1} parent=59 // pred_check_branch
          %432 = sbr.rel (%p430) target = $region76
        $region75: #{model_forward.1} parent=59 // pred_region
          %434 = dma.done [#allocation8], 3456
        $region76: #{model_forward.1} parent=59 // pred_fallthru
          _
        // Predicated region
        $region77: #{model_forward.1} parent=59 // pred_check
          %p435 = pneg %p154
        $region78: #{model_forward.1} parent=59 // pred_check_branch
          %437 = sbr.rel (%p435) target = $region80
        $region79: #{model_forward.1} parent=59 // pred_region
          %439 = dma.done [#allocation8], 16
        $region80: #{model_forward.1} parent=59 // pred_fallthru
          _
        // Predicated region
        $region81: #{model_forward.1} parent=59 // pred_check
          %p440 = pneg %p175
        $region82: #{model_forward.1} parent=59 // pred_check_branch
          %442 = sbr.rel (%p440) target = $region84
        $region83: #{model_forward.1} parent=59 // pred_region
          %444 = dma.done [#allocation11], 4096
        $region84: #{model_forward.1} parent=59 // pred_fallthru
          _
        // Predicated region
        $region85: #{model_forward.1} parent=59 // pred_check
          %p445 = pneg %p217
        $region86: #{model_forward.1} parent=59 // pred_check_branch
          %447 = sbr.rel (%p445) target = $region88
        $region87: #{model_forward.1} parent=59 // pred_region
          %449 = dma.done [#allocation11], 16
        $region88: #{model_forward.1} parent=59 // pred_fallthru
          _
        // Predicated region
        $region89: #{model_forward.1} parent=59 // pred_check
          %p450 = pneg %p238
        $region90: #{model_forward.1} parent=59 // pred_check_branch
          %452 = sbr.rel (%p450) target = $region92
        $region91: #{model_forward.1} parent=59 // pred_region
          %454 = dma.done [#allocation14], 16384
        $region92: #{model_forward.1} parent=59 // pred_fallthru
          _
        %s455 = sand.u32 %s36, 1
        %s456 = scalar_lea.sflag [#allocation3], %s455
        %s457 = sand.u32 %s36, 1
        %s458 = smul.addr %s457, 64
        %s459 = scalar_lea.vmem [#allocation2], %s458
        %p460 = pneg %p49
        %p461 = pneg %p46
        %p462 = pneg %p70
        %p463 = pneg %p67
        %p464 = pneg %p91
        %p465 = pneg %p88
        %p466 = pneg %p112
        %p467 = pneg %p109
        %p468 = pneg %p133
        %p469 = pneg %p130
        %p470 = pneg %p154
        %p471 = pneg %p151
        %p472 = pneg %p175
        %p473 = pneg %p172
        %p474 = pneg %p196
        %p475 = pneg %p193
        %p476 = pneg %p217
        %p477 = pneg %p214
        %p478 = pneg %p238
        %p479 = pneg %p235
        %p480 = pneg %p264
        %p481 = pneg %p261
        %p482 = scmp.lt.s32.totalorder %s28, 5
        %s483 = scalar_select %p482, %s28, 5
        %s484 = smul.addr %s483, 512
        %s485 = smul.addr %s484, 8
        %s486 = scalar_lea.vmem %s10, %s485
        %p487 = scmp.lt.s32.totalorder %s28, 5
        %s488 = scalar_select %p487, %s28, 5
        %s489 = smul.addr %s488, 512
        %s490 = smul.addr %s489, 8
        %s491 = scalar_lea.vmem %s10, %s490
        %v492 = vld [vmem:[%s414] sm:$0xff]
        %v493 = vld [vmem:[%s414 + $0x8] sm:$0xff]
        %v494 = vld [vmem:[%s414 + $0x10] sm:$0xff]
        %v495 = vld [vmem:[%s414 + $0x18] sm:$0xff]
        %v496 = vld [vmem:[%s414 + $0x20] sm:$0xff]
        %v497 = vld [vmem:[%s414 + $0x28] sm:$0xff]
        %v498 = vld [vmem:[%s414 + $0x30] sm:$0xff]
        %v499 = vld [vmem:[%s414 + $0x38] sm:$0xff]
        %v500 = vld [vmem:[#allocation4] sm:$0x1]
        %v501 = vld [vmem:[#allocation6] sm:$0xff]
        %v502 = vld [vmem:[#allocation6 + $0x8] sm:$0xff]
        %v503 = vld [vmem:[#allocation6 + $0x10] sm:$0xff]
        %v504 = vld [vmem:[#allocation6 + $0x18] sm:$0xff]
        %v505 = vld [vmem:[#allocation6 + $0x20] sm:$0xff]
        %v506 = vld [vmem:[#allocation6 + $0x28] sm:$0xff]
        %v507 = vld [vmem:[#allocation6 + $0x30] sm:$0xff]
        %v508 = vld [vmem:[#allocation6 + $0x38] sm:$0xff]
        %vm509 = vcmask 523264
        %v511 = vsel %vm509, %v501, 0
        %v514 = vsel %vm509, %v502, 0
        %v517 = vsel %vm509, %v503, 0
        %v520 = vsel %vm509, %v504, 0
        %v523 = vsel %vm509, %v505, 0
        %v526 = vsel %vm509, %v506, 0
        %v529 = vsel %vm509, %v507, 0
        %v532 = vsel %vm509, %v508, 0
        %534 = vmatpush.msra.mxu0 0.0
        %535 = vmatpush.msra.mxu0 0.0
        %536 = vmatpush.msra.mxu0 0.0
        %537 = vmatpush.msra.mxu0 0.0
        %538 = vmatpush.msra.mxu0 0.0
        %539 = vmatpush.msra.mxu0 0.0
        %540 = vmatpush.msra.mxu0 0.0
        %541 = vmatpush.msra.mxu0 0.0
        %542 = vmatpush.msra.mxu0 %v499
        %543 = vmatpush.msra.mxu0 %v498
        %544 = vmatpush.msra.mxu0 %v497
        %545 = vmatpush.msra.mxu0 %v496
        %546 = vmatpush.msra.mxu0 %v495
        %547 = vmatpush.msra.mxu0 %v494
        %548 = vmatpush.msra.mxu0 %v493
        %549 = vmatpush.msra.mxu0 %v492
        %550 = vmatmul.f32.gmra.mxu0 %v511
        %v551 = vpop.f32.mrf.mxu0
        %v552 = vadd.f32 0.0, %v551
        %553 = vmatmul.f32.gmra.mxu0 %v514
        %v554 = vpop.f32.mrf.mxu0
        %v555 = vadd.f32 0.0, %v554
        %556 = vmatmul.f32.gmra.mxu0 %v517
        %v557 = vpop.f32.mrf.mxu0
        %v558 = vadd.f32 0.0, %v557
        %559 = vmatmul.f32.gmra.mxu0 %v520
        %v560 = vpop.f32.mrf.mxu0
        %v561 = vadd.f32 0.0, %v560
        %562 = vmatmul.f32.gmra.mxu0 %v523
        %v563 = vpop.f32.mrf.mxu0
        %v564 = vadd.f32 0.0, %v563
        %565 = vmatmul.f32.gmra.mxu0 %v526
        %v566 = vpop.f32.mrf.mxu0
        %v567 = vadd.f32 0.0, %v566
        %568 = vmatmul.f32.gmra.mxu0 %v529
        %v569 = vpop.f32.mrf.mxu0
        %v570 = vadd.f32 0.0, %v569
        %571 = vmatmul.f32.gmra.mxu0 %v532
        %v572 = vpop.f32.mrf.mxu0
        %v573 = vadd.f32 0.0, %v572
        %574 = vdwg.mxu0
        %s575 = scalar_lea.vmem [#allocation6], 64
        %v576 = vld [vmem:[%s575] sm:$0xff]
        %v577 = vld [vmem:[%s575 + $0x8] sm:$0xff]
        %v578 = vld [vmem:[%s575 + $0x10] sm:$0xff]
        %v579 = vld [vmem:[%s575 + $0x18] sm:$0xff]
        %v580 = vld [vmem:[%s575 + $0x20] sm:$0xff]
        %v581 = vld [vmem:[%s575 + $0x28] sm:$0xff]
        %v582 = vld [vmem:[%s575 + $0x30] sm:$0xff]
        %v583 = vld [vmem:[%s575 + $0x38] sm:$0xff]
        %v585 = vsel %vm509, %v576, 0
        %v588 = vsel %vm509, %v577, 0
        %v591 = vsel %vm509, %v578, 0
        %v594 = vsel %vm509, %v579, 0
        %v597 = vsel %vm509, %v580, 0
        %v600 = vsel %vm509, %v581, 0
        %v603 = vsel %vm509, %v582, 0
        %v606 = vsel %vm509, %v583, 0
        %608 = vmatpush.msra.mxu0 0.0
        %609 = vmatpush.msra.mxu0 0.0
        %610 = vmatpush.msra.mxu0 0.0
        %611 = vmatpush.msra.mxu0 0.0
        %612 = vmatpush.msra.mxu0 0.0
        %613 = vmatpush.msra.mxu0 0.0
        %614 = vmatpush.msra.mxu0 0.0
        %615 = vmatpush.msra.mxu0 0.0
        %616 = vmatpush.msra.mxu0 %v499
        %617 = vmatpush.msra.mxu0 %v498
        %618 = vmatpush.msra.mxu0 %v497
        %619 = vmatpush.msra.mxu0 %v496
        %620 = vmatpush.msra.mxu0 %v495
        %621 = vmatpush.msra.mxu0 %v494
        %622 = vmatpush.msra.mxu0 %v493
        %623 = vmatpush.msra.mxu0 %v492
        %624 = vmatmul.f32.gmra.mxu0 %v585
        %v625 = vpop.f32.mrf.mxu0
        %v626 = vadd.f32 0.0, %v625
        %627 = vmatmul.f32.gmra.mxu0 %v588
        %v628 = vpop.f32.mrf.mxu0
        %v629 = vadd.f32 0.0, %v628
        %630 = vmatmul.f32.gmra.mxu0 %v591
        %v631 = vpop.f32.mrf.mxu0
        %v632 = vadd.f32 0.0, %v631
        %633 = vmatmul.f32.gmra.mxu0 %v594
        %v634 = vpop.f32.mrf.mxu0
        %v635 = vadd.f32 0.0, %v634
        %636 = vmatmul.f32.gmra.mxu0 %v597
        %v637 = vpop.f32.mrf.mxu0
        %v638 = vadd.f32 0.0, %v637
        %639 = vmatmul.f32.gmra.mxu0 %v600
        %v640 = vpop.f32.mrf.mxu0
        %v641 = vadd.f32 0.0, %v640
        %642 = vmatmul.f32.gmra.mxu0 %v603
        %v643 = vpop.f32.mrf.mxu0
        %v644 = vadd.f32 0.0, %v643
        %645 = vmatmul.f32.gmra.mxu0 %v606
        %v646 = vpop.f32.mrf.mxu0
        %v647 = vadd.f32 0.0, %v646
        %648 = vdwg.mxu0
        %649 = vmatpush.msra.mxu0 0.0
        %650 = vmatpush.msra.mxu0 0.0
        %651 = vmatpush.msra.mxu0 0.0
        %652 = vmatpush.msra.mxu0 0.0
        %653 = vmatpush.msra.mxu0 0.0
        %654 = vmatpush.msra.mxu0 0.0
        %655 = vmatpush.msra.mxu0 0.0
        %656 = vmatpush.msra.mxu0 0.0
        %657 = vmatpush.msra.mxu0 %v573
        %658 = vmatpush.msra.mxu0 %v570
        %659 = vmatpush.msra.mxu0 %v567
        %660 = vmatpush.msra.mxu0 %v564
        %661 = vmatpush.msra.mxu0 %v561
        %662 = vmatpush.msra.mxu0 %v558
        %663 = vmatpush.msra.mxu0 %v555
        %664 = vmatpush.msra.mxu0 %v552
        %665 = vmatmul.f32.gmra.mxu0 %v585
        %v666 = vpop.f32.mrf.mxu0
        %v667 = vadd.f32 0.0, %v666
        %668 = vmatmul.f32.gmra.mxu0 %v588
        %v669 = vpop.f32.mrf.mxu0
        %v670 = vadd.f32 0.0, %v669
        %671 = vmatmul.f32.gmra.mxu0 %v591
        %v672 = vpop.f32.mrf.mxu0
        %v673 = vadd.f32 0.0, %v672
        %674 = vmatmul.f32.gmra.mxu0 %v594
        %v675 = vpop.f32.mrf.mxu0
        %v676 = vadd.f32 0.0, %v675
        %677 = vmatmul.f32.gmra.mxu0 %v597
        %v678 = vpop.f32.mrf.mxu0
        %v679 = vadd.f32 0.0, %v678
        %680 = vmatmul.f32.gmra.mxu0 %v600
        %v681 = vpop.f32.mrf.mxu0
        %v682 = vadd.f32 0.0, %v681
        %683 = vmatmul.f32.gmra.mxu0 %v603
        %v684 = vpop.f32.mrf.mxu0
        %v685 = vadd.f32 0.0, %v684
        %686 = vmatmul.f32.gmra.mxu0 %v606
        %v687 = vpop.f32.mrf.mxu0
        %v688 = vadd.f32 0.0, %v687
        %689 = vdwg.mxu0
        %s690 = scalar_lea.vmem %s1, 64
        %v691 = vld [vmem:[%s690] sm:$0xff]
        %v692 = vld [vmem:[%s690 + $0x8] sm:$0x3]
        %v694 = vperm.slane %v500, 0
        %vm696 = vcmask 80896
        %v698 = vsel %vm696, %v492, 0
        %v701 = vsel %vm696, %v493, 0
        %v704 = vsel %vm696, %v494, 0
        %v707 = vsel %vm696, %v495, 0
        %v710 = vsel %vm696, %v496, 0
        %v713 = vsel %vm696, %v497, 0
        %v716 = vsel %vm696, %v498, 0
        %v719 = vsel %vm696, %v499, 0
        %vm721 = vcmask 1041408
        %v723 = vsel %vm721, %v692, 0
        %725 = vmatpush.msra.mxu0 0.0
        %726 = vmatpush.msra.mxu0 0.0
        %727 = vmatpush.msra.mxu0 0.0
        %728 = vmatpush.msra.mxu0 0.0
        %729 = vmatpush.msra.mxu0 0.0
        %730 = vmatpush.msra.mxu0 0.0
        %731 = vmatpush.msra.mxu0 0.0
        %732 = vmatpush.msra.mxu0 0.0
        %733 = vmatpush.msra.mxu0 0.0
        %734 = vmatpush.msra.mxu0 0.0
        %735 = vmatpush.msra.mxu0 0.0
        %736 = vmatpush.msra.mxu0 0.0
        %737 = vmatpush.msra.mxu0 0.0
        %738 = vmatpush.msra.mxu0 0.0
        %739 = vmatpush.msra.mxu0 %v723
        %740 = vmatpush.msra.mxu0 %v691
        %741 = vmatmul.f32.gmra.mxu0 %v698
        %v742 = vpop.f32.mrf.mxu0
        %v743 = vadd.f32 %v694, %v742
        %744 = vmatmul.f32.gmra.mxu0 %v701
        %v745 = vpop.f32.mrf.mxu0
        %v746 = vadd.f32 %v694, %v745
        %747 = vmatmul.f32.gmra.mxu0 %v704
        %v748 = vpop.f32.mrf.mxu0
        %v749 = vadd.f32 %v694, %v748
        %750 = vmatmul.f32.gmra.mxu0 %v707
        %v751 = vpop.f32.mrf.mxu0
        %v752 = vadd.f32 %v694, %v751
        %753 = vmatmul.f32.gmra.mxu0 %v710
        %v754 = vpop.f32.mrf.mxu0
        %v755 = vadd.f32 %v694, %v754
        %756 = vmatmul.f32.gmra.mxu0 %v713
        %v757 = vpop.f32.mrf.mxu0
        %v758 = vadd.f32 %v694, %v757
        %759 = vmatmul.f32.gmra.mxu0 %v716
        %v760 = vpop.f32.mrf.mxu0
        %v761 = vadd.f32 %v694, %v760
        %762 = vmatmul.f32.gmra.mxu0 %v719
        %v763 = vpop.f32.mrf.mxu0
        %v764 = vadd.f32 %v694, %v763
        %765 = vdwg.mxu0
        %s766 = scalar_lea.vmem %s1, 80
        %v767 = vld [vmem:[%s766] sm:$0xff]
        %v768 = vld [vmem:[%s766 + $0x8] sm:$0x3]
        %s769 = scalar_lea.vmem %s1, 48
        %v770 = vld [vmem:[%s769] sm:$0xff]
        %v771 = vld [vmem:[%s769 + $0x8] sm:$0x3]
        %v773 = vsel %vm696, %v552, 0
        %v776 = vsel %vm696, %v555, 0
        %v779 = vsel %vm696, %v558, 0
        %v782 = vsel %vm696, %v561, 0
        %v785 = vsel %vm696, %v564, 0
        %v788 = vsel %vm696, %v567, 0
        %v791 = vsel %vm696, %v570, 0
        %v794 = vsel %vm696, %v573, 0
        %v797 = vsel %vm721, %v771, 0
        %799 = vmatpush.msra.mxu0 0.0
        %800 = vmatpush.msra.mxu0 0.0
        %801 = vmatpush.msra.mxu0 0.0
        %802 = vmatpush.msra.mxu0 0.0
        %803 = vmatpush.msra.mxu0 0.0
        %804 = vmatpush.msra.mxu0 0.0
        %805 = vmatpush.msra.mxu0 0.0
        %806 = vmatpush.msra.mxu0 0.0
        %807 = vmatpush.msra.mxu0 0.0
        %808 = vmatpush.msra.mxu0 0.0
        %809 = vmatpush.msra.mxu0 0.0
        %810 = vmatpush.msra.mxu0 0.0
        %811 = vmatpush.msra.mxu0 0.0
        %812 = vmatpush.msra.mxu0 0.0
        %813 = vmatpush.msra.mxu0 %v797
        %814 = vmatpush.msra.mxu0 %v770
        %815 = vmatmul.f32.gmra.mxu0 %v773
        %v816 = vpop.f32.mrf.mxu0
        %v817 = vadd.f32 0.0, %v816
        %818 = vmatmul.f32.gmra.mxu0 %v776
        %v819 = vpop.f32.mrf.mxu0
        %v820 = vadd.f32 0.0, %v819
        %821 = vmatmul.f32.gmra.mxu0 %v779
        %v822 = vpop.f32.mrf.mxu0
        %v823 = vadd.f32 0.0, %v822
        %824 = vmatmul.f32.gmra.mxu0 %v782
        %v825 = vpop.f32.mrf.mxu0
        %v826 = vadd.f32 0.0, %v825
        %827 = vmatmul.f32.gmra.mxu0 %v785
        %v828 = vpop.f32.mrf.mxu0
        %v829 = vadd.f32 0.0, %v828
        %830 = vmatmul.f32.gmra.mxu0 %v788
        %v831 = vpop.f32.mrf.mxu0
        %v832 = vadd.f32 0.0, %v831
        %833 = vmatmul.f32.gmra.mxu0 %v791
        %v834 = vpop.f32.mrf.mxu0
        %v835 = vadd.f32 0.0, %v834
        %836 = vmatmul.f32.gmra.mxu0 %v794
        %v837 = vpop.f32.mrf.mxu0
        %v838 = vadd.f32 0.0, %v837
        %839 = vdwg.mxu0
        %v841 = vsel %vm721, %v768, 0
        %843 = vmatpush.msra.mxu0 0.0
        %844 = vmatpush.msra.mxu0 0.0
        %845 = vmatpush.msra.mxu0 0.0
        %846 = vmatpush.msra.mxu0 0.0
        %847 = vmatpush.msra.mxu0 0.0
        %848 = vmatpush.msra.mxu0 0.0
        %849 = vmatpush.msra.mxu0 0.0
        %850 = vmatpush.msra.mxu0 0.0
        %851 = vmatpush.msra.mxu0 0.0
        %852 = vmatpush.msra.mxu0 0.0
        %853 = vmatpush.msra.mxu0 0.0
        %854 = vmatpush.msra.mxu0 0.0
        %855 = vmatpush.msra.mxu0 0.0
        %856 = vmatpush.msra.mxu0 0.0
        %857 = vmatpush.msra.mxu0 %v841
        %858 = vmatpush.msra.mxu0 %v767
        %859 = vmatmul.f32.gmra.mxu0 %v698
        %v860 = vpop.f32.mrf.mxu0
        %v861 = vadd.f32 %v817, %v860
        %862 = vmatmul.f32.gmra.mxu0 %v701
        %v863 = vpop.f32.mrf.mxu0
        %v864 = vadd.f32 %v820, %v863
        %865 = vmatmul.f32.gmra.mxu0 %v704
        %v866 = vpop.f32.mrf.mxu0
        %v867 = vadd.f32 %v823, %v866
        %868 = vmatmul.f32.gmra.mxu0 %v707
        %v869 = vpop.f32.mrf.mxu0
        %v870 = vadd.f32 %v826, %v869
        %871 = vmatmul.f32.gmra.mxu0 %v710
        %v872 = vpop.f32.mrf.mxu0
        %v873 = vadd.f32 %v829, %v872
        %874 = vmatmul.f32.gmra.mxu0 %v713
        %v875 = vpop.f32.mrf.mxu0
        %v876 = vadd.f32 %v832, %v875
        %877 = vmatmul.f32.gmra.mxu0 %v716
        %v878 = vpop.f32.mrf.mxu0
        %v879 = vadd.f32 %v835, %v878
        %880 = vmatmul.f32.gmra.mxu0 %v719
        %v881 = vpop.f32.mrf.mxu0
        %v882 = vadd.f32 %v838, %v881
        %883 = vdwg.mxu0
        %v884 = vadd.f32 %v861, %v694
        %v885 = vadd.f32 %v864, %v694
        %v886 = vadd.f32 %v867, %v694
        %v887 = vadd.f32 %v870, %v694
        %v888 = vadd.f32 %v873, %v694
        %v889 = vadd.f32 %v876, %v694
        %v890 = vadd.f32 %v879, %v694
        %v891 = vadd.f32 %v882, %v694
        %s892 = scalar_lea.vmem %s1, 112
        %v893 = vld [vmem:[%s892] sm:$0xff]
        %v894 = vld [vmem:[%s892 + $0x8] sm:$0x3]
        %s895 = scalar_lea.vmem %s1, 16
        %v896 = vld [vmem:[%s895] sm:$0xff]
        %v897 = vld [vmem:[%s895 + $0x8] sm:$0x3]
        %v899 = vsel %vm696, %v626, 0
        %v902 = vsel %vm696, %v629, 0
        %v905 = vsel %vm696, %v632, 0
        %v908 = vsel %vm696, %v635, 0
        %v911 = vsel %vm696, %v638, 0
        %v914 = vsel %vm696, %v641, 0
        %v917 = vsel %vm696, %v644, 0
        %v920 = vsel %vm696, %v647, 0
        %v923 = vsel %vm721, %v897, 0
        %925 = vmatpush.msra.mxu0 0.0
        %926 = vmatpush.msra.mxu0 0.0
        %927 = vmatpush.msra.mxu0 0.0
        %928 = vmatpush.msra.mxu0 0.0
        %929 = vmatpush.msra.mxu0 0.0
        %930 = vmatpush.msra.mxu0 0.0
        %931 = vmatpush.msra.mxu0 0.0
        %932 = vmatpush.msra.mxu0 0.0
        %933 = vmatpush.msra.mxu0 0.0
        %934 = vmatpush.msra.mxu0 0.0
        %935 = vmatpush.msra.mxu0 0.0
        %936 = vmatpush.msra.mxu0 0.0
        %937 = vmatpush.msra.mxu0 0.0
        %938 = vmatpush.msra.mxu0 0.0
        %939 = vmatpush.msra.mxu0 %v923
        %940 = vmatpush.msra.mxu0 %v896
        %941 = vmatmul.f32.gmra.mxu0 %v899
        %v942 = vpop.f32.mrf.mxu0
        %v943 = vadd.f32 0.0, %v942
        %944 = vmatmul.f32.gmra.mxu0 %v902
        %v945 = vpop.f32.mrf.mxu0
        %v946 = vadd.f32 0.0, %v945
        %947 = vmatmul.f32.gmra.mxu0 %v905
        %v948 = vpop.f32.mrf.mxu0
        %v949 = vadd.f32 0.0, %v948
        %950 = vmatmul.f32.gmra.mxu0 %v908
        %v951 = vpop.f32.mrf.mxu0
        %v952 = vadd.f32 0.0, %v951
        %953 = vmatmul.f32.gmra.mxu0 %v911
        %v954 = vpop.f32.mrf.mxu0
        %v955 = vadd.f32 0.0, %v954
        %956 = vmatmul.f32.gmra.mxu0 %v914
        %v957 = vpop.f32.mrf.mxu0
        %v958 = vadd.f32 0.0, %v957
        %959 = vmatmul.f32.gmra.mxu0 %v917
        %v960 = vpop.f32.mrf.mxu0
        %v961 = vadd.f32 0.0, %v960
        %962 = vmatmul.f32.gmra.mxu0 %v920
        %v963 = vpop.f32.mrf.mxu0
        %v964 = vadd.f32 0.0, %v963
        %965 = vdwg.mxu0
        %v967 = vsel %vm721, %v894, 0
        %969 = vmatpush.msra.mxu0 0.0
        %970 = vmatpush.msra.mxu0 0.0
        %971 = vmatpush.msra.mxu0 0.0
        %972 = vmatpush.msra.mxu0 0.0
        %973 = vmatpush.msra.mxu0 0.0
        %974 = vmatpush.msra.mxu0 0.0
        %975 = vmatpush.msra.mxu0 0.0
        %976 = vmatpush.msra.mxu0 0.0
        %977 = vmatpush.msra.mxu0 0.0
        %978 = vmatpush.msra.mxu0 0.0
        %979 = vmatpush.msra.mxu0 0.0
        %980 = vmatpush.msra.mxu0 0.0
        %981 = vmatpush.msra.mxu0 0.0
        %982 = vmatpush.msra.mxu0 0.0
        %983 = vmatpush.msra.mxu0 %v967
        %984 = vmatpush.msra.mxu0 %v893
        %985 = vmatmul.f32.gmra.mxu0 %v698
        %v986 = vpop.f32.mrf.mxu0
        %v987 = vadd.f32 %v943, %v986
        %988 = vmatmul.f32.gmra.mxu0 %v701
        %v989 = vpop.f32.mrf.mxu0
        %v990 = vadd.f32 %v946, %v989
        %991 = vmatmul.f32.gmra.mxu0 %v704
        %v992 = vpop.f32.mrf.mxu0
        %v993 = vadd.f32 %v949, %v992
        %994 = vmatmul.f32.gmra.mxu0 %v707
        %v995 = vpop.f32.mrf.mxu0
        %v996 = vadd.f32 %v952, %v995
        %997 = vmatmul.f32.gmra.mxu0 %v710
        %v998 = vpop.f32.mrf.mxu0
        %v999 = vadd.f32 %v955, %v998
        %1000 = vmatmul.f32.gmra.mxu0 %v713
        %v1001 = vpop.f32.mrf.mxu0
        %v1002 = vadd.f32 %v958, %v1001
        %1003 = vmatmul.f32.gmra.mxu0 %v716
        %v1004 = vpop.f32.mrf.mxu0
        %v1005 = vadd.f32 %v961, %v1004
        %1006 = vmatmul.f32.gmra.mxu0 %v719
        %v1007 = vpop.f32.mrf.mxu0
        %v1008 = vadd.f32 %v964, %v1007
        %1009 = vdwg.mxu0
        %v1010 = vadd.f32 %v987, %v694
        %v1011 = vadd.f32 %v990, %v694
        %v1012 = vadd.f32 %v993, %v694
        %v1013 = vadd.f32 %v996, %v694
        %v1014 = vadd.f32 %v999, %v694
        %v1015 = vadd.f32 %v1002, %v694
        %v1016 = vadd.f32 %v1005, %v694
        %v1017 = vadd.f32 %v1008, %v694
        %s1018 = scalar_lea.vmem %s1, 128
        %v1019 = vld [vmem:[%s1018] sm:$0xff]
        %v1020 = vld [vmem:[%s1018 + $0x8] sm:$0x3]
        %s1021 = scalar_lea.vmem %s1, 96
        %v1022 = vld [vmem:[%s1021] sm:$0xff]
        %v1023 = vld [vmem:[%s1021 + $0x8] sm:$0x3]
        %v1025 = vsel %vm721, %v1023, 0
        %1027 = vmatpush.msra.mxu0 0.0
        %1028 = vmatpush.msra.mxu0 0.0
        %1029 = vmatpush.msra.mxu0 0.0
        %1030 = vmatpush.msra.mxu0 0.0
        %1031 = vmatpush.msra.mxu0 0.0
        %1032 = vmatpush.msra.mxu0 0.0
        %1033 = vmatpush.msra.mxu0 0.0
        %1034 = vmatpush.msra.mxu0 0.0
        %1035 = vmatpush.msra.mxu0 0.0
        %1036 = vmatpush.msra.mxu0 0.0
        %1037 = vmatpush.msra.mxu0 0.0
        %1038 = vmatpush.msra.mxu0 0.0
        %1039 = vmatpush.msra.mxu0 0.0
        %1040 = vmatpush.msra.mxu0 0.0
        %1041 = vmatpush.msra.mxu0 %v1025
        %1042 = vmatpush.msra.mxu0 %v1022
        %1043 = vmatmul.f32.gmra.mxu0 %v773
        %v1044 = vpop.f32.mrf.mxu0
        %v1045 = vadd.f32 0.0, %v1044
        %1046 = vmatmul.f32.gmra.mxu0 %v776
        %v1047 = vpop.f32.mrf.mxu0
        %v1048 = vadd.f32 0.0, %v1047
        %1049 = vmatmul.f32.gmra.mxu0 %v779
        %v1050 = vpop.f32.mrf.mxu0
        %v1051 = vadd.f32 0.0, %v1050
        %1052 = vmatmul.f32.gmra.mxu0 %v782
        %v1053 = vpop.f32.mrf.mxu0
        %v1054 = vadd.f32 0.0, %v1053
        %1055 = vmatmul.f32.gmra.mxu0 %v785
        %v1056 = vpop.f32.mrf.mxu0
        %v1057 = vadd.f32 0.0, %v1056
        %1058 = vmatmul.f32.gmra.mxu0 %v788
        %v1059 = vpop.f32.mrf.mxu0
        %v1060 = vadd.f32 0.0, %v1059
        %1061 = vmatmul.f32.gmra.mxu0 %v791
        %v1062 = vpop.f32.mrf.mxu0
        %v1063 = vadd.f32 0.0, %v1062
        %1064 = vmatmul.f32.gmra.mxu0 %v794
        %v1065 = vpop.f32.mrf.mxu0
        %v1066 = vadd.f32 0.0, %v1065
        %1067 = vdwg.mxu0
        %v1069 = vsel %vm721, %v1020, 0
        %1071 = vmatpush.msra.mxu0 0.0
        %1072 = vmatpush.msra.mxu0 0.0
        %1073 = vmatpush.msra.mxu0 0.0
        %1074 = vmatpush.msra.mxu0 0.0
        %1075 = vmatpush.msra.mxu0 0.0
        %1076 = vmatpush.msra.mxu0 0.0
        %1077 = vmatpush.msra.mxu0 0.0
        %1078 = vmatpush.msra.mxu0 0.0
        %1079 = vmatpush.msra.mxu0 0.0
        %1080 = vmatpush.msra.mxu0 0.0
        %1081 = vmatpush.msra.mxu0 0.0
        %1082 = vmatpush.msra.mxu0 0.0
        %1083 = vmatpush.msra.mxu0 0.0
        %1084 = vmatpush.msra.mxu0 0.0
        %1085 = vmatpush.msra.mxu0 %v1069
        %1086 = vmatpush.msra.mxu0 %v1019
        %1087 = vmatmul.f32.gmra.mxu0 %v698
        %v1088 = vpop.f32.mrf.mxu0
        %v1089 = vadd.f32 %v1045, %v1088
        %1090 = vmatmul.f32.gmra.mxu0 %v701
        %v1091 = vpop.f32.mrf.mxu0
        %v1092 = vadd.f32 %v1048, %v1091
        %1093 = vmatmul.f32.gmra.mxu0 %v704
        %v1094 = vpop.f32.mrf.mxu0
        %v1095 = vadd.f32 %v1051, %v1094
        %1096 = vmatmul.f32.gmra.mxu0 %v707
        %v1097 = vpop.f32.mrf.mxu0
        %v1098 = vadd.f32 %v1054, %v1097
        %1099 = vmatmul.f32.gmra.mxu0 %v710
        %v1100 = vpop.f32.mrf.mxu0
        %v1101 = vadd.f32 %v1057, %v1100
        %1102 = vmatmul.f32.gmra.mxu0 %v713
        %v1103 = vpop.f32.mrf.mxu0
        %v1104 = vadd.f32 %v1060, %v1103
        %1105 = vmatmul.f32.gmra.mxu0 %v716
        %v1106 = vpop.f32.mrf.mxu0
        %v1107 = vadd.f32 %v1063, %v1106
        %1108 = vmatmul.f32.gmra.mxu0 %v719
        %v1109 = vpop.f32.mrf.mxu0
        %v1110 = vadd.f32 %v1066, %v1109
        %1111 = vdwg.mxu0
        %s1112 = scalar_lea.vmem %s1, 32
        %v1113 = vld [vmem:[%s1112] sm:$0xff]
        %v1114 = vld [vmem:[%s1112 + $0x8] sm:$0x3]
        %v1116 = vsel %vm721, %v1114, 0
        %1118 = vmatpush.msra.mxu0 0.0
        %1119 = vmatpush.msra.mxu0 0.0
        %1120 = vmatpush.msra.mxu0 0.0
        %1121 = vmatpush.msra.mxu0 0.0
        %1122 = vmatpush.msra.mxu0 0.0
        %1123 = vmatpush.msra.mxu0 0.0
        %1124 = vmatpush.msra.mxu0 0.0
        %1125 = vmatpush.msra.mxu0 0.0
        %1126 = vmatpush.msra.mxu0 0.0
        %1127 = vmatpush.msra.mxu0 0.0
        %1128 = vmatpush.msra.mxu0 0.0
        %1129 = vmatpush.msra.mxu0 0.0
        %1130 = vmatpush.msra.mxu0 0.0
        %1131 = vmatpush.msra.mxu0 0.0
        %1132 = vmatpush.msra.mxu0 %v1116
        %1133 = vmatpush.msra.mxu0 %v1113
        %1134 = vmatmul.f32.gmra.mxu0 %v899
        %v1135 = vpop.f32.mrf.mxu0
        %v1136 = vadd.f32 0.0, %v1135
        %1137 = vmatmul.f32.gmra.mxu0 %v902
        %v1138 = vpop.f32.mrf.mxu0
        %v1139 = vadd.f32 0.0, %v1138
        %1140 = vmatmul.f32.gmra.mxu0 %v905
        %v1141 = vpop.f32.mrf.mxu0
        %v1142 = vadd.f32 0.0, %v1141
        %1143 = vmatmul.f32.gmra.mxu0 %v908
        %v1144 = vpop.f32.mrf.mxu0
        %v1145 = vadd.f32 0.0, %v1144
        %1146 = vmatmul.f32.gmra.mxu0 %v911
        %v1147 = vpop.f32.mrf.mxu0
        %v1148 = vadd.f32 0.0, %v1147
        %1149 = vmatmul.f32.gmra.mxu0 %v914
        %v1150 = vpop.f32.mrf.mxu0
        %v1151 = vadd.f32 0.0, %v1150
        %1152 = vmatmul.f32.gmra.mxu0 %v917
        %v1153 = vpop.f32.mrf.mxu0
        %v1154 = vadd.f32 0.0, %v1153
        %1155 = vmatmul.f32.gmra.mxu0 %v920
        %v1156 = vpop.f32.mrf.mxu0
        %v1157 = vadd.f32 0.0, %v1156
        %1158 = vdwg.mxu0
        %v1159 = vadd.f32 %v1089, %v1136
        %v1160 = vadd.f32 %v1092, %v1139
        %v1161 = vadd.f32 %v1095, %v1142
        %v1162 = vadd.f32 %v1098, %v1145
        %v1163 = vadd.f32 %v1101, %v1148
        %v1164 = vadd.f32 %v1104, %v1151
        %v1165 = vadd.f32 %v1107, %v1154
        %v1166 = vadd.f32 %v1110, %v1157
        %v1167 = vld [vmem:[%s1] sm:$0xff]
        %v1168 = vld [vmem:[%s1 + $0x8] sm:$0x3]
        %v1170 = vsel %vm696, %v667, 0
        %v1173 = vsel %vm696, %v670, 0
        %v1176 = vsel %vm696, %v673, 0
        %v1179 = vsel %vm696, %v676, 0
        %v1182 = vsel %vm696, %v679, 0
        %v1185 = vsel %vm696, %v682, 0
        %v1188 = vsel %vm696, %v685, 0
        %v1191 = vsel %vm696, %v688, 0
        %v1194 = vsel %vm721, %v1168, 0
        %1196 = vmatpush.msra.mxu0 0.0
        %1197 = vmatpush.msra.mxu0 0.0
        %1198 = vmatpush.msra.mxu0 0.0
        %1199 = vmatpush.msra.mxu0 0.0
        %1200 = vmatpush.msra.mxu0 0.0
        %1201 = vmatpush.msra.mxu0 0.0
        %1202 = vmatpush.msra.mxu0 0.0
        %1203 = vmatpush.msra.mxu0 0.0
        %1204 = vmatpush.msra.mxu0 0.0
        %1205 = vmatpush.msra.mxu0 0.0
        %1206 = vmatpush.msra.mxu0 0.0
        %1207 = vmatpush.msra.mxu0 0.0
        %1208 = vmatpush.msra.mxu0 0.0
        %1209 = vmatpush.msra.mxu0 0.0
        %1210 = vmatpush.msra.mxu0 %v1194
        %1211 = vmatpush.msra.mxu0 %v1167
        %1212 = vmatmul.f32.gmra.mxu0 %v1170
        %v1213 = vpop.f32.mrf.mxu0
        %v1214 = vadd.f32 0.0, %v1213
        %1215 = vmatmul.f32.gmra.mxu0 %v1173
        %v1216 = vpop.f32.mrf.mxu0
        %v1217 = vadd.f32 0.0, %v1216
        %1218 = vmatmul.f32.gmra.mxu0 %v1176
        %v1219 = vpop.f32.mrf.mxu0
        %v1220 = vadd.f32 0.0, %v1219
        %1221 = vmatmul.f32.gmra.mxu0 %v1179
        %v1222 = vpop.f32.mrf.mxu0
        %v1223 = vadd.f32 0.0, %v1222
        %1224 = vmatmul.f32.gmra.mxu0 %v1182
        %v1225 = vpop.f32.mrf.mxu0
        %v1226 = vadd.f32 0.0, %v1225
        %1227 = vmatmul.f32.gmra.mxu0 %v1185
        %v1228 = vpop.f32.mrf.mxu0
        %v1229 = vadd.f32 0.0, %v1228
        %1230 = vmatmul.f32.gmra.mxu0 %v1188
        %v1231 = vpop.f32.mrf.mxu0
        %v1232 = vadd.f32 0.0, %v1231
        %1233 = vmatmul.f32.gmra.mxu0 %v1191
        %v1234 = vpop.f32.mrf.mxu0
        %v1235 = vadd.f32 0.0, %v1234
        %1236 = vdwg.mxu0
        %v1237 = vadd.f32 %v1159, %v1214
        %v1238 = vadd.f32 %v1160, %v1217
        %v1239 = vadd.f32 %v1161, %v1220
        %v1240 = vadd.f32 %v1162, %v1223
        %v1241 = vadd.f32 %v1163, %v1226
        %v1242 = vadd.f32 %v1164, %v1229
        %v1243 = vadd.f32 %v1165, %v1232
        %v1244 = vadd.f32 %v1166, %v1235
        %v1245 = vadd.f32 %v1237, %v694
        %v1246 = vadd.f32 %v1238, %v694
        %v1247 = vadd.f32 %v1239, %v694
        %v1248 = vadd.f32 %v1240, %v694
        %v1249 = vadd.f32 %v1241, %v694
        %v1250 = vadd.f32 %v1242, %v694
        %v1251 = vadd.f32 %v1243, %v694
        %v1252 = vadd.f32 %v1244, %v694
        %v1253 = vld [vmem:[#allocation9] sm:$0x1]
        %v1254 = vld [vmem:[#allocation10] sm:$0xff]
        %v1255 = vld [vmem:[#allocation10 + $0x8] sm:$0xff]
        %v1256 = vld [vmem:[#allocation10 + $0x10] sm:$0xff]
        %v1257 = vld [vmem:[#allocation10 + $0x18] sm:$0xff]
        %v1258 = vld [vmem:[#allocation10 + $0x20] sm:$0xff]
        %v1259 = vld [vmem:[#allocation10 + $0x28] sm:$0xff]
        %v1260 = vld [vmem:[#allocation10 + $0x30] sm:$0xff]
        %v1261 = vld [vmem:[#allocation10 + $0x38] sm:$0xff]
        %v1262 = vld [vmem:[#allocation10 + $0x40] sm:$0xff]
        %v1263 = vld [vmem:[#allocation10 + $0x48] sm:$0xff]
        %v1264 = vld [vmem:[#allocation10 + $0x50] sm:$0xff]
        %v1265 = vld [vmem:[#allocation10 + $0x58] sm:$0xff]
        %v1266 = vld [vmem:[#allocation10 + $0x60] sm:$0xff]
        %v1267 = vld [vmem:[#allocation10 + $0x68] sm:$0xff]
        %v1268 = vld [vmem:[#allocation10 + $0x70] sm:$0xff]
        %v1269 = vld [vmem:[#allocation10 + $0x78] sm:$0xff]
        %1270 = vmatpush.msra.mxu0 %v1017
        %1271 = vmatpush.msra.mxu0 %v1016
        %1272 = vmatpush.msra.mxu0 %v1015
        %1273 = vmatpush.msra.mxu0 %v1014
        %1274 = vmatpush.msra.mxu0 %v1013
        %1275 = vmatpush.msra.mxu0 %v1012
        %1276 = vmatpush.msra.mxu0 %v1011
        %1277 = vmatpush.msra.mxu0 %v1010
        %1278 = vmatpush.msra.mxu0 %v764
        %1279 = vmatpush.msra.mxu0 %v761
        %1280 = vmatpush.msra.mxu0 %v758
        %1281 = vmatpush.msra.mxu0 %v755
        %1282 = vmatpush.msra.mxu0 %v752
        %1283 = vmatpush.msra.mxu0 %v749
        %1284 = vmatpush.msra.mxu0 %v746
        %1285 = vmatpush.msra.mxu0 %v743
        %1286 = vmatmul.f32.gmra.mxu0 %v1254
        %v1287 = vpop.f32.mrf.mxu0
        %v1288 = vadd.f32 0.0, %v1287
        %1289 = vmatmul.f32.gmra.mxu0 %v1255
        %v1290 = vpop.f32.mrf.mxu0
        %v1291 = vadd.f32 0.0, %v1290
        %1292 = vmatmul.f32.gmra.mxu0 %v1256
        %v1293 = vpop.f32.mrf.mxu0
        %v1294 = vadd.f32 0.0, %v1293
        %1295 = vmatmul.f32.gmra.mxu0 %v1257
        %v1296 = vpop.f32.mrf.mxu0
        %v1297 = vadd.f32 0.0, %v1296
        %1298 = vmatmul.f32.gmra.mxu0 %v1258
        %v1299 = vpop.f32.mrf.mxu0
        %v1300 = vadd.f32 0.0, %v1299
        %1301 = vmatmul.f32.gmra.mxu0 %v1259
        %v1302 = vpop.f32.mrf.mxu0
        %v1303 = vadd.f32 0.0, %v1302
        %1304 = vmatmul.f32.gmra.mxu0 %v1260
        %v1305 = vpop.f32.mrf.mxu0
        %v1306 = vadd.f32 0.0, %v1305
        %1307 = vmatmul.f32.gmra.mxu0 %v1261
        %v1308 = vpop.f32.mrf.mxu0
        %v1309 = vadd.f32 0.0, %v1308
        %1310 = vmatmul.f32.gmra.mxu0 %v1262
        %v1311 = vpop.f32.mrf.mxu0
        %v1312 = vadd.f32 0.0, %v1311
        %1313 = vmatmul.f32.gmra.mxu0 %v1263
        %v1314 = vpop.f32.mrf.mxu0
        %v1315 = vadd.f32 0.0, %v1314
        %1316 = vmatmul.f32.gmra.mxu0 %v1264
        %v1317 = vpop.f32.mrf.mxu0
        %v1318 = vadd.f32 0.0, %v1317
        %1319 = vmatmul.f32.gmra.mxu0 %v1265
        %v1320 = vpop.f32.mrf.mxu0
        %v1321 = vadd.f32 0.0, %v1320
        %1322 = vmatmul.f32.gmra.mxu0 %v1266
        %v1323 = vpop.f32.mrf.mxu0
        %v1324 = vadd.f32 0.0, %v1323
        %1325 = vmatmul.f32.gmra.mxu0 %v1267
        %v1326 = vpop.f32.mrf.mxu0
        %v1327 = vadd.f32 0.0, %v1326
        %1328 = vmatmul.f32.gmra.mxu0 %v1268
        %v1329 = vpop.f32.mrf.mxu0
        %v1330 = vadd.f32 0.0, %v1329
        %1331 = vmatmul.f32.gmra.mxu0 %v1269
        %v1332 = vpop.f32.mrf.mxu0
        %v1333 = vadd.f32 0.0, %v1332
        %1334 = vdwg.mxu0
        %s1335 = scalar_lea.vmem [#allocation10], 128
        %v1336 = vld [vmem:[%s1335] sm:$0xff]
        %v1337 = vld [vmem:[%s1335 + $0x8] sm:$0xff]
        %v1338 = vld [vmem:[%s1335 + $0x10] sm:$0xff]
        %v1339 = vld [vmem:[%s1335 + $0x18] sm:$0xff]
        %v1340 = vld [vmem:[%s1335 + $0x20] sm:$0xff]
        %v1341 = vld [vmem:[%s1335 + $0x28] sm:$0xff]
        %v1342 = vld [vmem:[%s1335 + $0x30] sm:$0xff]
        %v1343 = vld [vmem:[%s1335 + $0x38] sm:$0xff]
        %v1344 = vld [vmem:[%s1335 + $0x40] sm:$0xff]
        %v1345 = vld [vmem:[%s1335 + $0x48] sm:$0xff]
        %v1346 = vld [vmem:[%s1335 + $0x50] sm:$0xff]
        %v1347 = vld [vmem:[%s1335 + $0x58] sm:$0xff]
        %v1348 = vld [vmem:[%s1335 + $0x60] sm:$0xff]
        %v1349 = vld [vmem:[%s1335 + $0x68] sm:$0xff]
        %v1350 = vld [vmem:[%s1335 + $0x70] sm:$0xff]
        %v1351 = vld [vmem:[%s1335 + $0x78] sm:$0xff]
        %1352 = vmatpush.msra.mxu0 %v891
        %1353 = vmatpush.msra.mxu0 %v890
        %1354 = vmatpush.msra.mxu0 %v889
        %1355 = vmatpush.msra.mxu0 %v888
        %1356 = vmatpush.msra.mxu0 %v887
        %1357 = vmatpush.msra.mxu0 %v886
        %1358 = vmatpush.msra.mxu0 %v885
        %1359 = vmatpush.msra.mxu0 %v884
        %1360 = vmatpush.msra.mxu0 %v764
        %1361 = vmatpush.msra.mxu0 %v761
        %1362 = vmatpush.msra.mxu0 %v758
        %1363 = vmatpush.msra.mxu0 %v755
        %1364 = vmatpush.msra.mxu0 %v752
        %1365 = vmatpush.msra.mxu0 %v749
        %1366 = vmatpush.msra.mxu0 %v746
        %1367 = vmatpush.msra.mxu0 %v743
        %1368 = vmatmul.f32.gmra.mxu0 %v1336
        %v1369 = vpop.f32.mrf.mxu0
        %v1370 = vadd.f32 0.0, %v1369
        %1371 = vmatmul.f32.gmra.mxu0 %v1337
        %v1372 = vpop.f32.mrf.mxu0
        %v1373 = vadd.f32 0.0, %v1372
        %1374 = vmatmul.f32.gmra.mxu0 %v1338
        %v1375 = vpop.f32.mrf.mxu0
        %v1376 = vadd.f32 0.0, %v1375
        %1377 = vmatmul.f32.gmra.mxu0 %v1339
        %v1378 = vpop.f32.mrf.mxu0
        %v1379 = vadd.f32 0.0, %v1378
        %1380 = vmatmul.f32.gmra.mxu0 %v1340
        %v1381 = vpop.f32.mrf.mxu0
        %v1382 = vadd.f32 0.0, %v1381
        %1383 = vmatmul.f32.gmra.mxu0 %v1341
        %v1384 = vpop.f32.mrf.mxu0
        %v1385 = vadd.f32 0.0, %v1384
        %1386 = vmatmul.f32.gmra.mxu0 %v1342
        %v1387 = vpop.f32.mrf.mxu0
        %v1388 = vadd.f32 0.0, %v1387
        %1389 = vmatmul.f32.gmra.mxu0 %v1343
        %v1390 = vpop.f32.mrf.mxu0
        %v1391 = vadd.f32 0.0, %v1390
        %1392 = vmatmul.f32.gmra.mxu0 %v1344
        %v1393 = vpop.f32.mrf.mxu0
        %v1394 = vadd.f32 0.0, %v1393
        %1395 = vmatmul.f32.gmra.mxu0 %v1345
        %v1396 = vpop.f32.mrf.mxu0
        %v1397 = vadd.f32 0.0, %v1396
        %1398 = vmatmul.f32.gmra.mxu0 %v1346
        %v1399 = vpop.f32.mrf.mxu0
        %v1400 = vadd.f32 0.0, %v1399
        %1401 = vmatmul.f32.gmra.mxu0 %v1347
        %v1402 = vpop.f32.mrf.mxu0
        %v1403 = vadd.f32 0.0, %v1402
        %1404 = vmatmul.f32.gmra.mxu0 %v1348
        %v1405 = vpop.f32.mrf.mxu0
        %v1406 = vadd.f32 0.0, %v1405
        %1407 = vmatmul.f32.gmra.mxu0 %v1349
        %v1408 = vpop.f32.mrf.mxu0
        %v1409 = vadd.f32 0.0, %v1408
        %1410 = vmatmul.f32.gmra.mxu0 %v1350
        %v1411 = vpop.f32.mrf.mxu0
        %v1412 = vadd.f32 0.0, %v1411
        %1413 = vmatmul.f32.gmra.mxu0 %v1351
        %v1414 = vpop.f32.mrf.mxu0
        %v1415 = vadd.f32 0.0, %v1414
        %1416 = vdwg.mxu0
        %1417 = vmatpush.msra.mxu0 %v1309
        %1418 = vmatpush.msra.mxu0 %v1306
        %1419 = vmatpush.msra.mxu0 %v1303
        %1420 = vmatpush.msra.mxu0 %v1300
        %1421 = vmatpush.msra.mxu0 %v1297
        %1422 = vmatpush.msra.mxu0 %v1294
        %1423 = vmatpush.msra.mxu0 %v1291
        %1424 = vmatpush.msra.mxu0 %v1288
        %1425 = vmatpush.msra.mxu0 %v891
        %1426 = vmatpush.msra.mxu0 %v890
        %1427 = vmatpush.msra.mxu0 %v889
        %1428 = vmatpush.msra.mxu0 %v888
        %1429 = vmatpush.msra.mxu0 %v887
        %1430 = vmatpush.msra.mxu0 %v886
        %1431 = vmatpush.msra.mxu0 %v885
        %1432 = vmatpush.msra.mxu0 %v884
        %1433 = vmatmul.f32.gmra.mxu0 %v1336
        %v1434 = vpop.f32.mrf.mxu0
        %v1435 = vadd.f32 0.0, %v1434
        %1436 = vmatmul.f32.gmra.mxu0 %v1337
        %v1437 = vpop.f32.mrf.mxu0
        %v1438 = vadd.f32 0.0, %v1437
        %1439 = vmatmul.f32.gmra.mxu0 %v1338
        %v1440 = vpop.f32.mrf.mxu0
        %v1441 = vadd.f32 0.0, %v1440
        %1442 = vmatmul.f32.gmra.mxu0 %v1339
        %v1443 = vpop.f32.mrf.mxu0
        %v1444 = vadd.f32 0.0, %v1443
        %1445 = vmatmul.f32.gmra.mxu0 %v1340
        %v1446 = vpop.f32.mrf.mxu0
        %v1447 = vadd.f32 0.0, %v1446
        %1448 = vmatmul.f32.gmra.mxu0 %v1341
        %v1449 = vpop.f32.mrf.mxu0
        %v1450 = vadd.f32 0.0, %v1449
        %1451 = vmatmul.f32.gmra.mxu0 %v1342
        %v1452 = vpop.f32.mrf.mxu0
        %v1453 = vadd.f32 0.0, %v1452
        %1454 = vmatmul.f32.gmra.mxu0 %v1343
        %v1455 = vpop.f32.mrf.mxu0
        %v1456 = vadd.f32 0.0, %v1455
        %1457 = vmatmul.f32.gmra.mxu0 %v1344
        %v1458 = vpop.f32.mrf.mxu0
        %v1459 = vadd.f32 0.0, %v1458
        %1460 = vmatmul.f32.gmra.mxu0 %v1345
        %v1461 = vpop.f32.mrf.mxu0
        %v1462 = vadd.f32 0.0, %v1461
        %1463 = vmatmul.f32.gmra.mxu0 %v1346
        %v1464 = vpop.f32.mrf.mxu0
        %v1465 = vadd.f32 0.0, %v1464
        %1466 = vmatmul.f32.gmra.mxu0 %v1347
        %v1467 = vpop.f32.mrf.mxu0
        %v1468 = vadd.f32 0.0, %v1467
        %1469 = vmatmul.f32.gmra.mxu0 %v1348
        %v1470 = vpop.f32.mrf.mxu0
        %v1471 = vadd.f32 0.0, %v1470
        %1472 = vmatmul.f32.gmra.mxu0 %v1349
        %v1473 = vpop.f32.mrf.mxu0
        %v1474 = vadd.f32 0.0, %v1473
        %1475 = vmatmul.f32.gmra.mxu0 %v1350
        %v1476 = vpop.f32.mrf.mxu0
        %v1477 = vadd.f32 0.0, %v1476
        %1478 = vmatmul.f32.gmra.mxu0 %v1351
        %v1479 = vpop.f32.mrf.mxu0
        %v1480 = vadd.f32 0.0, %v1479
        %1481 = vdwg.mxu0
        %s1482 = scalar_lea.vmem [#allocation7], 96
        %v1483 = vld [vmem:[%s1482] sm:$0xff]
        %v1484 = vld [vmem:[%s1482 + $0x8] sm:$0xff]
        %v1485 = vld [vmem:[%s1482 + $0x10] sm:$0xf]
        %v1487 = vperm.slane %v1253, 0
        %vm1489 = vcmask 162816
        %v1491 = vsel %vm1489, %v743, 0
        %v1494 = vsel %vm1489, %v746, 0
        %v1497 = vsel %vm1489, %v749, 0
        %v1500 = vsel %vm1489, %v752, 0
        %v1503 = vsel %vm1489, %v755, 0
        %v1506 = vsel %vm1489, %v758, 0
        %v1509 = vsel %vm1489, %v761, 0
        %v1512 = vsel %vm1489, %v764, 0
        %v1515 = vsel %vm1489, %v884, 0
        %v1518 = vsel %vm1489, %v885, 0
        %v1521 = vsel %vm1489, %v886, 0
        %v1524 = vsel %vm1489, %v887, 0
        %v1527 = vsel %vm1489, %v888, 0
        %v1530 = vsel %vm1489, %v889, 0
        %v1533 = vsel %vm1489, %v890, 0
        %v1536 = vsel %vm1489, %v891, 0
        %v1539 = vsel %vm1489, %v1010, 0
        %v1542 = vsel %vm1489, %v1011, 0
        %v1545 = vsel %vm1489, %v1012, 0
        %v1548 = vsel %vm1489, %v1013, 0
        %v1551 = vsel %vm1489, %v1014, 0
        %v1554 = vsel %vm1489, %v1015, 0
        %v1557 = vsel %vm1489, %v1016, 0
        %v1560 = vsel %vm1489, %v1017, 0
        %v1563 = vsel %vm1489, %v1245, 0
        %v1566 = vsel %vm1489, %v1246, 0
        %v1569 = vsel %vm1489, %v1247, 0
        %v1572 = vsel %vm1489, %v1248, 0
        %v1575 = vsel %vm1489, %v1249, 0
        %v1578 = vsel %vm1489, %v1250, 0
        %v1581 = vsel %vm1489, %v1251, 0
        %v1584 = vsel %vm1489, %v1252, 0
        %vm1586 = vcmask 1043456
        %v1588 = vsel %vm1586, %v1485, 0
        %1590 = vmatpush.msra.mxu0 0.0
        %1591 = vmatpush.msra.mxu0 0.0
        %1592 = vmatpush.msra.mxu0 0.0
        %1593 = vmatpush.msra.mxu0 0.0
        %1594 = vmatpush.msra.mxu0 0.0
        %1595 = vmatpush.msra.mxu0 0.0
        %1596 = vmatpush.msra.mxu0 0.0
        %1597 = vmatpush.msra.mxu0 0.0
        %1598 = vmatpush.msra.mxu0 0.0
        %1599 = vmatpush.msra.mxu0 0.0
        %1600 = vmatpush.msra.mxu0 0.0
        %1601 = vmatpush.msra.mxu0 0.0
        %1602 = vmatpush.msra.mxu0 0.0
        %1603 = vmatpush.msra.mxu0 %v1588
        %1604 = vmatpush.msra.mxu0 %v1484
        %1605 = vmatpush.msra.mxu0 %v1483
        %1606 = vmatmul.f32.gmra.mxu0 %v1491
        %v1607 = vpop.f32.mrf.mxu0
        %v1608 = vadd.f32 %v1487, %v1607
        %1609 = vmatmul.f32.gmra.mxu0 %v1494
        %v1610 = vpop.f32.mrf.mxu0
        %v1611 = vadd.f32 %v1487, %v1610
        %1612 = vmatmul.f32.gmra.mxu0 %v1497
        %v1613 = vpop.f32.mrf.mxu0
        %v1614 = vadd.f32 %v1487, %v1613
        %1615 = vmatmul.f32.gmra.mxu0 %v1500
        %v1616 = vpop.f32.mrf.mxu0
        %v1617 = vadd.f32 %v1487, %v1616
        %1618 = vmatmul.f32.gmra.mxu0 %v1503
        %v1619 = vpop.f32.mrf.mxu0
        %v1620 = vadd.f32 %v1487, %v1619
        %1621 = vmatmul.f32.gmra.mxu0 %v1506
        %v1622 = vpop.f32.mrf.mxu0
        %v1623 = vadd.f32 %v1487, %v1622
        %1624 = vmatmul.f32.gmra.mxu0 %v1509
        %v1625 = vpop.f32.mrf.mxu0
        %v1626 = vadd.f32 %v1487, %v1625
        %1627 = vmatmul.f32.gmra.mxu0 %v1512
        %v1628 = vpop.f32.mrf.mxu0
        %v1629 = vadd.f32 %v1487, %v1628
        %1630 = vmatmul.f32.gmra.mxu0 %v1515
        %v1631 = vpop.f32.mrf.mxu0
        %v1632 = vadd.f32 %v1487, %v1631
        %1633 = vmatmul.f32.gmra.mxu0 %v1518
        %v1634 = vpop.f32.mrf.mxu0
        %v1635 = vadd.f32 %v1487, %v1634
        %1636 = vmatmul.f32.gmra.mxu0 %v1521
        %v1637 = vpop.f32.mrf.mxu0
        %v1638 = vadd.f32 %v1487, %v1637
        %1639 = vmatmul.f32.gmra.mxu0 %v1524
        %v1640 = vpop.f32.mrf.mxu0
        %v1641 = vadd.f32 %v1487, %v1640
        %1642 = vmatmul.f32.gmra.mxu0 %v1527
        %v1643 = vpop.f32.mrf.mxu0
        %v1644 = vadd.f32 %v1487, %v1643
        %1645 = vmatmul.f32.gmra.mxu0 %v1530
        %v1646 = vpop.f32.mrf.mxu0
        %v1647 = vadd.f32 %v1487, %v1646
        %1648 = vmatmul.f32.gmra.mxu0 %v1533
        %v1649 = vpop.f32.mrf.mxu0
        %v1650 = vadd.f32 %v1487, %v1649
        %1651 = vmatmul.f32.gmra.mxu0 %v1536
        %v1652 = vpop.f32.mrf.mxu0
        %v1653 = vadd.f32 %v1487, %v1652
        %1654 = vmatmul.f32.gmra.mxu0 %v1539
        %v1655 = vpop.f32.mrf.mxu0
        %v1656 = vadd.f32 %v1487, %v1655
        %1657 = vmatmul.f32.gmra.mxu0 %v1542
        %v1658 = vpop.f32.mrf.mxu0
        %v1659 = vadd.f32 %v1487, %v1658
        %1660 = vmatmul.f32.gmra.mxu0 %v1545
        %v1661 = vpop.f32.mrf.mxu0
        %v1662 = vadd.f32 %v1487, %v1661
        %1663 = vmatmul.f32.gmra.mxu0 %v1548
        %v1664 = vpop.f32.mrf.mxu0
        %v1665 = vadd.f32 %v1487, %v1664
        %1666 = vmatmul.f32.gmra.mxu0 %v1551
        %v1667 = vpop.f32.mrf.mxu0
        %v1668 = vadd.f32 %v1487, %v1667
        %1669 = vmatmul.f32.gmra.mxu0 %v1554
        %v1670 = vpop.f32.mrf.mxu0
        %v1671 = vadd.f32 %v1487, %v1670
        %1672 = vmatmul.f32.gmra.mxu0 %v1557
        %v1673 = vpop.f32.mrf.mxu0
        %v1674 = vadd.f32 %v1487, %v1673
        %1675 = vmatmul.f32.gmra.mxu0 %v1560
        %v1676 = vpop.f32.mrf.mxu0
        %v1677 = vadd.f32 %v1487, %v1676
        %1678 = vmatmul.f32.gmra.mxu0 %v1563
        %v1679 = vpop.f32.mrf.mxu0
        %v1680 = vadd.f32 %v1487, %v1679
        %1681 = vmatmul.f32.gmra.mxu0 %v1566
        %v1682 = vpop.f32.mrf.mxu0
        %v1683 = vadd.f32 %v1487, %v1682
        %1684 = vmatmul.f32.gmra.mxu0 %v1569
        %v1685 = vpop.f32.mrf.mxu0
        %v1686 = vadd.f32 %v1487, %v1685
        %1687 = vmatmul.f32.gmra.mxu0 %v1572
        %v1688 = vpop.f32.mrf.mxu0
        %v1689 = vadd.f32 %v1487, %v1688
        %1690 = vmatmul.f32.gmra.mxu0 %v1575
        %v1691 = vpop.f32.mrf.mxu0
        %v1692 = vadd.f32 %v1487, %v1691
        %1693 = vmatmul.f32.gmra.mxu0 %v1578
        %v1694 = vpop.f32.mrf.mxu0
        %v1695 = vadd.f32 %v1487, %v1694
        %1696 = vmatmul.f32.gmra.mxu0 %v1581
        %v1697 = vpop.f32.mrf.mxu0
        %v1698 = vadd.f32 %v1487, %v1697
        %1699 = vmatmul.f32.gmra.mxu0 %v1584
        %v1700 = vpop.f32.mrf.mxu0
        %v1701 = vadd.f32 %v1487, %v1700
        %1702 = vdwg.mxu0
        %s1703 = scalar_lea.vmem [#allocation7], 120
        %v1704 = vld [vmem:[%s1703] sm:$0xff]
        %v1705 = vld [vmem:[%s1703 + $0x8] sm:$0xff]
        %v1706 = vld [vmem:[%s1703 + $0x10] sm:$0xf]
        %s1707 = scalar_lea.vmem [#allocation7], 72
        %v1708 = vld [vmem:[%s1707] sm:$0xff]
        %v1709 = vld [vmem:[%s1707 + $0x8] sm:$0xff]
        %v1710 = vld [vmem:[%s1707 + $0x10] sm:$0xf]
        %v1712 = vsel %vm1489, %v1288, 0
        %v1715 = vsel %vm1489, %v1291, 0
        %v1718 = vsel %vm1489, %v1294, 0
        %v1721 = vsel %vm1489, %v1297, 0
        %v1724 = vsel %vm1489, %v1300, 0
        %v1727 = vsel %vm1489, %v1303, 0
        %v1730 = vsel %vm1489, %v1306, 0
        %v1733 = vsel %vm1489, %v1309, 0
        %v1736 = vsel %vm1489, %v1312, 0
        %v1739 = vsel %vm1489, %v1315, 0
        %v1742 = vsel %vm1489, %v1318, 0
        %v1745 = vsel %vm1489, %v1321, 0
        %v1748 = vsel %vm1489, %v1324, 0
        %v1751 = vsel %vm1489, %v1327, 0
        %v1754 = vsel %vm1489, %v1330, 0
        %v1757 = vsel %vm1489, %v1333, 0
        %v1760 = vsel %vm1586, %v1710, 0
        %1762 = vmatpush.msra.mxu0 0.0
        %1763 = vmatpush.msra.mxu0 0.0
        %1764 = vmatpush.msra.mxu0 0.0
        %1765 = vmatpush.msra.mxu0 0.0
        %1766 = vmatpush.msra.mxu0 0.0
        %1767 = vmatpush.msra.mxu0 0.0
        %1768 = vmatpush.msra.mxu0 0.0
        %1769 = vmatpush.msra.mxu0 0.0
        %1770 = vmatpush.msra.mxu0 0.0
        %1771 = vmatpush.msra.mxu0 0.0
        %1772 = vmatpush.msra.mxu0 0.0
        %1773 = vmatpush.msra.mxu0 0.0
        %1774 = vmatpush.msra.mxu0 0.0
        %1775 = vmatpush.msra.mxu0 %v1760
        %1776 = vmatpush.msra.mxu0 %v1709
        %1777 = vmatpush.msra.mxu0 %v1708
        %1778 = vmatmul.f32.gmra.mxu0 %v1515
        %v1779 = vpop.f32.mrf.mxu0
        %v1780 = vadd.f32 0.0, %v1779
        %1781 = vmatmul.f32.gmra.mxu0 %v1518
        %v1782 = vpop.f32.mrf.mxu0
        %v1783 = vadd.f32 0.0, %v1782
        %1784 = vmatmul.f32.gmra.mxu0 %v1521
        %v1785 = vpop.f32.mrf.mxu0
        %v1786 = vadd.f32 0.0, %v1785
        %1787 = vmatmul.f32.gmra.mxu0 %v1524
        %v1788 = vpop.f32.mrf.mxu0
        %v1789 = vadd.f32 0.0, %v1788
        %1790 = vmatmul.f32.gmra.mxu0 %v1527
        %v1791 = vpop.f32.mrf.mxu0
        %v1792 = vadd.f32 0.0, %v1791
        %1793 = vmatmul.f32.gmra.mxu0 %v1530
        %v1794 = vpop.f32.mrf.mxu0
        %v1795 = vadd.f32 0.0, %v1794
        %1796 = vmatmul.f32.gmra.mxu0 %v1533
        %v1797 = vpop.f32.mrf.mxu0
        %v1798 = vadd.f32 0.0, %v1797
        %1799 = vmatmul.f32.gmra.mxu0 %v1536
        %v1800 = vpop.f32.mrf.mxu0
        %v1801 = vadd.f32 0.0, %v1800
        %1802 = vmatmul.f32.gmra.mxu0 %v1712
        %v1803 = vpop.f32.mrf.mxu0
        %v1804 = vadd.f32 0.0, %v1803
        %1805 = vmatmul.f32.gmra.mxu0 %v1715
        %v1806 = vpop.f32.mrf.mxu0
        %v1807 = vadd.f32 0.0, %v1806
        %1808 = vmatmul.f32.gmra.mxu0 %v1718
        %v1809 = vpop.f32.mrf.mxu0
        %v1810 = vadd.f32 0.0, %v1809
        %1811 = vmatmul.f32.gmra.mxu0 %v1721
        %v1812 = vpop.f32.mrf.mxu0
        %v1813 = vadd.f32 0.0, %v1812
        %1814 = vmatmul.f32.gmra.mxu0 %v1724
        %v1815 = vpop.f32.mrf.mxu0
        %v1816 = vadd.f32 0.0, %v1815
        %1817 = vmatmul.f32.gmra.mxu0 %v1727
        %v1818 = vpop.f32.mrf.mxu0
        %v1819 = vadd.f32 0.0, %v1818
        %1820 = vmatmul.f32.gmra.mxu0 %v1730
        %v1821 = vpop.f32.mrf.mxu0
        %v1822 = vadd.f32 0.0, %v1821
        %1823 = vmatmul.f32.gmra.mxu0 %v1733
        %v1824 = vpop.f32.mrf.mxu0
        %v1825 = vadd.f32 0.0, %v1824
        %1826 = vmatmul.f32.gmra.mxu0 %v1563
        %v1827 = vpop.f32.mrf.mxu0
        %v1828 = vadd.f32 0.0, %v1827
        %1829 = vmatmul.f32.gmra.mxu0 %v1566
        %v1830 = vpop.f32.mrf.mxu0
        %v1831 = vadd.f32 0.0, %v1830
        %1832 = vmatmul.f32.gmra.mxu0 %v1569
        %v1833 = vpop.f32.mrf.mxu0
        %v1834 = vadd.f32 0.0, %v1833
        %1835 = vmatmul.f32.gmra.mxu0 %v1572
        %v1836 = vpop.f32.mrf.mxu0
        %v1837 = vadd.f32 0.0, %v1836
        %1838 = vmatmul.f32.gmra.mxu0 %v1575
        %v1839 = vpop.f32.mrf.mxu0
        %v1840 = vadd.f32 0.0, %v1839
        %1841 = vmatmul.f32.gmra.mxu0 %v1578
        %v1842 = vpop.f32.mrf.mxu0
        %v1843 = vadd.f32 0.0, %v1842
        %1844 = vmatmul.f32.gmra.mxu0 %v1581
        %v1845 = vpop.f32.mrf.mxu0
        %v1846 = vadd.f32 0.0, %v1845
        %1847 = vmatmul.f32.gmra.mxu0 %v1584
        %v1848 = vpop.f32.mrf.mxu0
        %v1849 = vadd.f32 0.0, %v1848
        %1850 = vmatmul.f32.gmra.mxu0 %v1736
        %v1851 = vpop.f32.mrf.mxu0
        %v1852 = vadd.f32 0.0, %v1851
        %1853 = vmatmul.f32.gmra.mxu0 %v1739
        %v1854 = vpop.f32.mrf.mxu0
        %v1855 = vadd.f32 0.0, %v1854
        %1856 = vmatmul.f32.gmra.mxu0 %v1742
        %v1857 = vpop.f32.mrf.mxu0
        %v1858 = vadd.f32 0.0, %v1857
        %1859 = vmatmul.f32.gmra.mxu0 %v1745
        %v1860 = vpop.f32.mrf.mxu0
        %v1861 = vadd.f32 0.0, %v1860
        %1862 = vmatmul.f32.gmra.mxu0 %v1748
        %v1863 = vpop.f32.mrf.mxu0
        %v1864 = vadd.f32 0.0, %v1863
        %1865 = vmatmul.f32.gmra.mxu0 %v1751
        %v1866 = vpop.f32.mrf.mxu0
        %v1867 = vadd.f32 0.0, %v1866
        %1868 = vmatmul.f32.gmra.mxu0 %v1754
        %v1869 = vpop.f32.mrf.mxu0
        %v1870 = vadd.f32 0.0, %v1869
        %1871 = vmatmul.f32.gmra.mxu0 %v1757
        %v1872 = vpop.f32.mrf.mxu0
        %v1873 = vadd.f32 0.0, %v1872
        %1874 = vdwg.mxu0
        %v1876 = vsel %vm1586, %v1706, 0
        %1878 = vmatpush.msra.mxu0 0.0
        %1879 = vmatpush.msra.mxu0 0.0
        %1880 = vmatpush.msra.mxu0 0.0
        %1881 = vmatpush.msra.mxu0 0.0
        %1882 = vmatpush.msra.mxu0 0.0
        %1883 = vmatpush.msra.mxu0 0.0
        %1884 = vmatpush.msra.mxu0 0.0
        %1885 = vmatpush.msra.mxu0 0.0
        %1886 = vmatpush.msra.mxu0 0.0
        %1887 = vmatpush.msra.mxu0 0.0
        %1888 = vmatpush.msra.mxu0 0.0
        %1889 = vmatpush.msra.mxu0 0.0
        %1890 = vmatpush.msra.mxu0 0.0
        %1891 = vmatpush.msra.mxu0 %v1876
        %1892 = vmatpush.msra.mxu0 %v1705
        %1893 = vmatpush.msra.mxu0 %v1704
        %1894 = vmatmul.f32.gmra.mxu0 %v1491
        %v1895 = vpop.f32.mrf.mxu0
        %v1896 = vadd.f32 %v1780, %v1895
        %1897 = vmatmul.f32.gmra.mxu0 %v1494
        %v1898 = vpop.f32.mrf.mxu0
        %v1899 = vadd.f32 %v1783, %v1898
        %1900 = vmatmul.f32.gmra.mxu0 %v1497
        %v1901 = vpop.f32.mrf.mxu0
        %v1902 = vadd.f32 %v1786, %v1901
        %1903 = vmatmul.f32.gmra.mxu0 %v1500
        %v1904 = vpop.f32.mrf.mxu0
        %v1905 = vadd.f32 %v1789, %v1904
        %1906 = vmatmul.f32.gmra.mxu0 %v1503
        %v1907 = vpop.f32.mrf.mxu0
        %v1908 = vadd.f32 %v1792, %v1907
        %1909 = vmatmul.f32.gmra.mxu0 %v1506
        %v1910 = vpop.f32.mrf.mxu0
        %v1911 = vadd.f32 %v1795, %v1910
        %1912 = vmatmul.f32.gmra.mxu0 %v1509
        %v1913 = vpop.f32.mrf.mxu0
        %v1914 = vadd.f32 %v1798, %v1913
        %1915 = vmatmul.f32.gmra.mxu0 %v1512
        %v1916 = vpop.f32.mrf.mxu0
        %v1917 = vadd.f32 %v1801, %v1916
        %1918 = vmatmul.f32.gmra.mxu0 %v1515
        %v1919 = vpop.f32.mrf.mxu0
        %v1920 = vadd.f32 %v1804, %v1919
        %1921 = vmatmul.f32.gmra.mxu0 %v1518
        %v1922 = vpop.f32.mrf.mxu0
        %v1923 = vadd.f32 %v1807, %v1922
        %1924 = vmatmul.f32.gmra.mxu0 %v1521
        %v1925 = vpop.f32.mrf.mxu0
        %v1926 = vadd.f32 %v1810, %v1925
        %1927 = vmatmul.f32.gmra.mxu0 %v1524
        %v1928 = vpop.f32.mrf.mxu0
        %v1929 = vadd.f32 %v1813, %v1928
        %1930 = vmatmul.f32.gmra.mxu0 %v1527
        %v1931 = vpop.f32.mrf.mxu0
        %v1932 = vadd.f32 %v1816, %v1931
        %1933 = vmatmul.f32.gmra.mxu0 %v1530
        %v1934 = vpop.f32.mrf.mxu0
        %v1935 = vadd.f32 %v1819, %v1934
        %1936 = vmatmul.f32.gmra.mxu0 %v1533
        %v1937 = vpop.f32.mrf.mxu0
        %v1938 = vadd.f32 %v1822, %v1937
        %1939 = vmatmul.f32.gmra.mxu0 %v1536
        %v1940 = vpop.f32.mrf.mxu0
        %v1941 = vadd.f32 %v1825, %v1940
        %1942 = vmatmul.f32.gmra.mxu0 %v1539
        %v1943 = vpop.f32.mrf.mxu0
        %v1944 = vadd.f32 %v1828, %v1943
        %1945 = vmatmul.f32.gmra.mxu0 %v1542
        %v1946 = vpop.f32.mrf.mxu0
        %v1947 = vadd.f32 %v1831, %v1946
        %1948 = vmatmul.f32.gmra.mxu0 %v1545
        %v1949 = vpop.f32.mrf.mxu0
        %v1950 = vadd.f32 %v1834, %v1949
        %1951 = vmatmul.f32.gmra.mxu0 %v1548
        %v1952 = vpop.f32.mrf.mxu0
        %v1953 = vadd.f32 %v1837, %v1952
        %1954 = vmatmul.f32.gmra.mxu0 %v1551
        %v1955 = vpop.f32.mrf.mxu0
        %v1956 = vadd.f32 %v1840, %v1955
        %1957 = vmatmul.f32.gmra.mxu0 %v1554
        %v1958 = vpop.f32.mrf.mxu0
        %v1959 = vadd.f32 %v1843, %v1958
        %1960 = vmatmul.f32.gmra.mxu0 %v1557
        %v1961 = vpop.f32.mrf.mxu0
        %v1962 = vadd.f32 %v1846, %v1961
        %1963 = vmatmul.f32.gmra.mxu0 %v1560
        %v1964 = vpop.f32.mrf.mxu0
        %v1965 = vadd.f32 %v1849, %v1964
        %1966 = vmatmul.f32.gmra.mxu0 %v1563
        %v1967 = vpop.f32.mrf.mxu0
        %v1968 = vadd.f32 %v1852, %v1967
        %1969 = vmatmul.f32.gmra.mxu0 %v1566
        %v1970 = vpop.f32.mrf.mxu0
        %v1971 = vadd.f32 %v1855, %v1970
        %1972 = vmatmul.f32.gmra.mxu0 %v1569
        %v1973 = vpop.f32.mrf.mxu0
        %v1974 = vadd.f32 %v1858, %v1973
        %1975 = vmatmul.f32.gmra.mxu0 %v1572
        %v1976 = vpop.f32.mrf.mxu0
        %v1977 = vadd.f32 %v1861, %v1976
        %1978 = vmatmul.f32.gmra.mxu0 %v1575
        %v1979 = vpop.f32.mrf.mxu0
        %v1980 = vadd.f32 %v1864, %v1979
        %1981 = vmatmul.f32.gmra.mxu0 %v1578
        %v1982 = vpop.f32.mrf.mxu0
        %v1983 = vadd.f32 %v1867, %v1982
        %1984 = vmatmul.f32.gmra.mxu0 %v1581
        %v1985 = vpop.f32.mrf.mxu0
        %v1986 = vadd.f32 %v1870, %v1985
        %1987 = vmatmul.f32.gmra.mxu0 %v1584
        %v1988 = vpop.f32.mrf.mxu0
        %v1989 = vadd.f32 %v1873, %v1988
        %1990 = vdwg.mxu0
        %v1991 = vadd.f32 %v1896, %v1487
        %v1992 = vadd.f32 %v1899, %v1487
        %v1993 = vadd.f32 %v1902, %v1487
        %v1994 = vadd.f32 %v1905, %v1487
        %v1995 = vadd.f32 %v1908, %v1487
        %v1996 = vadd.f32 %v1911, %v1487
        %v1997 = vadd.f32 %v1914, %v1487
        %v1998 = vadd.f32 %v1917, %v1487
        %v1999 = vadd.f32 %v1920, %v1487
        %v2000 = vadd.f32 %v1923, %v1487
        %v2001 = vadd.f32 %v1926, %v1487
        %v2002 = vadd.f32 %v1929, %v1487
        %v2003 = vadd.f32 %v1932, %v1487
        %v2004 = vadd.f32 %v1935, %v1487
        %v2005 = vadd.f32 %v1938, %v1487
        %v2006 = vadd.f32 %v1941, %v1487
        %v2007 = vadd.f32 %v1944, %v1487
        %v2008 = vadd.f32 %v1947, %v1487
        %v2009 = vadd.f32 %v1950, %v1487
        %v2010 = vadd.f32 %v1953, %v1487
        %v2011 = vadd.f32 %v1956, %v1487
        %v2012 = vadd.f32 %v1959, %v1487
        %v2013 = vadd.f32 %v1962, %v1487
        %v2014 = vadd.f32 %v1965, %v1487
        %v2015 = vadd.f32 %v1968, %v1487
        %v2016 = vadd.f32 %v1971, %v1487
        %v2017 = vadd.f32 %v1974, %v1487
        %v2018 = vadd.f32 %v1977, %v1487
        %v2019 = vadd.f32 %v1980, %v1487
        %v2020 = vadd.f32 %v1983, %v1487
        %v2021 = vadd.f32 %v1986, %v1487
        %v2022 = vadd.f32 %v1989, %v1487
        %s2023 = scalar_lea.vmem [#allocation7], 168
        %v2024 = vld [vmem:[%s2023] sm:$0xff]
        %v2025 = vld [vmem:[%s2023 + $0x8] sm:$0xff]
        %v2026 = vld [vmem:[%s2023 + $0x10] sm:$0xf]
        %s2027 = scalar_lea.vmem [#allocation7], 24
        %v2028 = vld [vmem:[%s2027] sm:$0xff]
        %v2029 = vld [vmem:[%s2027 + $0x8] sm:$0xff]
        %v2030 = vld [vmem:[%s2027 + $0x10] sm:$0xf]
        %v2032 = vsel %vm1489, %v1370, 0
        %v2035 = vsel %vm1489, %v1373, 0
        %v2038 = vsel %vm1489, %v1376, 0
        %v2041 = vsel %vm1489, %v1379, 0
        %v2044 = vsel %vm1489, %v1382, 0
        %v2047 = vsel %vm1489, %v1385, 0
        %v2050 = vsel %vm1489, %v1388, 0
        %v2053 = vsel %vm1489, %v1391, 0
        %v2056 = vsel %vm1489, %v1394, 0
        %v2059 = vsel %vm1489, %v1397, 0
        %v2062 = vsel %vm1489, %v1400, 0
        %v2065 = vsel %vm1489, %v1403, 0
        %v2068 = vsel %vm1489, %v1406, 0
        %v2071 = vsel %vm1489, %v1409, 0
        %v2074 = vsel %vm1489, %v1412, 0
        %v2077 = vsel %vm1489, %v1415, 0
        %v2080 = vsel %vm1586, %v2030, 0
        %2082 = vmatpush.msra.mxu0 0.0
        %2083 = vmatpush.msra.mxu0 0.0
        %2084 = vmatpush.msra.mxu0 0.0
        %2085 = vmatpush.msra.mxu0 0.0
        %2086 = vmatpush.msra.mxu0 0.0
        %2087 = vmatpush.msra.mxu0 0.0
        %2088 = vmatpush.msra.mxu0 0.0
        %2089 = vmatpush.msra.mxu0 0.0
        %2090 = vmatpush.msra.mxu0 0.0
        %2091 = vmatpush.msra.mxu0 0.0
        %2092 = vmatpush.msra.mxu0 0.0
        %2093 = vmatpush.msra.mxu0 0.0
        %2094 = vmatpush.msra.mxu0 0.0
        %2095 = vmatpush.msra.mxu0 %v2080
        %2096 = vmatpush.msra.mxu0 %v2029
        %2097 = vmatpush.msra.mxu0 %v2028
        %2098 = vmatmul.f32.gmra.mxu0 %v1539
        %v2099 = vpop.f32.mrf.mxu0
        %v2100 = vadd.f32 0.0, %v2099
        %2101 = vmatmul.f32.gmra.mxu0 %v1542
        %v2102 = vpop.f32.mrf.mxu0
        %v2103 = vadd.f32 0.0, %v2102
        %2104 = vmatmul.f32.gmra.mxu0 %v1545
        %v2105 = vpop.f32.mrf.mxu0
        %v2106 = vadd.f32 0.0, %v2105
        %2107 = vmatmul.f32.gmra.mxu0 %v1548
        %v2108 = vpop.f32.mrf.mxu0
        %v2109 = vadd.f32 0.0, %v2108
        %2110 = vmatmul.f32.gmra.mxu0 %v1551
        %v2111 = vpop.f32.mrf.mxu0
        %v2112 = vadd.f32 0.0, %v2111
        %2113 = vmatmul.f32.gmra.mxu0 %v1554
        %v2114 = vpop.f32.mrf.mxu0
        %v2115 = vadd.f32 0.0, %v2114
        %2116 = vmatmul.f32.gmra.mxu0 %v1557
        %v2117 = vpop.f32.mrf.mxu0
        %v2118 = vadd.f32 0.0, %v2117
        %2119 = vmatmul.f32.gmra.mxu0 %v1560
        %v2120 = vpop.f32.mrf.mxu0
        %v2121 = vadd.f32 0.0, %v2120
        %2122 = vmatmul.f32.gmra.mxu0 %v1563
        %v2123 = vpop.f32.mrf.mxu0
        %v2124 = vadd.f32 0.0, %v2123
        %2125 = vmatmul.f32.gmra.mxu0 %v1566
        %v2126 = vpop.f32.mrf.mxu0
        %v2127 = vadd.f32 0.0, %v2126
        %2128 = vmatmul.f32.gmra.mxu0 %v1569
        %v2129 = vpop.f32.mrf.mxu0
        %v2130 = vadd.f32 0.0, %v2129
        %2131 = vmatmul.f32.gmra.mxu0 %v1572
        %v2132 = vpop.f32.mrf.mxu0
        %v2133 = vadd.f32 0.0, %v2132
        %2134 = vmatmul.f32.gmra.mxu0 %v1575
        %v2135 = vpop.f32.mrf.mxu0
        %v2136 = vadd.f32 0.0, %v2135
        %2137 = vmatmul.f32.gmra.mxu0 %v1578
        %v2138 = vpop.f32.mrf.mxu0
        %v2139 = vadd.f32 0.0, %v2138
        %2140 = vmatmul.f32.gmra.mxu0 %v1581
        %v2141 = vpop.f32.mrf.mxu0
        %v2142 = vadd.f32 0.0, %v2141
        %2143 = vmatmul.f32.gmra.mxu0 %v1584
        %v2144 = vpop.f32.mrf.mxu0
        %v2145 = vadd.f32 0.0, %v2144
        %2146 = vmatmul.f32.gmra.mxu0 %v2032
        %v2147 = vpop.f32.mrf.mxu0
        %v2148 = vadd.f32 0.0, %v2147
        %2149 = vmatmul.f32.gmra.mxu0 %v2035
        %v2150 = vpop.f32.mrf.mxu0
        %v2151 = vadd.f32 0.0, %v2150
        %2152 = vmatmul.f32.gmra.mxu0 %v2038
        %v2153 = vpop.f32.mrf.mxu0
        %v2154 = vadd.f32 0.0, %v2153
        %2155 = vmatmul.f32.gmra.mxu0 %v2041
        %v2156 = vpop.f32.mrf.mxu0
        %v2157 = vadd.f32 0.0, %v2156
        %2158 = vmatmul.f32.gmra.mxu0 %v2044
        %v2159 = vpop.f32.mrf.mxu0
        %v2160 = vadd.f32 0.0, %v2159
        %2161 = vmatmul.f32.gmra.mxu0 %v2047
        %v2162 = vpop.f32.mrf.mxu0
        %v2163 = vadd.f32 0.0, %v2162
        %2164 = vmatmul.f32.gmra.mxu0 %v2050
        %v2165 = vpop.f32.mrf.mxu0
        %v2166 = vadd.f32 0.0, %v2165
        %2167 = vmatmul.f32.gmra.mxu0 %v2053
        %v2168 = vpop.f32.mrf.mxu0
        %v2169 = vadd.f32 0.0, %v2168
        %2170 = vmatmul.f32.gmra.mxu0 %v2056
        %v2171 = vpop.f32.mrf.mxu0
        %v2172 = vadd.f32 0.0, %v2171
        %2173 = vmatmul.f32.gmra.mxu0 %v2059
        %v2174 = vpop.f32.mrf.mxu0
        %v2175 = vadd.f32 0.0, %v2174
        %2176 = vmatmul.f32.gmra.mxu0 %v2062
        %v2177 = vpop.f32.mrf.mxu0
        %v2178 = vadd.f32 0.0, %v2177
        %2179 = vmatmul.f32.gmra.mxu0 %v2065
        %v2180 = vpop.f32.mrf.mxu0
        %v2181 = vadd.f32 0.0, %v2180
        %2182 = vmatmul.f32.gmra.mxu0 %v2068
        %v2183 = vpop.f32.mrf.mxu0
        %v2184 = vadd.f32 0.0, %v2183
        %2185 = vmatmul.f32.gmra.mxu0 %v2071
        %v2186 = vpop.f32.mrf.mxu0
        %v2187 = vadd.f32 0.0, %v2186
        %2188 = vmatmul.f32.gmra.mxu0 %v2074
        %v2189 = vpop.f32.mrf.mxu0
        %v2190 = vadd.f32 0.0, %v2189
        %2191 = vmatmul.f32.gmra.mxu0 %v2077
        %v2192 = vpop.f32.mrf.mxu0
        %v2193 = vadd.f32 0.0, %v2192
        %2194 = vdwg.mxu0
        %v2196 = vsel %vm1586, %v2026, 0
        %2198 = vmatpush.msra.mxu0 0.0
        %2199 = vmatpush.msra.mxu0 0.0
        %2200 = vmatpush.msra.mxu0 0.0
        %2201 = vmatpush.msra.mxu0 0.0
        %2202 = vmatpush.msra.mxu0 0.0
        %2203 = vmatpush.msra.mxu0 0.0
        %2204 = vmatpush.msra.mxu0 0.0
        %2205 = vmatpush.msra.mxu0 0.0
        %2206 = vmatpush.msra.mxu0 0.0
        %2207 = vmatpush.msra.mxu0 0.0
        %2208 = vmatpush.msra.mxu0 0.0
        %2209 = vmatpush.msra.mxu0 0.0
        %2210 = vmatpush.msra.mxu0 0.0
        %2211 = vmatpush.msra.mxu0 %v2196
        %2212 = vmatpush.msra.mxu0 %v2025
        %2213 = vmatpush.msra.mxu0 %v2024
        %2214 = vmatmul.f32.gmra.mxu0 %v1491
        %v2215 = vpop.f32.mrf.mxu0
        %v2216 = vadd.f32 %v2100, %v2215
        %2217 = vmatmul.f32.gmra.mxu0 %v1494
        %v2218 = vpop.f32.mrf.mxu0
        %v2219 = vadd.f32 %v2103, %v2218
        %2220 = vmatmul.f32.gmra.mxu0 %v1497
        %v2221 = vpop.f32.mrf.mxu0
        %v2222 = vadd.f32 %v2106, %v2221
        %2223 = vmatmul.f32.gmra.mxu0 %v1500
        %v2224 = vpop.f32.mrf.mxu0
        %v2225 = vadd.f32 %v2109, %v2224
        %2226 = vmatmul.f32.gmra.mxu0 %v1503
        %v2227 = vpop.f32.mrf.mxu0
        %v2228 = vadd.f32 %v2112, %v2227
        %2229 = vmatmul.f32.gmra.mxu0 %v1506
        %v2230 = vpop.f32.mrf.mxu0
        %v2231 = vadd.f32 %v2115, %v2230
        %2232 = vmatmul.f32.gmra.mxu0 %v1509
        %v2233 = vpop.f32.mrf.mxu0
        %v2234 = vadd.f32 %v2118, %v2233
        %2235 = vmatmul.f32.gmra.mxu0 %v1512
        %v2236 = vpop.f32.mrf.mxu0
        %v2237 = vadd.f32 %v2121, %v2236
        %2238 = vmatmul.f32.gmra.mxu0 %v1515
        %v2239 = vpop.f32.mrf.mxu0
        %v2240 = vadd.f32 %v2124, %v2239
        %2241 = vmatmul.f32.gmra.mxu0 %v1518
        %v2242 = vpop.f32.mrf.mxu0
        %v2243 = vadd.f32 %v2127, %v2242
        %2244 = vmatmul.f32.gmra.mxu0 %v1521
        %v2245 = vpop.f32.mrf.mxu0
        %v2246 = vadd.f32 %v2130, %v2245
        %2247 = vmatmul.f32.gmra.mxu0 %v1524
        %v2248 = vpop.f32.mrf.mxu0
        %v2249 = vadd.f32 %v2133, %v2248
        %2250 = vmatmul.f32.gmra.mxu0 %v1527
        %v2251 = vpop.f32.mrf.mxu0
        %v2252 = vadd.f32 %v2136, %v2251
        %2253 = vmatmul.f32.gmra.mxu0 %v1530
        %v2254 = vpop.f32.mrf.mxu0
        %v2255 = vadd.f32 %v2139, %v2254
        %2256 = vmatmul.f32.gmra.mxu0 %v1533
        %v2257 = vpop.f32.mrf.mxu0
        %v2258 = vadd.f32 %v2142, %v2257
        %2259 = vmatmul.f32.gmra.mxu0 %v1536
        %v2260 = vpop.f32.mrf.mxu0
        %v2261 = vadd.f32 %v2145, %v2260
        %2262 = vmatmul.f32.gmra.mxu0 %v1539
        %v2263 = vpop.f32.mrf.mxu0
        %v2264 = vadd.f32 %v2148, %v2263
        %2265 = vmatmul.f32.gmra.mxu0 %v1542
        %v2266 = vpop.f32.mrf.mxu0
        %v2267 = vadd.f32 %v2151, %v2266
        %2268 = vmatmul.f32.gmra.mxu0 %v1545
        %v2269 = vpop.f32.mrf.mxu0
        %v2270 = vadd.f32 %v2154, %v2269
        %2271 = vmatmul.f32.gmra.mxu0 %v1548
        %v2272 = vpop.f32.mrf.mxu0
        %v2273 = vadd.f32 %v2157, %v2272
        %2274 = vmatmul.f32.gmra.mxu0 %v1551
        %v2275 = vpop.f32.mrf.mxu0
        %v2276 = vadd.f32 %v2160, %v2275
        %2277 = vmatmul.f32.gmra.mxu0 %v1554
        %v2278 = vpop.f32.mrf.mxu0
        %v2279 = vadd.f32 %v2163, %v2278
        %2280 = vmatmul.f32.gmra.mxu0 %v1557
        %v2281 = vpop.f32.mrf.mxu0
        %v2282 = vadd.f32 %v2166, %v2281
        %2283 = vmatmul.f32.gmra.mxu0 %v1560
        %v2284 = vpop.f32.mrf.mxu0
        %v2285 = vadd.f32 %v2169, %v2284
        %2286 = vmatmul.f32.gmra.mxu0 %v1563
        %v2287 = vpop.f32.mrf.mxu0
        %v2288 = vadd.f32 %v2172, %v2287
        %2289 = vmatmul.f32.gmra.mxu0 %v1566
        %v2290 = vpop.f32.mrf.mxu0
        %v2291 = vadd.f32 %v2175, %v2290
        %2292 = vmatmul.f32.gmra.mxu0 %v1569
        %v2293 = vpop.f32.mrf.mxu0
        %v2294 = vadd.f32 %v2178, %v2293
        %2295 = vmatmul.f32.gmra.mxu0 %v1572
        %v2296 = vpop.f32.mrf.mxu0
        %v2297 = vadd.f32 %v2181, %v2296
        %2298 = vmatmul.f32.gmra.mxu0 %v1575
        %v2299 = vpop.f32.mrf.mxu0
        %v2300 = vadd.f32 %v2184, %v2299
        %2301 = vmatmul.f32.gmra.mxu0 %v1578
        %v2302 = vpop.f32.mrf.mxu0
        %v2303 = vadd.f32 %v2187, %v2302
        %2304 = vmatmul.f32.gmra.mxu0 %v1581
        %v2305 = vpop.f32.mrf.mxu0
        %v2306 = vadd.f32 %v2190, %v2305
        %2307 = vmatmul.f32.gmra.mxu0 %v1584
        %v2308 = vpop.f32.mrf.mxu0
        %v2309 = vadd.f32 %v2193, %v2308
        %2310 = vdwg.mxu0
        %v2311 = vadd.f32 %v2216, %v1487
        %v2312 = vadd.f32 %v2219, %v1487
        %v2313 = vadd.f32 %v2222, %v1487
        %v2314 = vadd.f32 %v2225, %v1487
        %v2315 = vadd.f32 %v2228, %v1487
        %v2316 = vadd.f32 %v2231, %v1487
        %v2317 = vadd.f32 %v2234, %v1487
        %v2318 = vadd.f32 %v2237, %v1487
        %v2319 = vadd.f32 %v2240, %v1487
        %v2320 = vadd.f32 %v2243, %v1487
        %v2321 = vadd.f32 %v2246, %v1487
        %v2322 = vadd.f32 %v2249, %v1487
        %v2323 = vadd.f32 %v2252, %v1487
        %v2324 = vadd.f32 %v2255, %v1487
        %v2325 = vadd.f32 %v2258, %v1487
        %v2326 = vadd.f32 %v2261, %v1487
        %v2327 = vadd.f32 %v2264, %v1487
        %v2328 = vadd.f32 %v2267, %v1487
        %v2329 = vadd.f32 %v2270, %v1487
        %v2330 = vadd.f32 %v2273, %v1487
        %v2331 = vadd.f32 %v2276, %v1487
        %v2332 = vadd.f32 %v2279, %v1487
        %v2333 = vadd.f32 %v2282, %v1487
        %v2334 = vadd.f32 %v2285, %v1487
        %v2335 = vadd.f32 %v2288, %v1487
        %v2336 = vadd.f32 %v2291, %v1487
        %v2337 = vadd.f32 %v2294, %v1487
        %v2338 = vadd.f32 %v2297, %v1487
        %v2339 = vadd.f32 %v2300, %v1487
        %v2340 = vadd.f32 %v2303, %v1487
        %v2341 = vadd.f32 %v2306, %v1487
        %v2342 = vadd.f32 %v2309, %v1487
        %s2343 = scalar_lea.vmem [#allocation7], 192
        %v2344 = vld [vmem:[%s2343] sm:$0xff]
        %v2345 = vld [vmem:[%s2343 + $0x8] sm:$0xff]
        %v2346 = vld [vmem:[%s2343 + $0x10] sm:$0xf]
        %s2347 = scalar_lea.vmem [#allocation7], 144
        %v2348 = vld [vmem:[%s2347] sm:$0xff]
        %v2349 = vld [vmem:[%s2347 + $0x8] sm:$0xff]
        %v2350 = vld [vmem:[%s2347 + $0x10] sm:$0xf]
        %v2352 = vsel %vm1586, %v2350, 0
        %2354 = vmatpush.msra.mxu0 0.0
        %2355 = vmatpush.msra.mxu0 0.0
        %2356 = vmatpush.msra.mxu0 0.0
        %2357 = vmatpush.msra.mxu0 0.0
        %2358 = vmatpush.msra.mxu0 0.0
        %2359 = vmatpush.msra.mxu0 0.0
        %2360 = vmatpush.msra.mxu0 0.0
        %2361 = vmatpush.msra.mxu0 0.0
        %2362 = vmatpush.msra.mxu0 0.0
        %2363 = vmatpush.msra.mxu0 0.0
        %2364 = vmatpush.msra.mxu0 0.0
        %2365 = vmatpush.msra.mxu0 0.0
        %2366 = vmatpush.msra.mxu0 0.0
        %2367 = vmatpush.msra.mxu0 %v2352
        %2368 = vmatpush.msra.mxu0 %v2349
        %2369 = vmatpush.msra.mxu0 %v2348
        %2370 = vmatmul.f32.gmra.mxu0 %v1515
        %v2371 = vpop.f32.mrf.mxu0
        %v2372 = vadd.f32 0.0, %v2371
        %2373 = vmatmul.f32.gmra.mxu0 %v1518
        %v2374 = vpop.f32.mrf.mxu0
        %v2375 = vadd.f32 0.0, %v2374
        %2376 = vmatmul.f32.gmra.mxu0 %v1521
        %v2377 = vpop.f32.mrf.mxu0
        %v2378 = vadd.f32 0.0, %v2377
        %2379 = vmatmul.f32.gmra.mxu0 %v1524
        %v2380 = vpop.f32.mrf.mxu0
        %v2381 = vadd.f32 0.0, %v2380
        %2382 = vmatmul.f32.gmra.mxu0 %v1527
        %v2383 = vpop.f32.mrf.mxu0
        %v2384 = vadd.f32 0.0, %v2383
        %2385 = vmatmul.f32.gmra.mxu0 %v1530
        %v2386 = vpop.f32.mrf.mxu0
        %v2387 = vadd.f32 0.0, %v2386
        %2388 = vmatmul.f32.gmra.mxu0 %v1533
        %v2389 = vpop.f32.mrf.mxu0
        %v2390 = vadd.f32 0.0, %v2389
        %2391 = vmatmul.f32.gmra.mxu0 %v1536
        %v2392 = vpop.f32.mrf.mxu0
        %v2393 = vadd.f32 0.0, %v2392
        %2394 = vmatmul.f32.gmra.mxu0 %v1712
        %v2395 = vpop.f32.mrf.mxu0
        %v2396 = vadd.f32 0.0, %v2395
        %2397 = vmatmul.f32.gmra.mxu0 %v1715
        %v2398 = vpop.f32.mrf.mxu0
        %v2399 = vadd.f32 0.0, %v2398
        %2400 = vmatmul.f32.gmra.mxu0 %v1718
        %v2401 = vpop.f32.mrf.mxu0
        %v2402 = vadd.f32 0.0, %v2401
        %2403 = vmatmul.f32.gmra.mxu0 %v1721
        %v2404 = vpop.f32.mrf.mxu0
        %v2405 = vadd.f32 0.0, %v2404
        %2406 = vmatmul.f32.gmra.mxu0 %v1724
        %v2407 = vpop.f32.mrf.mxu0
        %v2408 = vadd.f32 0.0, %v2407
        %2409 = vmatmul.f32.gmra.mxu0 %v1727
        %v2410 = vpop.f32.mrf.mxu0
        %v2411 = vadd.f32 0.0, %v2410
        %2412 = vmatmul.f32.gmra.mxu0 %v1730
        %v2413 = vpop.f32.mrf.mxu0
        %v2414 = vadd.f32 0.0, %v2413
        %2415 = vmatmul.f32.gmra.mxu0 %v1733
        %v2416 = vpop.f32.mrf.mxu0
        %v2417 = vadd.f32 0.0, %v2416
        %2418 = vmatmul.f32.gmra.mxu0 %v1563
        %v2419 = vpop.f32.mrf.mxu0
        %v2420 = vadd.f32 0.0, %v2419
        %2421 = vmatmul.f32.gmra.mxu0 %v1566
        %v2422 = vpop.f32.mrf.mxu0
        %v2423 = vadd.f32 0.0, %v2422
        %2424 = vmatmul.f32.gmra.mxu0 %v1569
        %v2425 = vpop.f32.mrf.mxu0
        %v2426 = vadd.f32 0.0, %v2425
        %2427 = vmatmul.f32.gmra.mxu0 %v1572
        %v2428 = vpop.f32.mrf.mxu0
        %v2429 = vadd.f32 0.0, %v2428
        %2430 = vmatmul.f32.gmra.mxu0 %v1575
        %v2431 = vpop.f32.mrf.mxu0
        %v2432 = vadd.f32 0.0, %v2431
        %2433 = vmatmul.f32.gmra.mxu0 %v1578
        %v2434 = vpop.f32.mrf.mxu0
        %v2435 = vadd.f32 0.0, %v2434
        %2436 = vmatmul.f32.gmra.mxu0 %v1581
        %v2437 = vpop.f32.mrf.mxu0
        %v2438 = vadd.f32 0.0, %v2437
        %2439 = vmatmul.f32.gmra.mxu0 %v1584
        %v2440 = vpop.f32.mrf.mxu0
        %v2441 = vadd.f32 0.0, %v2440
        %2442 = vmatmul.f32.gmra.mxu0 %v1736
        %v2443 = vpop.f32.mrf.mxu0
        %v2444 = vadd.f32 0.0, %v2443
        %2445 = vmatmul.f32.gmra.mxu0 %v1739
        %v2446 = vpop.f32.mrf.mxu0
        %v2447 = vadd.f32 0.0, %v2446
        %2448 = vmatmul.f32.gmra.mxu0 %v1742
        %v2449 = vpop.f32.mrf.mxu0
        %v2450 = vadd.f32 0.0, %v2449
        %2451 = vmatmul.f32.gmra.mxu0 %v1745
        %v2452 = vpop.f32.mrf.mxu0
        %v2453 = vadd.f32 0.0, %v2452
        %2454 = vmatmul.f32.gmra.mxu0 %v1748
        %v2455 = vpop.f32.mrf.mxu0
        %v2456 = vadd.f32 0.0, %v2455
        %2457 = vmatmul.f32.gmra.mxu0 %v1751
        %v2458 = vpop.f32.mrf.mxu0
        %v2459 = vadd.f32 0.0, %v2458
        %2460 = vmatmul.f32.gmra.mxu0 %v1754
        %v2461 = vpop.f32.mrf.mxu0
        %v2462 = vadd.f32 0.0, %v2461
        %2463 = vmatmul.f32.gmra.mxu0 %v1757
        %v2464 = vpop.f32.mrf.mxu0
        %v2465 = vadd.f32 0.0, %v2464
        %2466 = vdwg.mxu0
        %v2468 = vsel %vm1586, %v2346, 0
        %2470 = vmatpush.msra.mxu0 0.0
        %2471 = vmatpush.msra.mxu0 0.0
        %2472 = vmatpush.msra.mxu0 0.0
        %2473 = vmatpush.msra.mxu0 0.0
        %2474 = vmatpush.msra.mxu0 0.0
        %2475 = vmatpush.msra.mxu0 0.0
        %2476 = vmatpush.msra.mxu0 0.0
        %2477 = vmatpush.msra.mxu0 0.0
        %2478 = vmatpush.msra.mxu0 0.0
        %2479 = vmatpush.msra.mxu0 0.0
        %2480 = vmatpush.msra.mxu0 0.0
        %2481 = vmatpush.msra.mxu0 0.0
        %2482 = vmatpush.msra.mxu0 0.0
        %2483 = vmatpush.msra.mxu0 %v2468
        %2484 = vmatpush.msra.mxu0 %v2345
        %2485 = vmatpush.msra.mxu0 %v2344
        %2486 = vmatmul.f32.gmra.mxu0 %v1491
        %v2487 = vpop.f32.mrf.mxu0
        %v2488 = vadd.f32 %v2372, %v2487
        %2489 = vmatmul.f32.gmra.mxu0 %v1494
        %v2490 = vpop.f32.mrf.mxu0
        %v2491 = vadd.f32 %v2375, %v2490
        %2492 = vmatmul.f32.gmra.mxu0 %v1497
        %v2493 = vpop.f32.mrf.mxu0
        %v2494 = vadd.f32 %v2378, %v2493
        %2495 = vmatmul.f32.gmra.mxu0 %v1500
        %v2496 = vpop.f32.mrf.mxu0
        %v2497 = vadd.f32 %v2381, %v2496
        %2498 = vmatmul.f32.gmra.mxu0 %v1503
        %v2499 = vpop.f32.mrf.mxu0
        %v2500 = vadd.f32 %v2384, %v2499
        %2501 = vmatmul.f32.gmra.mxu0 %v1506
        %v2502 = vpop.f32.mrf.mxu0
        %v2503 = vadd.f32 %v2387, %v2502
        %2504 = vmatmul.f32.gmra.mxu0 %v1509
        %v2505 = vpop.f32.mrf.mxu0
        %v2506 = vadd.f32 %v2390, %v2505
        %2507 = vmatmul.f32.gmra.mxu0 %v1512
        %v2508 = vpop.f32.mrf.mxu0
        %v2509 = vadd.f32 %v2393, %v2508
        %2510 = vmatmul.f32.gmra.mxu0 %v1515
        %v2511 = vpop.f32.mrf.mxu0
        %v2512 = vadd.f32 %v2396, %v2511
        %2513 = vmatmul.f32.gmra.mxu0 %v1518
        %v2514 = vpop.f32.mrf.mxu0
        %v2515 = vadd.f32 %v2399, %v2514
        %2516 = vmatmul.f32.gmra.mxu0 %v1521
        %v2517 = vpop.f32.mrf.mxu0
        %v2518 = vadd.f32 %v2402, %v2517
        %2519 = vmatmul.f32.gmra.mxu0 %v1524
        %v2520 = vpop.f32.mrf.mxu0
        %v2521 = vadd.f32 %v2405, %v2520
        %2522 = vmatmul.f32.gmra.mxu0 %v1527
        %v2523 = vpop.f32.mrf.mxu0
        %v2524 = vadd.f32 %v2408, %v2523
        %2525 = vmatmul.f32.gmra.mxu0 %v1530
        %v2526 = vpop.f32.mrf.mxu0
        %v2527 = vadd.f32 %v2411, %v2526
        %2528 = vmatmul.f32.gmra.mxu0 %v1533
        %v2529 = vpop.f32.mrf.mxu0
        %v2530 = vadd.f32 %v2414, %v2529
        %2531 = vmatmul.f32.gmra.mxu0 %v1536
        %v2532 = vpop.f32.mrf.mxu0
        %v2533 = vadd.f32 %v2417, %v2532
        %2534 = vmatmul.f32.gmra.mxu0 %v1539
        %v2535 = vpop.f32.mrf.mxu0
        %v2536 = vadd.f32 %v2420, %v2535
        %2537 = vmatmul.f32.gmra.mxu0 %v1542
        %v2538 = vpop.f32.mrf.mxu0
        %v2539 = vadd.f32 %v2423, %v2538
        %2540 = vmatmul.f32.gmra.mxu0 %v1545
        %v2541 = vpop.f32.mrf.mxu0
        %v2542 = vadd.f32 %v2426, %v2541
        %2543 = vmatmul.f32.gmra.mxu0 %v1548
        %v2544 = vpop.f32.mrf.mxu0
        %v2545 = vadd.f32 %v2429, %v2544
        %2546 = vmatmul.f32.gmra.mxu0 %v1551
        %v2547 = vpop.f32.mrf.mxu0
        %v2548 = vadd.f32 %v2432, %v2547
        %2549 = vmatmul.f32.gmra.mxu0 %v1554
        %v2550 = vpop.f32.mrf.mxu0
        %v2551 = vadd.f32 %v2435, %v2550
        %2552 = vmatmul.f32.gmra.mxu0 %v1557
        %v2553 = vpop.f32.mrf.mxu0
        %v2554 = vadd.f32 %v2438, %v2553
        %2555 = vmatmul.f32.gmra.mxu0 %v1560
        %v2556 = vpop.f32.mrf.mxu0
        %v2557 = vadd.f32 %v2441, %v2556
        %2558 = vmatmul.f32.gmra.mxu0 %v1563
        %v2559 = vpop.f32.mrf.mxu0
        %v2560 = vadd.f32 %v2444, %v2559
        %2561 = vmatmul.f32.gmra.mxu0 %v1566
        %v2562 = vpop.f32.mrf.mxu0
        %v2563 = vadd.f32 %v2447, %v2562
        %2564 = vmatmul.f32.gmra.mxu0 %v1569
        %v2565 = vpop.f32.mrf.mxu0
        %v2566 = vadd.f32 %v2450, %v2565
        %2567 = vmatmul.f32.gmra.mxu0 %v1572
        %v2568 = vpop.f32.mrf.mxu0
        %v2569 = vadd.f32 %v2453, %v2568
        %2570 = vmatmul.f32.gmra.mxu0 %v1575
        %v2571 = vpop.f32.mrf.mxu0
        %v2572 = vadd.f32 %v2456, %v2571
        %2573 = vmatmul.f32.gmra.mxu0 %v1578
        %v2574 = vpop.f32.mrf.mxu0
        %v2575 = vadd.f32 %v2459, %v2574
        %2576 = vmatmul.f32.gmra.mxu0 %v1581
        %v2577 = vpop.f32.mrf.mxu0
        %v2578 = vadd.f32 %v2462, %v2577
        %2579 = vmatmul.f32.gmra.mxu0 %v1584
        %v2580 = vpop.f32.mrf.mxu0
        %v2581 = vadd.f32 %v2465, %v2580
        %2582 = vdwg.mxu0
        %s2583 = scalar_lea.vmem [#allocation7], 48
        %v2584 = vld [vmem:[%s2583] sm:$0xff]
        %v2585 = vld [vmem:[%s2583 + $0x8] sm:$0xff]
        %v2586 = vld [vmem:[%s2583 + $0x10] sm:$0xf]
        %v2588 = vsel %vm1586, %v2586, 0
        %2590 = vmatpush.msra.mxu0 0.0
        %2591 = vmatpush.msra.mxu0 0.0
        %2592 = vmatpush.msra.mxu0 0.0
        %2593 = vmatpush.msra.mxu0 0.0
        %2594 = vmatpush.msra.mxu0 0.0
        %2595 = vmatpush.msra.mxu0 0.0
        %2596 = vmatpush.msra.mxu0 0.0
        %2597 = vmatpush.msra.mxu0 0.0
        %2598 = vmatpush.msra.mxu0 0.0
        %2599 = vmatpush.msra.mxu0 0.0
        %2600 = vmatpush.msra.mxu0 0.0
        %2601 = vmatpush.msra.mxu0 0.0
        %2602 = vmatpush.msra.mxu0 0.0
        %2603 = vmatpush.msra.mxu0 %v2588
        %2604 = vmatpush.msra.mxu0 %v2585
        %2605 = vmatpush.msra.mxu0 %v2584
        %2606 = vmatmul.f32.gmra.mxu0 %v1539
        %v2607 = vpop.f32.mrf.mxu0
        %v2608 = vadd.f32 0.0, %v2607
        %2609 = vmatmul.f32.gmra.mxu0 %v1542
        %v2610 = vpop.f32.mrf.mxu0
        %v2611 = vadd.f32 0.0, %v2610
        %2612 = vmatmul.f32.gmra.mxu0 %v1545
        %v2613 = vpop.f32.mrf.mxu0
        %v2614 = vadd.f32 0.0, %v2613
        %2615 = vmatmul.f32.gmra.mxu0 %v1548
        %v2616 = vpop.f32.mrf.mxu0
        %v2617 = vadd.f32 0.0, %v2616
        %2618 = vmatmul.f32.gmra.mxu0 %v1551
        %v2619 = vpop.f32.mrf.mxu0
        %v2620 = vadd.f32 0.0, %v2619
        %2621 = vmatmul.f32.gmra.mxu0 %v1554
        %v2622 = vpop.f32.mrf.mxu0
        %v2623 = vadd.f32 0.0, %v2622
        %2624 = vmatmul.f32.gmra.mxu0 %v1557
        %v2625 = vpop.f32.mrf.mxu0
        %v2626 = vadd.f32 0.0, %v2625
        %2627 = vmatmul.f32.gmra.mxu0 %v1560
        %v2628 = vpop.f32.mrf.mxu0
        %v2629 = vadd.f32 0.0, %v2628
        %2630 = vmatmul.f32.gmra.mxu0 %v1563
        %v2631 = vpop.f32.mrf.mxu0
        %v2632 = vadd.f32 0.0, %v2631
        %2633 = vmatmul.f32.gmra.mxu0 %v1566
        %v2634 = vpop.f32.mrf.mxu0
        %v2635 = vadd.f32 0.0, %v2634
        %2636 = vmatmul.f32.gmra.mxu0 %v1569
        %v2637 = vpop.f32.mrf.mxu0
        %v2638 = vadd.f32 0.0, %v2637
        %2639 = vmatmul.f32.gmra.mxu0 %v1572
        %v2640 = vpop.f32.mrf.mxu0
        %v2641 = vadd.f32 0.0, %v2640
        %2642 = vmatmul.f32.gmra.mxu0 %v1575
        %v2643 = vpop.f32.mrf.mxu0
        %v2644 = vadd.f32 0.0, %v2643
        %2645 = vmatmul.f32.gmra.mxu0 %v1578
        %v2646 = vpop.f32.mrf.mxu0
        %v2647 = vadd.f32 0.0, %v2646
        %2648 = vmatmul.f32.gmra.mxu0 %v1581
        %v2649 = vpop.f32.mrf.mxu0
        %v2650 = vadd.f32 0.0, %v2649
        %2651 = vmatmul.f32.gmra.mxu0 %v1584
        %v2652 = vpop.f32.mrf.mxu0
        %v2653 = vadd.f32 0.0, %v2652
        %2654 = vmatmul.f32.gmra.mxu0 %v2032
        %v2655 = vpop.f32.mrf.mxu0
        %v2656 = vadd.f32 0.0, %v2655
        %2657 = vmatmul.f32.gmra.mxu0 %v2035
        %v2658 = vpop.f32.mrf.mxu0
        %v2659 = vadd.f32 0.0, %v2658
        %2660 = vmatmul.f32.gmra.mxu0 %v2038
        %v2661 = vpop.f32.mrf.mxu0
        %v2662 = vadd.f32 0.0, %v2661
        %2663 = vmatmul.f32.gmra.mxu0 %v2041
        %v2664 = vpop.f32.mrf.mxu0
        %v2665 = vadd.f32 0.0, %v2664
        %2666 = vmatmul.f32.gmra.mxu0 %v2044
        %v2667 = vpop.f32.mrf.mxu0
        %v2668 = vadd.f32 0.0, %v2667
        %2669 = vmatmul.f32.gmra.mxu0 %v2047
        %v2670 = vpop.f32.mrf.mxu0
        %v2671 = vadd.f32 0.0, %v2670
        %2672 = vmatmul.f32.gmra.mxu0 %v2050
        %v2673 = vpop.f32.mrf.mxu0
        %v2674 = vadd.f32 0.0, %v2673
        %2675 = vmatmul.f32.gmra.mxu0 %v2053
        %v2676 = vpop.f32.mrf.mxu0
        %v2677 = vadd.f32 0.0, %v2676
        %2678 = vmatmul.f32.gmra.mxu0 %v2056
        %v2679 = vpop.f32.mrf.mxu0
        %v2680 = vadd.f32 0.0, %v2679
        %2681 = vmatmul.f32.gmra.mxu0 %v2059
        %v2682 = vpop.f32.mrf.mxu0
        %v2683 = vadd.f32 0.0, %v2682
        %2684 = vmatmul.f32.gmra.mxu0 %v2062
        %v2685 = vpop.f32.mrf.mxu0
        %v2686 = vadd.f32 0.0, %v2685
        %2687 = vmatmul.f32.gmra.mxu0 %v2065
        %v2688 = vpop.f32.mrf.mxu0
        %v2689 = vadd.f32 0.0, %v2688
        %2690 = vmatmul.f32.gmra.mxu0 %v2068
        %v2691 = vpop.f32.mrf.mxu0
        %v2692 = vadd.f32 0.0, %v2691
        %2693 = vmatmul.f32.gmra.mxu0 %v2071
        %v2694 = vpop.f32.mrf.mxu0
        %v2695 = vadd.f32 0.0, %v2694
        %2696 = vmatmul.f32.gmra.mxu0 %v2074
        %v2697 = vpop.f32.mrf.mxu0
        %v2698 = vadd.f32 0.0, %v2697
        %2699 = vmatmul.f32.gmra.mxu0 %v2077
        %v2700 = vpop.f32.mrf.mxu0
        %v2701 = vadd.f32 0.0, %v2700
        %2702 = vdwg.mxu0
        %v2703 = vadd.f32 %v2488, %v2608
        %v2704 = vadd.f32 %v2491, %v2611
        %v2705 = vadd.f32 %v2494, %v2614
        %v2706 = vadd.f32 %v2497, %v2617
        %v2707 = vadd.f32 %v2500, %v2620
        %v2708 = vadd.f32 %v2503, %v2623
        %v2709 = vadd.f32 %v2506, %v2626
        %v2710 = vadd.f32 %v2509, %v2629
        %v2711 = vadd.f32 %v2512, %v2632
        %v2712 = vadd.f32 %v2515, %v2635
        %v2713 = vadd.f32 %v2518, %v2638
        %v2714 = vadd.f32 %v2521, %v2641
        %v2715 = vadd.f32 %v2524, %v2644
        %v2716 = vadd.f32 %v2527, %v2647
        %v2717 = vadd.f32 %v2530, %v2650
        %v2718 = vadd.f32 %v2533, %v2653
        %v2719 = vadd.f32 %v2536, %v2656
        %v2720 = vadd.f32 %v2539, %v2659
        %v2721 = vadd.f32 %v2542, %v2662
        %v2722 = vadd.f32 %v2545, %v2665
        %v2723 = vadd.f32 %v2548, %v2668
        %v2724 = vadd.f32 %v2551, %v2671
        %v2725 = vadd.f32 %v2554, %v2674
        %v2726 = vadd.f32 %v2557, %v2677
        %v2727 = vadd.f32 %v2560, %v2680
        %v2728 = vadd.f32 %v2563, %v2683
        %v2729 = vadd.f32 %v2566, %v2686
        %v2730 = vadd.f32 %v2569, %v2689
        %v2731 = vadd.f32 %v2572, %v2692
        %v2732 = vadd.f32 %v2575, %v2695
        %v2733 = vadd.f32 %v2578, %v2698
        %v2734 = vadd.f32 %v2581, %v2701
        %v2735 = vld [vmem:[#allocation7] sm:$0xff]
        %v2736 = vld [vmem:[#allocation7 + $0x8] sm:$0xff]
        %v2737 = vld [vmem:[#allocation7 + $0x10] sm:$0xf]
        %v2739 = vsel %vm1489, %v1435, 0
        %v2742 = vsel %vm1489, %v1438, 0
        %v2745 = vsel %vm1489, %v1441, 0
        %v2748 = vsel %vm1489, %v1444, 0
        %v2751 = vsel %vm1489, %v1447, 0
        %v2754 = vsel %vm1489, %v1450, 0
        %v2757 = vsel %vm1489, %v1453, 0
        %v2760 = vsel %vm1489, %v1456, 0
        %v2763 = vsel %vm1489, %v1459, 0
        %v2766 = vsel %vm1489, %v1462, 0
        %v2769 = vsel %vm1489, %v1465, 0
        %v2772 = vsel %vm1489, %v1468, 0
        %v2775 = vsel %vm1489, %v1471, 0
        %v2778 = vsel %vm1489, %v1474, 0
        %v2781 = vsel %vm1489, %v1477, 0
        %v2784 = vsel %vm1489, %v1480, 0
        %v2787 = vsel %vm1586, %v2737, 0
        %2789 = vmatpush.msra.mxu0 0.0
        %2790 = vmatpush.msra.mxu0 0.0
        %2791 = vmatpush.msra.mxu0 0.0
        %2792 = vmatpush.msra.mxu0 0.0
        %2793 = vmatpush.msra.mxu0 0.0
        %2794 = vmatpush.msra.mxu0 0.0
        %2795 = vmatpush.msra.mxu0 0.0
        %2796 = vmatpush.msra.mxu0 0.0
        %2797 = vmatpush.msra.mxu0 0.0
        %2798 = vmatpush.msra.mxu0 0.0
        %2799 = vmatpush.msra.mxu0 0.0
        %2800 = vmatpush.msra.mxu0 0.0
        %2801 = vmatpush.msra.mxu0 0.0
        %2802 = vmatpush.msra.mxu0 %v2787
        %2803 = vmatpush.msra.mxu0 %v2736
        %2804 = vmatpush.msra.mxu0 %v2735
        %2805 = vmatmul.f32.gmra.mxu0 %v1563
        %v2806 = vpop.f32.mrf.mxu0
        %v2807 = vadd.f32 0.0, %v2806
        %2808 = vmatmul.f32.gmra.mxu0 %v1566
        %v2809 = vpop.f32.mrf.mxu0
        %v2810 = vadd.f32 0.0, %v2809
        %2811 = vmatmul.f32.gmra.mxu0 %v1569
        %v2812 = vpop.f32.mrf.mxu0
        %v2813 = vadd.f32 0.0, %v2812
        %2814 = vmatmul.f32.gmra.mxu0 %v1572
        %v2815 = vpop.f32.mrf.mxu0
        %v2816 = vadd.f32 0.0, %v2815
        %2817 = vmatmul.f32.gmra.mxu0 %v1575
        %v2818 = vpop.f32.mrf.mxu0
        %v2819 = vadd.f32 0.0, %v2818
        %2820 = vmatmul.f32.gmra.mxu0 %v1578
        %v2821 = vpop.f32.mrf.mxu0
        %v2822 = vadd.f32 0.0, %v2821
        %2823 = vmatmul.f32.gmra.mxu0 %v1581
        %v2824 = vpop.f32.mrf.mxu0
        %v2825 = vadd.f32 0.0, %v2824
        %2826 = vmatmul.f32.gmra.mxu0 %v1584
        %v2827 = vpop.f32.mrf.mxu0
        %v2828 = vadd.f32 0.0, %v2827
        %2829 = vmatmul.f32.gmra.mxu0 %v1736
        %v2830 = vpop.f32.mrf.mxu0
        %v2831 = vadd.f32 0.0, %v2830
        %2832 = vmatmul.f32.gmra.mxu0 %v1739
        %v2833 = vpop.f32.mrf.mxu0
        %v2834 = vadd.f32 0.0, %v2833
        %2835 = vmatmul.f32.gmra.mxu0 %v1742
        %v2836 = vpop.f32.mrf.mxu0
        %v2837 = vadd.f32 0.0, %v2836
        %2838 = vmatmul.f32.gmra.mxu0 %v1745
        %v2839 = vpop.f32.mrf.mxu0
        %v2840 = vadd.f32 0.0, %v2839
        %2841 = vmatmul.f32.gmra.mxu0 %v1748
        %v2842 = vpop.f32.mrf.mxu0
        %v2843 = vadd.f32 0.0, %v2842
        %2844 = vmatmul.f32.gmra.mxu0 %v1751
        %v2845 = vpop.f32.mrf.mxu0
        %v2846 = vadd.f32 0.0, %v2845
        %2847 = vmatmul.f32.gmra.mxu0 %v1754
        %v2848 = vpop.f32.mrf.mxu0
        %v2849 = vadd.f32 0.0, %v2848
        %2850 = vmatmul.f32.gmra.mxu0 %v1757
        %v2851 = vpop.f32.mrf.mxu0
        %v2852 = vadd.f32 0.0, %v2851
        %2853 = vmatmul.f32.gmra.mxu0 %v2739
        %v2854 = vpop.f32.mrf.mxu0
        %v2855 = vadd.f32 0.0, %v2854
        %2856 = vmatmul.f32.gmra.mxu0 %v2742
        %v2857 = vpop.f32.mrf.mxu0
        %v2858 = vadd.f32 0.0, %v2857
        %2859 = vmatmul.f32.gmra.mxu0 %v2745
        %v2860 = vpop.f32.mrf.mxu0
        %v2861 = vadd.f32 0.0, %v2860
        %2862 = vmatmul.f32.gmra.mxu0 %v2748
        %v2863 = vpop.f32.mrf.mxu0
        %v2864 = vadd.f32 0.0, %v2863
        %2865 = vmatmul.f32.gmra.mxu0 %v2751
        %v2866 = vpop.f32.mrf.mxu0
        %v2867 = vadd.f32 0.0, %v2866
        %2868 = vmatmul.f32.gmra.mxu0 %v2754
        %v2869 = vpop.f32.mrf.mxu0
        %v2870 = vadd.f32 0.0, %v2869
        %2871 = vmatmul.f32.gmra.mxu0 %v2757
        %v2872 = vpop.f32.mrf.mxu0
        %v2873 = vadd.f32 0.0, %v2872
        %2874 = vmatmul.f32.gmra.mxu0 %v2760
        %v2875 = vpop.f32.mrf.mxu0
        %v2876 = vadd.f32 0.0, %v2875
        %2877 = vmatmul.f32.gmra.mxu0 %v2763
        %v2878 = vpop.f32.mrf.mxu0
        %v2879 = vadd.f32 0.0, %v2878
        %2880 = vmatmul.f32.gmra.mxu0 %v2766
        %v2881 = vpop.f32.mrf.mxu0
        %v2882 = vadd.f32 0.0, %v2881
        %2883 = vmatmul.f32.gmra.mxu0 %v2769
        %v2884 = vpop.f32.mrf.mxu0
        %v2885 = vadd.f32 0.0, %v2884
        %2886 = vmatmul.f32.gmra.mxu0 %v2772
        %v2887 = vpop.f32.mrf.mxu0
        %v2888 = vadd.f32 0.0, %v2887
        %2889 = vmatmul.f32.gmra.mxu0 %v2775
        %v2890 = vpop.f32.mrf.mxu0
        %v2891 = vadd.f32 0.0, %v2890
        %2892 = vmatmul.f32.gmra.mxu0 %v2778
        %v2893 = vpop.f32.mrf.mxu0
        %v2894 = vadd.f32 0.0, %v2893
        %2895 = vmatmul.f32.gmra.mxu0 %v2781
        %v2896 = vpop.f32.mrf.mxu0
        %v2897 = vadd.f32 0.0, %v2896
        %2898 = vmatmul.f32.gmra.mxu0 %v2784
        %v2899 = vpop.f32.mrf.mxu0
        %v2900 = vadd.f32 0.0, %v2899
        %2901 = vdwg.mxu0
        %v2902 = vadd.f32 %v2703, %v2807
        %v2903 = vadd.f32 %v2704, %v2810
        %v2904 = vadd.f32 %v2705, %v2813
        %v2905 = vadd.f32 %v2706, %v2816
        %v2906 = vadd.f32 %v2707, %v2819
        %v2907 = vadd.f32 %v2708, %v2822
        %v2908 = vadd.f32 %v2709, %v2825
        %v2909 = vadd.f32 %v2710, %v2828
        %v2910 = vadd.f32 %v2711, %v2831
        %v2911 = vadd.f32 %v2712, %v2834
        %v2912 = vadd.f32 %v2713, %v2837
        %v2913 = vadd.f32 %v2714, %v2840
        %v2914 = vadd.f32 %v2715, %v2843
        %v2915 = vadd.f32 %v2716, %v2846
        %v2916 = vadd.f32 %v2717, %v2849
        %v2917 = vadd.f32 %v2718, %v2852
        %v2918 = vadd.f32 %v2719, %v2855
        %v2919 = vadd.f32 %v2720, %v2858
        %v2920 = vadd.f32 %v2721, %v2861
        %v2921 = vadd.f32 %v2722, %v2864
        %v2922 = vadd.f32 %v2723, %v2867
        %v2923 = vadd.f32 %v2724, %v2870
        %v2924 = vadd.f32 %v2725, %v2873
        %v2925 = vadd.f32 %v2726, %v2876
        %v2926 = vadd.f32 %v2727, %v2879
        %v2927 = vadd.f32 %v2728, %v2882
        %v2928 = vadd.f32 %v2729, %v2885
        %v2929 = vadd.f32 %v2730, %v2888
        %v2930 = vadd.f32 %v2731, %v2891
        %v2931 = vadd.f32 %v2732, %v2894
        %v2932 = vadd.f32 %v2733, %v2897
        %v2933 = vadd.f32 %v2734, %v2900
        %v2934 = vadd.f32 %v2902, %v1487
        %v2935 = vadd.f32 %v2903, %v1487
        %v2936 = vadd.f32 %v2904, %v1487
        %v2937 = vadd.f32 %v2905, %v1487
        %v2938 = vadd.f32 %v2906, %v1487
        %v2939 = vadd.f32 %v2907, %v1487
        %v2940 = vadd.f32 %v2908, %v1487
        %v2941 = vadd.f32 %v2909, %v1487
        %v2942 = vadd.f32 %v2910, %v1487
        %v2943 = vadd.f32 %v2911, %v1487
        %v2944 = vadd.f32 %v2912, %v1487
        %v2945 = vadd.f32 %v2913, %v1487
        %v2946 = vadd.f32 %v2914, %v1487
        %v2947 = vadd.f32 %v2915, %v1487
        %v2948 = vadd.f32 %v2916, %v1487
        %v2949 = vadd.f32 %v2917, %v1487
        %v2950 = vadd.f32 %v2918, %v1487
        %v2951 = vadd.f32 %v2919, %v1487
        %v2952 = vadd.f32 %v2920, %v1487
        %v2953 = vadd.f32 %v2921, %v1487
        %v2954 = vadd.f32 %v2922, %v1487
        %v2955 = vadd.f32 %v2923, %v1487
        %v2956 = vadd.f32 %v2924, %v1487
        %v2957 = vadd.f32 %v2925, %v1487
        %v2958 = vadd.f32 %v2926, %v1487
        %v2959 = vadd.f32 %v2927, %v1487
        %v2960 = vadd.f32 %v2928, %v1487
        %v2961 = vadd.f32 %v2929, %v1487
        %v2962 = vadd.f32 %v2930, %v1487
        %v2963 = vadd.f32 %v2931, %v1487
        %v2964 = vadd.f32 %v2932, %v1487
        %v2965 = vadd.f32 %v2933, %v1487
        %v2966 = vld [vmem:[#allocation12] sm:$0x1]
        %v2967 = vld [vmem:[#allocation13] sm:$0xff]
        %v2968 = vld [vmem:[#allocation13 + $0x8] sm:$0xff]
        %v2969 = vld [vmem:[#allocation13 + $0x10] sm:$0xff]
        %v2970 = vld [vmem:[#allocation13 + $0x18] sm:$0xff]
        %v2971 = vld [vmem:[#allocation13 + $0x20] sm:$0xff]
        %v2972 = vld [vmem:[#allocation13 + $0x28] sm:$0xff]
        %v2973 = vld [vmem:[#allocation13 + $0x30] sm:$0xff]
        %v2974 = vld [vmem:[#allocation13 + $0x38] sm:$0xff]
        %v2975 = vld [vmem:[#allocation13 + $0x40] sm:$0xff]
        %v2976 = vld [vmem:[#allocation13 + $0x48] sm:$0xff]
        %v2977 = vld [vmem:[#allocation13 + $0x50] sm:$0xff]
        %v2978 = vld [vmem:[#allocation13 + $0x58] sm:$0xff]
        %v2979 = vld [vmem:[#allocation13 + $0x60] sm:$0xff]
        %v2980 = vld [vmem:[#allocation13 + $0x68] sm:$0xff]
        %v2981 = vld [vmem:[#allocation13 + $0x70] sm:$0xff]
        %v2982 = vld [vmem:[#allocation13 + $0x78] sm:$0xff]
        %v2983 = vld [vmem:[#allocation13 + $0x80] sm:$0xff]
        %v2984 = vld [vmem:[#allocation13 + $0x88] sm:$0xff]
        %v2985 = vld [vmem:[#allocation13 + $0x90] sm:$0xff]
        %v2986 = vld [vmem:[#allocation13 + $0x98] sm:$0xff]
        %v2987 = vld [vmem:[#allocation13 + $0xa0] sm:$0xff]
        %v2988 = vld [vmem:[#allocation13 + $0xa8] sm:$0xff]
        %v2989 = vld [vmem:[#allocation13 + $0xb0] sm:$0xff]
        %v2990 = vld [vmem:[#allocation13 + $0xb8] sm:$0xff]
        %v2991 = vld [vmem:[#allocation13 + $0xc0] sm:$0xff]
        %v2992 = vld [vmem:[#allocation13 + $0xc8] sm:$0xff]
        %v2993 = vld [vmem:[#allocation13 + $0xd0] sm:$0xff]
        %v2994 = vld [vmem:[#allocation13 + $0xd8] sm:$0xff]
        %v2995 = vld [vmem:[#allocation13 + $0xe0] sm:$0xff]
        %v2996 = vld [vmem:[#allocation13 + $0xe8] sm:$0xff]
        %v2997 = vld [vmem:[#allocation13 + $0xf0] sm:$0xff]
        %v2998 = vld [vmem:[#allocation13 + $0xf8] sm:$0xff]
        %v2999 = vld [vmem:[#allocation13 + $0x100] sm:$0xff]
        %v3000 = vld [vmem:[#allocation13 + $0x108] sm:$0xff]
        %v3001 = vld [vmem:[#allocation13 + $0x110] sm:$0xff]
        %v3002 = vld [vmem:[#allocation13 + $0x118] sm:$0xff]
        %v3003 = vld [vmem:[#allocation13 + $0x120] sm:$0xff]
        %v3004 = vld [vmem:[#allocation13 + $0x128] sm:$0xff]
        %v3005 = vld [vmem:[#allocation13 + $0x130] sm:$0xff]
        %v3006 = vld [vmem:[#allocation13 + $0x138] sm:$0xff]
        %v3007 = vld [vmem:[#allocation13 + $0x140] sm:$0xff]
        %v3008 = vld [vmem:[#allocation13 + $0x148] sm:$0xff]
        %v3009 = vld [vmem:[#allocation13 + $0x150] sm:$0xff]
        %v3010 = vld [vmem:[#allocation13 + $0x158] sm:$0xff]
        %v3011 = vld [vmem:[#allocation13 + $0x160] sm:$0xff]
        %v3012 = vld [vmem:[#allocation13 + $0x168] sm:$0xff]
        %v3013 = vld [vmem:[#allocation13 + $0x170] sm:$0xff]
        %v3014 = vld [vmem:[#allocation13 + $0x178] sm:$0xff]
        %v3015 = vld [vmem:[#allocation13 + $0x180] sm:$0xff]
        %v3016 = vld [vmem:[#allocation13 + $0x188] sm:$0xff]
        %v3017 = vld [vmem:[#allocation13 + $0x190] sm:$0xff]
        %v3018 = vld [vmem:[#allocation13 + $0x198] sm:$0xff]
        %v3019 = vld [vmem:[#allocation13 + $0x1a0] sm:$0xff]
        %v3020 = vld [vmem:[#allocation13 + $0x1a8] sm:$0xff]
        %v3021 = vld [vmem:[#allocation13 + $0x1b0] sm:$0xff]
        %v3022 = vld [vmem:[#allocation13 + $0x1b8] sm:$0xff]
        %v3023 = vld [vmem:[#allocation13 + $0x1c0] sm:$0xff]
        %v3024 = vld [vmem:[#allocation13 + $0x1c8] sm:$0xff]
        %v3025 = vld [vmem:[#allocation13 + $0x1d0] sm:$0xff]
        %v3026 = vld [vmem:[#allocation13 + $0x1d8] sm:$0xff]
        %v3027 = vld [vmem:[#allocation13 + $0x1e0] sm:$0xff]
        %v3028 = vld [vmem:[#allocation13 + $0x1e8] sm:$0xff]
        %v3029 = vld [vmem:[#allocation13 + $0x1f0] sm:$0xff]
        %v3030 = vld [vmem:[#allocation13 + $0x1f8] sm:$0xff]
        %3031 = vmatpush.msra.mxu0 %v2318
        %3032 = vmatpush.msra.mxu0 %v2317
        %3033 = vmatpush.msra.mxu0 %v2316
        %3034 = vmatpush.msra.mxu0 %v2315
        %3035 = vmatpush.msra.mxu0 %v2314
        %3036 = vmatpush.msra.mxu0 %v2313
        %3037 = vmatpush.msra.mxu0 %v2312
        %3038 = vmatpush.msra.mxu0 %v2311
        %3039 = vmatpush.msra.mxu0 %v1629
        %3040 = vmatpush.msra.mxu0 %v1626
        %3041 = vmatpush.msra.mxu0 %v1623
        %3042 = vmatpush.msra.mxu0 %v1620
        %3043 = vmatpush.msra.mxu0 %v1617
        %3044 = vmatpush.msra.mxu0 %v1614
        %3045 = vmatpush.msra.mxu0 %v1611
        %3046 = vmatpush.msra.mxu0 %v1608
        %3047 = vmatmul.f32.gmra.mxu0 %v2967
        %v3048 = vpop.f32.mrf.mxu0
        %v3049 = vadd.f32 0.0, %v3048
        %3050 = vmatmul.f32.gmra.mxu0 %v2969
        %v3051 = vpop.f32.mrf.mxu0
        %v3052 = vadd.f32 0.0, %v3051
        %3053 = vmatmul.f32.gmra.mxu0 %v2971
        %v3054 = vpop.f32.mrf.mxu0
        %v3055 = vadd.f32 0.0, %v3054
        %3056 = vmatmul.f32.gmra.mxu0 %v2973
        %v3057 = vpop.f32.mrf.mxu0
        %v3058 = vadd.f32 0.0, %v3057
        %3059 = vmatmul.f32.gmra.mxu0 %v2975
        %v3060 = vpop.f32.mrf.mxu0
        %v3061 = vadd.f32 0.0, %v3060
        %3062 = vmatmul.f32.gmra.mxu0 %v2977
        %v3063 = vpop.f32.mrf.mxu0
        %v3064 = vadd.f32 0.0, %v3063
        %3065 = vmatmul.f32.gmra.mxu0 %v2979
        %v3066 = vpop.f32.mrf.mxu0
        %v3067 = vadd.f32 0.0, %v3066
        %3068 = vmatmul.f32.gmra.mxu0 %v2981
        %v3069 = vpop.f32.mrf.mxu0
        %v3070 = vadd.f32 0.0, %v3069
        %3071 = vmatmul.f32.gmra.mxu0 %v2983
        %v3072 = vpop.f32.mrf.mxu0
        %v3073 = vadd.f32 0.0, %v3072
        %3074 = vmatmul.f32.gmra.mxu0 %v2985
        %v3075 = vpop.f32.mrf.mxu0
        %v3076 = vadd.f32 0.0, %v3075
        %3077 = vmatmul.f32.gmra.mxu0 %v2987
        %v3078 = vpop.f32.mrf.mxu0
        %v3079 = vadd.f32 0.0, %v3078
        %3080 = vmatmul.f32.gmra.mxu0 %v2989
        %v3081 = vpop.f32.mrf.mxu0
        %v3082 = vadd.f32 0.0, %v3081
        %3083 = vmatmul.f32.gmra.mxu0 %v2991
        %v3084 = vpop.f32.mrf.mxu0
        %v3085 = vadd.f32 0.0, %v3084
        %3086 = vmatmul.f32.gmra.mxu0 %v2993
        %v3087 = vpop.f32.mrf.mxu0
        %v3088 = vadd.f32 0.0, %v3087
        %3089 = vmatmul.f32.gmra.mxu0 %v2995
        %v3090 = vpop.f32.mrf.mxu0
        %v3091 = vadd.f32 0.0, %v3090
        %3092 = vmatmul.f32.gmra.mxu0 %v2997
        %v3093 = vpop.f32.mrf.mxu0
        %v3094 = vadd.f32 0.0, %v3093
        %3095 = vmatmul.f32.gmra.mxu0 %v2999
        %v3096 = vpop.f32.mrf.mxu0
        %v3097 = vadd.f32 0.0, %v3096
        %3098 = vmatmul.f32.gmra.mxu0 %v3001
        %v3099 = vpop.f32.mrf.mxu0
        %v3100 = vadd.f32 0.0, %v3099
        %3101 = vmatmul.f32.gmra.mxu0 %v3003
        %v3102 = vpop.f32.mrf.mxu0
        %v3103 = vadd.f32 0.0, %v3102
        %3104 = vmatmul.f32.gmra.mxu0 %v3005
        %v3105 = vpop.f32.mrf.mxu0
        %v3106 = vadd.f32 0.0, %v3105
        %3107 = vmatmul.f32.gmra.mxu0 %v3007
        %v3108 = vpop.f32.mrf.mxu0
        %v3109 = vadd.f32 0.0, %v3108
        %3110 = vmatmul.f32.gmra.mxu0 %v3009
        %v3111 = vpop.f32.mrf.mxu0
        %v3112 = vadd.f32 0.0, %v3111
        %3113 = vmatmul.f32.gmra.mxu0 %v3011
        %v3114 = vpop.f32.mrf.mxu0
        %v3115 = vadd.f32 0.0, %v3114
        %3116 = vmatmul.f32.gmra.mxu0 %v3013
        %v3117 = vpop.f32.mrf.mxu0
        %v3118 = vadd.f32 0.0, %v3117
        %3119 = vmatmul.f32.gmra.mxu0 %v3015
        %v3120 = vpop.f32.mrf.mxu0
        %v3121 = vadd.f32 0.0, %v3120
        %3122 = vmatmul.f32.gmra.mxu0 %v3017
        %v3123 = vpop.f32.mrf.mxu0
        %v3124 = vadd.f32 0.0, %v3123
        %3125 = vmatmul.f32.gmra.mxu0 %v3019
        %v3126 = vpop.f32.mrf.mxu0
        %v3127 = vadd.f32 0.0, %v3126
        %3128 = vmatmul.f32.gmra.mxu0 %v3021
        %v3129 = vpop.f32.mrf.mxu0
        %v3130 = vadd.f32 0.0, %v3129
        %3131 = vmatmul.f32.gmra.mxu0 %v3023
        %v3132 = vpop.f32.mrf.mxu0
        %v3133 = vadd.f32 0.0, %v3132
        %3134 = vmatmul.f32.gmra.mxu0 %v3025
        %v3135 = vpop.f32.mrf.mxu0
        %v3136 = vadd.f32 0.0, %v3135
        %3137 = vmatmul.f32.gmra.mxu0 %v3027
        %v3138 = vpop.f32.mrf.mxu0
        %v3139 = vadd.f32 0.0, %v3138
        %3140 = vmatmul.f32.gmra.mxu0 %v3029
        %v3141 = vpop.f32.mrf.mxu0
        %v3142 = vadd.f32 0.0, %v3141
        %3143 = vdwg.mxu0
        %3144 = vmatpush.msra.mxu0 %v2334
        %3145 = vmatpush.msra.mxu0 %v2333
        %3146 = vmatpush.msra.mxu0 %v2332
        %3147 = vmatpush.msra.mxu0 %v2331
        %3148 = vmatpush.msra.mxu0 %v2330
        %3149 = vmatpush.msra.mxu0 %v2329
        %3150 = vmatpush.msra.mxu0 %v2328
        %3151 = vmatpush.msra.mxu0 %v2327
        %3152 = vmatpush.msra.mxu0 %v1677
        %3153 = vmatpush.msra.mxu0 %v1674
        %3154 = vmatpush.msra.mxu0 %v1671
        %3155 = vmatpush.msra.mxu0 %v1668
        %3156 = vmatpush.msra.mxu0 %v1665
        %3157 = vmatpush.msra.mxu0 %v1662
        %3158 = vmatpush.msra.mxu0 %v1659
        %3159 = vmatpush.msra.mxu0 %v1656
        %3160 = vmatmul.f32.gmra.mxu0 %v2968
        %v3161 = vpop.f32.mrf.mxu0
        %v3162 = vadd.f32 %v3049, %v3161
        %3163 = vmatmul.f32.gmra.mxu0 %v2970
        %v3164 = vpop.f32.mrf.mxu0
        %v3165 = vadd.f32 %v3052, %v3164
        %3166 = vmatmul.f32.gmra.mxu0 %v2972
        %v3167 = vpop.f32.mrf.mxu0
        %v3168 = vadd.f32 %v3055, %v3167
        %3169 = vmatmul.f32.gmra.mxu0 %v2974
        %v3170 = vpop.f32.mrf.mxu0
        %v3171 = vadd.f32 %v3058, %v3170
        %3172 = vmatmul.f32.gmra.mxu0 %v2976
        %v3173 = vpop.f32.mrf.mxu0
        %v3174 = vadd.f32 %v3061, %v3173
        %3175 = vmatmul.f32.gmra.mxu0 %v2978
        %v3176 = vpop.f32.mrf.mxu0
        %v3177 = vadd.f32 %v3064, %v3176
        %3178 = vmatmul.f32.gmra.mxu0 %v2980
        %v3179 = vpop.f32.mrf.mxu0
        %v3180 = vadd.f32 %v3067, %v3179
        %3181 = vmatmul.f32.gmra.mxu0 %v2982
        %v3182 = vpop.f32.mrf.mxu0
        %v3183 = vadd.f32 %v3070, %v3182
        %3184 = vmatmul.f32.gmra.mxu0 %v2984
        %v3185 = vpop.f32.mrf.mxu0
        %v3186 = vadd.f32 %v3073, %v3185
        %3187 = vmatmul.f32.gmra.mxu0 %v2986
        %v3188 = vpop.f32.mrf.mxu0
        %v3189 = vadd.f32 %v3076, %v3188
        %3190 = vmatmul.f32.gmra.mxu0 %v2988
        %v3191 = vpop.f32.mrf.mxu0
        %v3192 = vadd.f32 %v3079, %v3191
        %3193 = vmatmul.f32.gmra.mxu0 %v2990
        %v3194 = vpop.f32.mrf.mxu0
        %v3195 = vadd.f32 %v3082, %v3194
        %3196 = vmatmul.f32.gmra.mxu0 %v2992
        %v3197 = vpop.f32.mrf.mxu0
        %v3198 = vadd.f32 %v3085, %v3197
        %3199 = vmatmul.f32.gmra.mxu0 %v2994
        %v3200 = vpop.f32.mrf.mxu0
        %v3201 = vadd.f32 %v3088, %v3200
        %3202 = vmatmul.f32.gmra.mxu0 %v2996
        %v3203 = vpop.f32.mrf.mxu0
        %v3204 = vadd.f32 %v3091, %v3203
        %3205 = vmatmul.f32.gmra.mxu0 %v2998
        %v3206 = vpop.f32.mrf.mxu0
        %v3207 = vadd.f32 %v3094, %v3206
        %3208 = vmatmul.f32.gmra.mxu0 %v3000
        %v3209 = vpop.f32.mrf.mxu0
        %v3210 = vadd.f32 %v3097, %v3209
        %3211 = vmatmul.f32.gmra.mxu0 %v3002
        %v3212 = vpop.f32.mrf.mxu0
        %v3213 = vadd.f32 %v3100, %v3212
        %3214 = vmatmul.f32.gmra.mxu0 %v3004
        %v3215 = vpop.f32.mrf.mxu0
        %v3216 = vadd.f32 %v3103, %v3215
        %3217 = vmatmul.f32.gmra.mxu0 %v3006
        %v3218 = vpop.f32.mrf.mxu0
        %v3219 = vadd.f32 %v3106, %v3218
        %3220 = vmatmul.f32.gmra.mxu0 %v3008
        %v3221 = vpop.f32.mrf.mxu0
        %v3222 = vadd.f32 %v3109, %v3221
        %3223 = vmatmul.f32.gmra.mxu0 %v3010
        %v3224 = vpop.f32.mrf.mxu0
        %v3225 = vadd.f32 %v3112, %v3224
        %3226 = vmatmul.f32.gmra.mxu0 %v3012
        %v3227 = vpop.f32.mrf.mxu0
        %v3228 = vadd.f32 %v3115, %v3227
        %3229 = vmatmul.f32.gmra.mxu0 %v3014
        %v3230 = vpop.f32.mrf.mxu0
        %v3231 = vadd.f32 %v3118, %v3230
        %3232 = vmatmul.f32.gmra.mxu0 %v3016
        %v3233 = vpop.f32.mrf.mxu0
        %v3234 = vadd.f32 %v3121, %v3233
        %3235 = vmatmul.f32.gmra.mxu0 %v3018
        %v3236 = vpop.f32.mrf.mxu0
        %v3237 = vadd.f32 %v3124, %v3236
        %3238 = vmatmul.f32.gmra.mxu0 %v3020
        %v3239 = vpop.f32.mrf.mxu0
        %v3240 = vadd.f32 %v3127, %v3239
        %3241 = vmatmul.f32.gmra.mxu0 %v3022
        %v3242 = vpop.f32.mrf.mxu0
        %v3243 = vadd.f32 %v3130, %v3242
        %3244 = vmatmul.f32.gmra.mxu0 %v3024
        %v3245 = vpop.f32.mrf.mxu0
        %v3246 = vadd.f32 %v3133, %v3245
        %3247 = vmatmul.f32.gmra.mxu0 %v3026
        %v3248 = vpop.f32.mrf.mxu0
        %v3249 = vadd.f32 %v3136, %v3248
        %3250 = vmatmul.f32.gmra.mxu0 %v3028
        %v3251 = vpop.f32.mrf.mxu0
        %v3252 = vadd.f32 %v3139, %v3251
        %3253 = vmatmul.f32.gmra.mxu0 %v3030
        %v3254 = vpop.f32.mrf.mxu0
        %v3255 = vadd.f32 %v3142, %v3254
        %3256 = vdwg.mxu0
        %s3257 = scalar_lea.vmem [#allocation13], 512
        %v3258 = vld [vmem:[%s3257] sm:$0xff]
        %v3259 = vld [vmem:[%s3257 + $0x8] sm:$0xff]
        %v3260 = vld [vmem:[%s3257 + $0x10] sm:$0xff]
        %v3261 = vld [vmem:[%s3257 + $0x18] sm:$0xff]
        %v3262 = vld [vmem:[%s3257 + $0x20] sm:$0xff]
        %v3263 = vld [vmem:[%s3257 + $0x28] sm:$0xff]
        %v3264 = vld [vmem:[%s3257 + $0x30] sm:$0xff]
        %v3265 = vld [vmem:[%s3257 + $0x38] sm:$0xff]
        %v3266 = vld [vmem:[%s3257 + $0x40] sm:$0xff]
        %v3267 = vld [vmem:[%s3257 + $0x48] sm:$0xff]
        %v3268 = vld [vmem:[%s3257 + $0x50] sm:$0xff]
        %v3269 = vld [vmem:[%s3257 + $0x58] sm:$0xff]
        %v3270 = vld [vmem:[%s3257 + $0x60] sm:$0xff]
        %v3271 = vld [vmem:[%s3257 + $0x68] sm:$0xff]
        %v3272 = vld [vmem:[%s3257 + $0x70] sm:$0xff]
        %v3273 = vld [vmem:[%s3257 + $0x78] sm:$0xff]
        %v3274 = vld [vmem:[%s3257 + $0x80] sm:$0xff]
        %v3275 = vld [vmem:[%s3257 + $0x88] sm:$0xff]
        %v3276 = vld [vmem:[%s3257 + $0x90] sm:$0xff]
        %v3277 = vld [vmem:[%s3257 + $0x98] sm:$0xff]
        %v3278 = vld [vmem:[%s3257 + $0xa0] sm:$0xff]
        %v3279 = vld [vmem:[%s3257 + $0xa8] sm:$0xff]
        %v3280 = vld [vmem:[%s3257 + $0xb0] sm:$0xff]
        %v3281 = vld [vmem:[%s3257 + $0xb8] sm:$0xff]
        %v3282 = vld [vmem:[%s3257 + $0xc0] sm:$0xff]
        %v3283 = vld [vmem:[%s3257 + $0xc8] sm:$0xff]
        %v3284 = vld [vmem:[%s3257 + $0xd0] sm:$0xff]
        %v3285 = vld [vmem:[%s3257 + $0xd8] sm:$0xff]
        %v3286 = vld [vmem:[%s3257 + $0xe0] sm:$0xff]
        %v3287 = vld [vmem:[%s3257 + $0xe8] sm:$0xff]
        %v3288 = vld [vmem:[%s3257 + $0xf0] sm:$0xff]
        %v3289 = vld [vmem:[%s3257 + $0xf8] sm:$0xff]
        %v3290 = vld [vmem:[%s3257 + $0x100] sm:$0xff]
        %v3291 = vld [vmem:[%s3257 + $0x108] sm:$0xff]
        %v3292 = vld [vmem:[%s3257 + $0x110] sm:$0xff]
        %v3293 = vld [vmem:[%s3257 + $0x118] sm:$0xff]
        %v3294 = vld [vmem:[%s3257 + $0x120] sm:$0xff]
        %v3295 = vld [vmem:[%s3257 + $0x128] sm:$0xff]
        %v3296 = vld [vmem:[%s3257 + $0x130] sm:$0xff]
        %v3297 = vld [vmem:[%s3257 + $0x138] sm:$0xff]
        %v3298 = vld [vmem:[%s3257 + $0x140] sm:$0xff]
        %v3299 = vld [vmem:[%s3257 + $0x148] sm:$0xff]
        %v3300 = vld [vmem:[%s3257 + $0x150] sm:$0xff]
        %v3301 = vld [vmem:[%s3257 + $0x158] sm:$0xff]
        %v3302 = vld [vmem:[%s3257 + $0x160] sm:$0xff]
        %v3303 = vld [vmem:[%s3257 + $0x168] sm:$0xff]
        %v3304 = vld [vmem:[%s3257 + $0x170] sm:$0xff]
        %v3305 = vld [vmem:[%s3257 + $0x178] sm:$0xff]
        %v3306 = vld [vmem:[%s3257 + $0x180] sm:$0xff]
        %v3307 = vld [vmem:[%s3257 + $0x188] sm:$0xff]
        %v3308 = vld [vmem:[%s3257 + $0x190] sm:$0xff]
        %v3309 = vld [vmem:[%s3257 + $0x198] sm:$0xff]
        %v3310 = vld [vmem:[%s3257 + $0x1a0] sm:$0xff]
        %v3311 = vld [vmem:[%s3257 + $0x1a8] sm:$0xff]
        %v3312 = vld [vmem:[%s3257 + $0x1b0] sm:$0xff]
        %v3313 = vld [vmem:[%s3257 + $0x1b8] sm:$0xff]
        %v3314 = vld [vmem:[%s3257 + $0x1c0] sm:$0xff]
        %v3315 = vld [vmem:[%s3257 + $0x1c8] sm:$0xff]
        %v3316 = vld [vmem:[%s3257 + $0x1d0] sm:$0xff]
        %v3317 = vld [vmem:[%s3257 + $0x1d8] sm:$0xff]
        %v3318 = vld [vmem:[%s3257 + $0x1e0] sm:$0xff]
        %v3319 = vld [vmem:[%s3257 + $0x1e8] sm:$0xff]
        %v3320 = vld [vmem:[%s3257 + $0x1f0] sm:$0xff]
        %v3321 = vld [vmem:[%s3257 + $0x1f8] sm:$0xff]
        %3322 = vmatpush.msra.mxu0 %v1998
        %3323 = vmatpush.msra.mxu0 %v1997
        %3324 = vmatpush.msra.mxu0 %v1996
        %3325 = vmatpush.msra.mxu0 %v1995
        %3326 = vmatpush.msra.mxu0 %v1994
        %3327 = vmatpush.msra.mxu0 %v1993
        %3328 = vmatpush.msra.mxu0 %v1992
        %3329 = vmatpush.msra.mxu0 %v1991
        %3330 = vmatpush.msra.mxu0 %v1629
        %3331 = vmatpush.msra.mxu0 %v1626
        %3332 = vmatpush.msra.mxu0 %v1623
        %3333 = vmatpush.msra.mxu0 %v1620
        %3334 = vmatpush.msra.mxu0 %v1617
        %3335 = vmatpush.msra.mxu0 %v1614
        %3336 = vmatpush.msra.mxu0 %v1611
        %3337 = vmatpush.msra.mxu0 %v1608
        %3338 = vmatmul.f32.gmra.mxu0 %v3258
        %v3339 = vpop.f32.mrf.mxu0
        %v3340 = vadd.f32 0.0, %v3339
        %3341 = vmatmul.f32.gmra.mxu0 %v3260
        %v3342 = vpop.f32.mrf.mxu0
        %v3343 = vadd.f32 0.0, %v3342
        %3344 = vmatmul.f32.gmra.mxu0 %v3262
        %v3345 = vpop.f32.mrf.mxu0
        %v3346 = vadd.f32 0.0, %v3345
        %3347 = vmatmul.f32.gmra.mxu0 %v3264
        %v3348 = vpop.f32.mrf.mxu0
        %v3349 = vadd.f32 0.0, %v3348
        %3350 = vmatmul.f32.gmra.mxu0 %v3266
        %v3351 = vpop.f32.mrf.mxu0
        %v3352 = vadd.f32 0.0, %v3351
        %3353 = vmatmul.f32.gmra.mxu0 %v3268
        %v3354 = vpop.f32.mrf.mxu0
        %v3355 = vadd.f32 0.0, %v3354
        %3356 = vmatmul.f32.gmra.mxu0 %v3270
        %v3357 = vpop.f32.mrf.mxu0
        %v3358 = vadd.f32 0.0, %v3357
        %3359 = vmatmul.f32.gmra.mxu0 %v3272
        %v3360 = vpop.f32.mrf.mxu0
        %v3361 = vadd.f32 0.0, %v3360
        %3362 = vmatmul.f32.gmra.mxu0 %v3274
        %v3363 = vpop.f32.mrf.mxu0
        %v3364 = vadd.f32 0.0, %v3363
        %3365 = vmatmul.f32.gmra.mxu0 %v3276
        %v3366 = vpop.f32.mrf.mxu0
        %v3367 = vadd.f32 0.0, %v3366
        %3368 = vmatmul.f32.gmra.mxu0 %v3278
        %v3369 = vpop.f32.mrf.mxu0
        %v3370 = vadd.f32 0.0, %v3369
        %3371 = vmatmul.f32.gmra.mxu0 %v3280
        %v3372 = vpop.f32.mrf.mxu0
        %v3373 = vadd.f32 0.0, %v3372
        %3374 = vmatmul.f32.gmra.mxu0 %v3282
        %v3375 = vpop.f32.mrf.mxu0
        %v3376 = vadd.f32 0.0, %v3375
        %3377 = vmatmul.f32.gmra.mxu0 %v3284
        %v3378 = vpop.f32.mrf.mxu0
        %v3379 = vadd.f32 0.0, %v3378
        %3380 = vmatmul.f32.gmra.mxu0 %v3286
        %v3381 = vpop.f32.mrf.mxu0
        %v3382 = vadd.f32 0.0, %v3381
        %3383 = vmatmul.f32.gmra.mxu0 %v3288
        %v3384 = vpop.f32.mrf.mxu0
        %v3385 = vadd.f32 0.0, %v3384
        %3386 = vmatmul.f32.gmra.mxu0 %v3290
        %v3387 = vpop.f32.mrf.mxu0
        %v3388 = vadd.f32 0.0, %v3387
        %3389 = vmatmul.f32.gmra.mxu0 %v3292
        %v3390 = vpop.f32.mrf.mxu0
        %v3391 = vadd.f32 0.0, %v3390
        %3392 = vmatmul.f32.gmra.mxu0 %v3294
        %v3393 = vpop.f32.mrf.mxu0
        %v3394 = vadd.f32 0.0, %v3393
        %3395 = vmatmul.f32.gmra.mxu0 %v3296
        %v3396 = vpop.f32.mrf.mxu0
        %v3397 = vadd.f32 0.0, %v3396
        %3398 = vmatmul.f32.gmra.mxu0 %v3298
        %v3399 = vpop.f32.mrf.mxu0
        %v3400 = vadd.f32 0.0, %v3399
        %3401 = vmatmul.f32.gmra.mxu0 %v3300
        %v3402 = vpop.f32.mrf.mxu0
        %v3403 = vadd.f32 0.0, %v3402
        %3404 = vmatmul.f32.gmra.mxu0 %v3302
        %v3405 = vpop.f32.mrf.mxu0
        %v3406 = vadd.f32 0.0, %v3405
        %3407 = vmatmul.f32.gmra.mxu0 %v3304
        %v3408 = vpop.f32.mrf.mxu0
        %v3409 = vadd.f32 0.0, %v3408
        %3410 = vmatmul.f32.gmra.mxu0 %v3306
        %v3411 = vpop.f32.mrf.mxu0
        %v3412 = vadd.f32 0.0, %v3411
        %3413 = vmatmul.f32.gmra.mxu0 %v3308
        %v3414 = vpop.f32.mrf.mxu0
        %v3415 = vadd.f32 0.0, %v3414
        %3416 = vmatmul.f32.gmra.mxu0 %v3310
        %v3417 = vpop.f32.mrf.mxu0
        %v3418 = vadd.f32 0.0, %v3417
        %3419 = vmatmul.f32.gmra.mxu0 %v3312
        %v3420 = vpop.f32.mrf.mxu0
        %v3421 = vadd.f32 0.0, %v3420
        %3422 = vmatmul.f32.gmra.mxu0 %v3314
        %v3423 = vpop.f32.mrf.mxu0
        %v3424 = vadd.f32 0.0, %v3423
        %3425 = vmatmul.f32.gmra.mxu0 %v3316
        %v3426 = vpop.f32.mrf.mxu0
        %v3427 = vadd.f32 0.0, %v3426
        %3428 = vmatmul.f32.gmra.mxu0 %v3318
        %v3429 = vpop.f32.mrf.mxu0
        %v3430 = vadd.f32 0.0, %v3429
        %3431 = vmatmul.f32.gmra.mxu0 %v3320
        %v3432 = vpop.f32.mrf.mxu0
        %v3433 = vadd.f32 0.0, %v3432
        %3434 = vdwg.mxu0
        %3435 = vmatpush.msra.mxu0 %v2006
        %3436 = vmatpush.msra.mxu0 %v2005
        %3437 = vmatpush.msra.mxu0 %v2004
        %3438 = vmatpush.msra.mxu0 %v2003
        %3439 = vmatpush.msra.mxu0 %v2002
        %3440 = vmatpush.msra.mxu0 %v2001
        %3441 = vmatpush.msra.mxu0 %v2000
        %3442 = vmatpush.msra.mxu0 %v1999
        %3443 = vmatpush.msra.mxu0 %v1653
        %3444 = vmatpush.msra.mxu0 %v1650
        %3445 = vmatpush.msra.mxu0 %v1647
        %3446 = vmatpush.msra.mxu0 %v1644
        %3447 = vmatpush.msra.mxu0 %v1641
        %3448 = vmatpush.msra.mxu0 %v1638
        %3449 = vmatpush.msra.mxu0 %v1635
        %3450 = vmatpush.msra.mxu0 %v1632
        %3451 = vmatmul.f32.gmra.mxu0 %v3259
        %v3452 = vpop.f32.mrf.mxu0
        %v3453 = vadd.f32 %v3340, %v3452
        %3454 = vmatmul.f32.gmra.mxu0 %v3261
        %v3455 = vpop.f32.mrf.mxu0
        %v3456 = vadd.f32 %v3343, %v3455
        %3457 = vmatmul.f32.gmra.mxu0 %v3263
        %v3458 = vpop.f32.mrf.mxu0
        %v3459 = vadd.f32 %v3346, %v3458
        %3460 = vmatmul.f32.gmra.mxu0 %v3265
        %v3461 = vpop.f32.mrf.mxu0
        %v3462 = vadd.f32 %v3349, %v3461
        %3463 = vmatmul.f32.gmra.mxu0 %v3267
        %v3464 = vpop.f32.mrf.mxu0
        %v3465 = vadd.f32 %v3352, %v3464
        %3466 = vmatmul.f32.gmra.mxu0 %v3269
        %v3467 = vpop.f32.mrf.mxu0
        %v3468 = vadd.f32 %v3355, %v3467
        %3469 = vmatmul.f32.gmra.mxu0 %v3271
        %v3470 = vpop.f32.mrf.mxu0
        %v3471 = vadd.f32 %v3358, %v3470
        %3472 = vmatmul.f32.gmra.mxu0 %v3273
        %v3473 = vpop.f32.mrf.mxu0
        %v3474 = vadd.f32 %v3361, %v3473
        %3475 = vmatmul.f32.gmra.mxu0 %v3275
        %v3476 = vpop.f32.mrf.mxu0
        %v3477 = vadd.f32 %v3364, %v3476
        %3478 = vmatmul.f32.gmra.mxu0 %v3277
        %v3479 = vpop.f32.mrf.mxu0
        %v3480 = vadd.f32 %v3367, %v3479
        %3481 = vmatmul.f32.gmra.mxu0 %v3279
        %v3482 = vpop.f32.mrf.mxu0
        %v3483 = vadd.f32 %v3370, %v3482
        %3484 = vmatmul.f32.gmra.mxu0 %v3281
        %v3485 = vpop.f32.mrf.mxu0
        %v3486 = vadd.f32 %v3373, %v3485
        %3487 = vmatmul.f32.gmra.mxu0 %v3283
        %v3488 = vpop.f32.mrf.mxu0
        %v3489 = vadd.f32 %v3376, %v3488
        %3490 = vmatmul.f32.gmra.mxu0 %v3285
        %v3491 = vpop.f32.mrf.mxu0
        %v3492 = vadd.f32 %v3379, %v3491
        %3493 = vmatmul.f32.gmra.mxu0 %v3287
        %v3494 = vpop.f32.mrf.mxu0
        %v3495 = vadd.f32 %v3382, %v3494
        %3496 = vmatmul.f32.gmra.mxu0 %v3289
        %v3497 = vpop.f32.mrf.mxu0
        %v3498 = vadd.f32 %v3385, %v3497
        %3499 = vmatmul.f32.gmra.mxu0 %v3291
        %v3500 = vpop.f32.mrf.mxu0
        %v3501 = vadd.f32 %v3388, %v3500
        %3502 = vmatmul.f32.gmra.mxu0 %v3293
        %v3503 = vpop.f32.mrf.mxu0
        %v3504 = vadd.f32 %v3391, %v3503
        %3505 = vmatmul.f32.gmra.mxu0 %v3295
        %v3506 = vpop.f32.mrf.mxu0
        %v3507 = vadd.f32 %v3394, %v3506
        %3508 = vmatmul.f32.gmra.mxu0 %v3297
        %v3509 = vpop.f32.mrf.mxu0
        %v3510 = vadd.f32 %v3397, %v3509
        %3511 = vmatmul.f32.gmra.mxu0 %v3299
        %v3512 = vpop.f32.mrf.mxu0
        %v3513 = vadd.f32 %v3400, %v3512
        %3514 = vmatmul.f32.gmra.mxu0 %v3301
        %v3515 = vpop.f32.mrf.mxu0
        %v3516 = vadd.f32 %v3403, %v3515
        %3517 = vmatmul.f32.gmra.mxu0 %v3303
        %v3518 = vpop.f32.mrf.mxu0
        %v3519 = vadd.f32 %v3406, %v3518
        %3520 = vmatmul.f32.gmra.mxu0 %v3305
        %v3521 = vpop.f32.mrf.mxu0
        %v3522 = vadd.f32 %v3409, %v3521
        %3523 = vmatmul.f32.gmra.mxu0 %v3307
        %v3524 = vpop.f32.mrf.mxu0
        %v3525 = vadd.f32 %v3412, %v3524
        %3526 = vmatmul.f32.gmra.mxu0 %v3309
        %v3527 = vpop.f32.mrf.mxu0
        %v3528 = vadd.f32 %v3415, %v3527
        %3529 = vmatmul.f32.gmra.mxu0 %v3311
        %v3530 = vpop.f32.mrf.mxu0
        %v3531 = vadd.f32 %v3418, %v3530
        %3532 = vmatmul.f32.gmra.mxu0 %v3313
        %v3533 = vpop.f32.mrf.mxu0
        %v3534 = vadd.f32 %v3421, %v3533
        %3535 = vmatmul.f32.gmra.mxu0 %v3315
        %v3536 = vpop.f32.mrf.mxu0
        %v3537 = vadd.f32 %v3424, %v3536
        %3538 = vmatmul.f32.gmra.mxu0 %v3317
        %v3539 = vpop.f32.mrf.mxu0
        %v3540 = vadd.f32 %v3427, %v3539
        %3541 = vmatmul.f32.gmra.mxu0 %v3319
        %v3542 = vpop.f32.mrf.mxu0
        %v3543 = vadd.f32 %v3430, %v3542
        %3544 = vmatmul.f32.gmra.mxu0 %v3321
        %v3545 = vpop.f32.mrf.mxu0
        %v3546 = vadd.f32 %v3433, %v3545
        %3547 = vdwg.mxu0
        %3548 = vmatpush.msra.mxu0 %v1653
        %3549 = vmatpush.msra.mxu0 %v1650
        %3550 = vmatpush.msra.mxu0 %v1647
        %3551 = vmatpush.msra.mxu0 %v1644
        %3552 = vmatpush.msra.mxu0 %v1641
        %3553 = vmatpush.msra.mxu0 %v1638
        %3554 = vmatpush.msra.mxu0 %v1635
        %3555 = vmatpush.msra.mxu0 %v1632
        %3556 = vmatpush.msra.mxu0 %v1998
        %3557 = vmatpush.msra.mxu0 %v1997
        %3558 = vmatpush.msra.mxu0 %v1996
        %3559 = vmatpush.msra.mxu0 %v1995
        %3560 = vmatpush.msra.mxu0 %v1994
        %3561 = vmatpush.msra.mxu0 %v1993
        %3562 = vmatpush.msra.mxu0 %v1992
        %3563 = vmatpush.msra.mxu0 %v1991
        %3564 = vmatmul.f32.gmra.mxu0 %v3258
        %v3565 = vpop.f32.mrf.mxu0
        %v3566 = vadd.f32 0.0, %v3565
        %3567 = vmatmul.f32.gmra.mxu0 %v3260
        %v3568 = vpop.f32.mrf.mxu0
        %v3569 = vadd.f32 0.0, %v3568
        %3570 = vmatmul.f32.gmra.mxu0 %v3262
        %v3571 = vpop.f32.mrf.mxu0
        %v3572 = vadd.f32 0.0, %v3571
        %3573 = vmatmul.f32.gmra.mxu0 %v3264
        %v3574 = vpop.f32.mrf.mxu0
        %v3575 = vadd.f32 0.0, %v3574
        %3576 = vmatmul.f32.gmra.mxu0 %v3266
        %v3577 = vpop.f32.mrf.mxu0
        %v3578 = vadd.f32 0.0, %v3577
        %3579 = vmatmul.f32.gmra.mxu0 %v3268
        %v3580 = vpop.f32.mrf.mxu0
        %v3581 = vadd.f32 0.0, %v3580
        %3582 = vmatmul.f32.gmra.mxu0 %v3270
        %v3583 = vpop.f32.mrf.mxu0
        %v3584 = vadd.f32 0.0, %v3583
        %3585 = vmatmul.f32.gmra.mxu0 %v3272
        %v3586 = vpop.f32.mrf.mxu0
        %v3587 = vadd.f32 0.0, %v3586
        %3588 = vmatmul.f32.gmra.mxu0 %v3274
        %v3589 = vpop.f32.mrf.mxu0
        %v3590 = vadd.f32 0.0, %v3589
        %3591 = vmatmul.f32.gmra.mxu0 %v3276
        %v3592 = vpop.f32.mrf.mxu0
        %v3593 = vadd.f32 0.0, %v3592
        %3594 = vmatmul.f32.gmra.mxu0 %v3278
        %v3595 = vpop.f32.mrf.mxu0
        %v3596 = vadd.f32 0.0, %v3595
        %3597 = vmatmul.f32.gmra.mxu0 %v3280
        %v3598 = vpop.f32.mrf.mxu0
        %v3599 = vadd.f32 0.0, %v3598
        %3600 = vmatmul.f32.gmra.mxu0 %v3282
        %v3601 = vpop.f32.mrf.mxu0
        %v3602 = vadd.f32 0.0, %v3601
        %3603 = vmatmul.f32.gmra.mxu0 %v3284
        %v3604 = vpop.f32.mrf.mxu0
        %v3605 = vadd.f32 0.0, %v3604
        %3606 = vmatmul.f32.gmra.mxu0 %v3286
        %v3607 = vpop.f32.mrf.mxu0
        %v3608 = vadd.f32 0.0, %v3607
        %3609 = vmatmul.f32.gmra.mxu0 %v3288
        %v3610 = vpop.f32.mrf.mxu0
        %v3611 = vadd.f32 0.0, %v3610
        %3612 = vmatmul.f32.gmra.mxu0 %v3290
        %v3613 = vpop.f32.mrf.mxu0
        %v3614 = vadd.f32 0.0, %v3613
        %3615 = vmatmul.f32.gmra.mxu0 %v3292
        %v3616 = vpop.f32.mrf.mxu0
        %v3617 = vadd.f32 0.0, %v3616
        %3618 = vmatmul.f32.gmra.mxu0 %v3294
        %v3619 = vpop.f32.mrf.mxu0
        %v3620 = vadd.f32 0.0, %v3619
        %3621 = vmatmul.f32.gmra.mxu0 %v3296
        %v3622 = vpop.f32.mrf.mxu0
        %v3623 = vadd.f32 0.0, %v3622
        %3624 = vmatmul.f32.gmra.mxu0 %v3298
        %v3625 = vpop.f32.mrf.mxu0
        %v3626 = vadd.f32 0.0, %v3625
        %3627 = vmatmul.f32.gmra.mxu0 %v3300
        %v3628 = vpop.f32.mrf.mxu0
        %v3629 = vadd.f32 0.0, %v3628
        %3630 = vmatmul.f32.gmra.mxu0 %v3302
        %v3631 = vpop.f32.mrf.mxu0
        %v3632 = vadd.f32 0.0, %v3631
        %3633 = vmatmul.f32.gmra.mxu0 %v3304
        %v3634 = vpop.f32.mrf.mxu0
        %v3635 = vadd.f32 0.0, %v3634
        %3636 = vmatmul.f32.gmra.mxu0 %v3306
        %v3637 = vpop.f32.mrf.mxu0
        %v3638 = vadd.f32 0.0, %v3637
        %3639 = vmatmul.f32.gmra.mxu0 %v3308
        %v3640 = vpop.f32.mrf.mxu0
        %v3641 = vadd.f32 0.0, %v3640
        %3642 = vmatmul.f32.gmra.mxu0 %v3310
        %v3643 = vpop.f32.mrf.mxu0
        %v3644 = vadd.f32 0.0, %v3643
        %3645 = vmatmul.f32.gmra.mxu0 %v3312
        %v3646 = vpop.f32.mrf.mxu0
        %v3647 = vadd.f32 0.0, %v3646
        %3648 = vmatmul.f32.gmra.mxu0 %v3314
        %v3649 = vpop.f32.mrf.mxu0
        %v3650 = vadd.f32 0.0, %v3649
        %3651 = vmatmul.f32.gmra.mxu0 %v3316
        %v3652 = vpop.f32.mrf.mxu0
        %v3653 = vadd.f32 0.0, %v3652
        %3654 = vmatmul.f32.gmra.mxu0 %v3318
        %v3655 = vpop.f32.mrf.mxu0
        %v3656 = vadd.f32 0.0, %v3655
        %3657 = vmatmul.f32.gmra.mxu0 %v3320
        %v3658 = vpop.f32.mrf.mxu0
        %v3659 = vadd.f32 0.0, %v3658
        %3660 = vdwg.mxu0
        %3661 = vmatpush.msra.mxu0 %v3183
        %3662 = vmatpush.msra.mxu0 %v3180
        %3663 = vmatpush.msra.mxu0 %v3177
        %3664 = vmatpush.msra.mxu0 %v3174
        %3665 = vmatpush.msra.mxu0 %v3171
        %3666 = vmatpush.msra.mxu0 %v3168
        %3667 = vmatpush.msra.mxu0 %v3165
        %3668 = vmatpush.msra.mxu0 %v3162
        %3669 = vmatpush.msra.mxu0 %v2006
        %3670 = vmatpush.msra.mxu0 %v2005
        %3671 = vmatpush.msra.mxu0 %v2004
        %3672 = vmatpush.msra.mxu0 %v2003
        %3673 = vmatpush.msra.mxu0 %v2002
        %3674 = vmatpush.msra.mxu0 %v2001
        %3675 = vmatpush.msra.mxu0 %v2000
        %3676 = vmatpush.msra.mxu0 %v1999
        %3677 = vmatmul.f32.gmra.mxu0 %v3259
        %v3678 = vpop.f32.mrf.mxu0
        %v3679 = vadd.f32 %v3566, %v3678
        %3680 = vmatmul.f32.gmra.mxu0 %v3261
        %v3681 = vpop.f32.mrf.mxu0
        %v3682 = vadd.f32 %v3569, %v3681
        %3683 = vmatmul.f32.gmra.mxu0 %v3263
        %v3684 = vpop.f32.mrf.mxu0
        %v3685 = vadd.f32 %v3572, %v3684
        %3686 = vmatmul.f32.gmra.mxu0 %v3265
        %v3687 = vpop.f32.mrf.mxu0
        %v3688 = vadd.f32 %v3575, %v3687
        %3689 = vmatmul.f32.gmra.mxu0 %v3267
        %v3690 = vpop.f32.mrf.mxu0
        %v3691 = vadd.f32 %v3578, %v3690
        %3692 = vmatmul.f32.gmra.mxu0 %v3269
        %v3693 = vpop.f32.mrf.mxu0
        %v3694 = vadd.f32 %v3581, %v3693
        %3695 = vmatmul.f32.gmra.mxu0 %v3271
        %v3696 = vpop.f32.mrf.mxu0
        %v3697 = vadd.f32 %v3584, %v3696
        %3698 = vmatmul.f32.gmra.mxu0 %v3273
        %v3699 = vpop.f32.mrf.mxu0
        %v3700 = vadd.f32 %v3587, %v3699
        %3701 = vmatmul.f32.gmra.mxu0 %v3275
        %v3702 = vpop.f32.mrf.mxu0
        %v3703 = vadd.f32 %v3590, %v3702
        %3704 = vmatmul.f32.gmra.mxu0 %v3277
        %v3705 = vpop.f32.mrf.mxu0
        %v3706 = vadd.f32 %v3593, %v3705
        %3707 = vmatmul.f32.gmra.mxu0 %v3279
        %v3708 = vpop.f32.mrf.mxu0
        %v3709 = vadd.f32 %v3596, %v3708
        %3710 = vmatmul.f32.gmra.mxu0 %v3281
        %v3711 = vpop.f32.mrf.mxu0
        %v3712 = vadd.f32 %v3599, %v3711
        %3713 = vmatmul.f32.gmra.mxu0 %v3283
        %v3714 = vpop.f32.mrf.mxu0
        %v3715 = vadd.f32 %v3602, %v3714
        %3716 = vmatmul.f32.gmra.mxu0 %v3285
        %v3717 = vpop.f32.mrf.mxu0
        %v3718 = vadd.f32 %v3605, %v3717
        %3719 = vmatmul.f32.gmra.mxu0 %v3287
        %v3720 = vpop.f32.mrf.mxu0
        %v3721 = vadd.f32 %v3608, %v3720
        %3722 = vmatmul.f32.gmra.mxu0 %v3289
        %v3723 = vpop.f32.mrf.mxu0
        %v3724 = vadd.f32 %v3611, %v3723
        %3725 = vmatmul.f32.gmra.mxu0 %v3291
        %v3726 = vpop.f32.mrf.mxu0
        %v3727 = vadd.f32 %v3614, %v3726
        %3728 = vmatmul.f32.gmra.mxu0 %v3293
        %v3729 = vpop.f32.mrf.mxu0
        %v3730 = vadd.f32 %v3617, %v3729
        %3731 = vmatmul.f32.gmra.mxu0 %v3295
        %v3732 = vpop.f32.mrf.mxu0
        %v3733 = vadd.f32 %v3620, %v3732
        %3734 = vmatmul.f32.gmra.mxu0 %v3297
        %v3735 = vpop.f32.mrf.mxu0
        %v3736 = vadd.f32 %v3623, %v3735
        %3737 = vmatmul.f32.gmra.mxu0 %v3299
        %v3738 = vpop.f32.mrf.mxu0
        %v3739 = vadd.f32 %v3626, %v3738
        %3740 = vmatmul.f32.gmra.mxu0 %v3301
        %v3741 = vpop.f32.mrf.mxu0
        %v3742 = vadd.f32 %v3629, %v3741
        %3743 = vmatmul.f32.gmra.mxu0 %v3303
        %v3744 = vpop.f32.mrf.mxu0
        %v3745 = vadd.f32 %v3632, %v3744
        %3746 = vmatmul.f32.gmra.mxu0 %v3305
        %v3747 = vpop.f32.mrf.mxu0
        %v3748 = vadd.f32 %v3635, %v3747
        %3749 = vmatmul.f32.gmra.mxu0 %v3307
        %v3750 = vpop.f32.mrf.mxu0
        %v3751 = vadd.f32 %v3638, %v3750
        %3752 = vmatmul.f32.gmra.mxu0 %v3309
        %v3753 = vpop.f32.mrf.mxu0
        %v3754 = vadd.f32 %v3641, %v3753
        %3755 = vmatmul.f32.gmra.mxu0 %v3311
        %v3756 = vpop.f32.mrf.mxu0
        %v3757 = vadd.f32 %v3644, %v3756
        %3758 = vmatmul.f32.gmra.mxu0 %v3313
        %v3759 = vpop.f32.mrf.mxu0
        %v3760 = vadd.f32 %v3647, %v3759
        %3761 = vmatmul.f32.gmra.mxu0 %v3315
        %v3762 = vpop.f32.mrf.mxu0
        %v3763 = vadd.f32 %v3650, %v3762
        %3764 = vmatmul.f32.gmra.mxu0 %v3317
        %v3765 = vpop.f32.mrf.mxu0
        %v3766 = vadd.f32 %v3653, %v3765
        %3767 = vmatmul.f32.gmra.mxu0 %v3319
        %v3768 = vpop.f32.mrf.mxu0
        %v3769 = vadd.f32 %v3656, %v3768
        %3770 = vmatmul.f32.gmra.mxu0 %v3321
        %v3771 = vpop.f32.mrf.mxu0
        %v3772 = vadd.f32 %v3659, %v3771
        %3773 = vdwg.mxu0
        %s3774 = scalar_lea.vmem %s7, 128
        %v3775 = vld [vmem:[%s3774] sm:$0xff]
        %v3776 = vld [vmem:[%s3774 + $0x8] sm:$0xff]
        %v3777 = vld [vmem:[%s3774 + $0x10] sm:$0xff]
        %v3778 = vld [vmem:[%s3774 + $0x18] sm:$0x3f]
        %v3780 = vperm.slane %v2966, 0
        %vm3782 = vcmask 244736
        %v3784 = vsel %vm3782, %v1608, 0
        %v3787 = vsel %vm3782, %v1611, 0
        %v3790 = vsel %vm3782, %v1614, 0
        %v3793 = vsel %vm3782, %v1617, 0
        %v3796 = vsel %vm3782, %v1620, 0
        %v3799 = vsel %vm3782, %v1623, 0
        %v3802 = vsel %vm3782, %v1626, 0
        %v3805 = vsel %vm3782, %v1629, 0
        %v3808 = vsel %vm3782, %v1991, 0
        %v3811 = vsel %vm3782, %v1992, 0
        %v3814 = vsel %vm3782, %v1993, 0
        %v3817 = vsel %vm3782, %v1994, 0
        %v3820 = vsel %vm3782, %v1995, 0
        %v3823 = vsel %vm3782, %v1996, 0
        %v3826 = vsel %vm3782, %v1997, 0
        %v3829 = vsel %vm3782, %v1998, 0
        %v3832 = vsel %vm3782, %v1632, 0
        %v3835 = vsel %vm3782, %v1635, 0
        %v3838 = vsel %vm3782, %v1638, 0
        %v3841 = vsel %vm3782, %v1641, 0
        %v3844 = vsel %vm3782, %v1644, 0
        %v3847 = vsel %vm3782, %v1647, 0
        %v3850 = vsel %vm3782, %v1650, 0
        %v3853 = vsel %vm3782, %v1653, 0
        %v3856 = vsel %vm3782, %v1999, 0
        %v3859 = vsel %vm3782, %v2000, 0
        %v3862 = vsel %vm3782, %v2001, 0
        %v3865 = vsel %vm3782, %v2002, 0
        %v3868 = vsel %vm3782, %v2003, 0
        %v3871 = vsel %vm3782, %v2004, 0
        %v3874 = vsel %vm3782, %v2005, 0
        %v3877 = vsel %vm3782, %v2006, 0
        %v3880 = vsel %vm3782, %v2311, 0
        %v3883 = vsel %vm3782, %v2312, 0
        %v3886 = vsel %vm3782, %v2313, 0
        %v3889 = vsel %vm3782, %v2314, 0
        %v3892 = vsel %vm3782, %v2315, 0
        %v3895 = vsel %vm3782, %v2316, 0
        %v3898 = vsel %vm3782, %v2317, 0
        %v3901 = vsel %vm3782, %v2318, 0
        %v3904 = vsel %vm3782, %v2934, 0
        %v3907 = vsel %vm3782, %v2935, 0
        %v3910 = vsel %vm3782, %v2936, 0
        %v3913 = vsel %vm3782, %v2937, 0
        %v3916 = vsel %vm3782, %v2938, 0
        %v3919 = vsel %vm3782, %v2939, 0
        %v3922 = vsel %vm3782, %v2940, 0
        %v3925 = vsel %vm3782, %v2941, 0
        %v3928 = vsel %vm3782, %v2319, 0
        %v3931 = vsel %vm3782, %v2320, 0
        %v3934 = vsel %vm3782, %v2321, 0
        %v3937 = vsel %vm3782, %v2322, 0
        %v3940 = vsel %vm3782, %v2323, 0
        %v3943 = vsel %vm3782, %v2324, 0
        %v3946 = vsel %vm3782, %v2325, 0
        %v3949 = vsel %vm3782, %v2326, 0
        %v3952 = vsel %vm3782, %v2942, 0
        %v3955 = vsel %vm3782, %v2943, 0
        %v3958 = vsel %vm3782, %v2944, 0
        %v3961 = vsel %vm3782, %v2945, 0
        %v3964 = vsel %vm3782, %v2946, 0
        %v3967 = vsel %vm3782, %v2947, 0
        %v3970 = vsel %vm3782, %v2948, 0
        %v3973 = vsel %vm3782, %v2949, 0
        %v3976 = vsel %vm3782, %v1656, 0
        %v3979 = vsel %vm3782, %v1659, 0
        %v3982 = vsel %vm3782, %v1662, 0
        %v3985 = vsel %vm3782, %v1665, 0
        %v3988 = vsel %vm3782, %v1668, 0
        %v3991 = vsel %vm3782, %v1671, 0
        %v3994 = vsel %vm3782, %v1674, 0
        %v3997 = vsel %vm3782, %v1677, 0
        %v4000 = vsel %vm3782, %v2007, 0
        %v4003 = vsel %vm3782, %v2008, 0
        %v4006 = vsel %vm3782, %v2009, 0
        %v4009 = vsel %vm3782, %v2010, 0
        %v4012 = vsel %vm3782, %v2011, 0
        %v4015 = vsel %vm3782, %v2012, 0
        %v4018 = vsel %vm3782, %v2013, 0
        %v4021 = vsel %vm3782, %v2014, 0
        %v4024 = vsel %vm3782, %v1680, 0
        %v4027 = vsel %vm3782, %v1683, 0
        %v4030 = vsel %vm3782, %v1686, 0
        %v4033 = vsel %vm3782, %v1689, 0
        %v4036 = vsel %vm3782, %v1692, 0
        %v4039 = vsel %vm3782, %v1695, 0
        %v4042 = vsel %vm3782, %v1698, 0
        %v4045 = vsel %vm3782, %v1701, 0
        %v4048 = vsel %vm3782, %v2015, 0
        %v4051 = vsel %vm3782, %v2016, 0
        %v4054 = vsel %vm3782, %v2017, 0
        %v4057 = vsel %vm3782, %v2018, 0
        %v4060 = vsel %vm3782, %v2019, 0
        %v4063 = vsel %vm3782, %v2020, 0
        %v4066 = vsel %vm3782, %v2021, 0
        %v4069 = vsel %vm3782, %v2022, 0
        %v4072 = vsel %vm3782, %v2327, 0
        %v4075 = vsel %vm3782, %v2328, 0
        %v4078 = vsel %vm3782, %v2329, 0
        %v4081 = vsel %vm3782, %v2330, 0
        %v4084 = vsel %vm3782, %v2331, 0
        %v4087 = vsel %vm3782, %v2332, 0
        %v4090 = vsel %vm3782, %v2333, 0
        %v4093 = vsel %vm3782, %v2334, 0
        %v4096 = vsel %vm3782, %v2950, 0
        %v4099 = vsel %vm3782, %v2951, 0
        %v4102 = vsel %vm3782, %v2952, 0
        %v4105 = vsel %vm3782, %v2953, 0
        %v4108 = vsel %vm3782, %v2954, 0
        %v4111 = vsel %vm3782, %v2955, 0
        %v4114 = vsel %vm3782, %v2956, 0
        %v4117 = vsel %vm3782, %v2957, 0
        %v4120 = vsel %vm3782, %v2335, 0
        %v4123 = vsel %vm3782, %v2336, 0
        %v4126 = vsel %vm3782, %v2337, 0
        %v4129 = vsel %vm3782, %v2338, 0
        %v4132 = vsel %vm3782, %v2339, 0
        %v4135 = vsel %vm3782, %v2340, 0
        %v4138 = vsel %vm3782, %v2341, 0
        %v4141 = vsel %vm3782, %v2342, 0
        %v4144 = vsel %vm3782, %v2958, 0
        %v4147 = vsel %vm3782, %v2959, 0
        %v4150 = vsel %vm3782, %v2960, 0
        %v4153 = vsel %vm3782, %v2961, 0
        %v4156 = vsel %vm3782, %v2962, 0
        %v4159 = vsel %vm3782, %v2963, 0
        %v4162 = vsel %vm3782, %v2964, 0
        %v4165 = vsel %vm3782, %v2965, 0
        %vm4167 = vcmask 1045504
        %v4169 = vsel %vm4167, %v3778, 0
        %4171 = vmatpush.msra.mxu0 0.0
        %4172 = vmatpush.msra.mxu0 0.0
        %4173 = vmatpush.msra.mxu0 0.0
        %4174 = vmatpush.msra.mxu0 0.0
        %4175 = vmatpush.msra.mxu0 0.0
        %4176 = vmatpush.msra.mxu0 0.0
        %4177 = vmatpush.msra.mxu0 0.0
        %4178 = vmatpush.msra.mxu0 0.0
        %4179 = vmatpush.msra.mxu0 0.0
        %4180 = vmatpush.msra.mxu0 0.0
        %4181 = vmatpush.msra.mxu0 0.0
        %4182 = vmatpush.msra.mxu0 0.0
        %4183 = vmatpush.msra.mxu0 %v4169
        %4184 = vmatpush.msra.mxu0 %v3777
        %4185 = vmatpush.msra.mxu0 %v3776
        %4186 = vmatpush.msra.mxu0 %v3775
        %4187 = vmatmul.f32.gmra.mxu0 %v3784
        %v4188 = vpop.f32.mrf.mxu0
        %v4189 = vadd.f32 %v3780, %v4188
        %4190 = vmatmul.f32.gmra.mxu0 %v3787
        %v4191 = vpop.f32.mrf.mxu0
        %v4192 = vadd.f32 %v3780, %v4191
        %4193 = vmatmul.f32.gmra.mxu0 %v3790
        %v4194 = vpop.f32.mrf.mxu0
        %v4195 = vadd.f32 %v3780, %v4194
        %4196 = vmatmul.f32.gmra.mxu0 %v3793
        %v4197 = vpop.f32.mrf.mxu0
        %v4198 = vadd.f32 %v3780, %v4197
        %4199 = vmatmul.f32.gmra.mxu0 %v3796
        %v4200 = vpop.f32.mrf.mxu0
        %v4201 = vadd.f32 %v3780, %v4200
        %4202 = vmatmul.f32.gmra.mxu0 %v3799
        %v4203 = vpop.f32.mrf.mxu0
        %v4204 = vadd.f32 %v3780, %v4203
        %4205 = vmatmul.f32.gmra.mxu0 %v3802
        %v4206 = vpop.f32.mrf.mxu0
        %v4207 = vadd.f32 %v3780, %v4206
        %4208 = vmatmul.f32.gmra.mxu0 %v3805
        %v4209 = vpop.f32.mrf.mxu0
        %v4210 = vadd.f32 %v3780, %v4209
        %4211 = vmatmul.f32.gmra.mxu0 %v3808
        %v4212 = vpop.f32.mrf.mxu0
        %v4213 = vadd.f32 %v3780, %v4212
        %4214 = vmatmul.f32.gmra.mxu0 %v3811
        %v4215 = vpop.f32.mrf.mxu0
        %v4216 = vadd.f32 %v3780, %v4215
        %4217 = vmatmul.f32.gmra.mxu0 %v3814
        %v4218 = vpop.f32.mrf.mxu0
        %v4219 = vadd.f32 %v3780, %v4218
        %4220 = vmatmul.f32.gmra.mxu0 %v3817
        %v4221 = vpop.f32.mrf.mxu0
        %v4222 = vadd.f32 %v3780, %v4221
        %4223 = vmatmul.f32.gmra.mxu0 %v3820
        %v4224 = vpop.f32.mrf.mxu0
        %v4225 = vadd.f32 %v3780, %v4224
        %4226 = vmatmul.f32.gmra.mxu0 %v3823
        %v4227 = vpop.f32.mrf.mxu0
        %v4228 = vadd.f32 %v3780, %v4227
        %4229 = vmatmul.f32.gmra.mxu0 %v3826
        %v4230 = vpop.f32.mrf.mxu0
        %v4231 = vadd.f32 %v3780, %v4230
        %4232 = vmatmul.f32.gmra.mxu0 %v3829
        %v4233 = vpop.f32.mrf.mxu0
        %v4234 = vadd.f32 %v3780, %v4233
        %4235 = vmatmul.f32.gmra.mxu0 %v3832
        %v4236 = vpop.f32.mrf.mxu0
        %v4237 = vadd.f32 %v3780, %v4236
        %4238 = vmatmul.f32.gmra.mxu0 %v3835
        %v4239 = vpop.f32.mrf.mxu0
        %v4240 = vadd.f32 %v3780, %v4239
        %4241 = vmatmul.f32.gmra.mxu0 %v3838
        %v4242 = vpop.f32.mrf.mxu0
        %v4243 = vadd.f32 %v3780, %v4242
        %4244 = vmatmul.f32.gmra.mxu0 %v3841
        %v4245 = vpop.f32.mrf.mxu0
        %v4246 = vadd.f32 %v3780, %v4245
        %4247 = vmatmul.f32.gmra.mxu0 %v3844
        %v4248 = vpop.f32.mrf.mxu0
        %v4249 = vadd.f32 %v3780, %v4248
        %4250 = vmatmul.f32.gmra.mxu0 %v3847
        %v4251 = vpop.f32.mrf.mxu0
        %v4252 = vadd.f32 %v3780, %v4251
        %4253 = vmatmul.f32.gmra.mxu0 %v3850
        %v4254 = vpop.f32.mrf.mxu0
        %v4255 = vadd.f32 %v3780, %v4254
        %4256 = vmatmul.f32.gmra.mxu0 %v3853
        %v4257 = vpop.f32.mrf.mxu0
        %v4258 = vadd.f32 %v3780, %v4257
        %4259 = vmatmul.f32.gmra.mxu0 %v3856
        %v4260 = vpop.f32.mrf.mxu0
        %v4261 = vadd.f32 %v3780, %v4260
        %4262 = vmatmul.f32.gmra.mxu0 %v3859
        %v4263 = vpop.f32.mrf.mxu0
        %v4264 = vadd.f32 %v3780, %v4263
        %4265 = vmatmul.f32.gmra.mxu0 %v3862
        %v4266 = vpop.f32.mrf.mxu0
        %v4267 = vadd.f32 %v3780, %v4266
        %4268 = vmatmul.f32.gmra.mxu0 %v3865
        %v4269 = vpop.f32.mrf.mxu0
        %v4270 = vadd.f32 %v3780, %v4269
        %4271 = vmatmul.f32.gmra.mxu0 %v3868
        %v4272 = vpop.f32.mrf.mxu0
        %v4273 = vadd.f32 %v3780, %v4272
        %4274 = vmatmul.f32.gmra.mxu0 %v3871
        %v4275 = vpop.f32.mrf.mxu0
        %v4276 = vadd.f32 %v3780, %v4275
        %4277 = vmatmul.f32.gmra.mxu0 %v3874
        %v4278 = vpop.f32.mrf.mxu0
        %v4279 = vadd.f32 %v3780, %v4278
        %4280 = vmatmul.f32.gmra.mxu0 %v3877
        %v4281 = vpop.f32.mrf.mxu0
        %v4282 = vadd.f32 %v3780, %v4281
        %4283 = vmatmul.f32.gmra.mxu0 %v3880
        %v4284 = vpop.f32.mrf.mxu0
        %v4285 = vadd.f32 %v3780, %v4284
        %4286 = vmatmul.f32.gmra.mxu0 %v3883
        %v4287 = vpop.f32.mrf.mxu0
        %v4288 = vadd.f32 %v3780, %v4287
        %4289 = vmatmul.f32.gmra.mxu0 %v3886
        %v4290 = vpop.f32.mrf.mxu0
        %v4291 = vadd.f32 %v3780, %v4290
        %4292 = vmatmul.f32.gmra.mxu0 %v3889
        %v4293 = vpop.f32.mrf.mxu0
        %v4294 = vadd.f32 %v3780, %v4293
        %4295 = vmatmul.f32.gmra.mxu0 %v3892
        %v4296 = vpop.f32.mrf.mxu0
        %v4297 = vadd.f32 %v3780, %v4296
        %4298 = vmatmul.f32.gmra.mxu0 %v3895
        %v4299 = vpop.f32.mrf.mxu0
        %v4300 = vadd.f32 %v3780, %v4299
        %4301 = vmatmul.f32.gmra.mxu0 %v3898
        %v4302 = vpop.f32.mrf.mxu0
        %v4303 = vadd.f32 %v3780, %v4302
        %4304 = vmatmul.f32.gmra.mxu0 %v3901
        %v4305 = vpop.f32.mrf.mxu0
        %v4306 = vadd.f32 %v3780, %v4305
        %4307 = vmatmul.f32.gmra.mxu0 %v3904
        %v4308 = vpop.f32.mrf.mxu0
        %v4309 = vadd.f32 %v3780, %v4308
        %4310 = vmatmul.f32.gmra.mxu0 %v3907
        %v4311 = vpop.f32.mrf.mxu0
        %v4312 = vadd.f32 %v3780, %v4311
        %4313 = vmatmul.f32.gmra.mxu0 %v3910
        %v4314 = vpop.f32.mrf.mxu0
        %v4315 = vadd.f32 %v3780, %v4314
        %4316 = vmatmul.f32.gmra.mxu0 %v3913
        %v4317 = vpop.f32.mrf.mxu0
        %v4318 = vadd.f32 %v3780, %v4317
        %4319 = vmatmul.f32.gmra.mxu0 %v3916
        %v4320 = vpop.f32.mrf.mxu0
        %v4321 = vadd.f32 %v3780, %v4320
        %4322 = vmatmul.f32.gmra.mxu0 %v3919
        %v4323 = vpop.f32.mrf.mxu0
        %v4324 = vadd.f32 %v3780, %v4323
        %4325 = vmatmul.f32.gmra.mxu0 %v3922
        %v4326 = vpop.f32.mrf.mxu0
        %v4327 = vadd.f32 %v3780, %v4326
        %4328 = vmatmul.f32.gmra.mxu0 %v3925
        %v4329 = vpop.f32.mrf.mxu0
        %v4330 = vadd.f32 %v3780, %v4329
        %4331 = vmatmul.f32.gmra.mxu0 %v3928
        %v4332 = vpop.f32.mrf.mxu0
        %v4333 = vadd.f32 %v3780, %v4332
        %4334 = vmatmul.f32.gmra.mxu0 %v3931
        %v4335 = vpop.f32.mrf.mxu0
        %v4336 = vadd.f32 %v3780, %v4335
        %4337 = vmatmul.f32.gmra.mxu0 %v3934
        %v4338 = vpop.f32.mrf.mxu0
        %v4339 = vadd.f32 %v3780, %v4338
        %4340 = vmatmul.f32.gmra.mxu0 %v3937
        %v4341 = vpop.f32.mrf.mxu0
        %v4342 = vadd.f32 %v3780, %v4341
        %4343 = vmatmul.f32.gmra.mxu0 %v3940
        %v4344 = vpop.f32.mrf.mxu0
        %v4345 = vadd.f32 %v3780, %v4344
        %4346 = vmatmul.f32.gmra.mxu0 %v3943
        %v4347 = vpop.f32.mrf.mxu0
        %v4348 = vadd.f32 %v3780, %v4347
        %4349 = vmatmul.f32.gmra.mxu0 %v3946
        %v4350 = vpop.f32.mrf.mxu0
        %v4351 = vadd.f32 %v3780, %v4350
        %4352 = vmatmul.f32.gmra.mxu0 %v3949
        %v4353 = vpop.f32.mrf.mxu0
        %v4354 = vadd.f32 %v3780, %v4353
        %4355 = vmatmul.f32.gmra.mxu0 %v3952
        %v4356 = vpop.f32.mrf.mxu0
        %v4357 = vadd.f32 %v3780, %v4356
        %4358 = vmatmul.f32.gmra.mxu0 %v3955
        %v4359 = vpop.f32.mrf.mxu0
        %v4360 = vadd.f32 %v3780, %v4359
        %4361 = vmatmul.f32.gmra.mxu0 %v3958
        %v4362 = vpop.f32.mrf.mxu0
        %v4363 = vadd.f32 %v3780, %v4362
        %4364 = vmatmul.f32.gmra.mxu0 %v3961
        %v4365 = vpop.f32.mrf.mxu0
        %v4366 = vadd.f32 %v3780, %v4365
        %4367 = vmatmul.f32.gmra.mxu0 %v3964
        %v4368 = vpop.f32.mrf.mxu0
        %v4369 = vadd.f32 %v3780, %v4368
        %4370 = vmatmul.f32.gmra.mxu0 %v3967
        %v4371 = vpop.f32.mrf.mxu0
        %v4372 = vadd.f32 %v3780, %v4371
        %4373 = vmatmul.f32.gmra.mxu0 %v3970
        %v4374 = vpop.f32.mrf.mxu0
        %v4375 = vadd.f32 %v3780, %v4374
        %4376 = vmatmul.f32.gmra.mxu0 %v3973
        %v4377 = vpop.f32.mrf.mxu0
        %v4378 = vadd.f32 %v3780, %v4377
        %4379 = vmatmul.f32.gmra.mxu0 %v3976
        %v4380 = vpop.f32.mrf.mxu0
        %v4381 = vadd.f32 %v3780, %v4380
        %4382 = vmatmul.f32.gmra.mxu0 %v3979
        %v4383 = vpop.f32.mrf.mxu0
        %v4384 = vadd.f32 %v3780, %v4383
        %4385 = vmatmul.f32.gmra.mxu0 %v3982
        %v4386 = vpop.f32.mrf.mxu0
        %v4387 = vadd.f32 %v3780, %v4386
        %4388 = vmatmul.f32.gmra.mxu0 %v3985
        %v4389 = vpop.f32.mrf.mxu0
        %v4390 = vadd.f32 %v3780, %v4389
        %4391 = vmatmul.f32.gmra.mxu0 %v3988
        %v4392 = vpop.f32.mrf.mxu0
        %v4393 = vadd.f32 %v3780, %v4392
        %4394 = vmatmul.f32.gmra.mxu0 %v3991
        %v4395 = vpop.f32.mrf.mxu0
        %v4396 = vadd.f32 %v3780, %v4395
        %4397 = vmatmul.f32.gmra.mxu0 %v3994
        %v4398 = vpop.f32.mrf.mxu0
        %v4399 = vadd.f32 %v3780, %v4398
        %4400 = vmatmul.f32.gmra.mxu0 %v3997
        %v4401 = vpop.f32.mrf.mxu0
        %v4402 = vadd.f32 %v3780, %v4401
        %4403 = vmatmul.f32.gmra.mxu0 %v4000
        %v4404 = vpop.f32.mrf.mxu0
        %v4405 = vadd.f32 %v3780, %v4404
        %4406 = vmatmul.f32.gmra.mxu0 %v4003
        %v4407 = vpop.f32.mrf.mxu0
        %v4408 = vadd.f32 %v3780, %v4407
        %4409 = vmatmul.f32.gmra.mxu0 %v4006
        %v4410 = vpop.f32.mrf.mxu0
        %v4411 = vadd.f32 %v3780, %v4410
        %4412 = vmatmul.f32.gmra.mxu0 %v4009
        %v4413 = vpop.f32.mrf.mxu0
        %v4414 = vadd.f32 %v3780, %v4413
        %4415 = vmatmul.f32.gmra.mxu0 %v4012
        %v4416 = vpop.f32.mrf.mxu0
        %v4417 = vadd.f32 %v3780, %v4416
        %4418 = vmatmul.f32.gmra.mxu0 %v4015
        %v4419 = vpop.f32.mrf.mxu0
        %v4420 = vadd.f32 %v3780, %v4419
        %4421 = vmatmul.f32.gmra.mxu0 %v4018
        %v4422 = vpop.f32.mrf.mxu0
        %v4423 = vadd.f32 %v3780, %v4422
        %4424 = vmatmul.f32.gmra.mxu0 %v4021
        %v4425 = vpop.f32.mrf.mxu0
        %v4426 = vadd.f32 %v3780, %v4425
        %4427 = vmatmul.f32.gmra.mxu0 %v4024
        %v4428 = vpop.f32.mrf.mxu0
        %v4429 = vadd.f32 %v3780, %v4428
        %4430 = vmatmul.f32.gmra.mxu0 %v4027
        %v4431 = vpop.f32.mrf.mxu0
        %v4432 = vadd.f32 %v3780, %v4431
        %4433 = vmatmul.f32.gmra.mxu0 %v4030
        %v4434 = vpop.f32.mrf.mxu0
        %v4435 = vadd.f32 %v3780, %v4434
        %4436 = vmatmul.f32.gmra.mxu0 %v4033
        %v4437 = vpop.f32.mrf.mxu0
        %v4438 = vadd.f32 %v3780, %v4437
        %4439 = vmatmul.f32.gmra.mxu0 %v4036
        %v4440 = vpop.f32.mrf.mxu0
        %v4441 = vadd.f32 %v3780, %v4440
        %4442 = vmatmul.f32.gmra.mxu0 %v4039
        %v4443 = vpop.f32.mrf.mxu0
        %v4444 = vadd.f32 %v3780, %v4443
        %4445 = vmatmul.f32.gmra.mxu0 %v4042
        %v4446 = vpop.f32.mrf.mxu0
        %v4447 = vadd.f32 %v3780, %v4446
        %4448 = vmatmul.f32.gmra.mxu0 %v4045
        %v4449 = vpop.f32.mrf.mxu0
        %v4450 = vadd.f32 %v3780, %v4449
        %4451 = vmatmul.f32.gmra.mxu0 %v4048
        %v4452 = vpop.f32.mrf.mxu0
        %v4453 = vadd.f32 %v3780, %v4452
        %4454 = vmatmul.f32.gmra.mxu0 %v4051
        %v4455 = vpop.f32.mrf.mxu0
        %v4456 = vadd.f32 %v3780, %v4455
        %4457 = vmatmul.f32.gmra.mxu0 %v4054
        %v4458 = vpop.f32.mrf.mxu0
        %v4459 = vadd.f32 %v3780, %v4458
        %4460 = vmatmul.f32.gmra.mxu0 %v4057
        %v4461 = vpop.f32.mrf.mxu0
        %v4462 = vadd.f32 %v3780, %v4461
        %4463 = vmatmul.f32.gmra.mxu0 %v4060
        %v4464 = vpop.f32.mrf.mxu0
        %v4465 = vadd.f32 %v3780, %v4464
        %4466 = vmatmul.f32.gmra.mxu0 %v4063
        %v4467 = vpop.f32.mrf.mxu0
        %v4468 = vadd.f32 %v3780, %v4467
        %4469 = vmatmul.f32.gmra.mxu0 %v4066
        %v4470 = vpop.f32.mrf.mxu0
        %v4471 = vadd.f32 %v3780, %v4470
        %4472 = vmatmul.f32.gmra.mxu0 %v4069
        %v4473 = vpop.f32.mrf.mxu0
        %v4474 = vadd.f32 %v3780, %v4473
        %4475 = vmatmul.f32.gmra.mxu0 %v4072
        %v4476 = vpop.f32.mrf.mxu0
        %v4477 = vadd.f32 %v3780, %v4476
        %4478 = vmatmul.f32.gmra.mxu0 %v4075
        %v4479 = vpop.f32.mrf.mxu0
        %v4480 = vadd.f32 %v3780, %v4479
        %4481 = vmatmul.f32.gmra.mxu0 %v4078
        %v4482 = vpop.f32.mrf.mxu0
        %v4483 = vadd.f32 %v3780, %v4482
        %4484 = vmatmul.f32.gmra.mxu0 %v4081
        %v4485 = vpop.f32.mrf.mxu0
        %v4486 = vadd.f32 %v3780, %v4485
        %4487 = vmatmul.f32.gmra.mxu0 %v4084
        %v4488 = vpop.f32.mrf.mxu0
        %v4489 = vadd.f32 %v3780, %v4488
        %4490 = vmatmul.f32.gmra.mxu0 %v4087
        %v4491 = vpop.f32.mrf.mxu0
        %v4492 = vadd.f32 %v3780, %v4491
        %4493 = vmatmul.f32.gmra.mxu0 %v4090
        %v4494 = vpop.f32.mrf.mxu0
        %v4495 = vadd.f32 %v3780, %v4494
        %4496 = vmatmul.f32.gmra.mxu0 %v4093
        %v4497 = vpop.f32.mrf.mxu0
        %v4498 = vadd.f32 %v3780, %v4497
        %4499 = vmatmul.f32.gmra.mxu0 %v4096
        %v4500 = vpop.f32.mrf.mxu0
        %v4501 = vadd.f32 %v3780, %v4500
        %4502 = vmatmul.f32.gmra.mxu0 %v4099
        %v4503 = vpop.f32.mrf.mxu0
        %v4504 = vadd.f32 %v3780, %v4503
        %4505 = vmatmul.f32.gmra.mxu0 %v4102
        %v4506 = vpop.f32.mrf.mxu0
        %v4507 = vadd.f32 %v3780, %v4506
        %4508 = vmatmul.f32.gmra.mxu0 %v4105
        %v4509 = vpop.f32.mrf.mxu0
        %v4510 = vadd.f32 %v3780, %v4509
        %4511 = vmatmul.f32.gmra.mxu0 %v4108
        %v4512 = vpop.f32.mrf.mxu0
        %v4513 = vadd.f32 %v3780, %v4512
        %4514 = vmatmul.f32.gmra.mxu0 %v4111
        %v4515 = vpop.f32.mrf.mxu0
        %v4516 = vadd.f32 %v3780, %v4515
        %4517 = vmatmul.f32.gmra.mxu0 %v4114
        %v4518 = vpop.f32.mrf.mxu0
        %v4519 = vadd.f32 %v3780, %v4518
        %4520 = vmatmul.f32.gmra.mxu0 %v4117
        %v4521 = vpop.f32.mrf.mxu0
        %v4522 = vadd.f32 %v3780, %v4521
        %4523 = vmatmul.f32.gmra.mxu0 %v4120
        %v4524 = vpop.f32.mrf.mxu0
        %v4525 = vadd.f32 %v3780, %v4524
        %4526 = vmatmul.f32.gmra.mxu0 %v4123
        %v4527 = vpop.f32.mrf.mxu0
        %v4528 = vadd.f32 %v3780, %v4527
        %4529 = vmatmul.f32.gmra.mxu0 %v4126
        %v4530 = vpop.f32.mrf.mxu0
        %v4531 = vadd.f32 %v3780, %v4530
        %4532 = vmatmul.f32.gmra.mxu0 %v4129
        %v4533 = vpop.f32.mrf.mxu0
        %v4534 = vadd.f32 %v3780, %v4533
        %4535 = vmatmul.f32.gmra.mxu0 %v4132
        %v4536 = vpop.f32.mrf.mxu0
        %v4537 = vadd.f32 %v3780, %v4536
        %4538 = vmatmul.f32.gmra.mxu0 %v4135
        %v4539 = vpop.f32.mrf.mxu0
        %v4540 = vadd.f32 %v3780, %v4539
        %4541 = vmatmul.f32.gmra.mxu0 %v4138
        %v4542 = vpop.f32.mrf.mxu0
        %v4543 = vadd.f32 %v3780, %v4542
        %4544 = vmatmul.f32.gmra.mxu0 %v4141
        %v4545 = vpop.f32.mrf.mxu0
        %v4546 = vadd.f32 %v3780, %v4545
        %4547 = vmatmul.f32.gmra.mxu0 %v4144
        %v4548 = vpop.f32.mrf.mxu0
        %v4549 = vadd.f32 %v3780, %v4548
        %4550 = vmatmul.f32.gmra.mxu0 %v4147
        %v4551 = vpop.f32.mrf.mxu0
        %v4552 = vadd.f32 %v3780, %v4551
        %4553 = vmatmul.f32.gmra.mxu0 %v4150
        %v4554 = vpop.f32.mrf.mxu0
        %v4555 = vadd.f32 %v3780, %v4554
        %4556 = vmatmul.f32.gmra.mxu0 %v4153
        %v4557 = vpop.f32.mrf.mxu0
        %v4558 = vadd.f32 %v3780, %v4557
        %4559 = vmatmul.f32.gmra.mxu0 %v4156
        %v4560 = vpop.f32.mrf.mxu0
        %v4561 = vadd.f32 %v3780, %v4560
        %4562 = vmatmul.f32.gmra.mxu0 %v4159
        %v4563 = vpop.f32.mrf.mxu0
        %v4564 = vadd.f32 %v3780, %v4563
        %4565 = vmatmul.f32.gmra.mxu0 %v4162
        %v4566 = vpop.f32.mrf.mxu0
        %v4567 = vadd.f32 %v3780, %v4566
        %4568 = vmatmul.f32.gmra.mxu0 %v4165
        %v4569 = vpop.f32.mrf.mxu0
        %v4570 = vadd.f32 %v3780, %v4569
        %4571 = vdwg.mxu0
        %s4572 = scalar_lea.vmem %s7, 160
        %v4573 = vld [vmem:[%s4572] sm:$0xff]
        %v4574 = vld [vmem:[%s4572 + $0x8] sm:$0xff]
        %v4575 = vld [vmem:[%s4572 + $0x10] sm:$0xff]
        %v4576 = vld [vmem:[%s4572 + $0x18] sm:$0x3f]
        %s4577 = scalar_lea.vmem %s7, 96
        %v4578 = vld [vmem:[%s4577] sm:$0xff]
        %v4579 = vld [vmem:[%s4577 + $0x8] sm:$0xff]
        %v4580 = vld [vmem:[%s4577 + $0x10] sm:$0xff]
        %v4581 = vld [vmem:[%s4577 + $0x18] sm:$0x3f]
        %v4583 = vsel %vm3782, %v3162, 0
        %v4586 = vsel %vm3782, %v3165, 0
        %v4589 = vsel %vm3782, %v3168, 0
        %v4592 = vsel %vm3782, %v3171, 0
        %v4595 = vsel %vm3782, %v3174, 0
        %v4598 = vsel %vm3782, %v3177, 0
        %v4601 = vsel %vm3782, %v3180, 0
        %v4604 = vsel %vm3782, %v3183, 0
        %v4607 = vsel %vm3782, %v3186, 0
        %v4610 = vsel %vm3782, %v3189, 0
        %v4613 = vsel %vm3782, %v3192, 0
        %v4616 = vsel %vm3782, %v3195, 0
        %v4619 = vsel %vm3782, %v3198, 0
        %v4622 = vsel %vm3782, %v3201, 0
        %v4625 = vsel %vm3782, %v3204, 0
        %v4628 = vsel %vm3782, %v3207, 0
        %v4631 = vsel %vm3782, %v3210, 0
        %v4634 = vsel %vm3782, %v3213, 0
        %v4637 = vsel %vm3782, %v3216, 0
        %v4640 = vsel %vm3782, %v3219, 0
        %v4643 = vsel %vm3782, %v3222, 0
        %v4646 = vsel %vm3782, %v3225, 0
        %v4649 = vsel %vm3782, %v3228, 0
        %v4652 = vsel %vm3782, %v3231, 0
        %v4655 = vsel %vm3782, %v3234, 0
        %v4658 = vsel %vm3782, %v3237, 0
        %v4661 = vsel %vm3782, %v3240, 0
        %v4664 = vsel %vm3782, %v3243, 0
        %v4667 = vsel %vm3782, %v3246, 0
        %v4670 = vsel %vm3782, %v3249, 0
        %v4673 = vsel %vm3782, %v3252, 0
        %v4676 = vsel %vm3782, %v3255, 0
        %v4679 = vsel %vm4167, %v4581, 0
        %4681 = vmatpush.msra.mxu0 0.0
        %4682 = vmatpush.msra.mxu0 0.0
        %4683 = vmatpush.msra.mxu0 0.0
        %4684 = vmatpush.msra.mxu0 0.0
        %4685 = vmatpush.msra.mxu0 0.0
        %4686 = vmatpush.msra.mxu0 0.0
        %4687 = vmatpush.msra.mxu0 0.0
        %4688 = vmatpush.msra.mxu0 0.0
        %4689 = vmatpush.msra.mxu0 0.0
        %4690 = vmatpush.msra.mxu0 0.0
        %4691 = vmatpush.msra.mxu0 0.0
        %4692 = vmatpush.msra.mxu0 0.0
        %4693 = vmatpush.msra.mxu0 %v4679
        %4694 = vmatpush.msra.mxu0 %v4580
        %4695 = vmatpush.msra.mxu0 %v4579
        %4696 = vmatpush.msra.mxu0 %v4578
        %4697 = vmatmul.f32.gmra.mxu0 %v3808
        %v4698 = vpop.f32.mrf.mxu0
        %v4699 = vadd.f32 0.0, %v4698
        %4700 = vmatmul.f32.gmra.mxu0 %v3811
        %v4701 = vpop.f32.mrf.mxu0
        %v4702 = vadd.f32 0.0, %v4701
        %4703 = vmatmul.f32.gmra.mxu0 %v3814
        %v4704 = vpop.f32.mrf.mxu0
        %v4705 = vadd.f32 0.0, %v4704
        %4706 = vmatmul.f32.gmra.mxu0 %v3817
        %v4707 = vpop.f32.mrf.mxu0
        %v4708 = vadd.f32 0.0, %v4707
        %4709 = vmatmul.f32.gmra.mxu0 %v3820
        %v4710 = vpop.f32.mrf.mxu0
        %v4711 = vadd.f32 0.0, %v4710
        %4712 = vmatmul.f32.gmra.mxu0 %v3823
        %v4713 = vpop.f32.mrf.mxu0
        %v4714 = vadd.f32 0.0, %v4713
        %4715 = vmatmul.f32.gmra.mxu0 %v3826
        %v4716 = vpop.f32.mrf.mxu0
        %v4717 = vadd.f32 0.0, %v4716
        %4718 = vmatmul.f32.gmra.mxu0 %v3829
        %v4719 = vpop.f32.mrf.mxu0
        %v4720 = vadd.f32 0.0, %v4719
        %4721 = vmatmul.f32.gmra.mxu0 %v3832
        %v4722 = vpop.f32.mrf.mxu0
        %v4723 = vadd.f32 0.0, %v4722
        %4724 = vmatmul.f32.gmra.mxu0 %v3835
        %v4725 = vpop.f32.mrf.mxu0
        %v4726 = vadd.f32 0.0, %v4725
        %4727 = vmatmul.f32.gmra.mxu0 %v3838
        %v4728 = vpop.f32.mrf.mxu0
        %v4729 = vadd.f32 0.0, %v4728
        %4730 = vmatmul.f32.gmra.mxu0 %v3841
        %v4731 = vpop.f32.mrf.mxu0
        %v4732 = vadd.f32 0.0, %v4731
        %4733 = vmatmul.f32.gmra.mxu0 %v3844
        %v4734 = vpop.f32.mrf.mxu0
        %v4735 = vadd.f32 0.0, %v4734
        %4736 = vmatmul.f32.gmra.mxu0 %v3847
        %v4737 = vpop.f32.mrf.mxu0
        %v4738 = vadd.f32 0.0, %v4737
        %4739 = vmatmul.f32.gmra.mxu0 %v3850
        %v4740 = vpop.f32.mrf.mxu0
        %v4741 = vadd.f32 0.0, %v4740
        %4742 = vmatmul.f32.gmra.mxu0 %v3853
        %v4743 = vpop.f32.mrf.mxu0
        %v4744 = vadd.f32 0.0, %v4743
        %4745 = vmatmul.f32.gmra.mxu0 %v3856
        %v4746 = vpop.f32.mrf.mxu0
        %v4747 = vadd.f32 0.0, %v4746
        %4748 = vmatmul.f32.gmra.mxu0 %v3859
        %v4749 = vpop.f32.mrf.mxu0
        %v4750 = vadd.f32 0.0, %v4749
        %4751 = vmatmul.f32.gmra.mxu0 %v3862
        %v4752 = vpop.f32.mrf.mxu0
        %v4753 = vadd.f32 0.0, %v4752
        %4754 = vmatmul.f32.gmra.mxu0 %v3865
        %v4755 = vpop.f32.mrf.mxu0
        %v4756 = vadd.f32 0.0, %v4755
        %4757 = vmatmul.f32.gmra.mxu0 %v3868
        %v4758 = vpop.f32.mrf.mxu0
        %v4759 = vadd.f32 0.0, %v4758
        %4760 = vmatmul.f32.gmra.mxu0 %v3871
        %v4761 = vpop.f32.mrf.mxu0
        %v4762 = vadd.f32 0.0, %v4761
        %4763 = vmatmul.f32.gmra.mxu0 %v3874
        %v4764 = vpop.f32.mrf.mxu0
        %v4765 = vadd.f32 0.0, %v4764
        %4766 = vmatmul.f32.gmra.mxu0 %v3877
        %v4767 = vpop.f32.mrf.mxu0
        %v4768 = vadd.f32 0.0, %v4767
        %4769 = vmatmul.f32.gmra.mxu0 %v4583
        %v4770 = vpop.f32.mrf.mxu0
        %v4771 = vadd.f32 0.0, %v4770
        %4772 = vmatmul.f32.gmra.mxu0 %v4586
        %v4773 = vpop.f32.mrf.mxu0
        %v4774 = vadd.f32 0.0, %v4773
        %4775 = vmatmul.f32.gmra.mxu0 %v4589
        %v4776 = vpop.f32.mrf.mxu0
        %v4777 = vadd.f32 0.0, %v4776
        %4778 = vmatmul.f32.gmra.mxu0 %v4592
        %v4779 = vpop.f32.mrf.mxu0
        %v4780 = vadd.f32 0.0, %v4779
        %4781 = vmatmul.f32.gmra.mxu0 %v4595
        %v4782 = vpop.f32.mrf.mxu0
        %v4783 = vadd.f32 0.0, %v4782
        %4784 = vmatmul.f32.gmra.mxu0 %v4598
        %v4785 = vpop.f32.mrf.mxu0
        %v4786 = vadd.f32 0.0, %v4785
        %4787 = vmatmul.f32.gmra.mxu0 %v4601
        %v4788 = vpop.f32.mrf.mxu0
        %v4789 = vadd.f32 0.0, %v4788
        %4790 = vmatmul.f32.gmra.mxu0 %v4604
        %v4791 = vpop.f32.mrf.mxu0
        %v4792 = vadd.f32 0.0, %v4791
        %4793 = vmatmul.f32.gmra.mxu0 %v3904
        %v4794 = vpop.f32.mrf.mxu0
        %v4795 = vadd.f32 0.0, %v4794
        %4796 = vmatmul.f32.gmra.mxu0 %v3907
        %v4797 = vpop.f32.mrf.mxu0
        %v4798 = vadd.f32 0.0, %v4797
        %4799 = vmatmul.f32.gmra.mxu0 %v3910
        %v4800 = vpop.f32.mrf.mxu0
        %v4801 = vadd.f32 0.0, %v4800
        %4802 = vmatmul.f32.gmra.mxu0 %v3913
        %v4803 = vpop.f32.mrf.mxu0
        %v4804 = vadd.f32 0.0, %v4803
        %4805 = vmatmul.f32.gmra.mxu0 %v3916
        %v4806 = vpop.f32.mrf.mxu0
        %v4807 = vadd.f32 0.0, %v4806
        %4808 = vmatmul.f32.gmra.mxu0 %v3919
        %v4809 = vpop.f32.mrf.mxu0
        %v4810 = vadd.f32 0.0, %v4809
        %4811 = vmatmul.f32.gmra.mxu0 %v3922
        %v4812 = vpop.f32.mrf.mxu0
        %v4813 = vadd.f32 0.0, %v4812
        %4814 = vmatmul.f32.gmra.mxu0 %v3925
        %v4815 = vpop.f32.mrf.mxu0
        %v4816 = vadd.f32 0.0, %v4815
        %4817 = vmatmul.f32.gmra.mxu0 %v3928
        %v4818 = vpop.f32.mrf.mxu0
        %v4819 = vadd.f32 0.0, %v4818
        %4820 = vmatmul.f32.gmra.mxu0 %v3931
        %v4821 = vpop.f32.mrf.mxu0
        %v4822 = vadd.f32 0.0, %v4821
        %4823 = vmatmul.f32.gmra.mxu0 %v3934
        %v4824 = vpop.f32.mrf.mxu0
        %v4825 = vadd.f32 0.0, %v4824
        %4826 = vmatmul.f32.gmra.mxu0 %v3937
        %v4827 = vpop.f32.mrf.mxu0
        %v4828 = vadd.f32 0.0, %v4827
        %4829 = vmatmul.f32.gmra.mxu0 %v3940
        %v4830 = vpop.f32.mrf.mxu0
        %v4831 = vadd.f32 0.0, %v4830
        %4832 = vmatmul.f32.gmra.mxu0 %v3943
        %v4833 = vpop.f32.mrf.mxu0
        %v4834 = vadd.f32 0.0, %v4833
        %4835 = vmatmul.f32.gmra.mxu0 %v3946
        %v4836 = vpop.f32.mrf.mxu0
        %v4837 = vadd.f32 0.0, %v4836
        %4838 = vmatmul.f32.gmra.mxu0 %v3949
        %v4839 = vpop.f32.mrf.mxu0
        %v4840 = vadd.f32 0.0, %v4839
        %4841 = vmatmul.f32.gmra.mxu0 %v3952
        %v4842 = vpop.f32.mrf.mxu0
        %v4843 = vadd.f32 0.0, %v4842
        %4844 = vmatmul.f32.gmra.mxu0 %v3955
        %v4845 = vpop.f32.mrf.mxu0
        %v4846 = vadd.f32 0.0, %v4845
        %4847 = vmatmul.f32.gmra.mxu0 %v3958
        %v4848 = vpop.f32.mrf.mxu0
        %v4849 = vadd.f32 0.0, %v4848
        %4850 = vmatmul.f32.gmra.mxu0 %v3961
        %v4851 = vpop.f32.mrf.mxu0
        %v4852 = vadd.f32 0.0, %v4851
        %4853 = vmatmul.f32.gmra.mxu0 %v3964
        %v4854 = vpop.f32.mrf.mxu0
        %v4855 = vadd.f32 0.0, %v4854
        %4856 = vmatmul.f32.gmra.mxu0 %v3967
        %v4857 = vpop.f32.mrf.mxu0
        %v4858 = vadd.f32 0.0, %v4857
        %4859 = vmatmul.f32.gmra.mxu0 %v3970
        %v4860 = vpop.f32.mrf.mxu0
        %v4861 = vadd.f32 0.0, %v4860
        %4862 = vmatmul.f32.gmra.mxu0 %v3973
        %v4863 = vpop.f32.mrf.mxu0
        %v4864 = vadd.f32 0.0, %v4863
        %4865 = vmatmul.f32.gmra.mxu0 %v4607
        %v4866 = vpop.f32.mrf.mxu0
        %v4867 = vadd.f32 0.0, %v4866
        %4868 = vmatmul.f32.gmra.mxu0 %v4610
        %v4869 = vpop.f32.mrf.mxu0
        %v4870 = vadd.f32 0.0, %v4869
        %4871 = vmatmul.f32.gmra.mxu0 %v4613
        %v4872 = vpop.f32.mrf.mxu0
        %v4873 = vadd.f32 0.0, %v4872
        %4874 = vmatmul.f32.gmra.mxu0 %v4616
        %v4875 = vpop.f32.mrf.mxu0
        %v4876 = vadd.f32 0.0, %v4875
        %4877 = vmatmul.f32.gmra.mxu0 %v4619
        %v4878 = vpop.f32.mrf.mxu0
        %v4879 = vadd.f32 0.0, %v4878
        %4880 = vmatmul.f32.gmra.mxu0 %v4622
        %v4881 = vpop.f32.mrf.mxu0
        %v4882 = vadd.f32 0.0, %v4881
        %4883 = vmatmul.f32.gmra.mxu0 %v4625
        %v4884 = vpop.f32.mrf.mxu0
        %v4885 = vadd.f32 0.0, %v4884
        %4886 = vmatmul.f32.gmra.mxu0 %v4628
        %v4887 = vpop.f32.mrf.mxu0
        %v4888 = vadd.f32 0.0, %v4887
        %4889 = vmatmul.f32.gmra.mxu0 %v4000
        %v4890 = vpop.f32.mrf.mxu0
        %v4891 = vadd.f32 0.0, %v4890
        %4892 = vmatmul.f32.gmra.mxu0 %v4003
        %v4893 = vpop.f32.mrf.mxu0
        %v4894 = vadd.f32 0.0, %v4893
        %4895 = vmatmul.f32.gmra.mxu0 %v4006
        %v4896 = vpop.f32.mrf.mxu0
        %v4897 = vadd.f32 0.0, %v4896
        %4898 = vmatmul.f32.gmra.mxu0 %v4009
        %v4899 = vpop.f32.mrf.mxu0
        %v4900 = vadd.f32 0.0, %v4899
        %4901 = vmatmul.f32.gmra.mxu0 %v4012
        %v4902 = vpop.f32.mrf.mxu0
        %v4903 = vadd.f32 0.0, %v4902
        %4904 = vmatmul.f32.gmra.mxu0 %v4015
        %v4905 = vpop.f32.mrf.mxu0
        %v4906 = vadd.f32 0.0, %v4905
        %4907 = vmatmul.f32.gmra.mxu0 %v4018
        %v4908 = vpop.f32.mrf.mxu0
        %v4909 = vadd.f32 0.0, %v4908
        %4910 = vmatmul.f32.gmra.mxu0 %v4021
        %v4911 = vpop.f32.mrf.mxu0
        %v4912 = vadd.f32 0.0, %v4911
        %4913 = vmatmul.f32.gmra.mxu0 %v4024
        %v4914 = vpop.f32.mrf.mxu0
        %v4915 = vadd.f32 0.0, %v4914
        %4916 = vmatmul.f32.gmra.mxu0 %v4027
        %v4917 = vpop.f32.mrf.mxu0
        %v4918 = vadd.f32 0.0, %v4917
        %4919 = vmatmul.f32.gmra.mxu0 %v4030
        %v4920 = vpop.f32.mrf.mxu0
        %v4921 = vadd.f32 0.0, %v4920
        %4922 = vmatmul.f32.gmra.mxu0 %v4033
        %v4923 = vpop.f32.mrf.mxu0
        %v4924 = vadd.f32 0.0, %v4923
        %4925 = vmatmul.f32.gmra.mxu0 %v4036
        %v4926 = vpop.f32.mrf.mxu0
        %v4927 = vadd.f32 0.0, %v4926
        %4928 = vmatmul.f32.gmra.mxu0 %v4039
        %v4929 = vpop.f32.mrf.mxu0
        %v4930 = vadd.f32 0.0, %v4929
        %4931 = vmatmul.f32.gmra.mxu0 %v4042
        %v4932 = vpop.f32.mrf.mxu0
        %v4933 = vadd.f32 0.0, %v4932
        %4934 = vmatmul.f32.gmra.mxu0 %v4045
        %v4935 = vpop.f32.mrf.mxu0
        %v4936 = vadd.f32 0.0, %v4935
        %4937 = vmatmul.f32.gmra.mxu0 %v4048
        %v4938 = vpop.f32.mrf.mxu0
        %v4939 = vadd.f32 0.0, %v4938
        %4940 = vmatmul.f32.gmra.mxu0 %v4051
        %v4941 = vpop.f32.mrf.mxu0
        %v4942 = vadd.f32 0.0, %v4941
        %4943 = vmatmul.f32.gmra.mxu0 %v4054
        %v4944 = vpop.f32.mrf.mxu0
        %v4945 = vadd.f32 0.0, %v4944
        %4946 = vmatmul.f32.gmra.mxu0 %v4057
        %v4947 = vpop.f32.mrf.mxu0
        %v4948 = vadd.f32 0.0, %v4947
        %4949 = vmatmul.f32.gmra.mxu0 %v4060
        %v4950 = vpop.f32.mrf.mxu0
        %v4951 = vadd.f32 0.0, %v4950
        %4952 = vmatmul.f32.gmra.mxu0 %v4063
        %v4953 = vpop.f32.mrf.mxu0
        %v4954 = vadd.f32 0.0, %v4953
        %4955 = vmatmul.f32.gmra.mxu0 %v4066
        %v4956 = vpop.f32.mrf.mxu0
        %v4957 = vadd.f32 0.0, %v4956
        %4958 = vmatmul.f32.gmra.mxu0 %v4069
        %v4959 = vpop.f32.mrf.mxu0
        %v4960 = vadd.f32 0.0, %v4959
        %4961 = vmatmul.f32.gmra.mxu0 %v4631
        %v4962 = vpop.f32.mrf.mxu0
        %v4963 = vadd.f32 0.0, %v4962
        %4964 = vmatmul.f32.gmra.mxu0 %v4634
        %v4965 = vpop.f32.mrf.mxu0
        %v4966 = vadd.f32 0.0, %v4965
        %4967 = vmatmul.f32.gmra.mxu0 %v4637
        %v4968 = vpop.f32.mrf.mxu0
        %v4969 = vadd.f32 0.0, %v4968
        %4970 = vmatmul.f32.gmra.mxu0 %v4640
        %v4971 = vpop.f32.mrf.mxu0
        %v4972 = vadd.f32 0.0, %v4971
        %4973 = vmatmul.f32.gmra.mxu0 %v4643
        %v4974 = vpop.f32.mrf.mxu0
        %v4975 = vadd.f32 0.0, %v4974
        %4976 = vmatmul.f32.gmra.mxu0 %v4646
        %v4977 = vpop.f32.mrf.mxu0
        %v4978 = vadd.f32 0.0, %v4977
        %4979 = vmatmul.f32.gmra.mxu0 %v4649
        %v4980 = vpop.f32.mrf.mxu0
        %v4981 = vadd.f32 0.0, %v4980
        %4982 = vmatmul.f32.gmra.mxu0 %v4652
        %v4983 = vpop.f32.mrf.mxu0
        %v4984 = vadd.f32 0.0, %v4983
        %4985 = vmatmul.f32.gmra.mxu0 %v4096
        %v4986 = vpop.f32.mrf.mxu0
        %v4987 = vadd.f32 0.0, %v4986
        %4988 = vmatmul.f32.gmra.mxu0 %v4099
        %v4989 = vpop.f32.mrf.mxu0
        %v4990 = vadd.f32 0.0, %v4989
        %4991 = vmatmul.f32.gmra.mxu0 %v4102
        %v4992 = vpop.f32.mrf.mxu0
        %v4993 = vadd.f32 0.0, %v4992
        %4994 = vmatmul.f32.gmra.mxu0 %v4105
        %v4995 = vpop.f32.mrf.mxu0
        %v4996 = vadd.f32 0.0, %v4995
        %4997 = vmatmul.f32.gmra.mxu0 %v4108
        %v4998 = vpop.f32.mrf.mxu0
        %v4999 = vadd.f32 0.0, %v4998
        %5000 = vmatmul.f32.gmra.mxu0 %v4111
        %v5001 = vpop.f32.mrf.mxu0
        %v5002 = vadd.f32 0.0, %v5001
        %5003 = vmatmul.f32.gmra.mxu0 %v4114
        %v5004 = vpop.f32.mrf.mxu0
        %v5005 = vadd.f32 0.0, %v5004
        %5006 = vmatmul.f32.gmra.mxu0 %v4117
        %v5007 = vpop.f32.mrf.mxu0
        %v5008 = vadd.f32 0.0, %v5007
        %5009 = vmatmul.f32.gmra.mxu0 %v4120
        %v5010 = vpop.f32.mrf.mxu0
        %v5011 = vadd.f32 0.0, %v5010
        %5012 = vmatmul.f32.gmra.mxu0 %v4123
        %v5013 = vpop.f32.mrf.mxu0
        %v5014 = vadd.f32 0.0, %v5013
        %5015 = vmatmul.f32.gmra.mxu0 %v4126
        %v5016 = vpop.f32.mrf.mxu0
        %v5017 = vadd.f32 0.0, %v5016
        %5018 = vmatmul.f32.gmra.mxu0 %v4129
        %v5019 = vpop.f32.mrf.mxu0
        %v5020 = vadd.f32 0.0, %v5019
        %5021 = vmatmul.f32.gmra.mxu0 %v4132
        %v5022 = vpop.f32.mrf.mxu0
        %v5023 = vadd.f32 0.0, %v5022
        %5024 = vmatmul.f32.gmra.mxu0 %v4135
        %v5025 = vpop.f32.mrf.mxu0
        %v5026 = vadd.f32 0.0, %v5025
        %5027 = vmatmul.f32.gmra.mxu0 %v4138
        %v5028 = vpop.f32.mrf.mxu0
        %v5029 = vadd.f32 0.0, %v5028
        %5030 = vmatmul.f32.gmra.mxu0 %v4141
        %v5031 = vpop.f32.mrf.mxu0
        %v5032 = vadd.f32 0.0, %v5031
        %5033 = vmatmul.f32.gmra.mxu0 %v4144
        %v5034 = vpop.f32.mrf.mxu0
        %v5035 = vadd.f32 0.0, %v5034
        %5036 = vmatmul.f32.gmra.mxu0 %v4147
        %v5037 = vpop.f32.mrf.mxu0
        %v5038 = vadd.f32 0.0, %v5037
        %5039 = vmatmul.f32.gmra.mxu0 %v4150
        %v5040 = vpop.f32.mrf.mxu0
        %v5041 = vadd.f32 0.0, %v5040
        %5042 = vmatmul.f32.gmra.mxu0 %v4153
        %v5043 = vpop.f32.mrf.mxu0
        %v5044 = vadd.f32 0.0, %v5043
        %5045 = vmatmul.f32.gmra.mxu0 %v4156
        %v5046 = vpop.f32.mrf.mxu0
        %v5047 = vadd.f32 0.0, %v5046
        %5048 = vmatmul.f32.gmra.mxu0 %v4159
        %v5049 = vpop.f32.mrf.mxu0
        %v5050 = vadd.f32 0.0, %v5049
        %5051 = vmatmul.f32.gmra.mxu0 %v4162
        %v5052 = vpop.f32.mrf.mxu0
        %v5053 = vadd.f32 0.0, %v5052
        %5054 = vmatmul.f32.gmra.mxu0 %v4165
        %v5055 = vpop.f32.mrf.mxu0
        %v5056 = vadd.f32 0.0, %v5055
        %5057 = vmatmul.f32.gmra.mxu0 %v4655
        %v5058 = vpop.f32.mrf.mxu0
        %v5059 = vadd.f32 0.0, %v5058
        %5060 = vmatmul.f32.gmra.mxu0 %v4658
        %v5061 = vpop.f32.mrf.mxu0
        %v5062 = vadd.f32 0.0, %v5061
        %5063 = vmatmul.f32.gmra.mxu0 %v4661
        %v5064 = vpop.f32.mrf.mxu0
        %v5065 = vadd.f32 0.0, %v5064
        %5066 = vmatmul.f32.gmra.mxu0 %v4664
        %v5067 = vpop.f32.mrf.mxu0
        %v5068 = vadd.f32 0.0, %v5067
        %5069 = vmatmul.f32.gmra.mxu0 %v4667
        %v5070 = vpop.f32.mrf.mxu0
        %v5071 = vadd.f32 0.0, %v5070
        %5072 = vmatmul.f32.gmra.mxu0 %v4670
        %v5073 = vpop.f32.mrf.mxu0
        %v5074 = vadd.f32 0.0, %v5073
        %5075 = vmatmul.f32.gmra.mxu0 %v4673
        %v5076 = vpop.f32.mrf.mxu0
        %v5077 = vadd.f32 0.0, %v5076
        %5078 = vmatmul.f32.gmra.mxu0 %v4676
        %v5079 = vpop.f32.mrf.mxu0
        %v5080 = vadd.f32 0.0, %v5079
        %5081 = vdwg.mxu0
        %v5083 = vsel %vm4167, %v4576, 0
        %5085 = vmatpush.msra.mxu0 0.0
        %5086 = vmatpush.msra.mxu0 0.0
        %5087 = vmatpush.msra.mxu0 0.0
        %5088 = vmatpush.msra.mxu0 0.0
        %5089 = vmatpush.msra.mxu0 0.0
        %5090 = vmatpush.msra.mxu0 0.0
        %5091 = vmatpush.msra.mxu0 0.0
        %5092 = vmatpush.msra.mxu0 0.0
        %5093 = vmatpush.msra.mxu0 0.0
        %5094 = vmatpush.msra.mxu0 0.0
        %5095 = vmatpush.msra.mxu0 0.0
        %5096 = vmatpush.msra.mxu0 0.0
        %5097 = vmatpush.msra.mxu0 %v5083
        %5098 = vmatpush.msra.mxu0 %v4575
        %5099 = vmatpush.msra.mxu0 %v4574
        %5100 = vmatpush.msra.mxu0 %v4573
        %5101 = vmatmul.f32.gmra.mxu0 %v3784
        %v5102 = vpop.f32.mrf.mxu0
        %v5103 = vadd.f32 %v4699, %v5102
        %5104 = vmatmul.f32.gmra.mxu0 %v3787
        %v5105 = vpop.f32.mrf.mxu0
        %v5106 = vadd.f32 %v4702, %v5105
        %5107 = vmatmul.f32.gmra.mxu0 %v3790
        %v5108 = vpop.f32.mrf.mxu0
        %v5109 = vadd.f32 %v4705, %v5108
        %5110 = vmatmul.f32.gmra.mxu0 %v3793
        %v5111 = vpop.f32.mrf.mxu0
        %v5112 = vadd.f32 %v4708, %v5111
        %5113 = vmatmul.f32.gmra.mxu0 %v3796
        %v5114 = vpop.f32.mrf.mxu0
        %v5115 = vadd.f32 %v4711, %v5114
        %5116 = vmatmul.f32.gmra.mxu0 %v3799
        %v5117 = vpop.f32.mrf.mxu0
        %v5118 = vadd.f32 %v4714, %v5117
        %5119 = vmatmul.f32.gmra.mxu0 %v3802
        %v5120 = vpop.f32.mrf.mxu0
        %v5121 = vadd.f32 %v4717, %v5120
        %5122 = vmatmul.f32.gmra.mxu0 %v3805
        %v5123 = vpop.f32.mrf.mxu0
        %v5124 = vadd.f32 %v4720, %v5123
        %5125 = vmatmul.f32.gmra.mxu0 %v3808
        %v5126 = vpop.f32.mrf.mxu0
        %v5127 = vadd.f32 %v4723, %v5126
        %5128 = vmatmul.f32.gmra.mxu0 %v3811
        %v5129 = vpop.f32.mrf.mxu0
        %v5130 = vadd.f32 %v4726, %v5129
        %5131 = vmatmul.f32.gmra.mxu0 %v3814
        %v5132 = vpop.f32.mrf.mxu0
        %v5133 = vadd.f32 %v4729, %v5132
        %5134 = vmatmul.f32.gmra.mxu0 %v3817
        %v5135 = vpop.f32.mrf.mxu0
        %v5136 = vadd.f32 %v4732, %v5135
        %5137 = vmatmul.f32.gmra.mxu0 %v3820
        %v5138 = vpop.f32.mrf.mxu0
        %v5139 = vadd.f32 %v4735, %v5138
        %5140 = vmatmul.f32.gmra.mxu0 %v3823
        %v5141 = vpop.f32.mrf.mxu0
        %v5142 = vadd.f32 %v4738, %v5141
        %5143 = vmatmul.f32.gmra.mxu0 %v3826
        %v5144 = vpop.f32.mrf.mxu0
        %v5145 = vadd.f32 %v4741, %v5144
        %5146 = vmatmul.f32.gmra.mxu0 %v3829
        %v5147 = vpop.f32.mrf.mxu0
        %v5148 = vadd.f32 %v4744, %v5147
        %5149 = vmatmul.f32.gmra.mxu0 %v3832
        %v5150 = vpop.f32.mrf.mxu0
        %v5151 = vadd.f32 %v4747, %v5150
        %5152 = vmatmul.f32.gmra.mxu0 %v3835
        %v5153 = vpop.f32.mrf.mxu0
        %v5154 = vadd.f32 %v4750, %v5153
        %5155 = vmatmul.f32.gmra.mxu0 %v3838
        %v5156 = vpop.f32.mrf.mxu0
        %v5157 = vadd.f32 %v4753, %v5156
        %5158 = vmatmul.f32.gmra.mxu0 %v3841
        %v5159 = vpop.f32.mrf.mxu0
        %v5160 = vadd.f32 %v4756, %v5159
        %5161 = vmatmul.f32.gmra.mxu0 %v3844
        %v5162 = vpop.f32.mrf.mxu0
        %v5163 = vadd.f32 %v4759, %v5162
        %5164 = vmatmul.f32.gmra.mxu0 %v3847
        %v5165 = vpop.f32.mrf.mxu0
        %v5166 = vadd.f32 %v4762, %v5165
        %5167 = vmatmul.f32.gmra.mxu0 %v3850
        %v5168 = vpop.f32.mrf.mxu0
        %v5169 = vadd.f32 %v4765, %v5168
        %5170 = vmatmul.f32.gmra.mxu0 %v3853
        %v5171 = vpop.f32.mrf.mxu0
        %v5172 = vadd.f32 %v4768, %v5171
        %5173 = vmatmul.f32.gmra.mxu0 %v3856
        %v5174 = vpop.f32.mrf.mxu0
        %v5175 = vadd.f32 %v4771, %v5174
        %5176 = vmatmul.f32.gmra.mxu0 %v3859
        %v5177 = vpop.f32.mrf.mxu0
        %v5178 = vadd.f32 %v4774, %v5177
        %5179 = vmatmul.f32.gmra.mxu0 %v3862
        %v5180 = vpop.f32.mrf.mxu0
        %v5181 = vadd.f32 %v4777, %v5180
        %5182 = vmatmul.f32.gmra.mxu0 %v3865
        %v5183 = vpop.f32.mrf.mxu0
        %v5184 = vadd.f32 %v4780, %v5183
        %5185 = vmatmul.f32.gmra.mxu0 %v3868
        %v5186 = vpop.f32.mrf.mxu0
        %v5187 = vadd.f32 %v4783, %v5186
        %5188 = vmatmul.f32.gmra.mxu0 %v3871
        %v5189 = vpop.f32.mrf.mxu0
        %v5190 = vadd.f32 %v4786, %v5189
        %5191 = vmatmul.f32.gmra.mxu0 %v3874
        %v5192 = vpop.f32.mrf.mxu0
        %v5193 = vadd.f32 %v4789, %v5192
        %5194 = vmatmul.f32.gmra.mxu0 %v3877
        %v5195 = vpop.f32.mrf.mxu0
        %v5196 = vadd.f32 %v4792, %v5195
        %5197 = vmatmul.f32.gmra.mxu0 %v3880
        %v5198 = vpop.f32.mrf.mxu0
        %v5199 = vadd.f32 %v4795, %v5198
        %5200 = vmatmul.f32.gmra.mxu0 %v3883
        %v5201 = vpop.f32.mrf.mxu0
        %v5202 = vadd.f32 %v4798, %v5201
        %5203 = vmatmul.f32.gmra.mxu0 %v3886
        %v5204 = vpop.f32.mrf.mxu0
        %v5205 = vadd.f32 %v4801, %v5204
        %5206 = vmatmul.f32.gmra.mxu0 %v3889
        %v5207 = vpop.f32.mrf.mxu0
        %v5208 = vadd.f32 %v4804, %v5207
        %5209 = vmatmul.f32.gmra.mxu0 %v3892
        %v5210 = vpop.f32.mrf.mxu0
        %v5211 = vadd.f32 %v4807, %v5210
        %5212 = vmatmul.f32.gmra.mxu0 %v3895
        %v5213 = vpop.f32.mrf.mxu0
        %v5214 = vadd.f32 %v4810, %v5213
        %5215 = vmatmul.f32.gmra.mxu0 %v3898
        %v5216 = vpop.f32.mrf.mxu0
        %v5217 = vadd.f32 %v4813, %v5216
        %5218 = vmatmul.f32.gmra.mxu0 %v3901
        %v5219 = vpop.f32.mrf.mxu0
        %v5220 = vadd.f32 %v4816, %v5219
        %5221 = vmatmul.f32.gmra.mxu0 %v3904
        %v5222 = vpop.f32.mrf.mxu0
        %v5223 = vadd.f32 %v4819, %v5222
        %5224 = vmatmul.f32.gmra.mxu0 %v3907
        %v5225 = vpop.f32.mrf.mxu0
        %v5226 = vadd.f32 %v4822, %v5225
        %5227 = vmatmul.f32.gmra.mxu0 %v3910
        %v5228 = vpop.f32.mrf.mxu0
        %v5229 = vadd.f32 %v4825, %v5228
        %5230 = vmatmul.f32.gmra.mxu0 %v3913
        %v5231 = vpop.f32.mrf.mxu0
        %v5232 = vadd.f32 %v4828, %v5231
        %5233 = vmatmul.f32.gmra.mxu0 %v3916
        %v5234 = vpop.f32.mrf.mxu0
        %v5235 = vadd.f32 %v4831, %v5234
        %5236 = vmatmul.f32.gmra.mxu0 %v3919
        %v5237 = vpop.f32.mrf.mxu0
        %v5238 = vadd.f32 %v4834, %v5237
        %5239 = vmatmul.f32.gmra.mxu0 %v3922
        %v5240 = vpop.f32.mrf.mxu0
        %v5241 = vadd.f32 %v4837, %v5240
        %5242 = vmatmul.f32.gmra.mxu0 %v3925
        %v5243 = vpop.f32.mrf.mxu0
        %v5244 = vadd.f32 %v4840, %v5243
        %5245 = vmatmul.f32.gmra.mxu0 %v3928
        %v5246 = vpop.f32.mrf.mxu0
        %v5247 = vadd.f32 %v4843, %v5246
        %5248 = vmatmul.f32.gmra.mxu0 %v3931
        %v5249 = vpop.f32.mrf.mxu0
        %v5250 = vadd.f32 %v4846, %v5249
        %5251 = vmatmul.f32.gmra.mxu0 %v3934
        %v5252 = vpop.f32.mrf.mxu0
        %v5253 = vadd.f32 %v4849, %v5252
        %5254 = vmatmul.f32.gmra.mxu0 %v3937
        %v5255 = vpop.f32.mrf.mxu0
        %v5256 = vadd.f32 %v4852, %v5255
        %5257 = vmatmul.f32.gmra.mxu0 %v3940
        %v5258 = vpop.f32.mrf.mxu0
        %v5259 = vadd.f32 %v4855, %v5258
        %5260 = vmatmul.f32.gmra.mxu0 %v3943
        %v5261 = vpop.f32.mrf.mxu0
        %v5262 = vadd.f32 %v4858, %v5261
        %5263 = vmatmul.f32.gmra.mxu0 %v3946
        %v5264 = vpop.f32.mrf.mxu0
        %v5265 = vadd.f32 %v4861, %v5264
        %5266 = vmatmul.f32.gmra.mxu0 %v3949
        %v5267 = vpop.f32.mrf.mxu0
        %v5268 = vadd.f32 %v4864, %v5267
        %5269 = vmatmul.f32.gmra.mxu0 %v3952
        %v5270 = vpop.f32.mrf.mxu0
        %v5271 = vadd.f32 %v4867, %v5270
        %5272 = vmatmul.f32.gmra.mxu0 %v3955
        %v5273 = vpop.f32.mrf.mxu0
        %v5274 = vadd.f32 %v4870, %v5273
        %5275 = vmatmul.f32.gmra.mxu0 %v3958
        %v5276 = vpop.f32.mrf.mxu0
        %v5277 = vadd.f32 %v4873, %v5276
        %5278 = vmatmul.f32.gmra.mxu0 %v3961
        %v5279 = vpop.f32.mrf.mxu0
        %v5280 = vadd.f32 %v4876, %v5279
        %5281 = vmatmul.f32.gmra.mxu0 %v3964
        %v5282 = vpop.f32.mrf.mxu0
        %v5283 = vadd.f32 %v4879, %v5282
        %5284 = vmatmul.f32.gmra.mxu0 %v3967
        %v5285 = vpop.f32.mrf.mxu0
        %v5286 = vadd.f32 %v4882, %v5285
        %5287 = vmatmul.f32.gmra.mxu0 %v3970
        %v5288 = vpop.f32.mrf.mxu0
        %v5289 = vadd.f32 %v4885, %v5288
        %5290 = vmatmul.f32.gmra.mxu0 %v3973
        %v5291 = vpop.f32.mrf.mxu0
        %v5292 = vadd.f32 %v4888, %v5291
        %5293 = vmatmul.f32.gmra.mxu0 %v3976
        %v5294 = vpop.f32.mrf.mxu0
        %v5295 = vadd.f32 %v4891, %v5294
        %5296 = vmatmul.f32.gmra.mxu0 %v3979
        %v5297 = vpop.f32.mrf.mxu0
        %v5298 = vadd.f32 %v4894, %v5297
        %5299 = vmatmul.f32.gmra.mxu0 %v3982
        %v5300 = vpop.f32.mrf.mxu0
        %v5301 = vadd.f32 %v4897, %v5300
        %5302 = vmatmul.f32.gmra.mxu0 %v3985
        %v5303 = vpop.f32.mrf.mxu0
        %v5304 = vadd.f32 %v4900, %v5303
        %5305 = vmatmul.f32.gmra.mxu0 %v3988
        %v5306 = vpop.f32.mrf.mxu0
        %v5307 = vadd.f32 %v4903, %v5306
        %5308 = vmatmul.f32.gmra.mxu0 %v3991
        %v5309 = vpop.f32.mrf.mxu0
        %v5310 = vadd.f32 %v4906, %v5309
        %5311 = vmatmul.f32.gmra.mxu0 %v3994
        %v5312 = vpop.f32.mrf.mxu0
        %v5313 = vadd.f32 %v4909, %v5312
        %5314 = vmatmul.f32.gmra.mxu0 %v3997
        %v5315 = vpop.f32.mrf.mxu0
        %v5316 = vadd.f32 %v4912, %v5315
        %5317 = vmatmul.f32.gmra.mxu0 %v4000
        %v5318 = vpop.f32.mrf.mxu0
        %v5319 = vadd.f32 %v4915, %v5318
        %5320 = vmatmul.f32.gmra.mxu0 %v4003
        %v5321 = vpop.f32.mrf.mxu0
        %v5322 = vadd.f32 %v4918, %v5321
        %5323 = vmatmul.f32.gmra.mxu0 %v4006
        %v5324 = vpop.f32.mrf.mxu0
        %v5325 = vadd.f32 %v4921, %v5324
        %5326 = vmatmul.f32.gmra.mxu0 %v4009
        %v5327 = vpop.f32.mrf.mxu0
        %v5328 = vadd.f32 %v4924, %v5327
        %5329 = vmatmul.f32.gmra.mxu0 %v4012
        %v5330 = vpop.f32.mrf.mxu0
        %v5331 = vadd.f32 %v4927, %v5330
        %5332 = vmatmul.f32.gmra.mxu0 %v4015
        %v5333 = vpop.f32.mrf.mxu0
        %v5334 = vadd.f32 %v4930, %v5333
        %5335 = vmatmul.f32.gmra.mxu0 %v4018
        %v5336 = vpop.f32.mrf.mxu0
        %v5337 = vadd.f32 %v4933, %v5336
        %5338 = vmatmul.f32.gmra.mxu0 %v4021
        %v5339 = vpop.f32.mrf.mxu0
        %v5340 = vadd.f32 %v4936, %v5339
        %5341 = vmatmul.f32.gmra.mxu0 %v4024
        %v5342 = vpop.f32.mrf.mxu0
        %v5343 = vadd.f32 %v4939, %v5342
        %5344 = vmatmul.f32.gmra.mxu0 %v4027
        %v5345 = vpop.f32.mrf.mxu0
        %v5346 = vadd.f32 %v4942, %v5345
        %5347 = vmatmul.f32.gmra.mxu0 %v4030
        %v5348 = vpop.f32.mrf.mxu0
        %v5349 = vadd.f32 %v4945, %v5348
        %5350 = vmatmul.f32.gmra.mxu0 %v4033
        %v5351 = vpop.f32.mrf.mxu0
        %v5352 = vadd.f32 %v4948, %v5351
        %5353 = vmatmul.f32.gmra.mxu0 %v4036
        %v5354 = vpop.f32.mrf.mxu0
        %v5355 = vadd.f32 %v4951, %v5354
        %5356 = vmatmul.f32.gmra.mxu0 %v4039
        %v5357 = vpop.f32.mrf.mxu0
        %v5358 = vadd.f32 %v4954, %v5357
        %5359 = vmatmul.f32.gmra.mxu0 %v4042
        %v5360 = vpop.f32.mrf.mxu0
        %v5361 = vadd.f32 %v4957, %v5360
        %5362 = vmatmul.f32.gmra.mxu0 %v4045
        %v5363 = vpop.f32.mrf.mxu0
        %v5364 = vadd.f32 %v4960, %v5363
        %5365 = vmatmul.f32.gmra.mxu0 %v4048
        %v5366 = vpop.f32.mrf.mxu0
        %v5367 = vadd.f32 %v4963, %v5366
        %5368 = vmatmul.f32.gmra.mxu0 %v4051
        %v5369 = vpop.f32.mrf.mxu0
        %v5370 = vadd.f32 %v4966, %v5369
        %5371 = vmatmul.f32.gmra.mxu0 %v4054
        %v5372 = vpop.f32.mrf.mxu0
        %v5373 = vadd.f32 %v4969, %v5372
        %5374 = vmatmul.f32.gmra.mxu0 %v4057
        %v5375 = vpop.f32.mrf.mxu0
        %v5376 = vadd.f32 %v4972, %v5375
        %5377 = vmatmul.f32.gmra.mxu0 %v4060
        %v5378 = vpop.f32.mrf.mxu0
        %v5379 = vadd.f32 %v4975, %v5378
        %5380 = vmatmul.f32.gmra.mxu0 %v4063
        %v5381 = vpop.f32.mrf.mxu0
        %v5382 = vadd.f32 %v4978, %v5381
        %5383 = vmatmul.f32.gmra.mxu0 %v4066
        %v5384 = vpop.f32.mrf.mxu0
        %v5385 = vadd.f32 %v4981, %v5384
        %5386 = vmatmul.f32.gmra.mxu0 %v4069
        %v5387 = vpop.f32.mrf.mxu0
        %v5388 = vadd.f32 %v4984, %v5387
        %5389 = vmatmul.f32.gmra.mxu0 %v4072
        %v5390 = vpop.f32.mrf.mxu0
        %v5391 = vadd.f32 %v4987, %v5390
        %5392 = vmatmul.f32.gmra.mxu0 %v4075
        %v5393 = vpop.f32.mrf.mxu0
        %v5394 = vadd.f32 %v4990, %v5393
        %5395 = vmatmul.f32.gmra.mxu0 %v4078
        %v5396 = vpop.f32.mrf.mxu0
        %v5397 = vadd.f32 %v4993, %v5396
        %5398 = vmatmul.f32.gmra.mxu0 %v4081
        %v5399 = vpop.f32.mrf.mxu0
        %v5400 = vadd.f32 %v4996, %v5399
        %5401 = vmatmul.f32.gmra.mxu0 %v4084
        %v5402 = vpop.f32.mrf.mxu0
        %v5403 = vadd.f32 %v4999, %v5402
        %5404 = vmatmul.f32.gmra.mxu0 %v4087
        %v5405 = vpop.f32.mrf.mxu0
        %v5406 = vadd.f32 %v5002, %v5405
        %5407 = vmatmul.f32.gmra.mxu0 %v4090
        %v5408 = vpop.f32.mrf.mxu0
        %v5409 = vadd.f32 %v5005, %v5408
        %5410 = vmatmul.f32.gmra.mxu0 %v4093
        %v5411 = vpop.f32.mrf.mxu0
        %v5412 = vadd.f32 %v5008, %v5411
        %5413 = vmatmul.f32.gmra.mxu0 %v4096
        %v5414 = vpop.f32.mrf.mxu0
        %v5415 = vadd.f32 %v5011, %v5414
        %5416 = vmatmul.f32.gmra.mxu0 %v4099
        %v5417 = vpop.f32.mrf.mxu0
        %v5418 = vadd.f32 %v5014, %v5417
        %5419 = vmatmul.f32.gmra.mxu0 %v4102
        %v5420 = vpop.f32.mrf.mxu0
        %v5421 = vadd.f32 %v5017, %v5420
        %5422 = vmatmul.f32.gmra.mxu0 %v4105
        %v5423 = vpop.f32.mrf.mxu0
        %v5424 = vadd.f32 %v5020, %v5423
        %5425 = vmatmul.f32.gmra.mxu0 %v4108
        %v5426 = vpop.f32.mrf.mxu0
        %v5427 = vadd.f32 %v5023, %v5426
        %5428 = vmatmul.f32.gmra.mxu0 %v4111
        %v5429 = vpop.f32.mrf.mxu0
        %v5430 = vadd.f32 %v5026, %v5429
        %5431 = vmatmul.f32.gmra.mxu0 %v4114
        %v5432 = vpop.f32.mrf.mxu0
        %v5433 = vadd.f32 %v5029, %v5432
        %5434 = vmatmul.f32.gmra.mxu0 %v4117
        %v5435 = vpop.f32.mrf.mxu0
        %v5436 = vadd.f32 %v5032, %v5435
        %5437 = vmatmul.f32.gmra.mxu0 %v4120
        %v5438 = vpop.f32.mrf.mxu0
        %v5439 = vadd.f32 %v5035, %v5438
        %5440 = vmatmul.f32.gmra.mxu0 %v4123
        %v5441 = vpop.f32.mrf.mxu0
        %v5442 = vadd.f32 %v5038, %v5441
        %5443 = vmatmul.f32.gmra.mxu0 %v4126
        %v5444 = vpop.f32.mrf.mxu0
        %v5445 = vadd.f32 %v5041, %v5444
        %5446 = vmatmul.f32.gmra.mxu0 %v4129
        %v5447 = vpop.f32.mrf.mxu0
        %v5448 = vadd.f32 %v5044, %v5447
        %5449 = vmatmul.f32.gmra.mxu0 %v4132
        %v5450 = vpop.f32.mrf.mxu0
        %v5451 = vadd.f32 %v5047, %v5450
        %5452 = vmatmul.f32.gmra.mxu0 %v4135
        %v5453 = vpop.f32.mrf.mxu0
        %v5454 = vadd.f32 %v5050, %v5453
        %5455 = vmatmul.f32.gmra.mxu0 %v4138
        %v5456 = vpop.f32.mrf.mxu0
        %v5457 = vadd.f32 %v5053, %v5456
        %5458 = vmatmul.f32.gmra.mxu0 %v4141
        %v5459 = vpop.f32.mrf.mxu0
        %v5460 = vadd.f32 %v5056, %v5459
        %5461 = vmatmul.f32.gmra.mxu0 %v4144
        %v5462 = vpop.f32.mrf.mxu0
        %v5463 = vadd.f32 %v5059, %v5462
        %5464 = vmatmul.f32.gmra.mxu0 %v4147
        %v5465 = vpop.f32.mrf.mxu0
        %v5466 = vadd.f32 %v5062, %v5465
        %5467 = vmatmul.f32.gmra.mxu0 %v4150
        %v5468 = vpop.f32.mrf.mxu0
        %v5469 = vadd.f32 %v5065, %v5468
        %5470 = vmatmul.f32.gmra.mxu0 %v4153
        %v5471 = vpop.f32.mrf.mxu0
        %v5472 = vadd.f32 %v5068, %v5471
        %5473 = vmatmul.f32.gmra.mxu0 %v4156
        %v5474 = vpop.f32.mrf.mxu0
        %v5475 = vadd.f32 %v5071, %v5474
        %5476 = vmatmul.f32.gmra.mxu0 %v4159
        %v5477 = vpop.f32.mrf.mxu0
        %v5478 = vadd.f32 %v5074, %v5477
        %5479 = vmatmul.f32.gmra.mxu0 %v4162
        %v5480 = vpop.f32.mrf.mxu0
        %v5481 = vadd.f32 %v5077, %v5480
        %5482 = vmatmul.f32.gmra.mxu0 %v4165
        %v5483 = vpop.f32.mrf.mxu0
        %v5484 = vadd.f32 %v5080, %v5483
        %5485 = vdwg.mxu0
        %v5486 = vadd.f32 %v5103, %v3780
        %v5487 = vadd.f32 %v5106, %v3780
        %v5488 = vadd.f32 %v5109, %v3780
        %v5489 = vadd.f32 %v5112, %v3780
        %v5490 = vadd.f32 %v5115, %v3780
        %v5491 = vadd.f32 %v5118, %v3780
        %v5492 = vadd.f32 %v5121, %v3780
        %v5493 = vadd.f32 %v5124, %v3780
        %v5494 = vadd.f32 %v5127, %v3780
        %v5495 = vadd.f32 %v5130, %v3780
        %v5496 = vadd.f32 %v5133, %v3780
        %v5497 = vadd.f32 %v5136, %v3780
        %v5498 = vadd.f32 %v5139, %v3780
        %v5499 = vadd.f32 %v5142, %v3780
        %v5500 = vadd.f32 %v5145, %v3780
        %v5501 = vadd.f32 %v5148, %v3780
        %v5502 = vadd.f32 %v5151, %v3780
        %v5503 = vadd.f32 %v5154, %v3780
        %v5504 = vadd.f32 %v5157, %v3780
        %v5505 = vadd.f32 %v5160, %v3780
        %v5506 = vadd.f32 %v5163, %v3780
        %v5507 = vadd.f32 %v5166, %v3780
        %v5508 = vadd.f32 %v5169, %v3780
        %v5509 = vadd.f32 %v5172, %v3780
        %v5510 = vadd.f32 %v5175, %v3780
        %v5511 = vadd.f32 %v5178, %v3780
        %v5512 = vadd.f32 %v5181, %v3780
        %v5513 = vadd.f32 %v5184, %v3780
        %v5514 = vadd.f32 %v5187, %v3780
        %v5515 = vadd.f32 %v5190, %v3780
        %v5516 = vadd.f32 %v5193, %v3780
        %v5517 = vadd.f32 %v5196, %v3780
        %v5518 = vadd.f32 %v5199, %v3780
        %v5519 = vadd.f32 %v5202, %v3780
        %v5520 = vadd.f32 %v5205, %v3780
        %v5521 = vadd.f32 %v5208, %v3780
        %v5522 = vadd.f32 %v5211, %v3780
        %v5523 = vadd.f32 %v5214, %v3780
        %v5524 = vadd.f32 %v5217, %v3780
        %v5525 = vadd.f32 %v5220, %v3780
        %v5526 = vadd.f32 %v5223, %v3780
        %v5527 = vadd.f32 %v5226, %v3780
        %v5528 = vadd.f32 %v5229, %v3780
        %v5529 = vadd.f32 %v5232, %v3780
        %v5530 = vadd.f32 %v5235, %v3780
        %v5531 = vadd.f32 %v5238, %v3780
        %v5532 = vadd.f32 %v5241, %v3780
        %v5533 = vadd.f32 %v5244, %v3780
        %v5534 = vadd.f32 %v5247, %v3780
        %v5535 = vadd.f32 %v5250, %v3780
        %v5536 = vadd.f32 %v5253, %v3780
        %v5537 = vadd.f32 %v5256, %v3780
        %v5538 = vadd.f32 %v5259, %v3780
        %v5539 = vadd.f32 %v5262, %v3780
        %v5540 = vadd.f32 %v5265, %v3780
        %v5541 = vadd.f32 %v5268, %v3780
        %v5542 = vadd.f32 %v5271, %v3780
        %v5543 = vadd.f32 %v5274, %v3780
        %v5544 = vadd.f32 %v5277, %v3780
        %v5545 = vadd.f32 %v5280, %v3780
        %v5546 = vadd.f32 %v5283, %v3780
        %v5547 = vadd.f32 %v5286, %v3780
        %v5548 = vadd.f32 %v5289, %v3780
        %v5549 = vadd.f32 %v5292, %v3780
        %v5550 = vadd.f32 %v5295, %v3780
        %v5551 = vadd.f32 %v5298, %v3780
        %v5552 = vadd.f32 %v5301, %v3780
        %v5553 = vadd.f32 %v5304, %v3780
        %v5554 = vadd.f32 %v5307, %v3780
        %v5555 = vadd.f32 %v5310, %v3780
        %v5556 = vadd.f32 %v5313, %v3780
        %v5557 = vadd.f32 %v5316, %v3780
        %v5558 = vadd.f32 %v5319, %v3780
        %v5559 = vadd.f32 %v5322, %v3780
        %v5560 = vadd.f32 %v5325, %v3780
        %v5561 = vadd.f32 %v5328, %v3780
        %v5562 = vadd.f32 %v5331, %v3780
        %v5563 = vadd.f32 %v5334, %v3780
        %v5564 = vadd.f32 %v5337, %v3780
        %v5565 = vadd.f32 %v5340, %v3780
        %v5566 = vadd.f32 %v5343, %v3780
        %v5567 = vadd.f32 %v5346, %v3780
        %v5568 = vadd.f32 %v5349, %v3780
        %v5569 = vadd.f32 %v5352, %v3780
        %v5570 = vadd.f32 %v5355, %v3780
        %v5571 = vadd.f32 %v5358, %v3780
        %v5572 = vadd.f32 %v5361, %v3780
        %v5573 = vadd.f32 %v5364, %v3780
        %v5574 = vadd.f32 %v5367, %v3780
        %v5575 = vadd.f32 %v5370, %v3780
        %v5576 = vadd.f32 %v5373, %v3780
        %v5577 = vadd.f32 %v5376, %v3780
        %v5578 = vadd.f32 %v5379, %v3780
        %v5579 = vadd.f32 %v5382, %v3780
        %v5580 = vadd.f32 %v5385, %v3780
        %v5581 = vadd.f32 %v5388, %v3780
        %v5582 = vadd.f32 %v5391, %v3780
        %v5583 = vadd.f32 %v5394, %v3780
        %v5584 = vadd.f32 %v5397, %v3780
        %v5585 = vadd.f32 %v5400, %v3780
        %v5586 = vadd.f32 %v5403, %v3780
        %v5587 = vadd.f32 %v5406, %v3780
        %v5588 = vadd.f32 %v5409, %v3780
        %v5589 = vadd.f32 %v5412, %v3780
        %v5590 = vadd.f32 %v5415, %v3780
        %v5591 = vadd.f32 %v5418, %v3780
        %v5592 = vadd.f32 %v5421, %v3780
        %v5593 = vadd.f32 %v5424, %v3780
        %v5594 = vadd.f32 %v5427, %v3780
        %v5595 = vadd.f32 %v5430, %v3780
        %v5596 = vadd.f32 %v5433, %v3780
        %v5597 = vadd.f32 %v5436, %v3780
        %v5598 = vadd.f32 %v5439, %v3780
        %v5599 = vadd.f32 %v5442, %v3780
        %v5600 = vadd.f32 %v5445, %v3780
        %v5601 = vadd.f32 %v5448, %v3780
        %v5602 = vadd.f32 %v5451, %v3780
        %v5603 = vadd.f32 %v5454, %v3780
        %v5604 = vadd.f32 %v5457, %v3780
        %v5605 = vadd.f32 %v5460, %v3780
        %v5606 = vadd.f32 %v5463, %v3780
        %v5607 = vadd.f32 %v5466, %v3780
        %v5608 = vadd.f32 %v5469, %v3780
        %v5609 = vadd.f32 %v5472, %v3780
        %v5610 = vadd.f32 %v5475, %v3780
        %v5611 = vadd.f32 %v5478, %v3780
        %v5612 = vadd.f32 %v5481, %v3780
        %v5613 = vadd.f32 %v5484, %v3780
        %s5614 = scalar_lea.vmem %s7, 224
        %v5615 = vld [vmem:[%s5614] sm:$0xff]
        %v5616 = vld [vmem:[%s5614 + $0x8] sm:$0xff]
        %v5617 = vld [vmem:[%s5614 + $0x10] sm:$0xff]
        %v5618 = vld [vmem:[%s5614 + $0x18] sm:$0x3f]
        %s5619 = scalar_lea.vmem %s7, 32
        %v5620 = vld [vmem:[%s5619] sm:$0xff]
        %v5621 = vld [vmem:[%s5619 + $0x8] sm:$0xff]
        %v5622 = vld [vmem:[%s5619 + $0x10] sm:$0xff]
        %v5623 = vld [vmem:[%s5619 + $0x18] sm:$0x3f]
        %v5625 = vsel %vm3782, %v3453, 0
        %v5628 = vsel %vm3782, %v3456, 0
        %v5631 = vsel %vm3782, %v3459, 0
        %v5634 = vsel %vm3782, %v3462, 0
        %v5637 = vsel %vm3782, %v3465, 0
        %v5640 = vsel %vm3782, %v3468, 0
        %v5643 = vsel %vm3782, %v3471, 0
        %v5646 = vsel %vm3782, %v3474, 0
        %v5649 = vsel %vm3782, %v3477, 0
        %v5652 = vsel %vm3782, %v3480, 0
        %v5655 = vsel %vm3782, %v3483, 0
        %v5658 = vsel %vm3782, %v3486, 0
        %v5661 = vsel %vm3782, %v3489, 0
        %v5664 = vsel %vm3782, %v3492, 0
        %v5667 = vsel %vm3782, %v3495, 0
        %v5670 = vsel %vm3782, %v3498, 0
        %v5673 = vsel %vm3782, %v3501, 0
        %v5676 = vsel %vm3782, %v3504, 0
        %v5679 = vsel %vm3782, %v3507, 0
        %v5682 = vsel %vm3782, %v3510, 0
        %v5685 = vsel %vm3782, %v3513, 0
        %v5688 = vsel %vm3782, %v3516, 0
        %v5691 = vsel %vm3782, %v3519, 0
        %v5694 = vsel %vm3782, %v3522, 0
        %v5697 = vsel %vm3782, %v3525, 0
        %v5700 = vsel %vm3782, %v3528, 0
        %v5703 = vsel %vm3782, %v3531, 0
        %v5706 = vsel %vm3782, %v3534, 0
        %v5709 = vsel %vm3782, %v3537, 0
        %v5712 = vsel %vm3782, %v3540, 0
        %v5715 = vsel %vm3782, %v3543, 0
        %v5718 = vsel %vm3782, %v3546, 0
        %v5721 = vsel %vm4167, %v5623, 0
        %5723 = vmatpush.msra.mxu0 0.0
        %5724 = vmatpush.msra.mxu0 0.0
        %5725 = vmatpush.msra.mxu0 0.0
        %5726 = vmatpush.msra.mxu0 0.0
        %5727 = vmatpush.msra.mxu0 0.0
        %5728 = vmatpush.msra.mxu0 0.0
        %5729 = vmatpush.msra.mxu0 0.0
        %5730 = vmatpush.msra.mxu0 0.0
        %5731 = vmatpush.msra.mxu0 0.0
        %5732 = vmatpush.msra.mxu0 0.0
        %5733 = vmatpush.msra.mxu0 0.0
        %5734 = vmatpush.msra.mxu0 0.0
        %5735 = vmatpush.msra.mxu0 %v5721
        %5736 = vmatpush.msra.mxu0 %v5622
        %5737 = vmatpush.msra.mxu0 %v5621
        %5738 = vmatpush.msra.mxu0 %v5620
        %5739 = vmatmul.f32.gmra.mxu0 %v3880
        %v5740 = vpop.f32.mrf.mxu0
        %v5741 = vadd.f32 0.0, %v5740
        %5742 = vmatmul.f32.gmra.mxu0 %v3883
        %v5743 = vpop.f32.mrf.mxu0
        %v5744 = vadd.f32 0.0, %v5743
        %5745 = vmatmul.f32.gmra.mxu0 %v3886
        %v5746 = vpop.f32.mrf.mxu0
        %v5747 = vadd.f32 0.0, %v5746
        %5748 = vmatmul.f32.gmra.mxu0 %v3889
        %v5749 = vpop.f32.mrf.mxu0
        %v5750 = vadd.f32 0.0, %v5749
        %5751 = vmatmul.f32.gmra.mxu0 %v3892
        %v5752 = vpop.f32.mrf.mxu0
        %v5753 = vadd.f32 0.0, %v5752
        %5754 = vmatmul.f32.gmra.mxu0 %v3895
        %v5755 = vpop.f32.mrf.mxu0
        %v5756 = vadd.f32 0.0, %v5755
        %5757 = vmatmul.f32.gmra.mxu0 %v3898
        %v5758 = vpop.f32.mrf.mxu0
        %v5759 = vadd.f32 0.0, %v5758
        %5760 = vmatmul.f32.gmra.mxu0 %v3901
        %v5761 = vpop.f32.mrf.mxu0
        %v5762 = vadd.f32 0.0, %v5761
        %5763 = vmatmul.f32.gmra.mxu0 %v3904
        %v5764 = vpop.f32.mrf.mxu0
        %v5765 = vadd.f32 0.0, %v5764
        %5766 = vmatmul.f32.gmra.mxu0 %v3907
        %v5767 = vpop.f32.mrf.mxu0
        %v5768 = vadd.f32 0.0, %v5767
        %5769 = vmatmul.f32.gmra.mxu0 %v3910
        %v5770 = vpop.f32.mrf.mxu0
        %v5771 = vadd.f32 0.0, %v5770
        %5772 = vmatmul.f32.gmra.mxu0 %v3913
        %v5773 = vpop.f32.mrf.mxu0
        %v5774 = vadd.f32 0.0, %v5773
        %5775 = vmatmul.f32.gmra.mxu0 %v3916
        %v5776 = vpop.f32.mrf.mxu0
        %v5777 = vadd.f32 0.0, %v5776
        %5778 = vmatmul.f32.gmra.mxu0 %v3919
        %v5779 = vpop.f32.mrf.mxu0
        %v5780 = vadd.f32 0.0, %v5779
        %5781 = vmatmul.f32.gmra.mxu0 %v3922
        %v5782 = vpop.f32.mrf.mxu0
        %v5783 = vadd.f32 0.0, %v5782
        %5784 = vmatmul.f32.gmra.mxu0 %v3925
        %v5785 = vpop.f32.mrf.mxu0
        %v5786 = vadd.f32 0.0, %v5785
        %5787 = vmatmul.f32.gmra.mxu0 %v3928
        %v5788 = vpop.f32.mrf.mxu0
        %v5789 = vadd.f32 0.0, %v5788
        %5790 = vmatmul.f32.gmra.mxu0 %v3931
        %v5791 = vpop.f32.mrf.mxu0
        %v5792 = vadd.f32 0.0, %v5791
        %5793 = vmatmul.f32.gmra.mxu0 %v3934
        %v5794 = vpop.f32.mrf.mxu0
        %v5795 = vadd.f32 0.0, %v5794
        %5796 = vmatmul.f32.gmra.mxu0 %v3937
        %v5797 = vpop.f32.mrf.mxu0
        %v5798 = vadd.f32 0.0, %v5797
        %5799 = vmatmul.f32.gmra.mxu0 %v3940
        %v5800 = vpop.f32.mrf.mxu0
        %v5801 = vadd.f32 0.0, %v5800
        %5802 = vmatmul.f32.gmra.mxu0 %v3943
        %v5803 = vpop.f32.mrf.mxu0
        %v5804 = vadd.f32 0.0, %v5803
        %5805 = vmatmul.f32.gmra.mxu0 %v3946
        %v5806 = vpop.f32.mrf.mxu0
        %v5807 = vadd.f32 0.0, %v5806
        %5808 = vmatmul.f32.gmra.mxu0 %v3949
        %v5809 = vpop.f32.mrf.mxu0
        %v5810 = vadd.f32 0.0, %v5809
        %5811 = vmatmul.f32.gmra.mxu0 %v3952
        %v5812 = vpop.f32.mrf.mxu0
        %v5813 = vadd.f32 0.0, %v5812
        %5814 = vmatmul.f32.gmra.mxu0 %v3955
        %v5815 = vpop.f32.mrf.mxu0
        %v5816 = vadd.f32 0.0, %v5815
        %5817 = vmatmul.f32.gmra.mxu0 %v3958
        %v5818 = vpop.f32.mrf.mxu0
        %v5819 = vadd.f32 0.0, %v5818
        %5820 = vmatmul.f32.gmra.mxu0 %v3961
        %v5821 = vpop.f32.mrf.mxu0
        %v5822 = vadd.f32 0.0, %v5821
        %5823 = vmatmul.f32.gmra.mxu0 %v3964
        %v5824 = vpop.f32.mrf.mxu0
        %v5825 = vadd.f32 0.0, %v5824
        %5826 = vmatmul.f32.gmra.mxu0 %v3967
        %v5827 = vpop.f32.mrf.mxu0
        %v5828 = vadd.f32 0.0, %v5827
        %5829 = vmatmul.f32.gmra.mxu0 %v3970
        %v5830 = vpop.f32.mrf.mxu0
        %v5831 = vadd.f32 0.0, %v5830
        %5832 = vmatmul.f32.gmra.mxu0 %v3973
        %v5833 = vpop.f32.mrf.mxu0
        %v5834 = vadd.f32 0.0, %v5833
        %5835 = vmatmul.f32.gmra.mxu0 %v3976
        %v5836 = vpop.f32.mrf.mxu0
        %v5837 = vadd.f32 0.0, %v5836
        %5838 = vmatmul.f32.gmra.mxu0 %v3979
        %v5839 = vpop.f32.mrf.mxu0
        %v5840 = vadd.f32 0.0, %v5839
        %5841 = vmatmul.f32.gmra.mxu0 %v3982
        %v5842 = vpop.f32.mrf.mxu0
        %v5843 = vadd.f32 0.0, %v5842
        %5844 = vmatmul.f32.gmra.mxu0 %v3985
        %v5845 = vpop.f32.mrf.mxu0
        %v5846 = vadd.f32 0.0, %v5845
        %5847 = vmatmul.f32.gmra.mxu0 %v3988
        %v5848 = vpop.f32.mrf.mxu0
        %v5849 = vadd.f32 0.0, %v5848
        %5850 = vmatmul.f32.gmra.mxu0 %v3991
        %v5851 = vpop.f32.mrf.mxu0
        %v5852 = vadd.f32 0.0, %v5851
        %5853 = vmatmul.f32.gmra.mxu0 %v3994
        %v5854 = vpop.f32.mrf.mxu0
        %v5855 = vadd.f32 0.0, %v5854
        %5856 = vmatmul.f32.gmra.mxu0 %v3997
        %v5857 = vpop.f32.mrf.mxu0
        %v5858 = vadd.f32 0.0, %v5857
        %5859 = vmatmul.f32.gmra.mxu0 %v4000
        %v5860 = vpop.f32.mrf.mxu0
        %v5861 = vadd.f32 0.0, %v5860
        %5862 = vmatmul.f32.gmra.mxu0 %v4003
        %v5863 = vpop.f32.mrf.mxu0
        %v5864 = vadd.f32 0.0, %v5863
        %5865 = vmatmul.f32.gmra.mxu0 %v4006
        %v5866 = vpop.f32.mrf.mxu0
        %v5867 = vadd.f32 0.0, %v5866
        %5868 = vmatmul.f32.gmra.mxu0 %v4009
        %v5869 = vpop.f32.mrf.mxu0
        %v5870 = vadd.f32 0.0, %v5869
        %5871 = vmatmul.f32.gmra.mxu0 %v4012
        %v5872 = vpop.f32.mrf.mxu0
        %v5873 = vadd.f32 0.0, %v5872
        %5874 = vmatmul.f32.gmra.mxu0 %v4015
        %v5875 = vpop.f32.mrf.mxu0
        %v5876 = vadd.f32 0.0, %v5875
        %5877 = vmatmul.f32.gmra.mxu0 %v4018
        %v5878 = vpop.f32.mrf.mxu0
        %v5879 = vadd.f32 0.0, %v5878
        %5880 = vmatmul.f32.gmra.mxu0 %v4021
        %v5881 = vpop.f32.mrf.mxu0
        %v5882 = vadd.f32 0.0, %v5881
        %5883 = vmatmul.f32.gmra.mxu0 %v4024
        %v5884 = vpop.f32.mrf.mxu0
        %v5885 = vadd.f32 0.0, %v5884
        %5886 = vmatmul.f32.gmra.mxu0 %v4027
        %v5887 = vpop.f32.mrf.mxu0
        %v5888 = vadd.f32 0.0, %v5887
        %5889 = vmatmul.f32.gmra.mxu0 %v4030
        %v5890 = vpop.f32.mrf.mxu0
        %v5891 = vadd.f32 0.0, %v5890
        %5892 = vmatmul.f32.gmra.mxu0 %v4033
        %v5893 = vpop.f32.mrf.mxu0
        %v5894 = vadd.f32 0.0, %v5893
        %5895 = vmatmul.f32.gmra.mxu0 %v4036
        %v5896 = vpop.f32.mrf.mxu0
        %v5897 = vadd.f32 0.0, %v5896
        %5898 = vmatmul.f32.gmra.mxu0 %v4039
        %v5899 = vpop.f32.mrf.mxu0
        %v5900 = vadd.f32 0.0, %v5899
        %5901 = vmatmul.f32.gmra.mxu0 %v4042
        %v5902 = vpop.f32.mrf.mxu0
        %v5903 = vadd.f32 0.0, %v5902
        %5904 = vmatmul.f32.gmra.mxu0 %v4045
        %v5905 = vpop.f32.mrf.mxu0
        %v5906 = vadd.f32 0.0, %v5905
        %5907 = vmatmul.f32.gmra.mxu0 %v4048
        %v5908 = vpop.f32.mrf.mxu0
        %v5909 = vadd.f32 0.0, %v5908
        %5910 = vmatmul.f32.gmra.mxu0 %v4051
        %v5911 = vpop.f32.mrf.mxu0
        %v5912 = vadd.f32 0.0, %v5911
        %5913 = vmatmul.f32.gmra.mxu0 %v4054
        %v5914 = vpop.f32.mrf.mxu0
        %v5915 = vadd.f32 0.0, %v5914
        %5916 = vmatmul.f32.gmra.mxu0 %v4057
        %v5917 = vpop.f32.mrf.mxu0
        %v5918 = vadd.f32 0.0, %v5917
        %5919 = vmatmul.f32.gmra.mxu0 %v4060
        %v5920 = vpop.f32.mrf.mxu0
        %v5921 = vadd.f32 0.0, %v5920
        %5922 = vmatmul.f32.gmra.mxu0 %v4063
        %v5923 = vpop.f32.mrf.mxu0
        %v5924 = vadd.f32 0.0, %v5923
        %5925 = vmatmul.f32.gmra.mxu0 %v4066
        %v5926 = vpop.f32.mrf.mxu0
        %v5927 = vadd.f32 0.0, %v5926
        %5928 = vmatmul.f32.gmra.mxu0 %v4069
        %v5929 = vpop.f32.mrf.mxu0
        %v5930 = vadd.f32 0.0, %v5929
        %5931 = vmatmul.f32.gmra.mxu0 %v4072
        %v5932 = vpop.f32.mrf.mxu0
        %v5933 = vadd.f32 0.0, %v5932
        %5934 = vmatmul.f32.gmra.mxu0 %v4075
        %v5935 = vpop.f32.mrf.mxu0
        %v5936 = vadd.f32 0.0, %v5935
        %5937 = vmatmul.f32.gmra.mxu0 %v4078
        %v5938 = vpop.f32.mrf.mxu0
        %v5939 = vadd.f32 0.0, %v5938
        %5940 = vmatmul.f32.gmra.mxu0 %v4081
        %v5941 = vpop.f32.mrf.mxu0
        %v5942 = vadd.f32 0.0, %v5941
        %5943 = vmatmul.f32.gmra.mxu0 %v4084
        %v5944 = vpop.f32.mrf.mxu0
        %v5945 = vadd.f32 0.0, %v5944
        %5946 = vmatmul.f32.gmra.mxu0 %v4087
        %v5947 = vpop.f32.mrf.mxu0
        %v5948 = vadd.f32 0.0, %v5947
        %5949 = vmatmul.f32.gmra.mxu0 %v4090
        %v5950 = vpop.f32.mrf.mxu0
        %v5951 = vadd.f32 0.0, %v5950
        %5952 = vmatmul.f32.gmra.mxu0 %v4093
        %v5953 = vpop.f32.mrf.mxu0
        %v5954 = vadd.f32 0.0, %v5953
        %5955 = vmatmul.f32.gmra.mxu0 %v4096
        %v5956 = vpop.f32.mrf.mxu0
        %v5957 = vadd.f32 0.0, %v5956
        %5958 = vmatmul.f32.gmra.mxu0 %v4099
        %v5959 = vpop.f32.mrf.mxu0
        %v5960 = vadd.f32 0.0, %v5959
        %5961 = vmatmul.f32.gmra.mxu0 %v4102
        %v5962 = vpop.f32.mrf.mxu0
        %v5963 = vadd.f32 0.0, %v5962
        %5964 = vmatmul.f32.gmra.mxu0 %v4105
        %v5965 = vpop.f32.mrf.mxu0
        %v5966 = vadd.f32 0.0, %v5965
        %5967 = vmatmul.f32.gmra.mxu0 %v4108
        %v5968 = vpop.f32.mrf.mxu0
        %v5969 = vadd.f32 0.0, %v5968
        %5970 = vmatmul.f32.gmra.mxu0 %v4111
        %v5971 = vpop.f32.mrf.mxu0
        %v5972 = vadd.f32 0.0, %v5971
        %5973 = vmatmul.f32.gmra.mxu0 %v4114
        %v5974 = vpop.f32.mrf.mxu0
        %v5975 = vadd.f32 0.0, %v5974
        %5976 = vmatmul.f32.gmra.mxu0 %v4117
        %v5977 = vpop.f32.mrf.mxu0
        %v5978 = vadd.f32 0.0, %v5977
        %5979 = vmatmul.f32.gmra.mxu0 %v4120
        %v5980 = vpop.f32.mrf.mxu0
        %v5981 = vadd.f32 0.0, %v5980
        %5982 = vmatmul.f32.gmra.mxu0 %v4123
        %v5983 = vpop.f32.mrf.mxu0
        %v5984 = vadd.f32 0.0, %v5983
        %5985 = vmatmul.f32.gmra.mxu0 %v4126
        %v5986 = vpop.f32.mrf.mxu0
        %v5987 = vadd.f32 0.0, %v5986
        %5988 = vmatmul.f32.gmra.mxu0 %v4129
        %v5989 = vpop.f32.mrf.mxu0
        %v5990 = vadd.f32 0.0, %v5989
        %5991 = vmatmul.f32.gmra.mxu0 %v4132
        %v5992 = vpop.f32.mrf.mxu0
        %v5993 = vadd.f32 0.0, %v5992
        %5994 = vmatmul.f32.gmra.mxu0 %v4135
        %v5995 = vpop.f32.mrf.mxu0
        %v5996 = vadd.f32 0.0, %v5995
        %5997 = vmatmul.f32.gmra.mxu0 %v4138
        %v5998 = vpop.f32.mrf.mxu0
        %v5999 = vadd.f32 0.0, %v5998
        %6000 = vmatmul.f32.gmra.mxu0 %v4141
        %v6001 = vpop.f32.mrf.mxu0
        %v6002 = vadd.f32 0.0, %v6001
        %6003 = vmatmul.f32.gmra.mxu0 %v4144
        %v6004 = vpop.f32.mrf.mxu0
        %v6005 = vadd.f32 0.0, %v6004
        %6006 = vmatmul.f32.gmra.mxu0 %v4147
        %v6007 = vpop.f32.mrf.mxu0
        %v6008 = vadd.f32 0.0, %v6007
        %6009 = vmatmul.f32.gmra.mxu0 %v4150
        %v6010 = vpop.f32.mrf.mxu0
        %v6011 = vadd.f32 0.0, %v6010
        %6012 = vmatmul.f32.gmra.mxu0 %v4153
        %v6013 = vpop.f32.mrf.mxu0
        %v6014 = vadd.f32 0.0, %v6013
        %6015 = vmatmul.f32.gmra.mxu0 %v4156
        %v6016 = vpop.f32.mrf.mxu0
        %v6017 = vadd.f32 0.0, %v6016
        %6018 = vmatmul.f32.gmra.mxu0 %v4159
        %v6019 = vpop.f32.mrf.mxu0
        %v6020 = vadd.f32 0.0, %v6019
        %6021 = vmatmul.f32.gmra.mxu0 %v4162
        %v6022 = vpop.f32.mrf.mxu0
        %v6023 = vadd.f32 0.0, %v6022
        %6024 = vmatmul.f32.gmra.mxu0 %v4165
        %v6025 = vpop.f32.mrf.mxu0
        %v6026 = vadd.f32 0.0, %v6025
        %6027 = vmatmul.f32.gmra.mxu0 %v5625
        %v6028 = vpop.f32.mrf.mxu0
        %v6029 = vadd.f32 0.0, %v6028
        %6030 = vmatmul.f32.gmra.mxu0 %v5628
        %v6031 = vpop.f32.mrf.mxu0
        %v6032 = vadd.f32 0.0, %v6031
        %6033 = vmatmul.f32.gmra.mxu0 %v5631
        %v6034 = vpop.f32.mrf.mxu0
        %v6035 = vadd.f32 0.0, %v6034
        %6036 = vmatmul.f32.gmra.mxu0 %v5634
        %v6037 = vpop.f32.mrf.mxu0
        %v6038 = vadd.f32 0.0, %v6037
        %6039 = vmatmul.f32.gmra.mxu0 %v5637
        %v6040 = vpop.f32.mrf.mxu0
        %v6041 = vadd.f32 0.0, %v6040
        %6042 = vmatmul.f32.gmra.mxu0 %v5640
        %v6043 = vpop.f32.mrf.mxu0
        %v6044 = vadd.f32 0.0, %v6043
        %6045 = vmatmul.f32.gmra.mxu0 %v5643
        %v6046 = vpop.f32.mrf.mxu0
        %v6047 = vadd.f32 0.0, %v6046
        %6048 = vmatmul.f32.gmra.mxu0 %v5646
        %v6049 = vpop.f32.mrf.mxu0
        %v6050 = vadd.f32 0.0, %v6049
        %6051 = vmatmul.f32.gmra.mxu0 %v5649
        %v6052 = vpop.f32.mrf.mxu0
        %v6053 = vadd.f32 0.0, %v6052
        %6054 = vmatmul.f32.gmra.mxu0 %v5652
        %v6055 = vpop.f32.mrf.mxu0
        %v6056 = vadd.f32 0.0, %v6055
        %6057 = vmatmul.f32.gmra.mxu0 %v5655
        %v6058 = vpop.f32.mrf.mxu0
        %v6059 = vadd.f32 0.0, %v6058
        %6060 = vmatmul.f32.gmra.mxu0 %v5658
        %v6061 = vpop.f32.mrf.mxu0
        %v6062 = vadd.f32 0.0, %v6061
        %6063 = vmatmul.f32.gmra.mxu0 %v5661
        %v6064 = vpop.f32.mrf.mxu0
        %v6065 = vadd.f32 0.0, %v6064
        %6066 = vmatmul.f32.gmra.mxu0 %v5664
        %v6067 = vpop.f32.mrf.mxu0
        %v6068 = vadd.f32 0.0, %v6067
        %6069 = vmatmul.f32.gmra.mxu0 %v5667
        %v6070 = vpop.f32.mrf.mxu0
        %v6071 = vadd.f32 0.0, %v6070
        %6072 = vmatmul.f32.gmra.mxu0 %v5670
        %v6073 = vpop.f32.mrf.mxu0
        %v6074 = vadd.f32 0.0, %v6073
        %6075 = vmatmul.f32.gmra.mxu0 %v5673
        %v6076 = vpop.f32.mrf.mxu0
        %v6077 = vadd.f32 0.0, %v6076
        %6078 = vmatmul.f32.gmra.mxu0 %v5676
        %v6079 = vpop.f32.mrf.mxu0
        %v6080 = vadd.f32 0.0, %v6079
        %6081 = vmatmul.f32.gmra.mxu0 %v5679
        %v6082 = vpop.f32.mrf.mxu0
        %v6083 = vadd.f32 0.0, %v6082
        %6084 = vmatmul.f32.gmra.mxu0 %v5682
        %v6085 = vpop.f32.mrf.mxu0
        %v6086 = vadd.f32 0.0, %v6085
        %6087 = vmatmul.f32.gmra.mxu0 %v5685
        %v6088 = vpop.f32.mrf.mxu0
        %v6089 = vadd.f32 0.0, %v6088
        %6090 = vmatmul.f32.gmra.mxu0 %v5688
        %v6091 = vpop.f32.mrf.mxu0
        %v6092 = vadd.f32 0.0, %v6091
        %6093 = vmatmul.f32.gmra.mxu0 %v5691
        %v6094 = vpop.f32.mrf.mxu0
        %v6095 = vadd.f32 0.0, %v6094
        %6096 = vmatmul.f32.gmra.mxu0 %v5694
        %v6097 = vpop.f32.mrf.mxu0
        %v6098 = vadd.f32 0.0, %v6097
        %6099 = vmatmul.f32.gmra.mxu0 %v5697
        %v6100 = vpop.f32.mrf.mxu0
        %v6101 = vadd.f32 0.0, %v6100
        %6102 = vmatmul.f32.gmra.mxu0 %v5700
        %v6103 = vpop.f32.mrf.mxu0
        %v6104 = vadd.f32 0.0, %v6103
        %6105 = vmatmul.f32.gmra.mxu0 %v5703
        %v6106 = vpop.f32.mrf.mxu0
        %v6107 = vadd.f32 0.0, %v6106
        %6108 = vmatmul.f32.gmra.mxu0 %v5706
        %v6109 = vpop.f32.mrf.mxu0
        %v6110 = vadd.f32 0.0, %v6109
        %6111 = vmatmul.f32.gmra.mxu0 %v5709
        %v6112 = vpop.f32.mrf.mxu0
        %v6113 = vadd.f32 0.0, %v6112
        %6114 = vmatmul.f32.gmra.mxu0 %v5712
        %v6115 = vpop.f32.mrf.mxu0
        %v6116 = vadd.f32 0.0, %v6115
        %6117 = vmatmul.f32.gmra.mxu0 %v5715
        %v6118 = vpop.f32.mrf.mxu0
        %v6119 = vadd.f32 0.0, %v6118
        %6120 = vmatmul.f32.gmra.mxu0 %v5718
        %v6121 = vpop.f32.mrf.mxu0
        %v6122 = vadd.f32 0.0, %v6121
        %6123 = vdwg.mxu0
        %v6125 = vsel %vm4167, %v5618, 0
        %6127 = vmatpush.msra.mxu0 0.0
        %6128 = vmatpush.msra.mxu0 0.0
        %6129 = vmatpush.msra.mxu0 0.0
        %6130 = vmatpush.msra.mxu0 0.0
        %6131 = vmatpush.msra.mxu0 0.0
        %6132 = vmatpush.msra.mxu0 0.0
        %6133 = vmatpush.msra.mxu0 0.0
        %6134 = vmatpush.msra.mxu0 0.0
        %6135 = vmatpush.msra.mxu0 0.0
        %6136 = vmatpush.msra.mxu0 0.0
        %6137 = vmatpush.msra.mxu0 0.0
        %6138 = vmatpush.msra.mxu0 0.0
        %6139 = vmatpush.msra.mxu0 %v6125
        %6140 = vmatpush.msra.mxu0 %v5617
        %6141 = vmatpush.msra.mxu0 %v5616
        %6142 = vmatpush.msra.mxu0 %v5615
        %6143 = vmatmul.f32.gmra.mxu0 %v3784
        %v6144 = vpop.f32.mrf.mxu0
        %v6145 = vadd.f32 %v5741, %v6144
        %6146 = vmatmul.f32.gmra.mxu0 %v3787
        %v6147 = vpop.f32.mrf.mxu0
        %v6148 = vadd.f32 %v5744, %v6147
        %6149 = vmatmul.f32.gmra.mxu0 %v3790
        %v6150 = vpop.f32.mrf.mxu0
        %v6151 = vadd.f32 %v5747, %v6150
        %6152 = vmatmul.f32.gmra.mxu0 %v3793
        %v6153 = vpop.f32.mrf.mxu0
        %v6154 = vadd.f32 %v5750, %v6153
        %6155 = vmatmul.f32.gmra.mxu0 %v3796
        %v6156 = vpop.f32.mrf.mxu0
        %v6157 = vadd.f32 %v5753, %v6156
        %6158 = vmatmul.f32.gmra.mxu0 %v3799
        %v6159 = vpop.f32.mrf.mxu0
        %v6160 = vadd.f32 %v5756, %v6159
        %6161 = vmatmul.f32.gmra.mxu0 %v3802
        %v6162 = vpop.f32.mrf.mxu0
        %v6163 = vadd.f32 %v5759, %v6162
        %6164 = vmatmul.f32.gmra.mxu0 %v3805
        %v6165 = vpop.f32.mrf.mxu0
        %v6166 = vadd.f32 %v5762, %v6165
        %6167 = vmatmul.f32.gmra.mxu0 %v3808
        %v6168 = vpop.f32.mrf.mxu0
        %v6169 = vadd.f32 %v5765, %v6168
        %6170 = vmatmul.f32.gmra.mxu0 %v3811
        %v6171 = vpop.f32.mrf.mxu0
        %v6172 = vadd.f32 %v5768, %v6171
        %6173 = vmatmul.f32.gmra.mxu0 %v3814
        %v6174 = vpop.f32.mrf.mxu0
        %v6175 = vadd.f32 %v5771, %v6174
        %6176 = vmatmul.f32.gmra.mxu0 %v3817
        %v6177 = vpop.f32.mrf.mxu0
        %v6178 = vadd.f32 %v5774, %v6177
        %6179 = vmatmul.f32.gmra.mxu0 %v3820
        %v6180 = vpop.f32.mrf.mxu0
        %v6181 = vadd.f32 %v5777, %v6180
        %6182 = vmatmul.f32.gmra.mxu0 %v3823
        %v6183 = vpop.f32.mrf.mxu0
        %v6184 = vadd.f32 %v5780, %v6183
        %6185 = vmatmul.f32.gmra.mxu0 %v3826
        %v6186 = vpop.f32.mrf.mxu0
        %v6187 = vadd.f32 %v5783, %v6186
        %6188 = vmatmul.f32.gmra.mxu0 %v3829
        %v6189 = vpop.f32.mrf.mxu0
        %v6190 = vadd.f32 %v5786, %v6189
        %6191 = vmatmul.f32.gmra.mxu0 %v3832
        %v6192 = vpop.f32.mrf.mxu0
        %v6193 = vadd.f32 %v5789, %v6192
        %6194 = vmatmul.f32.gmra.mxu0 %v3835
        %v6195 = vpop.f32.mrf.mxu0
        %v6196 = vadd.f32 %v5792, %v6195
        %6197 = vmatmul.f32.gmra.mxu0 %v3838
        %v6198 = vpop.f32.mrf.mxu0
        %v6199 = vadd.f32 %v5795, %v6198
        %6200 = vmatmul.f32.gmra.mxu0 %v3841
        %v6201 = vpop.f32.mrf.mxu0
        %v6202 = vadd.f32 %v5798, %v6201
        %6203 = vmatmul.f32.gmra.mxu0 %v3844
        %v6204 = vpop.f32.mrf.mxu0
        %v6205 = vadd.f32 %v5801, %v6204
        %6206 = vmatmul.f32.gmra.mxu0 %v3847
        %v6207 = vpop.f32.mrf.mxu0
        %v6208 = vadd.f32 %v5804, %v6207
        %6209 = vmatmul.f32.gmra.mxu0 %v3850
        %v6210 = vpop.f32.mrf.mxu0
        %v6211 = vadd.f32 %v5807, %v6210
        %6212 = vmatmul.f32.gmra.mxu0 %v3853
        %v6213 = vpop.f32.mrf.mxu0
        %v6214 = vadd.f32 %v5810, %v6213
        %6215 = vmatmul.f32.gmra.mxu0 %v3856
        %v6216 = vpop.f32.mrf.mxu0
        %v6217 = vadd.f32 %v5813, %v6216
        %6218 = vmatmul.f32.gmra.mxu0 %v3859
        %v6219 = vpop.f32.mrf.mxu0
        %v6220 = vadd.f32 %v5816, %v6219
        %6221 = vmatmul.f32.gmra.mxu0 %v3862
        %v6222 = vpop.f32.mrf.mxu0
        %v6223 = vadd.f32 %v5819, %v6222
        %6224 = vmatmul.f32.gmra.mxu0 %v3865
        %v6225 = vpop.f32.mrf.mxu0
        %v6226 = vadd.f32 %v5822, %v6225
        %6227 = vmatmul.f32.gmra.mxu0 %v3868
        %v6228 = vpop.f32.mrf.mxu0
        %v6229 = vadd.f32 %v5825, %v6228
        %6230 = vmatmul.f32.gmra.mxu0 %v3871
        %v6231 = vpop.f32.mrf.mxu0
        %v6232 = vadd.f32 %v5828, %v6231
        %6233 = vmatmul.f32.gmra.mxu0 %v3874
        %v6234 = vpop.f32.mrf.mxu0
        %v6235 = vadd.f32 %v5831, %v6234
        %6236 = vmatmul.f32.gmra.mxu0 %v3877
        %v6237 = vpop.f32.mrf.mxu0
        %v6238 = vadd.f32 %v5834, %v6237
        %6239 = vmatmul.f32.gmra.mxu0 %v3880
        %v6240 = vpop.f32.mrf.mxu0
        %v6241 = vadd.f32 %v5837, %v6240
        %6242 = vmatmul.f32.gmra.mxu0 %v3883
        %v6243 = vpop.f32.mrf.mxu0
        %v6244 = vadd.f32 %v5840, %v6243
        %6245 = vmatmul.f32.gmra.mxu0 %v3886
        %v6246 = vpop.f32.mrf.mxu0
        %v6247 = vadd.f32 %v5843, %v6246
        %6248 = vmatmul.f32.gmra.mxu0 %v3889
        %v6249 = vpop.f32.mrf.mxu0
        %v6250 = vadd.f32 %v5846, %v6249
        %6251 = vmatmul.f32.gmra.mxu0 %v3892
        %v6252 = vpop.f32.mrf.mxu0
        %v6253 = vadd.f32 %v5849, %v6252
        %6254 = vmatmul.f32.gmra.mxu0 %v3895
        %v6255 = vpop.f32.mrf.mxu0
        %v6256 = vadd.f32 %v5852, %v6255
        %6257 = vmatmul.f32.gmra.mxu0 %v3898
        %v6258 = vpop.f32.mrf.mxu0
        %v6259 = vadd.f32 %v5855, %v6258
        %6260 = vmatmul.f32.gmra.mxu0 %v3901
        %v6261 = vpop.f32.mrf.mxu0
        %v6262 = vadd.f32 %v5858, %v6261
        %6263 = vmatmul.f32.gmra.mxu0 %v3904
        %v6264 = vpop.f32.mrf.mxu0
        %v6265 = vadd.f32 %v5861, %v6264
        %6266 = vmatmul.f32.gmra.mxu0 %v3907
        %v6267 = vpop.f32.mrf.mxu0
        %v6268 = vadd.f32 %v5864, %v6267
        %6269 = vmatmul.f32.gmra.mxu0 %v3910
        %v6270 = vpop.f32.mrf.mxu0
        %v6271 = vadd.f32 %v5867, %v6270
        %6272 = vmatmul.f32.gmra.mxu0 %v3913
        %v6273 = vpop.f32.mrf.mxu0
        %v6274 = vadd.f32 %v5870, %v6273
        %6275 = vmatmul.f32.gmra.mxu0 %v3916
        %v6276 = vpop.f32.mrf.mxu0
        %v6277 = vadd.f32 %v5873, %v6276
        %6278 = vmatmul.f32.gmra.mxu0 %v3919
        %v6279 = vpop.f32.mrf.mxu0
        %v6280 = vadd.f32 %v5876, %v6279
        %6281 = vmatmul.f32.gmra.mxu0 %v3922
        %v6282 = vpop.f32.mrf.mxu0
        %v6283 = vadd.f32 %v5879, %v6282
        %6284 = vmatmul.f32.gmra.mxu0 %v3925
        %v6285 = vpop.f32.mrf.mxu0
        %v6286 = vadd.f32 %v5882, %v6285
        %6287 = vmatmul.f32.gmra.mxu0 %v3928
        %v6288 = vpop.f32.mrf.mxu0
        %v6289 = vadd.f32 %v5885, %v6288
        %6290 = vmatmul.f32.gmra.mxu0 %v3931
        %v6291 = vpop.f32.mrf.mxu0
        %v6292 = vadd.f32 %v5888, %v6291
        %6293 = vmatmul.f32.gmra.mxu0 %v3934
        %v6294 = vpop.f32.mrf.mxu0
        %v6295 = vadd.f32 %v5891, %v6294
        %6296 = vmatmul.f32.gmra.mxu0 %v3937
        %v6297 = vpop.f32.mrf.mxu0
        %v6298 = vadd.f32 %v5894, %v6297
        %6299 = vmatmul.f32.gmra.mxu0 %v3940
        %v6300 = vpop.f32.mrf.mxu0
        %v6301 = vadd.f32 %v5897, %v6300
        %6302 = vmatmul.f32.gmra.mxu0 %v3943
        %v6303 = vpop.f32.mrf.mxu0
        %v6304 = vadd.f32 %v5900, %v6303
        %6305 = vmatmul.f32.gmra.mxu0 %v3946
        %v6306 = vpop.f32.mrf.mxu0
        %v6307 = vadd.f32 %v5903, %v6306
        %6308 = vmatmul.f32.gmra.mxu0 %v3949
        %v6309 = vpop.f32.mrf.mxu0
        %v6310 = vadd.f32 %v5906, %v6309
        %6311 = vmatmul.f32.gmra.mxu0 %v3952
        %v6312 = vpop.f32.mrf.mxu0
        %v6313 = vadd.f32 %v5909, %v6312
        %6314 = vmatmul.f32.gmra.mxu0 %v3955
        %v6315 = vpop.f32.mrf.mxu0
        %v6316 = vadd.f32 %v5912, %v6315
        %6317 = vmatmul.f32.gmra.mxu0 %v3958
        %v6318 = vpop.f32.mrf.mxu0
        %v6319 = vadd.f32 %v5915, %v6318
        %6320 = vmatmul.f32.gmra.mxu0 %v3961
        %v6321 = vpop.f32.mrf.mxu0
        %v6322 = vadd.f32 %v5918, %v6321
        %6323 = vmatmul.f32.gmra.mxu0 %v3964
        %v6324 = vpop.f32.mrf.mxu0
        %v6325 = vadd.f32 %v5921, %v6324
        %6326 = vmatmul.f32.gmra.mxu0 %v3967
        %v6327 = vpop.f32.mrf.mxu0
        %v6328 = vadd.f32 %v5924, %v6327
        %6329 = vmatmul.f32.gmra.mxu0 %v3970
        %v6330 = vpop.f32.mrf.mxu0
        %v6331 = vadd.f32 %v5927, %v6330
        %6332 = vmatmul.f32.gmra.mxu0 %v3973
        %v6333 = vpop.f32.mrf.mxu0
        %v6334 = vadd.f32 %v5930, %v6333
        %6335 = vmatmul.f32.gmra.mxu0 %v3976
        %v6336 = vpop.f32.mrf.mxu0
        %v6337 = vadd.f32 %v5933, %v6336
        %6338 = vmatmul.f32.gmra.mxu0 %v3979
        %v6339 = vpop.f32.mrf.mxu0
        %v6340 = vadd.f32 %v5936, %v6339
        %6341 = vmatmul.f32.gmra.mxu0 %v3982
        %v6342 = vpop.f32.mrf.mxu0
        %v6343 = vadd.f32 %v5939, %v6342
        %6344 = vmatmul.f32.gmra.mxu0 %v3985
        %v6345 = vpop.f32.mrf.mxu0
        %v6346 = vadd.f32 %v5942, %v6345
        %6347 = vmatmul.f32.gmra.mxu0 %v3988
        %v6348 = vpop.f32.mrf.mxu0
        %v6349 = vadd.f32 %v5945, %v6348
        %6350 = vmatmul.f32.gmra.mxu0 %v3991
        %v6351 = vpop.f32.mrf.mxu0
        %v6352 = vadd.f32 %v5948, %v6351
        %6353 = vmatmul.f32.gmra.mxu0 %v3994
        %v6354 = vpop.f32.mrf.mxu0
        %v6355 = vadd.f32 %v5951, %v6354
        %6356 = vmatmul.f32.gmra.mxu0 %v3997
        %v6357 = vpop.f32.mrf.mxu0
        %v6358 = vadd.f32 %v5954, %v6357
        %6359 = vmatmul.f32.gmra.mxu0 %v4000
        %v6360 = vpop.f32.mrf.mxu0
        %v6361 = vadd.f32 %v5957, %v6360
        %6362 = vmatmul.f32.gmra.mxu0 %v4003
        %v6363 = vpop.f32.mrf.mxu0
        %v6364 = vadd.f32 %v5960, %v6363
        %6365 = vmatmul.f32.gmra.mxu0 %v4006
        %v6366 = vpop.f32.mrf.mxu0
        %v6367 = vadd.f32 %v5963, %v6366
        %6368 = vmatmul.f32.gmra.mxu0 %v4009
        %v6369 = vpop.f32.mrf.mxu0
        %v6370 = vadd.f32 %v5966, %v6369
        %6371 = vmatmul.f32.gmra.mxu0 %v4012
        %v6372 = vpop.f32.mrf.mxu0
        %v6373 = vadd.f32 %v5969, %v6372
        %6374 = vmatmul.f32.gmra.mxu0 %v4015
        %v6375 = vpop.f32.mrf.mxu0
        %v6376 = vadd.f32 %v5972, %v6375
        %6377 = vmatmul.f32.gmra.mxu0 %v4018
        %v6378 = vpop.f32.mrf.mxu0
        %v6379 = vadd.f32 %v5975, %v6378
        %6380 = vmatmul.f32.gmra.mxu0 %v4021
        %v6381 = vpop.f32.mrf.mxu0
        %v6382 = vadd.f32 %v5978, %v6381
        %6383 = vmatmul.f32.gmra.mxu0 %v4024
        %v6384 = vpop.f32.mrf.mxu0
        %v6385 = vadd.f32 %v5981, %v6384
        %6386 = vmatmul.f32.gmra.mxu0 %v4027
        %v6387 = vpop.f32.mrf.mxu0
        %v6388 = vadd.f32 %v5984, %v6387
        %6389 = vmatmul.f32.gmra.mxu0 %v4030
        %v6390 = vpop.f32.mrf.mxu0
        %v6391 = vadd.f32 %v5987, %v6390
        %6392 = vmatmul.f32.gmra.mxu0 %v4033
        %v6393 = vpop.f32.mrf.mxu0
        %v6394 = vadd.f32 %v5990, %v6393
        %6395 = vmatmul.f32.gmra.mxu0 %v4036
        %v6396 = vpop.f32.mrf.mxu0
        %v6397 = vadd.f32 %v5993, %v6396
        %6398 = vmatmul.f32.gmra.mxu0 %v4039
        %v6399 = vpop.f32.mrf.mxu0
        %v6400 = vadd.f32 %v5996, %v6399
        %6401 = vmatmul.f32.gmra.mxu0 %v4042
        %v6402 = vpop.f32.mrf.mxu0
        %v6403 = vadd.f32 %v5999, %v6402
        %6404 = vmatmul.f32.gmra.mxu0 %v4045
        %v6405 = vpop.f32.mrf.mxu0
        %v6406 = vadd.f32 %v6002, %v6405
        %6407 = vmatmul.f32.gmra.mxu0 %v4048
        %v6408 = vpop.f32.mrf.mxu0
        %v6409 = vadd.f32 %v6005, %v6408
        %6410 = vmatmul.f32.gmra.mxu0 %v4051
        %v6411 = vpop.f32.mrf.mxu0
        %v6412 = vadd.f32 %v6008, %v6411
        %6413 = vmatmul.f32.gmra.mxu0 %v4054
        %v6414 = vpop.f32.mrf.mxu0
        %v6415 = vadd.f32 %v6011, %v6414
        %6416 = vmatmul.f32.gmra.mxu0 %v4057
        %v6417 = vpop.f32.mrf.mxu0
        %v6418 = vadd.f32 %v6014, %v6417
        %6419 = vmatmul.f32.gmra.mxu0 %v4060
        %v6420 = vpop.f32.mrf.mxu0
        %v6421 = vadd.f32 %v6017, %v6420
        %6422 = vmatmul.f32.gmra.mxu0 %v4063
        %v6423 = vpop.f32.mrf.mxu0
        %v6424 = vadd.f32 %v6020, %v6423
        %6425 = vmatmul.f32.gmra.mxu0 %v4066
        %v6426 = vpop.f32.mrf.mxu0
        %v6427 = vadd.f32 %v6023, %v6426
        %6428 = vmatmul.f32.gmra.mxu0 %v4069
        %v6429 = vpop.f32.mrf.mxu0
        %v6430 = vadd.f32 %v6026, %v6429
        %6431 = vmatmul.f32.gmra.mxu0 %v4072
        %v6432 = vpop.f32.mrf.mxu0
        %v6433 = vadd.f32 %v6029, %v6432
        %6434 = vmatmul.f32.gmra.mxu0 %v4075
        %v6435 = vpop.f32.mrf.mxu0
        %v6436 = vadd.f32 %v6032, %v6435
        %6437 = vmatmul.f32.gmra.mxu0 %v4078
        %v6438 = vpop.f32.mrf.mxu0
        %v6439 = vadd.f32 %v6035, %v6438
        %6440 = vmatmul.f32.gmra.mxu0 %v4081
        %v6441 = vpop.f32.mrf.mxu0
        %v6442 = vadd.f32 %v6038, %v6441
        %6443 = vmatmul.f32.gmra.mxu0 %v4084
        %v6444 = vpop.f32.mrf.mxu0
        %v6445 = vadd.f32 %v6041, %v6444
        %6446 = vmatmul.f32.gmra.mxu0 %v4087
        %v6447 = vpop.f32.mrf.mxu0
        %v6448 = vadd.f32 %v6044, %v6447
        %6449 = vmatmul.f32.gmra.mxu0 %v4090
        %v6450 = vpop.f32.mrf.mxu0
        %v6451 = vadd.f32 %v6047, %v6450
        %6452 = vmatmul.f32.gmra.mxu0 %v4093
        %v6453 = vpop.f32.mrf.mxu0
        %v6454 = vadd.f32 %v6050, %v6453
        %6455 = vmatmul.f32.gmra.mxu0 %v4096
        %v6456 = vpop.f32.mrf.mxu0
        %v6457 = vadd.f32 %v6053, %v6456
        %6458 = vmatmul.f32.gmra.mxu0 %v4099
        %v6459 = vpop.f32.mrf.mxu0
        %v6460 = vadd.f32 %v6056, %v6459
        %6461 = vmatmul.f32.gmra.mxu0 %v4102
        %v6462 = vpop.f32.mrf.mxu0
        %v6463 = vadd.f32 %v6059, %v6462
        %6464 = vmatmul.f32.gmra.mxu0 %v4105
        %v6465 = vpop.f32.mrf.mxu0
        %v6466 = vadd.f32 %v6062, %v6465
        %6467 = vmatmul.f32.gmra.mxu0 %v4108
        %v6468 = vpop.f32.mrf.mxu0
        %v6469 = vadd.f32 %v6065, %v6468
        %6470 = vmatmul.f32.gmra.mxu0 %v4111
        %v6471 = vpop.f32.mrf.mxu0
        %v6472 = vadd.f32 %v6068, %v6471
        %6473 = vmatmul.f32.gmra.mxu0 %v4114
        %v6474 = vpop.f32.mrf.mxu0
        %v6475 = vadd.f32 %v6071, %v6474
        %6476 = vmatmul.f32.gmra.mxu0 %v4117
        %v6477 = vpop.f32.mrf.mxu0
        %v6478 = vadd.f32 %v6074, %v6477
        %6479 = vmatmul.f32.gmra.mxu0 %v4120
        %v6480 = vpop.f32.mrf.mxu0
        %v6481 = vadd.f32 %v6077, %v6480
        %6482 = vmatmul.f32.gmra.mxu0 %v4123
        %v6483 = vpop.f32.mrf.mxu0
        %v6484 = vadd.f32 %v6080, %v6483
        %6485 = vmatmul.f32.gmra.mxu0 %v4126
        %v6486 = vpop.f32.mrf.mxu0
        %v6487 = vadd.f32 %v6083, %v6486
        %6488 = vmatmul.f32.gmra.mxu0 %v4129
        %v6489 = vpop.f32.mrf.mxu0
        %v6490 = vadd.f32 %v6086, %v6489
        %6491 = vmatmul.f32.gmra.mxu0 %v4132
        %v6492 = vpop.f32.mrf.mxu0
        %v6493 = vadd.f32 %v6089, %v6492
        %6494 = vmatmul.f32.gmra.mxu0 %v4135
        %v6495 = vpop.f32.mrf.mxu0
        %v6496 = vadd.f32 %v6092, %v6495
        %6497 = vmatmul.f32.gmra.mxu0 %v4138
        %v6498 = vpop.f32.mrf.mxu0
        %v6499 = vadd.f32 %v6095, %v6498
        %6500 = vmatmul.f32.gmra.mxu0 %v4141
        %v6501 = vpop.f32.mrf.mxu0
        %v6502 = vadd.f32 %v6098, %v6501
        %6503 = vmatmul.f32.gmra.mxu0 %v4144
        %v6504 = vpop.f32.mrf.mxu0
        %v6505 = vadd.f32 %v6101, %v6504
        %6506 = vmatmul.f32.gmra.mxu0 %v4147
        %v6507 = vpop.f32.mrf.mxu0
        %v6508 = vadd.f32 %v6104, %v6507
        %6509 = vmatmul.f32.gmra.mxu0 %v4150
        %v6510 = vpop.f32.mrf.mxu0
        %v6511 = vadd.f32 %v6107, %v6510
        %6512 = vmatmul.f32.gmra.mxu0 %v4153
        %v6513 = vpop.f32.mrf.mxu0
        %v6514 = vadd.f32 %v6110, %v6513
        %6515 = vmatmul.f32.gmra.mxu0 %v4156
        %v6516 = vpop.f32.mrf.mxu0
        %v6517 = vadd.f32 %v6113, %v6516
        %6518 = vmatmul.f32.gmra.mxu0 %v4159
        %v6519 = vpop.f32.mrf.mxu0
        %v6520 = vadd.f32 %v6116, %v6519
        %6521 = vmatmul.f32.gmra.mxu0 %v4162
        %v6522 = vpop.f32.mrf.mxu0
        %v6523 = vadd.f32 %v6119, %v6522
        %6524 = vmatmul.f32.gmra.mxu0 %v4165
        %v6525 = vpop.f32.mrf.mxu0
        %v6526 = vadd.f32 %v6122, %v6525
        %6527 = vdwg.mxu0
        %v6528 = vadd.f32 %v6145, %v3780
        %v6529 = vadd.f32 %v6148, %v3780
        %v6530 = vadd.f32 %v6151, %v3780
        %v6531 = vadd.f32 %v6154, %v3780
        %v6532 = vadd.f32 %v6157, %v3780
        %v6533 = vadd.f32 %v6160, %v3780
        %v6534 = vadd.f32 %v6163, %v3780
        %v6535 = vadd.f32 %v6166, %v3780
        %v6536 = vadd.f32 %v6169, %v3780
        %v6537 = vadd.f32 %v6172, %v3780
        %v6538 = vadd.f32 %v6175, %v3780
        %v6539 = vadd.f32 %v6178, %v3780
        %v6540 = vadd.f32 %v6181, %v3780
        %v6541 = vadd.f32 %v6184, %v3780
        %v6542 = vadd.f32 %v6187, %v3780
        %v6543 = vadd.f32 %v6190, %v3780
        %v6544 = vadd.f32 %v6193, %v3780
        %v6545 = vadd.f32 %v6196, %v3780
        %v6546 = vadd.f32 %v6199, %v3780
        %v6547 = vadd.f32 %v6202, %v3780
        %v6548 = vadd.f32 %v6205, %v3780
        %v6549 = vadd.f32 %v6208, %v3780
        %v6550 = vadd.f32 %v6211, %v3780
        %v6551 = vadd.f32 %v6214, %v3780
        %v6552 = vadd.f32 %v6217, %v3780
        %v6553 = vadd.f32 %v6220, %v3780
        %v6554 = vadd.f32 %v6223, %v3780
        %v6555 = vadd.f32 %v6226, %v3780
        %v6556 = vadd.f32 %v6229, %v3780
        %v6557 = vadd.f32 %v6232, %v3780
        %v6558 = vadd.f32 %v6235, %v3780
        %v6559 = vadd.f32 %v6238, %v3780
        %v6560 = vadd.f32 %v6241, %v3780
        %v6561 = vadd.f32 %v6244, %v3780
        %v6562 = vadd.f32 %v6247, %v3780
        %v6563 = vadd.f32 %v6250, %v3780
        %v6564 = vadd.f32 %v6253, %v3780
        %v6565 = vadd.f32 %v6256, %v3780
        %v6566 = vadd.f32 %v6259, %v3780
        %v6567 = vadd.f32 %v6262, %v3780
        %v6568 = vadd.f32 %v6265, %v3780
        %v6569 = vadd.f32 %v6268, %v3780
        %v6570 = vadd.f32 %v6271, %v3780
        %v6571 = vadd.f32 %v6274, %v3780
        %v6572 = vadd.f32 %v6277, %v3780
        %v6573 = vadd.f32 %v6280, %v3780
        %v6574 = vadd.f32 %v6283, %v3780
        %v6575 = vadd.f32 %v6286, %v3780
        %v6576 = vadd.f32 %v6289, %v3780
        %v6577 = vadd.f32 %v6292, %v3780
        %v6578 = vadd.f32 %v6295, %v3780
        %v6579 = vadd.f32 %v6298, %v3780
        %v6580 = vadd.f32 %v6301, %v3780
        %v6581 = vadd.f32 %v6304, %v3780
        %v6582 = vadd.f32 %v6307, %v3780
        %v6583 = vadd.f32 %v6310, %v3780
        %v6584 = vadd.f32 %v6313, %v3780
        %v6585 = vadd.f32 %v6316, %v3780
        %v6586 = vadd.f32 %v6319, %v3780
        %v6587 = vadd.f32 %v6322, %v3780
        %v6588 = vadd.f32 %v6325, %v3780
        %v6589 = vadd.f32 %v6328, %v3780
        %v6590 = vadd.f32 %v6331, %v3780
        %v6591 = vadd.f32 %v6334, %v3780
        %v6592 = vadd.f32 %v6337, %v3780
        %v6593 = vadd.f32 %v6340, %v3780
        %v6594 = vadd.f32 %v6343, %v3780
        %v6595 = vadd.f32 %v6346, %v3780
        %v6596 = vadd.f32 %v6349, %v3780
        %v6597 = vadd.f32 %v6352, %v3780
        %v6598 = vadd.f32 %v6355, %v3780
        %v6599 = vadd.f32 %v6358, %v3780
        %v6600 = vadd.f32 %v6361, %v3780
        %v6601 = vadd.f32 %v6364, %v3780
        %v6602 = vadd.f32 %v6367, %v3780
        %v6603 = vadd.f32 %v6370, %v3780
        %v6604 = vadd.f32 %v6373, %v3780
        %v6605 = vadd.f32 %v6376, %v3780
        %v6606 = vadd.f32 %v6379, %v3780
        %v6607 = vadd.f32 %v6382, %v3780
        %v6608 = vadd.f32 %v6385, %v3780
        %v6609 = vadd.f32 %v6388, %v3780
        %v6610 = vadd.f32 %v6391, %v3780
        %v6611 = vadd.f32 %v6394, %v3780
        %v6612 = vadd.f32 %v6397, %v3780
        %v6613 = vadd.f32 %v6400, %v3780
        %v6614 = vadd.f32 %v6403, %v3780
        %v6615 = vadd.f32 %v6406, %v3780
        %v6616 = vadd.f32 %v6409, %v3780
        %v6617 = vadd.f32 %v6412, %v3780
        %v6618 = vadd.f32 %v6415, %v3780
        %v6619 = vadd.f32 %v6418, %v3780
        %v6620 = vadd.f32 %v6421, %v3780
        %v6621 = vadd.f32 %v6424, %v3780
        %v6622 = vadd.f32 %v6427, %v3780
        %v6623 = vadd.f32 %v6430, %v3780
        %v6624 = vadd.f32 %v6433, %v3780
        %v6625 = vadd.f32 %v6436, %v3780
        %v6626 = vadd.f32 %v6439, %v3780
        %v6627 = vadd.f32 %v6442, %v3780
        %v6628 = vadd.f32 %v6445, %v3780
        %v6629 = vadd.f32 %v6448, %v3780
        %v6630 = vadd.f32 %v6451, %v3780
        %v6631 = vadd.f32 %v6454, %v3780
        %v6632 = vadd.f32 %v6457, %v3780
        %v6633 = vadd.f32 %v6460, %v3780
        %v6634 = vadd.f32 %v6463, %v3780
        %v6635 = vadd.f32 %v6466, %v3780
        %v6636 = vadd.f32 %v6469, %v3780
        %v6637 = vadd.f32 %v6472, %v3780
        %v6638 = vadd.f32 %v6475, %v3780
        %v6639 = vadd.f32 %v6478, %v3780
        %v6640 = vadd.f32 %v6481, %v3780
        %v6641 = vadd.f32 %v6484, %v3780
        %v6642 = vadd.f32 %v6487, %v3780
        %v6643 = vadd.f32 %v6490, %v3780
        %v6644 = vadd.f32 %v6493, %v3780
        %v6645 = vadd.f32 %v6496, %v3780
        %v6646 = vadd.f32 %v6499, %v3780
        %v6647 = vadd.f32 %v6502, %v3780
        %v6648 = vadd.f32 %v6505, %v3780
        %v6649 = vadd.f32 %v6508, %v3780
        %v6650 = vadd.f32 %v6511, %v3780
        %v6651 = vadd.f32 %v6514, %v3780
        %v6652 = vadd.f32 %v6517, %v3780
        %v6653 = vadd.f32 %v6520, %v3780
        %v6654 = vadd.f32 %v6523, %v3780
        %v6655 = vadd.f32 %v6526, %v3780
        %s6656 = scalar_lea.vmem %s7, 256
        %v6657 = vld [vmem:[%s6656] sm:$0xff]
        %v6658 = vld [vmem:[%s6656 + $0x8] sm:$0xff]
        %v6659 = vld [vmem:[%s6656 + $0x10] sm:$0xff]
        %v6660 = vld [vmem:[%s6656 + $0x18] sm:$0x3f]
        %s6661 = scalar_lea.vmem %s7, 192
        %v6662 = vld [vmem:[%s6661] sm:$0xff]
        %v6663 = vld [vmem:[%s6661 + $0x8] sm:$0xff]
        %v6664 = vld [vmem:[%s6661 + $0x10] sm:$0xff]
        %v6665 = vld [vmem:[%s6661 + $0x18] sm:$0x3f]
        %v6667 = vsel %vm4167, %v6665, 0
        %6669 = vmatpush.msra.mxu0 0.0
        %6670 = vmatpush.msra.mxu0 0.0
        %6671 = vmatpush.msra.mxu0 0.0
        %6672 = vmatpush.msra.mxu0 0.0
        %6673 = vmatpush.msra.mxu0 0.0
        %6674 = vmatpush.msra.mxu0 0.0
        %6675 = vmatpush.msra.mxu0 0.0
        %6676 = vmatpush.msra.mxu0 0.0
        %6677 = vmatpush.msra.mxu0 0.0
        %6678 = vmatpush.msra.mxu0 0.0
        %6679 = vmatpush.msra.mxu0 0.0
        %6680 = vmatpush.msra.mxu0 0.0
        %6681 = vmatpush.msra.mxu0 %v6667
        %6682 = vmatpush.msra.mxu0 %v6664
        %6683 = vmatpush.msra.mxu0 %v6663
        %6684 = vmatpush.msra.mxu0 %v6662
        %6685 = vmatmul.f32.gmra.mxu0 %v3808
        %v6686 = vpop.f32.mrf.mxu0
        %v6687 = vadd.f32 0.0, %v6686
        %6688 = vmatmul.f32.gmra.mxu0 %v3811
        %v6689 = vpop.f32.mrf.mxu0
        %v6690 = vadd.f32 0.0, %v6689
        %6691 = vmatmul.f32.gmra.mxu0 %v3814
        %v6692 = vpop.f32.mrf.mxu0
        %v6693 = vadd.f32 0.0, %v6692
        %6694 = vmatmul.f32.gmra.mxu0 %v3817
        %v6695 = vpop.f32.mrf.mxu0
        %v6696 = vadd.f32 0.0, %v6695
        %6697 = vmatmul.f32.gmra.mxu0 %v3820
        %v6698 = vpop.f32.mrf.mxu0
        %v6699 = vadd.f32 0.0, %v6698
        %6700 = vmatmul.f32.gmra.mxu0 %v3823
        %v6701 = vpop.f32.mrf.mxu0
        %v6702 = vadd.f32 0.0, %v6701
        %6703 = vmatmul.f32.gmra.mxu0 %v3826
        %v6704 = vpop.f32.mrf.mxu0
        %v6705 = vadd.f32 0.0, %v6704
        %6706 = vmatmul.f32.gmra.mxu0 %v3829
        %v6707 = vpop.f32.mrf.mxu0
        %v6708 = vadd.f32 0.0, %v6707
        %6709 = vmatmul.f32.gmra.mxu0 %v3832
        %v6710 = vpop.f32.mrf.mxu0
        %v6711 = vadd.f32 0.0, %v6710
        %6712 = vmatmul.f32.gmra.mxu0 %v3835
        %v6713 = vpop.f32.mrf.mxu0
        %v6714 = vadd.f32 0.0, %v6713
        %6715 = vmatmul.f32.gmra.mxu0 %v3838
        %v6716 = vpop.f32.mrf.mxu0
        %v6717 = vadd.f32 0.0, %v6716
        %6718 = vmatmul.f32.gmra.mxu0 %v3841
        %v6719 = vpop.f32.mrf.mxu0
        %v6720 = vadd.f32 0.0, %v6719
        %6721 = vmatmul.f32.gmra.mxu0 %v3844
        %v6722 = vpop.f32.mrf.mxu0
        %v6723 = vadd.f32 0.0, %v6722
        %6724 = vmatmul.f32.gmra.mxu0 %v3847
        %v6725 = vpop.f32.mrf.mxu0
        %v6726 = vadd.f32 0.0, %v6725
        %6727 = vmatmul.f32.gmra.mxu0 %v3850
        %v6728 = vpop.f32.mrf.mxu0
        %v6729 = vadd.f32 0.0, %v6728
        %6730 = vmatmul.f32.gmra.mxu0 %v3853
        %v6731 = vpop.f32.mrf.mxu0
        %v6732 = vadd.f32 0.0, %v6731
        %6733 = vmatmul.f32.gmra.mxu0 %v3856
        %v6734 = vpop.f32.mrf.mxu0
        %v6735 = vadd.f32 0.0, %v6734
        %6736 = vmatmul.f32.gmra.mxu0 %v3859
        %v6737 = vpop.f32.mrf.mxu0
        %v6738 = vadd.f32 0.0, %v6737
        %6739 = vmatmul.f32.gmra.mxu0 %v3862
        %v6740 = vpop.f32.mrf.mxu0
        %v6741 = vadd.f32 0.0, %v6740
        %6742 = vmatmul.f32.gmra.mxu0 %v3865
        %v6743 = vpop.f32.mrf.mxu0
        %v6744 = vadd.f32 0.0, %v6743
        %6745 = vmatmul.f32.gmra.mxu0 %v3868
        %v6746 = vpop.f32.mrf.mxu0
        %v6747 = vadd.f32 0.0, %v6746
        %6748 = vmatmul.f32.gmra.mxu0 %v3871
        %v6749 = vpop.f32.mrf.mxu0
        %v6750 = vadd.f32 0.0, %v6749
        %6751 = vmatmul.f32.gmra.mxu0 %v3874
        %v6752 = vpop.f32.mrf.mxu0
        %v6753 = vadd.f32 0.0, %v6752
        %6754 = vmatmul.f32.gmra.mxu0 %v3877
        %v6755 = vpop.f32.mrf.mxu0
        %v6756 = vadd.f32 0.0, %v6755
        %6757 = vmatmul.f32.gmra.mxu0 %v4583
        %v6758 = vpop.f32.mrf.mxu0
        %v6759 = vadd.f32 0.0, %v6758
        %6760 = vmatmul.f32.gmra.mxu0 %v4586
        %v6761 = vpop.f32.mrf.mxu0
        %v6762 = vadd.f32 0.0, %v6761
        %6763 = vmatmul.f32.gmra.mxu0 %v4589
        %v6764 = vpop.f32.mrf.mxu0
        %v6765 = vadd.f32 0.0, %v6764
        %6766 = vmatmul.f32.gmra.mxu0 %v4592
        %v6767 = vpop.f32.mrf.mxu0
        %v6768 = vadd.f32 0.0, %v6767
        %6769 = vmatmul.f32.gmra.mxu0 %v4595
        %v6770 = vpop.f32.mrf.mxu0
        %v6771 = vadd.f32 0.0, %v6770
        %6772 = vmatmul.f32.gmra.mxu0 %v4598
        %v6773 = vpop.f32.mrf.mxu0
        %v6774 = vadd.f32 0.0, %v6773
        %6775 = vmatmul.f32.gmra.mxu0 %v4601
        %v6776 = vpop.f32.mrf.mxu0
        %v6777 = vadd.f32 0.0, %v6776
        %6778 = vmatmul.f32.gmra.mxu0 %v4604
        %v6779 = vpop.f32.mrf.mxu0
        %v6780 = vadd.f32 0.0, %v6779
        %6781 = vmatmul.f32.gmra.mxu0 %v3904
        %v6782 = vpop.f32.mrf.mxu0
        %v6783 = vadd.f32 0.0, %v6782
        %6784 = vmatmul.f32.gmra.mxu0 %v3907
        %v6785 = vpop.f32.mrf.mxu0
        %v6786 = vadd.f32 0.0, %v6785
        %6787 = vmatmul.f32.gmra.mxu0 %v3910
        %v6788 = vpop.f32.mrf.mxu0
        %v6789 = vadd.f32 0.0, %v6788
        %6790 = vmatmul.f32.gmra.mxu0 %v3913
        %v6791 = vpop.f32.mrf.mxu0
        %v6792 = vadd.f32 0.0, %v6791
        %6793 = vmatmul.f32.gmra.mxu0 %v3916
        %v6794 = vpop.f32.mrf.mxu0
        %v6795 = vadd.f32 0.0, %v6794
        %6796 = vmatmul.f32.gmra.mxu0 %v3919
        %v6797 = vpop.f32.mrf.mxu0
        %v6798 = vadd.f32 0.0, %v6797
        %6799 = vmatmul.f32.gmra.mxu0 %v3922
        %v6800 = vpop.f32.mrf.mxu0
        %v6801 = vadd.f32 0.0, %v6800
        %6802 = vmatmul.f32.gmra.mxu0 %v3925
        %v6803 = vpop.f32.mrf.mxu0
        %v6804 = vadd.f32 0.0, %v6803
        %6805 = vmatmul.f32.gmra.mxu0 %v3928
        %v6806 = vpop.f32.mrf.mxu0
        %v6807 = vadd.f32 0.0, %v6806
        %6808 = vmatmul.f32.gmra.mxu0 %v3931
        %v6809 = vpop.f32.mrf.mxu0
        %v6810 = vadd.f32 0.0, %v6809
        %6811 = vmatmul.f32.gmra.mxu0 %v3934
        %v6812 = vpop.f32.mrf.mxu0
        %v6813 = vadd.f32 0.0, %v6812
        %6814 = vmatmul.f32.gmra.mxu0 %v3937
        %v6815 = vpop.f32.mrf.mxu0
        %v6816 = vadd.f32 0.0, %v6815
        %6817 = vmatmul.f32.gmra.mxu0 %v3940
        %v6818 = vpop.f32.mrf.mxu0
        %v6819 = vadd.f32 0.0, %v6818
        %6820 = vmatmul.f32.gmra.mxu0 %v3943
        %v6821 = vpop.f32.mrf.mxu0
        %v6822 = vadd.f32 0.0, %v6821
        %6823 = vmatmul.f32.gmra.mxu0 %v3946
        %v6824 = vpop.f32.mrf.mxu0
        %v6825 = vadd.f32 0.0, %v6824
        %6826 = vmatmul.f32.gmra.mxu0 %v3949
        %v6827 = vpop.f32.mrf.mxu0
        %v6828 = vadd.f32 0.0, %v6827
        %6829 = vmatmul.f32.gmra.mxu0 %v3952
        %v6830 = vpop.f32.mrf.mxu0
        %v6831 = vadd.f32 0.0, %v6830
        %6832 = vmatmul.f32.gmra.mxu0 %v3955
        %v6833 = vpop.f32.mrf.mxu0
        %v6834 = vadd.f32 0.0, %v6833
        %6835 = vmatmul.f32.gmra.mxu0 %v3958
        %v6836 = vpop.f32.mrf.mxu0
        %v6837 = vadd.f32 0.0, %v6836
        %6838 = vmatmul.f32.gmra.mxu0 %v3961
        %v6839 = vpop.f32.mrf.mxu0
        %v6840 = vadd.f32 0.0, %v6839
        %6841 = vmatmul.f32.gmra.mxu0 %v3964
        %v6842 = vpop.f32.mrf.mxu0
        %v6843 = vadd.f32 0.0, %v6842
        %6844 = vmatmul.f32.gmra.mxu0 %v3967
        %v6845 = vpop.f32.mrf.mxu0
        %v6846 = vadd.f32 0.0, %v6845
        %6847 = vmatmul.f32.gmra.mxu0 %v3970
        %v6848 = vpop.f32.mrf.mxu0
        %v6849 = vadd.f32 0.0, %v6848
        %6850 = vmatmul.f32.gmra.mxu0 %v3973
        %v6851 = vpop.f32.mrf.mxu0
        %v6852 = vadd.f32 0.0, %v6851
        %6853 = vmatmul.f32.gmra.mxu0 %v4607
        %v6854 = vpop.f32.mrf.mxu0
        %v6855 = vadd.f32 0.0, %v6854
        %6856 = vmatmul.f32.gmra.mxu0 %v4610
        %v6857 = vpop.f32.mrf.mxu0
        %v6858 = vadd.f32 0.0, %v6857
        %6859 = vmatmul.f32.gmra.mxu0 %v4613
        %v6860 = vpop.f32.mrf.mxu0
        %v6861 = vadd.f32 0.0, %v6860
        %6862 = vmatmul.f32.gmra.mxu0 %v4616
        %v6863 = vpop.f32.mrf.mxu0
        %v6864 = vadd.f32 0.0, %v6863
        %6865 = vmatmul.f32.gmra.mxu0 %v4619
        %v6866 = vpop.f32.mrf.mxu0
        %v6867 = vadd.f32 0.0, %v6866
        %6868 = vmatmul.f32.gmra.mxu0 %v4622
        %v6869 = vpop.f32.mrf.mxu0
        %v6870 = vadd.f32 0.0, %v6869
        %6871 = vmatmul.f32.gmra.mxu0 %v4625
        %v6872 = vpop.f32.mrf.mxu0
        %v6873 = vadd.f32 0.0, %v6872
        %6874 = vmatmul.f32.gmra.mxu0 %v4628
        %v6875 = vpop.f32.mrf.mxu0
        %v6876 = vadd.f32 0.0, %v6875
        %6877 = vmatmul.f32.gmra.mxu0 %v4000
        %v6878 = vpop.f32.mrf.mxu0
        %v6879 = vadd.f32 0.0, %v6878
        %6880 = vmatmul.f32.gmra.mxu0 %v4003
        %v6881 = vpop.f32.mrf.mxu0
        %v6882 = vadd.f32 0.0, %v6881
        %6883 = vmatmul.f32.gmra.mxu0 %v4006
        %v6884 = vpop.f32.mrf.mxu0
        %v6885 = vadd.f32 0.0, %v6884
        %6886 = vmatmul.f32.gmra.mxu0 %v4009
        %v6887 = vpop.f32.mrf.mxu0
        %v6888 = vadd.f32 0.0, %v6887
        %6889 = vmatmul.f32.gmra.mxu0 %v4012
        %v6890 = vpop.f32.mrf.mxu0
        %v6891 = vadd.f32 0.0, %v6890
        %6892 = vmatmul.f32.gmra.mxu0 %v4015
        %v6893 = vpop.f32.mrf.mxu0
        %v6894 = vadd.f32 0.0, %v6893
        %6895 = vmatmul.f32.gmra.mxu0 %v4018
        %v6896 = vpop.f32.mrf.mxu0
        %v6897 = vadd.f32 0.0, %v6896
        %6898 = vmatmul.f32.gmra.mxu0 %v4021
        %v6899 = vpop.f32.mrf.mxu0
        %v6900 = vadd.f32 0.0, %v6899
        %6901 = vmatmul.f32.gmra.mxu0 %v4024
        %v6902 = vpop.f32.mrf.mxu0
        %v6903 = vadd.f32 0.0, %v6902
        %6904 = vmatmul.f32.gmra.mxu0 %v4027
        %v6905 = vpop.f32.mrf.mxu0
        %v6906 = vadd.f32 0.0, %v6905
        %6907 = vmatmul.f32.gmra.mxu0 %v4030
        %v6908 = vpop.f32.mrf.mxu0
        %v6909 = vadd.f32 0.0, %v6908
        %6910 = vmatmul.f32.gmra.mxu0 %v4033
        %v6911 = vpop.f32.mrf.mxu0
        %v6912 = vadd.f32 0.0, %v6911
        %6913 = vmatmul.f32.gmra.mxu0 %v4036
        %v6914 = vpop.f32.mrf.mxu0
        %v6915 = vadd.f32 0.0, %v6914
        %6916 = vmatmul.f32.gmra.mxu0 %v4039
        %v6917 = vpop.f32.mrf.mxu0
        %v6918 = vadd.f32 0.0, %v6917
        %6919 = vmatmul.f32.gmra.mxu0 %v4042
        %v6920 = vpop.f32.mrf.mxu0
        %v6921 = vadd.f32 0.0, %v6920
        %6922 = vmatmul.f32.gmra.mxu0 %v4045
        %v6923 = vpop.f32.mrf.mxu0
        %v6924 = vadd.f32 0.0, %v6923
        %6925 = vmatmul.f32.gmra.mxu0 %v4048
        %v6926 = vpop.f32.mrf.mxu0
        %v6927 = vadd.f32 0.0, %v6926
        %6928 = vmatmul.f32.gmra.mxu0 %v4051
        %v6929 = vpop.f32.mrf.mxu0
        %v6930 = vadd.f32 0.0, %v6929
        %6931 = vmatmul.f32.gmra.mxu0 %v4054
        %v6932 = vpop.f32.mrf.mxu0
        %v6933 = vadd.f32 0.0, %v6932
        %6934 = vmatmul.f32.gmra.mxu0 %v4057
        %v6935 = vpop.f32.mrf.mxu0
        %v6936 = vadd.f32 0.0, %v6935
        %6937 = vmatmul.f32.gmra.mxu0 %v4060
        %v6938 = vpop.f32.mrf.mxu0
        %v6939 = vadd.f32 0.0, %v6938
        %6940 = vmatmul.f32.gmra.mxu0 %v4063
        %v6941 = vpop.f32.mrf.mxu0
        %v6942 = vadd.f32 0.0, %v6941
        %6943 = vmatmul.f32.gmra.mxu0 %v4066
        %v6944 = vpop.f32.mrf.mxu0
        %v6945 = vadd.f32 0.0, %v6944
        %6946 = vmatmul.f32.gmra.mxu0 %v4069
        %v6947 = vpop.f32.mrf.mxu0
        %v6948 = vadd.f32 0.0, %v6947
        %6949 = vmatmul.f32.gmra.mxu0 %v4631
        %v6950 = vpop.f32.mrf.mxu0
        %v6951 = vadd.f32 0.0, %v6950
        %6952 = vmatmul.f32.gmra.mxu0 %v4634
        %v6953 = vpop.f32.mrf.mxu0
        %v6954 = vadd.f32 0.0, %v6953
        %6955 = vmatmul.f32.gmra.mxu0 %v4637
        %v6956 = vpop.f32.mrf.mxu0
        %v6957 = vadd.f32 0.0, %v6956
        %6958 = vmatmul.f32.gmra.mxu0 %v4640
        %v6959 = vpop.f32.mrf.mxu0
        %v6960 = vadd.f32 0.0, %v6959
        %6961 = vmatmul.f32.gmra.mxu0 %v4643
        %v6962 = vpop.f32.mrf.mxu0
        %v6963 = vadd.f32 0.0, %v6962
        %6964 = vmatmul.f32.gmra.mxu0 %v4646
        %v6965 = vpop.f32.mrf.mxu0
        %v6966 = vadd.f32 0.0, %v6965
        %6967 = vmatmul.f32.gmra.mxu0 %v4649
        %v6968 = vpop.f32.mrf.mxu0
        %v6969 = vadd.f32 0.0, %v6968
        %6970 = vmatmul.f32.gmra.mxu0 %v4652
        %v6971 = vpop.f32.mrf.mxu0
        %v6972 = vadd.f32 0.0, %v6971
        %6973 = vmatmul.f32.gmra.mxu0 %v4096
        %v6974 = vpop.f32.mrf.mxu0
        %v6975 = vadd.f32 0.0, %v6974
        %6976 = vmatmul.f32.gmra.mxu0 %v4099
        %v6977 = vpop.f32.mrf.mxu0
        %v6978 = vadd.f32 0.0, %v6977
        %6979 = vmatmul.f32.gmra.mxu0 %v4102
        %v6980 = vpop.f32.mrf.mxu0
        %v6981 = vadd.f32 0.0, %v6980
        %6982 = vmatmul.f32.gmra.mxu0 %v4105
        %v6983 = vpop.f32.mrf.mxu0
        %v6984 = vadd.f32 0.0, %v6983
        %6985 = vmatmul.f32.gmra.mxu0 %v4108
        %v6986 = vpop.f32.mrf.mxu0
        %v6987 = vadd.f32 0.0, %v6986
        %6988 = vmatmul.f32.gmra.mxu0 %v4111
        %v6989 = vpop.f32.mrf.mxu0
        %v6990 = vadd.f32 0.0, %v6989
        %6991 = vmatmul.f32.gmra.mxu0 %v4114
        %v6992 = vpop.f32.mrf.mxu0
        %v6993 = vadd.f32 0.0, %v6992
        %6994 = vmatmul.f32.gmra.mxu0 %v4117
        %v6995 = vpop.f32.mrf.mxu0
        %v6996 = vadd.f32 0.0, %v6995
        %6997 = vmatmul.f32.gmra.mxu0 %v4120
        %v6998 = vpop.f32.mrf.mxu0
        %v6999 = vadd.f32 0.0, %v6998
        %7000 = vmatmul.f32.gmra.mxu0 %v4123
        %v7001 = vpop.f32.mrf.mxu0
        %v7002 = vadd.f32 0.0, %v7001
        %7003 = vmatmul.f32.gmra.mxu0 %v4126
        %v7004 = vpop.f32.mrf.mxu0
        %v7005 = vadd.f32 0.0, %v7004
        %7006 = vmatmul.f32.gmra.mxu0 %v4129
        %v7007 = vpop.f32.mrf.mxu0
        %v7008 = vadd.f32 0.0, %v7007
        %7009 = vmatmul.f32.gmra.mxu0 %v4132
        %v7010 = vpop.f32.mrf.mxu0
        %v7011 = vadd.f32 0.0, %v7010
        %7012 = vmatmul.f32.gmra.mxu0 %v4135
        %v7013 = vpop.f32.mrf.mxu0
        %v7014 = vadd.f32 0.0, %v7013
        %7015 = vmatmul.f32.gmra.mxu0 %v4138
        %v7016 = vpop.f32.mrf.mxu0
        %v7017 = vadd.f32 0.0, %v7016
        %7018 = vmatmul.f32.gmra.mxu0 %v4141
        %v7019 = vpop.f32.mrf.mxu0
        %v7020 = vadd.f32 0.0, %v7019
        %7021 = vmatmul.f32.gmra.mxu0 %v4144
        %v7022 = vpop.f32.mrf.mxu0
        %v7023 = vadd.f32 0.0, %v7022
        %7024 = vmatmul.f32.gmra.mxu0 %v4147
        %v7025 = vpop.f32.mrf.mxu0
        %v7026 = vadd.f32 0.0, %v7025
        %7027 = vmatmul.f32.gmra.mxu0 %v4150
        %v7028 = vpop.f32.mrf.mxu0
        %v7029 = vadd.f32 0.0, %v7028
        %7030 = vmatmul.f32.gmra.mxu0 %v4153
        %v7031 = vpop.f32.mrf.mxu0
        %v7032 = vadd.f32 0.0, %v7031
        %7033 = vmatmul.f32.gmra.mxu0 %v4156
        %v7034 = vpop.f32.mrf.mxu0
        %v7035 = vadd.f32 0.0, %v7034
        %7036 = vmatmul.f32.gmra.mxu0 %v4159
        %v7037 = vpop.f32.mrf.mxu0
        %v7038 = vadd.f32 0.0, %v7037
        %7039 = vmatmul.f32.gmra.mxu0 %v4162
        %v7040 = vpop.f32.mrf.mxu0
        %v7041 = vadd.f32 0.0, %v7040
        %7042 = vmatmul.f32.gmra.mxu0 %v4165
        %v7043 = vpop.f32.mrf.mxu0
        %v7044 = vadd.f32 0.0, %v7043
        %7045 = vmatmul.f32.gmra.mxu0 %v4655
        %v7046 = vpop.f32.mrf.mxu0
        %v7047 = vadd.f32 0.0, %v7046
        %7048 = vmatmul.f32.gmra.mxu0 %v4658
        %v7049 = vpop.f32.mrf.mxu0
        %v7050 = vadd.f32 0.0, %v7049
        %7051 = vmatmul.f32.gmra.mxu0 %v4661
        %v7052 = vpop.f32.mrf.mxu0
        %v7053 = vadd.f32 0.0, %v7052
        %7054 = vmatmul.f32.gmra.mxu0 %v4664
        %v7055 = vpop.f32.mrf.mxu0
        %v7056 = vadd.f32 0.0, %v7055
        %7057 = vmatmul.f32.gmra.mxu0 %v4667
        %v7058 = vpop.f32.mrf.mxu0
        %v7059 = vadd.f32 0.0, %v7058
        %7060 = vmatmul.f32.gmra.mxu0 %v4670
        %v7061 = vpop.f32.mrf.mxu0
        %v7062 = vadd.f32 0.0, %v7061
        %7063 = vmatmul.f32.gmra.mxu0 %v4673
        %v7064 = vpop.f32.mrf.mxu0
        %v7065 = vadd.f32 0.0, %v7064
        %7066 = vmatmul.f32.gmra.mxu0 %v4676
        %v7067 = vpop.f32.mrf.mxu0
        %v7068 = vadd.f32 0.0, %v7067
        %7069 = vdwg.mxu0
        %v7071 = vsel %vm4167, %v6660, 0
        %7073 = vmatpush.msra.mxu0 0.0
        %7074 = vmatpush.msra.mxu0 0.0
        %7075 = vmatpush.msra.mxu0 0.0
        %7076 = vmatpush.msra.mxu0 0.0
        %7077 = vmatpush.msra.mxu0 0.0
        %7078 = vmatpush.msra.mxu0 0.0
        %7079 = vmatpush.msra.mxu0 0.0
        %7080 = vmatpush.msra.mxu0 0.0
        %7081 = vmatpush.msra.mxu0 0.0
        %7082 = vmatpush.msra.mxu0 0.0
        %7083 = vmatpush.msra.mxu0 0.0
        %7084 = vmatpush.msra.mxu0 0.0
        %7085 = vmatpush.msra.mxu0 %v7071
        %7086 = vmatpush.msra.mxu0 %v6659
        %7087 = vmatpush.msra.mxu0 %v6658
        %7088 = vmatpush.msra.mxu0 %v6657
        %7089 = vmatmul.f32.gmra.mxu0 %v3784
        %v7090 = vpop.f32.mrf.mxu0
        %v7091 = vadd.f32 %v6687, %v7090
        %7092 = vmatmul.f32.gmra.mxu0 %v3787
        %v7093 = vpop.f32.mrf.mxu0
        %v7094 = vadd.f32 %v6690, %v7093
        %7095 = vmatmul.f32.gmra.mxu0 %v3790
        %v7096 = vpop.f32.mrf.mxu0
        %v7097 = vadd.f32 %v6693, %v7096
        %7098 = vmatmul.f32.gmra.mxu0 %v3793
        %v7099 = vpop.f32.mrf.mxu0
        %v7100 = vadd.f32 %v6696, %v7099
        %7101 = vmatmul.f32.gmra.mxu0 %v3796
        %v7102 = vpop.f32.mrf.mxu0
        %v7103 = vadd.f32 %v6699, %v7102
        %7104 = vmatmul.f32.gmra.mxu0 %v3799
        %v7105 = vpop.f32.mrf.mxu0
        %v7106 = vadd.f32 %v6702, %v7105
        %7107 = vmatmul.f32.gmra.mxu0 %v3802
        %v7108 = vpop.f32.mrf.mxu0
        %v7109 = vadd.f32 %v6705, %v7108
        %7110 = vmatmul.f32.gmra.mxu0 %v3805
        %v7111 = vpop.f32.mrf.mxu0
        %v7112 = vadd.f32 %v6708, %v7111
        %7113 = vmatmul.f32.gmra.mxu0 %v3808
        %v7114 = vpop.f32.mrf.mxu0
        %v7115 = vadd.f32 %v6711, %v7114
        %7116 = vmatmul.f32.gmra.mxu0 %v3811
        %v7117 = vpop.f32.mrf.mxu0
        %v7118 = vadd.f32 %v6714, %v7117
        %7119 = vmatmul.f32.gmra.mxu0 %v3814
        %v7120 = vpop.f32.mrf.mxu0
        %v7121 = vadd.f32 %v6717, %v7120
        %7122 = vmatmul.f32.gmra.mxu0 %v3817
        %v7123 = vpop.f32.mrf.mxu0
        %v7124 = vadd.f32 %v6720, %v7123
        %7125 = vmatmul.f32.gmra.mxu0 %v3820
        %v7126 = vpop.f32.mrf.mxu0
        %v7127 = vadd.f32 %v6723, %v7126
        %7128 = vmatmul.f32.gmra.mxu0 %v3823
        %v7129 = vpop.f32.mrf.mxu0
        %v7130 = vadd.f32 %v6726, %v7129
        %7131 = vmatmul.f32.gmra.mxu0 %v3826
        %v7132 = vpop.f32.mrf.mxu0
        %v7133 = vadd.f32 %v6729, %v7132
        %7134 = vmatmul.f32.gmra.mxu0 %v3829
        %v7135 = vpop.f32.mrf.mxu0
        %v7136 = vadd.f32 %v6732, %v7135
        %7137 = vmatmul.f32.gmra.mxu0 %v3832
        %v7138 = vpop.f32.mrf.mxu0
        %v7139 = vadd.f32 %v6735, %v7138
        %7140 = vmatmul.f32.gmra.mxu0 %v3835
        %v7141 = vpop.f32.mrf.mxu0
        %v7142 = vadd.f32 %v6738, %v7141
        %7143 = vmatmul.f32.gmra.mxu0 %v3838
        %v7144 = vpop.f32.mrf.mxu0
        %v7145 = vadd.f32 %v6741, %v7144
        %7146 = vmatmul.f32.gmra.mxu0 %v3841
        %v7147 = vpop.f32.mrf.mxu0
        %v7148 = vadd.f32 %v6744, %v7147
        %7149 = vmatmul.f32.gmra.mxu0 %v3844
        %v7150 = vpop.f32.mrf.mxu0
        %v7151 = vadd.f32 %v6747, %v7150
        %7152 = vmatmul.f32.gmra.mxu0 %v3847
        %v7153 = vpop.f32.mrf.mxu0
        %v7154 = vadd.f32 %v6750, %v7153
        %7155 = vmatmul.f32.gmra.mxu0 %v3850
        %v7156 = vpop.f32.mrf.mxu0
        %v7157 = vadd.f32 %v6753, %v7156
        %7158 = vmatmul.f32.gmra.mxu0 %v3853
        %v7159 = vpop.f32.mrf.mxu0
        %v7160 = vadd.f32 %v6756, %v7159
        %7161 = vmatmul.f32.gmra.mxu0 %v3856
        %v7162 = vpop.f32.mrf.mxu0
        %v7163 = vadd.f32 %v6759, %v7162
        %7164 = vmatmul.f32.gmra.mxu0 %v3859
        %v7165 = vpop.f32.mrf.mxu0
        %v7166 = vadd.f32 %v6762, %v7165
        %7167 = vmatmul.f32.gmra.mxu0 %v3862
        %v7168 = vpop.f32.mrf.mxu0
        %v7169 = vadd.f32 %v6765, %v7168
        %7170 = vmatmul.f32.gmra.mxu0 %v3865
        %v7171 = vpop.f32.mrf.mxu0
        %v7172 = vadd.f32 %v6768, %v7171
        %7173 = vmatmul.f32.gmra.mxu0 %v3868
        %v7174 = vpop.f32.mrf.mxu0
        %v7175 = vadd.f32 %v6771, %v7174
        %7176 = vmatmul.f32.gmra.mxu0 %v3871
        %v7177 = vpop.f32.mrf.mxu0
        %v7178 = vadd.f32 %v6774, %v7177
        %7179 = vmatmul.f32.gmra.mxu0 %v3874
        %v7180 = vpop.f32.mrf.mxu0
        %v7181 = vadd.f32 %v6777, %v7180
        %7182 = vmatmul.f32.gmra.mxu0 %v3877
        %v7183 = vpop.f32.mrf.mxu0
        %v7184 = vadd.f32 %v6780, %v7183
        %7185 = vmatmul.f32.gmra.mxu0 %v3880
        %v7186 = vpop.f32.mrf.mxu0
        %v7187 = vadd.f32 %v6783, %v7186
        %7188 = vmatmul.f32.gmra.mxu0 %v3883
        %v7189 = vpop.f32.mrf.mxu0
        %v7190 = vadd.f32 %v6786, %v7189
        %7191 = vmatmul.f32.gmra.mxu0 %v3886
        %v7192 = vpop.f32.mrf.mxu0
        %v7193 = vadd.f32 %v6789, %v7192
        %7194 = vmatmul.f32.gmra.mxu0 %v3889
        %v7195 = vpop.f32.mrf.mxu0
        %v7196 = vadd.f32 %v6792, %v7195
        %7197 = vmatmul.f32.gmra.mxu0 %v3892
        %v7198 = vpop.f32.mrf.mxu0
        %v7199 = vadd.f32 %v6795, %v7198
        %7200 = vmatmul.f32.gmra.mxu0 %v3895
        %v7201 = vpop.f32.mrf.mxu0
        %v7202 = vadd.f32 %v6798, %v7201
        %7203 = vmatmul.f32.gmra.mxu0 %v3898
        %v7204 = vpop.f32.mrf.mxu0
        %v7205 = vadd.f32 %v6801, %v7204
        %7206 = vmatmul.f32.gmra.mxu0 %v3901
        %v7207 = vpop.f32.mrf.mxu0
        %v7208 = vadd.f32 %v6804, %v7207
        %7209 = vmatmul.f32.gmra.mxu0 %v3904
        %v7210 = vpop.f32.mrf.mxu0
        %v7211 = vadd.f32 %v6807, %v7210
        %7212 = vmatmul.f32.gmra.mxu0 %v3907
        %v7213 = vpop.f32.mrf.mxu0
        %v7214 = vadd.f32 %v6810, %v7213
        %7215 = vmatmul.f32.gmra.mxu0 %v3910
        %v7216 = vpop.f32.mrf.mxu0
        %v7217 = vadd.f32 %v6813, %v7216
        %7218 = vmatmul.f32.gmra.mxu0 %v3913
        %v7219 = vpop.f32.mrf.mxu0
        %v7220 = vadd.f32 %v6816, %v7219
        %7221 = vmatmul.f32.gmra.mxu0 %v3916
        %v7222 = vpop.f32.mrf.mxu0
        %v7223 = vadd.f32 %v6819, %v7222
        %7224 = vmatmul.f32.gmra.mxu0 %v3919
        %v7225 = vpop.f32.mrf.mxu0
        %v7226 = vadd.f32 %v6822, %v7225
        %7227 = vmatmul.f32.gmra.mxu0 %v3922
        %v7228 = vpop.f32.mrf.mxu0
        %v7229 = vadd.f32 %v6825, %v7228
        %7230 = vmatmul.f32.gmra.mxu0 %v3925
        %v7231 = vpop.f32.mrf.mxu0
        %v7232 = vadd.f32 %v6828, %v7231
        %7233 = vmatmul.f32.gmra.mxu0 %v3928
        %v7234 = vpop.f32.mrf.mxu0
        %v7235 = vadd.f32 %v6831, %v7234
        %7236 = vmatmul.f32.gmra.mxu0 %v3931
        %v7237 = vpop.f32.mrf.mxu0
        %v7238 = vadd.f32 %v6834, %v7237
        %7239 = vmatmul.f32.gmra.mxu0 %v3934
        %v7240 = vpop.f32.mrf.mxu0
        %v7241 = vadd.f32 %v6837, %v7240
        %7242 = vmatmul.f32.gmra.mxu0 %v3937
        %v7243 = vpop.f32.mrf.mxu0
        %v7244 = vadd.f32 %v6840, %v7243
        %7245 = vmatmul.f32.gmra.mxu0 %v3940
        %v7246 = vpop.f32.mrf.mxu0
        %v7247 = vadd.f32 %v6843, %v7246
        %7248 = vmatmul.f32.gmra.mxu0 %v3943
        %v7249 = vpop.f32.mrf.mxu0
        %v7250 = vadd.f32 %v6846, %v7249
        %7251 = vmatmul.f32.gmra.mxu0 %v3946
        %v7252 = vpop.f32.mrf.mxu0
        %v7253 = vadd.f32 %v6849, %v7252
        %7254 = vmatmul.f32.gmra.mxu0 %v3949
        %v7255 = vpop.f32.mrf.mxu0
        %v7256 = vadd.f32 %v6852, %v7255
        %7257 = vmatmul.f32.gmra.mxu0 %v3952
        %v7258 = vpop.f32.mrf.mxu0
        %v7259 = vadd.f32 %v6855, %v7258
        %7260 = vmatmul.f32.gmra.mxu0 %v3955
        %v7261 = vpop.f32.mrf.mxu0
        %v7262 = vadd.f32 %v6858, %v7261
        %7263 = vmatmul.f32.gmra.mxu0 %v3958
        %v7264 = vpop.f32.mrf.mxu0
        %v7265 = vadd.f32 %v6861, %v7264
        %7266 = vmatmul.f32.gmra.mxu0 %v3961
        %v7267 = vpop.f32.mrf.mxu0
        %v7268 = vadd.f32 %v6864, %v7267
        %7269 = vmatmul.f32.gmra.mxu0 %v3964
        %v7270 = vpop.f32.mrf.mxu0
        %v7271 = vadd.f32 %v6867, %v7270
        %7272 = vmatmul.f32.gmra.mxu0 %v3967
        %v7273 = vpop.f32.mrf.mxu0
        %v7274 = vadd.f32 %v6870, %v7273
        %7275 = vmatmul.f32.gmra.mxu0 %v3970
        %v7276 = vpop.f32.mrf.mxu0
        %v7277 = vadd.f32 %v6873, %v7276
        %7278 = vmatmul.f32.gmra.mxu0 %v3973
        %v7279 = vpop.f32.mrf.mxu0
        %v7280 = vadd.f32 %v6876, %v7279
        %7281 = vmatmul.f32.gmra.mxu0 %v3976
        %v7282 = vpop.f32.mrf.mxu0
        %v7283 = vadd.f32 %v6879, %v7282
        %7284 = vmatmul.f32.gmra.mxu0 %v3979
        %v7285 = vpop.f32.mrf.mxu0
        %v7286 = vadd.f32 %v6882, %v7285
        %7287 = vmatmul.f32.gmra.mxu0 %v3982
        %v7288 = vpop.f32.mrf.mxu0
        %v7289 = vadd.f32 %v6885, %v7288
        %7290 = vmatmul.f32.gmra.mxu0 %v3985
        %v7291 = vpop.f32.mrf.mxu0
        %v7292 = vadd.f32 %v6888, %v7291
        %7293 = vmatmul.f32.gmra.mxu0 %v3988
        %v7294 = vpop.f32.mrf.mxu0
        %v7295 = vadd.f32 %v6891, %v7294
        %7296 = vmatmul.f32.gmra.mxu0 %v3991
        %v7297 = vpop.f32.mrf.mxu0
        %v7298 = vadd.f32 %v6894, %v7297
        %7299 = vmatmul.f32.gmra.mxu0 %v3994
        %v7300 = vpop.f32.mrf.mxu0
        %v7301 = vadd.f32 %v6897, %v7300
        %7302 = vmatmul.f32.gmra.mxu0 %v3997
        %v7303 = vpop.f32.mrf.mxu0
        %v7304 = vadd.f32 %v6900, %v7303
        %7305 = vmatmul.f32.gmra.mxu0 %v4000
        %v7306 = vpop.f32.mrf.mxu0
        %v7307 = vadd.f32 %v6903, %v7306
        %7308 = vmatmul.f32.gmra.mxu0 %v4003
        %v7309 = vpop.f32.mrf.mxu0
        %v7310 = vadd.f32 %v6906, %v7309
        %7311 = vmatmul.f32.gmra.mxu0 %v4006
        %v7312 = vpop.f32.mrf.mxu0
        %v7313 = vadd.f32 %v6909, %v7312
        %7314 = vmatmul.f32.gmra.mxu0 %v4009
        %v7315 = vpop.f32.mrf.mxu0
        %v7316 = vadd.f32 %v6912, %v7315
        %7317 = vmatmul.f32.gmra.mxu0 %v4012
        %v7318 = vpop.f32.mrf.mxu0
        %v7319 = vadd.f32 %v6915, %v7318
        %7320 = vmatmul.f32.gmra.mxu0 %v4015
        %v7321 = vpop.f32.mrf.mxu0
        %v7322 = vadd.f32 %v6918, %v7321
        %7323 = vmatmul.f32.gmra.mxu0 %v4018
        %v7324 = vpop.f32.mrf.mxu0
        %v7325 = vadd.f32 %v6921, %v7324
        %7326 = vmatmul.f32.gmra.mxu0 %v4021
        %v7327 = vpop.f32.mrf.mxu0
        %v7328 = vadd.f32 %v6924, %v7327
        %7329 = vmatmul.f32.gmra.mxu0 %v4024
        %v7330 = vpop.f32.mrf.mxu0
        %v7331 = vadd.f32 %v6927, %v7330
        %7332 = vmatmul.f32.gmra.mxu0 %v4027
        %v7333 = vpop.f32.mrf.mxu0
        %v7334 = vadd.f32 %v6930, %v7333
        %7335 = vmatmul.f32.gmra.mxu0 %v4030
        %v7336 = vpop.f32.mrf.mxu0
        %v7337 = vadd.f32 %v6933, %v7336
        %7338 = vmatmul.f32.gmra.mxu0 %v4033
        %v7339 = vpop.f32.mrf.mxu0
        %v7340 = vadd.f32 %v6936, %v7339
        %7341 = vmatmul.f32.gmra.mxu0 %v4036
        %v7342 = vpop.f32.mrf.mxu0
        %v7343 = vadd.f32 %v6939, %v7342
        %7344 = vmatmul.f32.gmra.mxu0 %v4039
        %v7345 = vpop.f32.mrf.mxu0
        %v7346 = vadd.f32 %v6942, %v7345
        %7347 = vmatmul.f32.gmra.mxu0 %v4042
        %v7348 = vpop.f32.mrf.mxu0
        %v7349 = vadd.f32 %v6945, %v7348
        %7350 = vmatmul.f32.gmra.mxu0 %v4045
        %v7351 = vpop.f32.mrf.mxu0
        %v7352 = vadd.f32 %v6948, %v7351
        %7353 = vmatmul.f32.gmra.mxu0 %v4048
        %v7354 = vpop.f32.mrf.mxu0
        %v7355 = vadd.f32 %v6951, %v7354
        %7356 = vmatmul.f32.gmra.mxu0 %v4051
        %v7357 = vpop.f32.mrf.mxu0
        %v7358 = vadd.f32 %v6954, %v7357
        %7359 = vmatmul.f32.gmra.mxu0 %v4054
        %v7360 = vpop.f32.mrf.mxu0
        %v7361 = vadd.f32 %v6957, %v7360
        %7362 = vmatmul.f32.gmra.mxu0 %v4057
        %v7363 = vpop.f32.mrf.mxu0
        %v7364 = vadd.f32 %v6960, %v7363
        %7365 = vmatmul.f32.gmra.mxu0 %v4060
        %v7366 = vpop.f32.mrf.mxu0
        %v7367 = vadd.f32 %v6963, %v7366
        %7368 = vmatmul.f32.gmra.mxu0 %v4063
        %v7369 = vpop.f32.mrf.mxu0
        %v7370 = vadd.f32 %v6966, %v7369
        %7371 = vmatmul.f32.gmra.mxu0 %v4066
        %v7372 = vpop.f32.mrf.mxu0
        %v7373 = vadd.f32 %v6969, %v7372
        %7374 = vmatmul.f32.gmra.mxu0 %v4069
        %v7375 = vpop.f32.mrf.mxu0
        %v7376 = vadd.f32 %v6972, %v7375
        %7377 = vmatmul.f32.gmra.mxu0 %v4072
        %v7378 = vpop.f32.mrf.mxu0
        %v7379 = vadd.f32 %v6975, %v7378
        %7380 = vmatmul.f32.gmra.mxu0 %v4075
        %v7381 = vpop.f32.mrf.mxu0
        %v7382 = vadd.f32 %v6978, %v7381
        %7383 = vmatmul.f32.gmra.mxu0 %v4078
        %v7384 = vpop.f32.mrf.mxu0
        %v7385 = vadd.f32 %v6981, %v7384
        %7386 = vmatmul.f32.gmra.mxu0 %v4081
        %v7387 = vpop.f32.mrf.mxu0
        %v7388 = vadd.f32 %v6984, %v7387
        %7389 = vmatmul.f32.gmra.mxu0 %v4084
        %v7390 = vpop.f32.mrf.mxu0
        %v7391 = vadd.f32 %v6987, %v7390
        %7392 = vmatmul.f32.gmra.mxu0 %v4087
        %v7393 = vpop.f32.mrf.mxu0
        %v7394 = vadd.f32 %v6990, %v7393
        %7395 = vmatmul.f32.gmra.mxu0 %v4090
        %v7396 = vpop.f32.mrf.mxu0
        %v7397 = vadd.f32 %v6993, %v7396
        %7398 = vmatmul.f32.gmra.mxu0 %v4093
        %v7399 = vpop.f32.mrf.mxu0
        %v7400 = vadd.f32 %v6996, %v7399
        %7401 = vmatmul.f32.gmra.mxu0 %v4096
        %v7402 = vpop.f32.mrf.mxu0
        %v7403 = vadd.f32 %v6999, %v7402
        %7404 = vmatmul.f32.gmra.mxu0 %v4099
        %v7405 = vpop.f32.mrf.mxu0
        %v7406 = vadd.f32 %v7002, %v7405
        %7407 = vmatmul.f32.gmra.mxu0 %v4102
        %v7408 = vpop.f32.mrf.mxu0
        %v7409 = vadd.f32 %v7005, %v7408
        %7410 = vmatmul.f32.gmra.mxu0 %v4105
        %v7411 = vpop.f32.mrf.mxu0
        %v7412 = vadd.f32 %v7008, %v7411
        %7413 = vmatmul.f32.gmra.mxu0 %v4108
        %v7414 = vpop.f32.mrf.mxu0
        %v7415 = vadd.f32 %v7011, %v7414
        %7416 = vmatmul.f32.gmra.mxu0 %v4111
        %v7417 = vpop.f32.mrf.mxu0
        %v7418 = vadd.f32 %v7014, %v7417
        %7419 = vmatmul.f32.gmra.mxu0 %v4114
        %v7420 = vpop.f32.mrf.mxu0
        %v7421 = vadd.f32 %v7017, %v7420
        %7422 = vmatmul.f32.gmra.mxu0 %v4117
        %v7423 = vpop.f32.mrf.mxu0
        %v7424 = vadd.f32 %v7020, %v7423
        %7425 = vmatmul.f32.gmra.mxu0 %v4120
        %v7426 = vpop.f32.mrf.mxu0
        %v7427 = vadd.f32 %v7023, %v7426
        %7428 = vmatmul.f32.gmra.mxu0 %v4123
        %v7429 = vpop.f32.mrf.mxu0
        %v7430 = vadd.f32 %v7026, %v7429
        %7431 = vmatmul.f32.gmra.mxu0 %v4126
        %v7432 = vpop.f32.mrf.mxu0
        %v7433 = vadd.f32 %v7029, %v7432
        %7434 = vmatmul.f32.gmra.mxu0 %v4129
        %v7435 = vpop.f32.mrf.mxu0
        %v7436 = vadd.f32 %v7032, %v7435
        %7437 = vmatmul.f32.gmra.mxu0 %v4132
        %v7438 = vpop.f32.mrf.mxu0
        %v7439 = vadd.f32 %v7035, %v7438
        %7440 = vmatmul.f32.gmra.mxu0 %v4135
        %v7441 = vpop.f32.mrf.mxu0
        %v7442 = vadd.f32 %v7038, %v7441
        %7443 = vmatmul.f32.gmra.mxu0 %v4138
        %v7444 = vpop.f32.mrf.mxu0
        %v7445 = vadd.f32 %v7041, %v7444
        %7446 = vmatmul.f32.gmra.mxu0 %v4141
        %v7447 = vpop.f32.mrf.mxu0
        %v7448 = vadd.f32 %v7044, %v7447
        %7449 = vmatmul.f32.gmra.mxu0 %v4144
        %v7450 = vpop.f32.mrf.mxu0
        %v7451 = vadd.f32 %v7047, %v7450
        %7452 = vmatmul.f32.gmra.mxu0 %v4147
        %v7453 = vpop.f32.mrf.mxu0
        %v7454 = vadd.f32 %v7050, %v7453
        %7455 = vmatmul.f32.gmra.mxu0 %v4150
        %v7456 = vpop.f32.mrf.mxu0
        %v7457 = vadd.f32 %v7053, %v7456
        %7458 = vmatmul.f32.gmra.mxu0 %v4153
        %v7459 = vpop.f32.mrf.mxu0
        %v7460 = vadd.f32 %v7056, %v7459
        %7461 = vmatmul.f32.gmra.mxu0 %v4156
        %v7462 = vpop.f32.mrf.mxu0
        %v7463 = vadd.f32 %v7059, %v7462
        %7464 = vmatmul.f32.gmra.mxu0 %v4159
        %v7465 = vpop.f32.mrf.mxu0
        %v7466 = vadd.f32 %v7062, %v7465
        %7467 = vmatmul.f32.gmra.mxu0 %v4162
        %v7468 = vpop.f32.mrf.mxu0
        %v7469 = vadd.f32 %v7065, %v7468
        %7470 = vmatmul.f32.gmra.mxu0 %v4165
        %v7471 = vpop.f32.mrf.mxu0
        %v7472 = vadd.f32 %v7068, %v7471
        %7473 = vdwg.mxu0
        %s7474 = scalar_lea.vmem %s7, 64
        %v7475 = vld [vmem:[%s7474] sm:$0xff]
        %v7476 = vld [vmem:[%s7474 + $0x8] sm:$0xff]
        %v7477 = vld [vmem:[%s7474 + $0x10] sm:$0xff]
        %v7478 = vld [vmem:[%s7474 + $0x18] sm:$0x3f]
        %v7480 = vsel %vm4167, %v7478, 0
        %7482 = vmatpush.msra.mxu0 0.0
        %7483 = vmatpush.msra.mxu0 0.0
        %7484 = vmatpush.msra.mxu0 0.0
        %7485 = vmatpush.msra.mxu0 0.0
        %7486 = vmatpush.msra.mxu0 0.0
        %7487 = vmatpush.msra.mxu0 0.0
        %7488 = vmatpush.msra.mxu0 0.0
        %7489 = vmatpush.msra.mxu0 0.0
        %7490 = vmatpush.msra.mxu0 0.0
        %7491 = vmatpush.msra.mxu0 0.0
        %7492 = vmatpush.msra.mxu0 0.0
        %7493 = vmatpush.msra.mxu0 0.0
        %7494 = vmatpush.msra.mxu0 %v7480
        %7495 = vmatpush.msra.mxu0 %v7477
        %7496 = vmatpush.msra.mxu0 %v7476
        %7497 = vmatpush.msra.mxu0 %v7475
        %7498 = vmatmul.f32.gmra.mxu0 %v3880
        %v7499 = vpop.f32.mrf.mxu0
        %v7500 = vadd.f32 0.0, %v7499
        %7501 = vmatmul.f32.gmra.mxu0 %v3883
        %v7502 = vpop.f32.mrf.mxu0
        %v7503 = vadd.f32 0.0, %v7502
        %7504 = vmatmul.f32.gmra.mxu0 %v3886
        %v7505 = vpop.f32.mrf.mxu0
        %v7506 = vadd.f32 0.0, %v7505
        %7507 = vmatmul.f32.gmra.mxu0 %v3889
        %v7508 = vpop.f32.mrf.mxu0
        %v7509 = vadd.f32 0.0, %v7508
        %7510 = vmatmul.f32.gmra.mxu0 %v3892
        %v7511 = vpop.f32.mrf.mxu0
        %v7512 = vadd.f32 0.0, %v7511
        %7513 = vmatmul.f32.gmra.mxu0 %v3895
        %v7514 = vpop.f32.mrf.mxu0
        %v7515 = vadd.f32 0.0, %v7514
        %7516 = vmatmul.f32.gmra.mxu0 %v3898
        %v7517 = vpop.f32.mrf.mxu0
        %v7518 = vadd.f32 0.0, %v7517
        %7519 = vmatmul.f32.gmra.mxu0 %v3901
        %v7520 = vpop.f32.mrf.mxu0
        %v7521 = vadd.f32 0.0, %v7520
        %7522 = vmatmul.f32.gmra.mxu0 %v3904
        %v7523 = vpop.f32.mrf.mxu0
        %v7524 = vadd.f32 0.0, %v7523
        %7525 = vmatmul.f32.gmra.mxu0 %v3907
        %v7526 = vpop.f32.mrf.mxu0
        %v7527 = vadd.f32 0.0, %v7526
        %7528 = vmatmul.f32.gmra.mxu0 %v3910
        %v7529 = vpop.f32.mrf.mxu0
        %v7530 = vadd.f32 0.0, %v7529
        %7531 = vmatmul.f32.gmra.mxu0 %v3913
        %v7532 = vpop.f32.mrf.mxu0
        %v7533 = vadd.f32 0.0, %v7532
        %7534 = vmatmul.f32.gmra.mxu0 %v3916
        %v7535 = vpop.f32.mrf.mxu0
        %v7536 = vadd.f32 0.0, %v7535
        %7537 = vmatmul.f32.gmra.mxu0 %v3919
        %v7538 = vpop.f32.mrf.mxu0
        %v7539 = vadd.f32 0.0, %v7538
        %7540 = vmatmul.f32.gmra.mxu0 %v3922
        %v7541 = vpop.f32.mrf.mxu0
        %v7542 = vadd.f32 0.0, %v7541
        %7543 = vmatmul.f32.gmra.mxu0 %v3925
        %v7544 = vpop.f32.mrf.mxu0
        %v7545 = vadd.f32 0.0, %v7544
        %7546 = vmatmul.f32.gmra.mxu0 %v3928
        %v7547 = vpop.f32.mrf.mxu0
        %v7548 = vadd.f32 0.0, %v7547
        %7549 = vmatmul.f32.gmra.mxu0 %v3931
        %v7550 = vpop.f32.mrf.mxu0
        %v7551 = vadd.f32 0.0, %v7550
        %7552 = vmatmul.f32.gmra.mxu0 %v3934
        %v7553 = vpop.f32.mrf.mxu0
        %v7554 = vadd.f32 0.0, %v7553
        %7555 = vmatmul.f32.gmra.mxu0 %v3937
        %v7556 = vpop.f32.mrf.mxu0
        %v7557 = vadd.f32 0.0, %v7556
        %7558 = vmatmul.f32.gmra.mxu0 %v3940
        %v7559 = vpop.f32.mrf.mxu0
        %v7560 = vadd.f32 0.0, %v7559
        %7561 = vmatmul.f32.gmra.mxu0 %v3943
        %v7562 = vpop.f32.mrf.mxu0
        %v7563 = vadd.f32 0.0, %v7562
        %7564 = vmatmul.f32.gmra.mxu0 %v3946
        %v7565 = vpop.f32.mrf.mxu0
        %v7566 = vadd.f32 0.0, %v7565
        %7567 = vmatmul.f32.gmra.mxu0 %v3949
        %v7568 = vpop.f32.mrf.mxu0
        %v7569 = vadd.f32 0.0, %v7568
        %7570 = vmatmul.f32.gmra.mxu0 %v3952
        %v7571 = vpop.f32.mrf.mxu0
        %v7572 = vadd.f32 0.0, %v7571
        %7573 = vmatmul.f32.gmra.mxu0 %v3955
        %v7574 = vpop.f32.mrf.mxu0
        %v7575 = vadd.f32 0.0, %v7574
        %7576 = vmatmul.f32.gmra.mxu0 %v3958
        %v7577 = vpop.f32.mrf.mxu0
        %v7578 = vadd.f32 0.0, %v7577
        %7579 = vmatmul.f32.gmra.mxu0 %v3961
        %v7580 = vpop.f32.mrf.mxu0
        %v7581 = vadd.f32 0.0, %v7580
        %7582 = vmatmul.f32.gmra.mxu0 %v3964
        %v7583 = vpop.f32.mrf.mxu0
        %v7584 = vadd.f32 0.0, %v7583
        %7585 = vmatmul.f32.gmra.mxu0 %v3967
        %v7586 = vpop.f32.mrf.mxu0
        %v7587 = vadd.f32 0.0, %v7586
        %7588 = vmatmul.f32.gmra.mxu0 %v3970
        %v7589 = vpop.f32.mrf.mxu0
        %v7590 = vadd.f32 0.0, %v7589
        %7591 = vmatmul.f32.gmra.mxu0 %v3973
        %v7592 = vpop.f32.mrf.mxu0
        %v7593 = vadd.f32 0.0, %v7592
        %7594 = vmatmul.f32.gmra.mxu0 %v3976
        %v7595 = vpop.f32.mrf.mxu0
        %v7596 = vadd.f32 0.0, %v7595
        %7597 = vmatmul.f32.gmra.mxu0 %v3979
        %v7598 = vpop.f32.mrf.mxu0
        %v7599 = vadd.f32 0.0, %v7598
        %7600 = vmatmul.f32.gmra.mxu0 %v3982
        %v7601 = vpop.f32.mrf.mxu0
        %v7602 = vadd.f32 0.0, %v7601
        %7603 = vmatmul.f32.gmra.mxu0 %v3985
        %v7604 = vpop.f32.mrf.mxu0
        %v7605 = vadd.f32 0.0, %v7604
        %7606 = vmatmul.f32.gmra.mxu0 %v3988
        %v7607 = vpop.f32.mrf.mxu0
        %v7608 = vadd.f32 0.0, %v7607
        %7609 = vmatmul.f32.gmra.mxu0 %v3991
        %v7610 = vpop.f32.mrf.mxu0
        %v7611 = vadd.f32 0.0, %v7610
        %7612 = vmatmul.f32.gmra.mxu0 %v3994
        %v7613 = vpop.f32.mrf.mxu0
        %v7614 = vadd.f32 0.0, %v7613
        %7615 = vmatmul.f32.gmra.mxu0 %v3997
        %v7616 = vpop.f32.mrf.mxu0
        %v7617 = vadd.f32 0.0, %v7616
        %7618 = vmatmul.f32.gmra.mxu0 %v4000
        %v7619 = vpop.f32.mrf.mxu0
        %v7620 = vadd.f32 0.0, %v7619
        %7621 = vmatmul.f32.gmra.mxu0 %v4003
        %v7622 = vpop.f32.mrf.mxu0
        %v7623 = vadd.f32 0.0, %v7622
        %7624 = vmatmul.f32.gmra.mxu0 %v4006
        %v7625 = vpop.f32.mrf.mxu0
        %v7626 = vadd.f32 0.0, %v7625
        %7627 = vmatmul.f32.gmra.mxu0 %v4009
        %v7628 = vpop.f32.mrf.mxu0
        %v7629 = vadd.f32 0.0, %v7628
        %7630 = vmatmul.f32.gmra.mxu0 %v4012
        %v7631 = vpop.f32.mrf.mxu0
        %v7632 = vadd.f32 0.0, %v7631
        %7633 = vmatmul.f32.gmra.mxu0 %v4015
        %v7634 = vpop.f32.mrf.mxu0
        %v7635 = vadd.f32 0.0, %v7634
        %7636 = vmatmul.f32.gmra.mxu0 %v4018
        %v7637 = vpop.f32.mrf.mxu0
        %v7638 = vadd.f32 0.0, %v7637
        %7639 = vmatmul.f32.gmra.mxu0 %v4021
        %v7640 = vpop.f32.mrf.mxu0
        %v7641 = vadd.f32 0.0, %v7640
        %7642 = vmatmul.f32.gmra.mxu0 %v4024
        %v7643 = vpop.f32.mrf.mxu0
        %v7644 = vadd.f32 0.0, %v7643
        %7645 = vmatmul.f32.gmra.mxu0 %v4027
        %v7646 = vpop.f32.mrf.mxu0
        %v7647 = vadd.f32 0.0, %v7646
        %7648 = vmatmul.f32.gmra.mxu0 %v4030
        %v7649 = vpop.f32.mrf.mxu0
        %v7650 = vadd.f32 0.0, %v7649
        %7651 = vmatmul.f32.gmra.mxu0 %v4033
        %v7652 = vpop.f32.mrf.mxu0
        %v7653 = vadd.f32 0.0, %v7652
        %7654 = vmatmul.f32.gmra.mxu0 %v4036
        %v7655 = vpop.f32.mrf.mxu0
        %v7656 = vadd.f32 0.0, %v7655
        %7657 = vmatmul.f32.gmra.mxu0 %v4039
        %v7658 = vpop.f32.mrf.mxu0
        %v7659 = vadd.f32 0.0, %v7658
        %7660 = vmatmul.f32.gmra.mxu0 %v4042
        %v7661 = vpop.f32.mrf.mxu0
        %v7662 = vadd.f32 0.0, %v7661
        %7663 = vmatmul.f32.gmra.mxu0 %v4045
        %v7664 = vpop.f32.mrf.mxu0
        %v7665 = vadd.f32 0.0, %v7664
        %7666 = vmatmul.f32.gmra.mxu0 %v4048
        %v7667 = vpop.f32.mrf.mxu0
        %v7668 = vadd.f32 0.0, %v7667
        %7669 = vmatmul.f32.gmra.mxu0 %v4051
        %v7670 = vpop.f32.mrf.mxu0
        %v7671 = vadd.f32 0.0, %v7670
        %7672 = vmatmul.f32.gmra.mxu0 %v4054
        %v7673 = vpop.f32.mrf.mxu0
        %v7674 = vadd.f32 0.0, %v7673
        %7675 = vmatmul.f32.gmra.mxu0 %v4057
        %v7676 = vpop.f32.mrf.mxu0
        %v7677 = vadd.f32 0.0, %v7676
        %7678 = vmatmul.f32.gmra.mxu0 %v4060
        %v7679 = vpop.f32.mrf.mxu0
        %v7680 = vadd.f32 0.0, %v7679
        %7681 = vmatmul.f32.gmra.mxu0 %v4063
        %v7682 = vpop.f32.mrf.mxu0
        %v7683 = vadd.f32 0.0, %v7682
        %7684 = vmatmul.f32.gmra.mxu0 %v4066
        %v7685 = vpop.f32.mrf.mxu0
        %v7686 = vadd.f32 0.0, %v7685
        %7687 = vmatmul.f32.gmra.mxu0 %v4069
        %v7688 = vpop.f32.mrf.mxu0
        %v7689 = vadd.f32 0.0, %v7688
        %7690 = vmatmul.f32.gmra.mxu0 %v4072
        %v7691 = vpop.f32.mrf.mxu0
        %v7692 = vadd.f32 0.0, %v7691
        %7693 = vmatmul.f32.gmra.mxu0 %v4075
        %v7694 = vpop.f32.mrf.mxu0
        %v7695 = vadd.f32 0.0, %v7694
        %7696 = vmatmul.f32.gmra.mxu0 %v4078
        %v7697 = vpop.f32.mrf.mxu0
        %v7698 = vadd.f32 0.0, %v7697
        %7699 = vmatmul.f32.gmra.mxu0 %v4081
        %v7700 = vpop.f32.mrf.mxu0
        %v7701 = vadd.f32 0.0, %v7700
        %7702 = vmatmul.f32.gmra.mxu0 %v4084
        %v7703 = vpop.f32.mrf.mxu0
        %v7704 = vadd.f32 0.0, %v7703
        %7705 = vmatmul.f32.gmra.mxu0 %v4087
        %v7706 = vpop.f32.mrf.mxu0
        %v7707 = vadd.f32 0.0, %v7706
        %7708 = vmatmul.f32.gmra.mxu0 %v4090
        %v7709 = vpop.f32.mrf.mxu0
        %v7710 = vadd.f32 0.0, %v7709
        %7711 = vmatmul.f32.gmra.mxu0 %v4093
        %v7712 = vpop.f32.mrf.mxu0
        %v7713 = vadd.f32 0.0, %v7712
        %7714 = vmatmul.f32.gmra.mxu0 %v4096
        %v7715 = vpop.f32.mrf.mxu0
        %v7716 = vadd.f32 0.0, %v7715
        %7717 = vmatmul.f32.gmra.mxu0 %v4099
        %v7718 = vpop.f32.mrf.mxu0
        %v7719 = vadd.f32 0.0, %v7718
        %7720 = vmatmul.f32.gmra.mxu0 %v4102
        %v7721 = vpop.f32.mrf.mxu0
        %v7722 = vadd.f32 0.0, %v7721
        %7723 = vmatmul.f32.gmra.mxu0 %v4105
        %v7724 = vpop.f32.mrf.mxu0
        %v7725 = vadd.f32 0.0, %v7724
        %7726 = vmatmul.f32.gmra.mxu0 %v4108
        %v7727 = vpop.f32.mrf.mxu0
        %v7728 = vadd.f32 0.0, %v7727
        %7729 = vmatmul.f32.gmra.mxu0 %v4111
        %v7730 = vpop.f32.mrf.mxu0
        %v7731 = vadd.f32 0.0, %v7730
        %7732 = vmatmul.f32.gmra.mxu0 %v4114
        %v7733 = vpop.f32.mrf.mxu0
        %v7734 = vadd.f32 0.0, %v7733
        %7735 = vmatmul.f32.gmra.mxu0 %v4117
        %v7736 = vpop.f32.mrf.mxu0
        %v7737 = vadd.f32 0.0, %v7736
        %7738 = vmatmul.f32.gmra.mxu0 %v4120
        %v7739 = vpop.f32.mrf.mxu0
        %v7740 = vadd.f32 0.0, %v7739
        %7741 = vmatmul.f32.gmra.mxu0 %v4123
        %v7742 = vpop.f32.mrf.mxu0
        %v7743 = vadd.f32 0.0, %v7742
        %7744 = vmatmul.f32.gmra.mxu0 %v4126
        %v7745 = vpop.f32.mrf.mxu0
        %v7746 = vadd.f32 0.0, %v7745
        %7747 = vmatmul.f32.gmra.mxu0 %v4129
        %v7748 = vpop.f32.mrf.mxu0
        %v7749 = vadd.f32 0.0, %v7748
        %7750 = vmatmul.f32.gmra.mxu0 %v4132
        %v7751 = vpop.f32.mrf.mxu0
        %v7752 = vadd.f32 0.0, %v7751
        %7753 = vmatmul.f32.gmra.mxu0 %v4135
        %v7754 = vpop.f32.mrf.mxu0
        %v7755 = vadd.f32 0.0, %v7754
        %7756 = vmatmul.f32.gmra.mxu0 %v4138
        %v7757 = vpop.f32.mrf.mxu0
        %v7758 = vadd.f32 0.0, %v7757
        %7759 = vmatmul.f32.gmra.mxu0 %v4141
        %v7760 = vpop.f32.mrf.mxu0
        %v7761 = vadd.f32 0.0, %v7760
        %7762 = vmatmul.f32.gmra.mxu0 %v4144
        %v7763 = vpop.f32.mrf.mxu0
        %v7764 = vadd.f32 0.0, %v7763
        %7765 = vmatmul.f32.gmra.mxu0 %v4147
        %v7766 = vpop.f32.mrf.mxu0
        %v7767 = vadd.f32 0.0, %v7766
        %7768 = vmatmul.f32.gmra.mxu0 %v4150
        %v7769 = vpop.f32.mrf.mxu0
        %v7770 = vadd.f32 0.0, %v7769
        %7771 = vmatmul.f32.gmra.mxu0 %v4153
        %v7772 = vpop.f32.mrf.mxu0
        %v7773 = vadd.f32 0.0, %v7772
        %7774 = vmatmul.f32.gmra.mxu0 %v4156
        %v7775 = vpop.f32.mrf.mxu0
        %v7776 = vadd.f32 0.0, %v7775
        %7777 = vmatmul.f32.gmra.mxu0 %v4159
        %v7778 = vpop.f32.mrf.mxu0
        %v7779 = vadd.f32 0.0, %v7778
        %7780 = vmatmul.f32.gmra.mxu0 %v4162
        %v7781 = vpop.f32.mrf.mxu0
        %v7782 = vadd.f32 0.0, %v7781
        %7783 = vmatmul.f32.gmra.mxu0 %v4165
        %v7784 = vpop.f32.mrf.mxu0
        %v7785 = vadd.f32 0.0, %v7784
        %7786 = vmatmul.f32.gmra.mxu0 %v5625
        %v7787 = vpop.f32.mrf.mxu0
        %v7788 = vadd.f32 0.0, %v7787
        %7789 = vmatmul.f32.gmra.mxu0 %v5628
        %v7790 = vpop.f32.mrf.mxu0
        %v7791 = vadd.f32 0.0, %v7790
        %7792 = vmatmul.f32.gmra.mxu0 %v5631
        %v7793 = vpop.f32.mrf.mxu0
        %v7794 = vadd.f32 0.0, %v7793
        %7795 = vmatmul.f32.gmra.mxu0 %v5634
        %v7796 = vpop.f32.mrf.mxu0
        %v7797 = vadd.f32 0.0, %v7796
        %7798 = vmatmul.f32.gmra.mxu0 %v5637
        %v7799 = vpop.f32.mrf.mxu0
        %v7800 = vadd.f32 0.0, %v7799
        %7801 = vmatmul.f32.gmra.mxu0 %v5640
        %v7802 = vpop.f32.mrf.mxu0
        %v7803 = vadd.f32 0.0, %v7802
        %7804 = vmatmul.f32.gmra.mxu0 %v5643
        %v7805 = vpop.f32.mrf.mxu0
        %v7806 = vadd.f32 0.0, %v7805
        %7807 = vmatmul.f32.gmra.mxu0 %v5646
        %v7808 = vpop.f32.mrf.mxu0
        %v7809 = vadd.f32 0.0, %v7808
        %7810 = vmatmul.f32.gmra.mxu0 %v5649
        %v7811 = vpop.f32.mrf.mxu0
        %v7812 = vadd.f32 0.0, %v7811
        %7813 = vmatmul.f32.gmra.mxu0 %v5652
        %v7814 = vpop.f32.mrf.mxu0
        %v7815 = vadd.f32 0.0, %v7814
        %7816 = vmatmul.f32.gmra.mxu0 %v5655
        %v7817 = vpop.f32.mrf.mxu0
        %v7818 = vadd.f32 0.0, %v7817
        %7819 = vmatmul.f32.gmra.mxu0 %v5658
        %v7820 = vpop.f32.mrf.mxu0
        %v7821 = vadd.f32 0.0, %v7820
        %7822 = vmatmul.f32.gmra.mxu0 %v5661
        %v7823 = vpop.f32.mrf.mxu0
        %v7824 = vadd.f32 0.0, %v7823
        %7825 = vmatmul.f32.gmra.mxu0 %v5664
        %v7826 = vpop.f32.mrf.mxu0
        %v7827 = vadd.f32 0.0, %v7826
        %7828 = vmatmul.f32.gmra.mxu0 %v5667
        %v7829 = vpop.f32.mrf.mxu0
        %v7830 = vadd.f32 0.0, %v7829
        %7831 = vmatmul.f32.gmra.mxu0 %v5670
        %v7832 = vpop.f32.mrf.mxu0
        %v7833 = vadd.f32 0.0, %v7832
        %7834 = vmatmul.f32.gmra.mxu0 %v5673
        %v7835 = vpop.f32.mrf.mxu0
        %v7836 = vadd.f32 0.0, %v7835
        %7837 = vmatmul.f32.gmra.mxu0 %v5676
        %v7838 = vpop.f32.mrf.mxu0
        %v7839 = vadd.f32 0.0, %v7838
        %7840 = vmatmul.f32.gmra.mxu0 %v5679
        %v7841 = vpop.f32.mrf.mxu0
        %v7842 = vadd.f32 0.0, %v7841
        %7843 = vmatmul.f32.gmra.mxu0 %v5682
        %v7844 = vpop.f32.mrf.mxu0
        %v7845 = vadd.f32 0.0, %v7844
        %7846 = vmatmul.f32.gmra.mxu0 %v5685
        %v7847 = vpop.f32.mrf.mxu0
        %v7848 = vadd.f32 0.0, %v7847
        %7849 = vmatmul.f32.gmra.mxu0 %v5688
        %v7850 = vpop.f32.mrf.mxu0
        %v7851 = vadd.f32 0.0, %v7850
        %7852 = vmatmul.f32.gmra.mxu0 %v5691
        %v7853 = vpop.f32.mrf.mxu0
        %v7854 = vadd.f32 0.0, %v7853
        %7855 = vmatmul.f32.gmra.mxu0 %v5694
        %v7856 = vpop.f32.mrf.mxu0
        %v7857 = vadd.f32 0.0, %v7856
        %7858 = vmatmul.f32.gmra.mxu0 %v5697
        %v7859 = vpop.f32.mrf.mxu0
        %v7860 = vadd.f32 0.0, %v7859
        %7861 = vmatmul.f32.gmra.mxu0 %v5700
        %v7862 = vpop.f32.mrf.mxu0
        %v7863 = vadd.f32 0.0, %v7862
        %7864 = vmatmul.f32.gmra.mxu0 %v5703
        %v7865 = vpop.f32.mrf.mxu0
        %v7866 = vadd.f32 0.0, %v7865
        %7867 = vmatmul.f32.gmra.mxu0 %v5706
        %v7868 = vpop.f32.mrf.mxu0
        %v7869 = vadd.f32 0.0, %v7868
        %7870 = vmatmul.f32.gmra.mxu0 %v5709
        %v7871 = vpop.f32.mrf.mxu0
        %v7872 = vadd.f32 0.0, %v7871
        %7873 = vmatmul.f32.gmra.mxu0 %v5712
        %v7874 = vpop.f32.mrf.mxu0
        %v7875 = vadd.f32 0.0, %v7874
        %7876 = vmatmul.f32.gmra.mxu0 %v5715
        %v7877 = vpop.f32.mrf.mxu0
        %v7878 = vadd.f32 0.0, %v7877
        %7879 = vmatmul.f32.gmra.mxu0 %v5718
        %v7880 = vpop.f32.mrf.mxu0
        %v7881 = vadd.f32 0.0, %v7880
        %7882 = vdwg.mxu0
        %v7883 = vadd.f32 %v7091, %v7500
        %v7884 = vadd.f32 %v7094, %v7503
        %v7885 = vadd.f32 %v7097, %v7506
        %v7886 = vadd.f32 %v7100, %v7509
        %v7887 = vadd.f32 %v7103, %v7512
        %v7888 = vadd.f32 %v7106, %v7515
        %v7889 = vadd.f32 %v7109, %v7518
        %v7890 = vadd.f32 %v7112, %v7521
        %v7891 = vadd.f32 %v7115, %v7524
        %v7892 = vadd.f32 %v7118, %v7527
        %v7893 = vadd.f32 %v7121, %v7530
        %v7894 = vadd.f32 %v7124, %v7533
        %v7895 = vadd.f32 %v7127, %v7536
        %v7896 = vadd.f32 %v7130, %v7539
        %v7897 = vadd.f32 %v7133, %v7542
        %v7898 = vadd.f32 %v7136, %v7545
        %v7899 = vadd.f32 %v7139, %v7548
        %v7900 = vadd.f32 %v7142, %v7551
        %v7901 = vadd.f32 %v7145, %v7554
        %v7902 = vadd.f32 %v7148, %v7557
        %v7903 = vadd.f32 %v7151, %v7560
        %v7904 = vadd.f32 %v7154, %v7563
        %v7905 = vadd.f32 %v7157, %v7566
        %v7906 = vadd.f32 %v7160, %v7569
        %v7907 = vadd.f32 %v7163, %v7572
        %v7908 = vadd.f32 %v7166, %v7575
        %v7909 = vadd.f32 %v7169, %v7578
        %v7910 = vadd.f32 %v7172, %v7581
        %v7911 = vadd.f32 %v7175, %v7584
        %v7912 = vadd.f32 %v7178, %v7587
        %v7913 = vadd.f32 %v7181, %v7590
        %v7914 = vadd.f32 %v7184, %v7593
        %v7915 = vadd.f32 %v7187, %v7596
        %v7916 = vadd.f32 %v7190, %v7599
        %v7917 = vadd.f32 %v7193, %v7602
        %v7918 = vadd.f32 %v7196, %v7605
        %v7919 = vadd.f32 %v7199, %v7608
        %v7920 = vadd.f32 %v7202, %v7611
        %v7921 = vadd.f32 %v7205, %v7614
        %v7922 = vadd.f32 %v7208, %v7617
        %v7923 = vadd.f32 %v7211, %v7620
        %v7924 = vadd.f32 %v7214, %v7623
        %v7925 = vadd.f32 %v7217, %v7626
        %v7926 = vadd.f32 %v7220, %v7629
        %v7927 = vadd.f32 %v7223, %v7632
        %v7928 = vadd.f32 %v7226, %v7635
        %v7929 = vadd.f32 %v7229, %v7638
        %v7930 = vadd.f32 %v7232, %v7641
        %v7931 = vadd.f32 %v7235, %v7644
        %v7932 = vadd.f32 %v7238, %v7647
        %v7933 = vadd.f32 %v7241, %v7650
        %v7934 = vadd.f32 %v7244, %v7653
        %v7935 = vadd.f32 %v7247, %v7656
        %v7936 = vadd.f32 %v7250, %v7659
        %v7937 = vadd.f32 %v7253, %v7662
        %v7938 = vadd.f32 %v7256, %v7665
        %v7939 = vadd.f32 %v7259, %v7668
        %v7940 = vadd.f32 %v7262, %v7671
        %v7941 = vadd.f32 %v7265, %v7674
        %v7942 = vadd.f32 %v7268, %v7677
        %v7943 = vadd.f32 %v7271, %v7680
        %v7944 = vadd.f32 %v7274, %v7683
        %v7945 = vadd.f32 %v7277, %v7686
        %v7946 = vadd.f32 %v7280, %v7689
        %v7947 = vadd.f32 %v7283, %v7692
        %v7948 = vadd.f32 %v7286, %v7695
        %v7949 = vadd.f32 %v7289, %v7698
        %v7950 = vadd.f32 %v7292, %v7701
        %v7951 = vadd.f32 %v7295, %v7704
        %v7952 = vadd.f32 %v7298, %v7707
        %v7953 = vadd.f32 %v7301, %v7710
        %v7954 = vadd.f32 %v7304, %v7713
        %v7955 = vadd.f32 %v7307, %v7716
        %v7956 = vadd.f32 %v7310, %v7719
        %v7957 = vadd.f32 %v7313, %v7722
        %v7958 = vadd.f32 %v7316, %v7725
        %v7959 = vadd.f32 %v7319, %v7728
        %v7960 = vadd.f32 %v7322, %v7731
        %v7961 = vadd.f32 %v7325, %v7734
        %v7962 = vadd.f32 %v7328, %v7737
        %v7963 = vadd.f32 %v7331, %v7740
        %v7964 = vadd.f32 %v7334, %v7743
        %v7965 = vadd.f32 %v7337, %v7746
        %v7966 = vadd.f32 %v7340, %v7749
        %v7967 = vadd.f32 %v7343, %v7752
        %v7968 = vadd.f32 %v7346, %v7755
        %v7969 = vadd.f32 %v7349, %v7758
        %v7970 = vadd.f32 %v7352, %v7761
        %v7971 = vadd.f32 %v7355, %v7764
        %v7972 = vadd.f32 %v7358, %v7767
        %v7973 = vadd.f32 %v7361, %v7770
        %v7974 = vadd.f32 %v7364, %v7773
        %v7975 = vadd.f32 %v7367, %v7776
        %v7976 = vadd.f32 %v7370, %v7779
        %v7977 = vadd.f32 %v7373, %v7782
        %v7978 = vadd.f32 %v7376, %v7785
        %v7979 = vadd.f32 %v7379, %v7788
        %v7980 = vadd.f32 %v7382, %v7791
        %v7981 = vadd.f32 %v7385, %v7794
        %v7982 = vadd.f32 %v7388, %v7797
        %v7983 = vadd.f32 %v7391, %v7800
        %v7984 = vadd.f32 %v7394, %v7803
        %v7985 = vadd.f32 %v7397, %v7806
        %v7986 = vadd.f32 %v7400, %v7809
        %v7987 = vadd.f32 %v7403, %v7812
        %v7988 = vadd.f32 %v7406, %v7815
        %v7989 = vadd.f32 %v7409, %v7818
        %v7990 = vadd.f32 %v7412, %v7821
        %v7991 = vadd.f32 %v7415, %v7824
        %v7992 = vadd.f32 %v7418, %v7827
        %v7993 = vadd.f32 %v7421, %v7830
        %v7994 = vadd.f32 %v7424, %v7833
        %v7995 = vadd.f32 %v7427, %v7836
        %v7996 = vadd.f32 %v7430, %v7839
        %v7997 = vadd.f32 %v7433, %v7842
        %v7998 = vadd.f32 %v7436, %v7845
        %v7999 = vadd.f32 %v7439, %v7848
        %v8000 = vadd.f32 %v7442, %v7851
        %v8001 = vadd.f32 %v7445, %v7854
        %v8002 = vadd.f32 %v7448, %v7857
        %v8003 = vadd.f32 %v7451, %v7860
        %v8004 = vadd.f32 %v7454, %v7863
        %v8005 = vadd.f32 %v7457, %v7866
        %v8006 = vadd.f32 %v7460, %v7869
        %v8007 = vadd.f32 %v7463, %v7872
        %v8008 = vadd.f32 %v7466, %v7875
        %v8009 = vadd.f32 %v7469, %v7878
        %v8010 = vadd.f32 %v7472, %v7881
        %v8011 = vld [vmem:[%s7] sm:$0xff]
        %v8012 = vld [vmem:[%s7 + $0x8] sm:$0xff]
        %v8013 = vld [vmem:[%s7 + $0x10] sm:$0xff]
        %v8014 = vld [vmem:[%s7 + $0x18] sm:$0x3f]
        %v8016 = vsel %vm3782, %v3679, 0
        %v8019 = vsel %vm3782, %v3682, 0
        %v8022 = vsel %vm3782, %v3685, 0
        %v8025 = vsel %vm3782, %v3688, 0
        %v8028 = vsel %vm3782, %v3691, 0
        %v8031 = vsel %vm3782, %v3694, 0
        %v8034 = vsel %vm3782, %v3697, 0
        %v8037 = vsel %vm3782, %v3700, 0
        %v8040 = vsel %vm3782, %v3703, 0
        %v8043 = vsel %vm3782, %v3706, 0
        %v8046 = vsel %vm3782, %v3709, 0
        %v8049 = vsel %vm3782, %v3712, 0
        %v8052 = vsel %vm3782, %v3715, 0
        %v8055 = vsel %vm3782, %v3718, 0
        %v8058 = vsel %vm3782, %v3721, 0
        %v8061 = vsel %vm3782, %v3724, 0
        %v8064 = vsel %vm3782, %v3727, 0
        %v8067 = vsel %vm3782, %v3730, 0
        %v8070 = vsel %vm3782, %v3733, 0
        %v8073 = vsel %vm3782, %v3736, 0
        %v8076 = vsel %vm3782, %v3739, 0
        %v8079 = vsel %vm3782, %v3742, 0
        %v8082 = vsel %vm3782, %v3745, 0
        %v8085 = vsel %vm3782, %v3748, 0
        %v8088 = vsel %vm3782, %v3751, 0
        %v8091 = vsel %vm3782, %v3754, 0
        %v8094 = vsel %vm3782, %v3757, 0
        %v8097 = vsel %vm3782, %v3760, 0
        %v8100 = vsel %vm3782, %v3763, 0
        %v8103 = vsel %vm3782, %v3766, 0
        %v8106 = vsel %vm3782, %v3769, 0
        %v8109 = vsel %vm3782, %v3772, 0
        %v8112 = vsel %vm4167, %v8014, 0
        %8114 = vmatpush.msra.mxu0 0.0
        %8115 = vmatpush.msra.mxu0 0.0
        %8116 = vmatpush.msra.mxu0 0.0
        %8117 = vmatpush.msra.mxu0 0.0
        %8118 = vmatpush.msra.mxu0 0.0
        %8119 = vmatpush.msra.mxu0 0.0
        %8120 = vmatpush.msra.mxu0 0.0
        %8121 = vmatpush.msra.mxu0 0.0
        %8122 = vmatpush.msra.mxu0 0.0
        %8123 = vmatpush.msra.mxu0 0.0
        %8124 = vmatpush.msra.mxu0 0.0
        %8125 = vmatpush.msra.mxu0 0.0
        %8126 = vmatpush.msra.mxu0 %v8112
        %8127 = vmatpush.msra.mxu0 %v8013
        %8128 = vmatpush.msra.mxu0 %v8012
        %8129 = vmatpush.msra.mxu0 %v8011
        %8130 = vmatmul.f32.gmra.mxu0 %v3904
        %v8131 = vpop.f32.mrf.mxu0
        %v8132 = vadd.f32 0.0, %v8131
        %8133 = vmatmul.f32.gmra.mxu0 %v3907
        %v8134 = vpop.f32.mrf.mxu0
        %v8135 = vadd.f32 0.0, %v8134
        %8136 = vmatmul.f32.gmra.mxu0 %v3910
        %v8137 = vpop.f32.mrf.mxu0
        %v8138 = vadd.f32 0.0, %v8137
        %8139 = vmatmul.f32.gmra.mxu0 %v3913
        %v8140 = vpop.f32.mrf.mxu0
        %v8141 = vadd.f32 0.0, %v8140
        %8142 = vmatmul.f32.gmra.mxu0 %v3916
        %v8143 = vpop.f32.mrf.mxu0
        %v8144 = vadd.f32 0.0, %v8143
        %8145 = vmatmul.f32.gmra.mxu0 %v3919
        %v8146 = vpop.f32.mrf.mxu0
        %v8147 = vadd.f32 0.0, %v8146
        %8148 = vmatmul.f32.gmra.mxu0 %v3922
        %v8149 = vpop.f32.mrf.mxu0
        %v8150 = vadd.f32 0.0, %v8149
        %8151 = vmatmul.f32.gmra.mxu0 %v3925
        %v8152 = vpop.f32.mrf.mxu0
        %v8153 = vadd.f32 0.0, %v8152
        %8154 = vmatmul.f32.gmra.mxu0 %v3928
        %v8155 = vpop.f32.mrf.mxu0
        %v8156 = vadd.f32 0.0, %v8155
        %8157 = vmatmul.f32.gmra.mxu0 %v3931
        %v8158 = vpop.f32.mrf.mxu0
        %v8159 = vadd.f32 0.0, %v8158
        %8160 = vmatmul.f32.gmra.mxu0 %v3934
        %v8161 = vpop.f32.mrf.mxu0
        %v8162 = vadd.f32 0.0, %v8161
        %8163 = vmatmul.f32.gmra.mxu0 %v3937
        %v8164 = vpop.f32.mrf.mxu0
        %v8165 = vadd.f32 0.0, %v8164
        %8166 = vmatmul.f32.gmra.mxu0 %v3940
        %v8167 = vpop.f32.mrf.mxu0
        %v8168 = vadd.f32 0.0, %v8167
        %8169 = vmatmul.f32.gmra.mxu0 %v3943
        %v8170 = vpop.f32.mrf.mxu0
        %v8171 = vadd.f32 0.0, %v8170
        %8172 = vmatmul.f32.gmra.mxu0 %v3946
        %v8173 = vpop.f32.mrf.mxu0
        %v8174 = vadd.f32 0.0, %v8173
        %8175 = vmatmul.f32.gmra.mxu0 %v3949
        %v8176 = vpop.f32.mrf.mxu0
        %v8177 = vadd.f32 0.0, %v8176
        %8178 = vmatmul.f32.gmra.mxu0 %v3952
        %v8179 = vpop.f32.mrf.mxu0
        %v8180 = vadd.f32 0.0, %v8179
        %8181 = vmatmul.f32.gmra.mxu0 %v3955
        %v8182 = vpop.f32.mrf.mxu0
        %v8183 = vadd.f32 0.0, %v8182
        %8184 = vmatmul.f32.gmra.mxu0 %v3958
        %v8185 = vpop.f32.mrf.mxu0
        %v8186 = vadd.f32 0.0, %v8185
        %8187 = vmatmul.f32.gmra.mxu0 %v3961
        %v8188 = vpop.f32.mrf.mxu0
        %v8189 = vadd.f32 0.0, %v8188
        %8190 = vmatmul.f32.gmra.mxu0 %v3964
        %v8191 = vpop.f32.mrf.mxu0
        %v8192 = vadd.f32 0.0, %v8191
        %8193 = vmatmul.f32.gmra.mxu0 %v3967
        %v8194 = vpop.f32.mrf.mxu0
        %v8195 = vadd.f32 0.0, %v8194
        %8196 = vmatmul.f32.gmra.mxu0 %v3970
        %v8197 = vpop.f32.mrf.mxu0
        %v8198 = vadd.f32 0.0, %v8197
        %8199 = vmatmul.f32.gmra.mxu0 %v3973
        %v8200 = vpop.f32.mrf.mxu0
        %v8201 = vadd.f32 0.0, %v8200
        %8202 = vmatmul.f32.gmra.mxu0 %v4607
        %v8203 = vpop.f32.mrf.mxu0
        %v8204 = vadd.f32 0.0, %v8203
        %8205 = vmatmul.f32.gmra.mxu0 %v4610
        %v8206 = vpop.f32.mrf.mxu0
        %v8207 = vadd.f32 0.0, %v8206
        %8208 = vmatmul.f32.gmra.mxu0 %v4613
        %v8209 = vpop.f32.mrf.mxu0
        %v8210 = vadd.f32 0.0, %v8209
        %8211 = vmatmul.f32.gmra.mxu0 %v4616
        %v8212 = vpop.f32.mrf.mxu0
        %v8213 = vadd.f32 0.0, %v8212
        %8214 = vmatmul.f32.gmra.mxu0 %v4619
        %v8215 = vpop.f32.mrf.mxu0
        %v8216 = vadd.f32 0.0, %v8215
        %8217 = vmatmul.f32.gmra.mxu0 %v4622
        %v8218 = vpop.f32.mrf.mxu0
        %v8219 = vadd.f32 0.0, %v8218
        %8220 = vmatmul.f32.gmra.mxu0 %v4625
        %v8221 = vpop.f32.mrf.mxu0
        %v8222 = vadd.f32 0.0, %v8221
        %8223 = vmatmul.f32.gmra.mxu0 %v4628
        %v8224 = vpop.f32.mrf.mxu0
        %v8225 = vadd.f32 0.0, %v8224
        %8226 = vmatmul.f32.gmra.mxu0 %v4000
        %v8227 = vpop.f32.mrf.mxu0
        %v8228 = vadd.f32 0.0, %v8227
        %8229 = vmatmul.f32.gmra.mxu0 %v4003
        %v8230 = vpop.f32.mrf.mxu0
        %v8231 = vadd.f32 0.0, %v8230
        %8232 = vmatmul.f32.gmra.mxu0 %v4006
        %v8233 = vpop.f32.mrf.mxu0
        %v8234 = vadd.f32 0.0, %v8233
        %8235 = vmatmul.f32.gmra.mxu0 %v4009
        %v8236 = vpop.f32.mrf.mxu0
        %v8237 = vadd.f32 0.0, %v8236
        %8238 = vmatmul.f32.gmra.mxu0 %v4012
        %v8239 = vpop.f32.mrf.mxu0
        %v8240 = vadd.f32 0.0, %v8239
        %8241 = vmatmul.f32.gmra.mxu0 %v4015
        %v8242 = vpop.f32.mrf.mxu0
        %v8243 = vadd.f32 0.0, %v8242
        %8244 = vmatmul.f32.gmra.mxu0 %v4018
        %v8245 = vpop.f32.mrf.mxu0
        %v8246 = vadd.f32 0.0, %v8245
        %8247 = vmatmul.f32.gmra.mxu0 %v4021
        %v8248 = vpop.f32.mrf.mxu0
        %v8249 = vadd.f32 0.0, %v8248
        %8250 = vmatmul.f32.gmra.mxu0 %v4024
        %v8251 = vpop.f32.mrf.mxu0
        %v8252 = vadd.f32 0.0, %v8251
        %8253 = vmatmul.f32.gmra.mxu0 %v4027
        %v8254 = vpop.f32.mrf.mxu0
        %v8255 = vadd.f32 0.0, %v8254
        %8256 = vmatmul.f32.gmra.mxu0 %v4030
        %v8257 = vpop.f32.mrf.mxu0
        %v8258 = vadd.f32 0.0, %v8257
        %8259 = vmatmul.f32.gmra.mxu0 %v4033
        %v8260 = vpop.f32.mrf.mxu0
        %v8261 = vadd.f32 0.0, %v8260
        %8262 = vmatmul.f32.gmra.mxu0 %v4036
        %v8263 = vpop.f32.mrf.mxu0
        %v8264 = vadd.f32 0.0, %v8263
        %8265 = vmatmul.f32.gmra.mxu0 %v4039
        %v8266 = vpop.f32.mrf.mxu0
        %v8267 = vadd.f32 0.0, %v8266
        %8268 = vmatmul.f32.gmra.mxu0 %v4042
        %v8269 = vpop.f32.mrf.mxu0
        %v8270 = vadd.f32 0.0, %v8269
        %8271 = vmatmul.f32.gmra.mxu0 %v4045
        %v8272 = vpop.f32.mrf.mxu0
        %v8273 = vadd.f32 0.0, %v8272
        %8274 = vmatmul.f32.gmra.mxu0 %v4048
        %v8275 = vpop.f32.mrf.mxu0
        %v8276 = vadd.f32 0.0, %v8275
        %8277 = vmatmul.f32.gmra.mxu0 %v4051
        %v8278 = vpop.f32.mrf.mxu0
        %v8279 = vadd.f32 0.0, %v8278
        %8280 = vmatmul.f32.gmra.mxu0 %v4054
        %v8281 = vpop.f32.mrf.mxu0
        %v8282 = vadd.f32 0.0, %v8281
        %8283 = vmatmul.f32.gmra.mxu0 %v4057
        %v8284 = vpop.f32.mrf.mxu0
        %v8285 = vadd.f32 0.0, %v8284
        %8286 = vmatmul.f32.gmra.mxu0 %v4060
        %v8287 = vpop.f32.mrf.mxu0
        %v8288 = vadd.f32 0.0, %v8287
        %8289 = vmatmul.f32.gmra.mxu0 %v4063
        %v8290 = vpop.f32.mrf.mxu0
        %v8291 = vadd.f32 0.0, %v8290
        %8292 = vmatmul.f32.gmra.mxu0 %v4066
        %v8293 = vpop.f32.mrf.mxu0
        %v8294 = vadd.f32 0.0, %v8293
        %8295 = vmatmul.f32.gmra.mxu0 %v4069
        %v8296 = vpop.f32.mrf.mxu0
        %v8297 = vadd.f32 0.0, %v8296
        %8298 = vmatmul.f32.gmra.mxu0 %v4631
        %v8299 = vpop.f32.mrf.mxu0
        %v8300 = vadd.f32 0.0, %v8299
        %8301 = vmatmul.f32.gmra.mxu0 %v4634
        %v8302 = vpop.f32.mrf.mxu0
        %v8303 = vadd.f32 0.0, %v8302
        %8304 = vmatmul.f32.gmra.mxu0 %v4637
        %v8305 = vpop.f32.mrf.mxu0
        %v8306 = vadd.f32 0.0, %v8305
        %8307 = vmatmul.f32.gmra.mxu0 %v4640
        %v8308 = vpop.f32.mrf.mxu0
        %v8309 = vadd.f32 0.0, %v8308
        %8310 = vmatmul.f32.gmra.mxu0 %v4643
        %v8311 = vpop.f32.mrf.mxu0
        %v8312 = vadd.f32 0.0, %v8311
        %8313 = vmatmul.f32.gmra.mxu0 %v4646
        %v8314 = vpop.f32.mrf.mxu0
        %v8315 = vadd.f32 0.0, %v8314
        %8316 = vmatmul.f32.gmra.mxu0 %v4649
        %v8317 = vpop.f32.mrf.mxu0
        %v8318 = vadd.f32 0.0, %v8317
        %8319 = vmatmul.f32.gmra.mxu0 %v4652
        %v8320 = vpop.f32.mrf.mxu0
        %v8321 = vadd.f32 0.0, %v8320
        %8322 = vmatmul.f32.gmra.mxu0 %v4096
        %v8323 = vpop.f32.mrf.mxu0
        %v8324 = vadd.f32 0.0, %v8323
        %8325 = vmatmul.f32.gmra.mxu0 %v4099
        %v8326 = vpop.f32.mrf.mxu0
        %v8327 = vadd.f32 0.0, %v8326
        %8328 = vmatmul.f32.gmra.mxu0 %v4102
        %v8329 = vpop.f32.mrf.mxu0
        %v8330 = vadd.f32 0.0, %v8329
        %8331 = vmatmul.f32.gmra.mxu0 %v4105
        %v8332 = vpop.f32.mrf.mxu0
        %v8333 = vadd.f32 0.0, %v8332
        %8334 = vmatmul.f32.gmra.mxu0 %v4108
        %v8335 = vpop.f32.mrf.mxu0
        %v8336 = vadd.f32 0.0, %v8335
        %8337 = vmatmul.f32.gmra.mxu0 %v4111
        %v8338 = vpop.f32.mrf.mxu0
        %v8339 = vadd.f32 0.0, %v8338
        %8340 = vmatmul.f32.gmra.mxu0 %v4114
        %v8341 = vpop.f32.mrf.mxu0
        %v8342 = vadd.f32 0.0, %v8341
        %8343 = vmatmul.f32.gmra.mxu0 %v4117
        %v8344 = vpop.f32.mrf.mxu0
        %v8345 = vadd.f32 0.0, %v8344
        %8346 = vmatmul.f32.gmra.mxu0 %v4120
        %v8347 = vpop.f32.mrf.mxu0
        %v8348 = vadd.f32 0.0, %v8347
        %8349 = vmatmul.f32.gmra.mxu0 %v4123
        %v8350 = vpop.f32.mrf.mxu0
        %v8351 = vadd.f32 0.0, %v8350
        %8352 = vmatmul.f32.gmra.mxu0 %v4126
        %v8353 = vpop.f32.mrf.mxu0
        %v8354 = vadd.f32 0.0, %v8353
        %8355 = vmatmul.f32.gmra.mxu0 %v4129
        %v8356 = vpop.f32.mrf.mxu0
        %v8357 = vadd.f32 0.0, %v8356
        %8358 = vmatmul.f32.gmra.mxu0 %v4132
        %v8359 = vpop.f32.mrf.mxu0
        %v8360 = vadd.f32 0.0, %v8359
        %8361 = vmatmul.f32.gmra.mxu0 %v4135
        %v8362 = vpop.f32.mrf.mxu0
        %v8363 = vadd.f32 0.0, %v8362
        %8364 = vmatmul.f32.gmra.mxu0 %v4138
        %v8365 = vpop.f32.mrf.mxu0
        %v8366 = vadd.f32 0.0, %v8365
        %8367 = vmatmul.f32.gmra.mxu0 %v4141
        %v8368 = vpop.f32.mrf.mxu0
        %v8369 = vadd.f32 0.0, %v8368
        %8370 = vmatmul.f32.gmra.mxu0 %v4144
        %v8371 = vpop.f32.mrf.mxu0
        %v8372 = vadd.f32 0.0, %v8371
        %8373 = vmatmul.f32.gmra.mxu0 %v4147
        %v8374 = vpop.f32.mrf.mxu0
        %v8375 = vadd.f32 0.0, %v8374
        %8376 = vmatmul.f32.gmra.mxu0 %v4150
        %v8377 = vpop.f32.mrf.mxu0
        %v8378 = vadd.f32 0.0, %v8377
        %8379 = vmatmul.f32.gmra.mxu0 %v4153
        %v8380 = vpop.f32.mrf.mxu0
        %v8381 = vadd.f32 0.0, %v8380
        %8382 = vmatmul.f32.gmra.mxu0 %v4156
        %v8383 = vpop.f32.mrf.mxu0
        %v8384 = vadd.f32 0.0, %v8383
        %8385 = vmatmul.f32.gmra.mxu0 %v4159
        %v8386 = vpop.f32.mrf.mxu0
        %v8387 = vadd.f32 0.0, %v8386
        %8388 = vmatmul.f32.gmra.mxu0 %v4162
        %v8389 = vpop.f32.mrf.mxu0
        %v8390 = vadd.f32 0.0, %v8389
        %8391 = vmatmul.f32.gmra.mxu0 %v4165
        %v8392 = vpop.f32.mrf.mxu0
        %v8393 = vadd.f32 0.0, %v8392
        %8394 = vmatmul.f32.gmra.mxu0 %v4655
        %v8395 = vpop.f32.mrf.mxu0
        %v8396 = vadd.f32 0.0, %v8395
        %8397 = vmatmul.f32.gmra.mxu0 %v4658
        %v8398 = vpop.f32.mrf.mxu0
        %v8399 = vadd.f32 0.0, %v8398
        %8400 = vmatmul.f32.gmra.mxu0 %v4661
        %v8401 = vpop.f32.mrf.mxu0
        %v8402 = vadd.f32 0.0, %v8401
        %8403 = vmatmul.f32.gmra.mxu0 %v4664
        %v8404 = vpop.f32.mrf.mxu0
        %v8405 = vadd.f32 0.0, %v8404
        %8406 = vmatmul.f32.gmra.mxu0 %v4667
        %v8407 = vpop.f32.mrf.mxu0
        %v8408 = vadd.f32 0.0, %v8407
        %8409 = vmatmul.f32.gmra.mxu0 %v4670
        %v8410 = vpop.f32.mrf.mxu0
        %v8411 = vadd.f32 0.0, %v8410
        %8412 = vmatmul.f32.gmra.mxu0 %v4673
        %v8413 = vpop.f32.mrf.mxu0
        %v8414 = vadd.f32 0.0, %v8413
        %8415 = vmatmul.f32.gmra.mxu0 %v4676
        %v8416 = vpop.f32.mrf.mxu0
        %v8417 = vadd.f32 0.0, %v8416
        %8418 = vmatmul.f32.gmra.mxu0 %v8016
        %v8419 = vpop.f32.mrf.mxu0
        %v8420 = vadd.f32 0.0, %v8419
        %8421 = vmatmul.f32.gmra.mxu0 %v8019
        %v8422 = vpop.f32.mrf.mxu0
        %v8423 = vadd.f32 0.0, %v8422
        %8424 = vmatmul.f32.gmra.mxu0 %v8022
        %v8425 = vpop.f32.mrf.mxu0
        %v8426 = vadd.f32 0.0, %v8425
        %8427 = vmatmul.f32.gmra.mxu0 %v8025
        %v8428 = vpop.f32.mrf.mxu0
        %v8429 = vadd.f32 0.0, %v8428
        %8430 = vmatmul.f32.gmra.mxu0 %v8028
        %v8431 = vpop.f32.mrf.mxu0
        %v8432 = vadd.f32 0.0, %v8431
        %8433 = vmatmul.f32.gmra.mxu0 %v8031
        %v8434 = vpop.f32.mrf.mxu0
        %v8435 = vadd.f32 0.0, %v8434
        %8436 = vmatmul.f32.gmra.mxu0 %v8034
        %v8437 = vpop.f32.mrf.mxu0
        %v8438 = vadd.f32 0.0, %v8437
        %8439 = vmatmul.f32.gmra.mxu0 %v8037
        %v8440 = vpop.f32.mrf.mxu0
        %v8441 = vadd.f32 0.0, %v8440
        %8442 = vmatmul.f32.gmra.mxu0 %v8040
        %v8443 = vpop.f32.mrf.mxu0
        %v8444 = vadd.f32 0.0, %v8443
        %8445 = vmatmul.f32.gmra.mxu0 %v8043
        %v8446 = vpop.f32.mrf.mxu0
        %v8447 = vadd.f32 0.0, %v8446
        %8448 = vmatmul.f32.gmra.mxu0 %v8046
        %v8449 = vpop.f32.mrf.mxu0
        %v8450 = vadd.f32 0.0, %v8449
        %8451 = vmatmul.f32.gmra.mxu0 %v8049
        %v8452 = vpop.f32.mrf.mxu0
        %v8453 = vadd.f32 0.0, %v8452
        %8454 = vmatmul.f32.gmra.mxu0 %v8052
        %v8455 = vpop.f32.mrf.mxu0
        %v8456 = vadd.f32 0.0, %v8455
        %8457 = vmatmul.f32.gmra.mxu0 %v8055
        %v8458 = vpop.f32.mrf.mxu0
        %v8459 = vadd.f32 0.0, %v8458
        %8460 = vmatmul.f32.gmra.mxu0 %v8058
        %v8461 = vpop.f32.mrf.mxu0
        %v8462 = vadd.f32 0.0, %v8461
        %8463 = vmatmul.f32.gmra.mxu0 %v8061
        %v8464 = vpop.f32.mrf.mxu0
        %v8465 = vadd.f32 0.0, %v8464
        %8466 = vmatmul.f32.gmra.mxu0 %v8064
        %v8467 = vpop.f32.mrf.mxu0
        %v8468 = vadd.f32 0.0, %v8467
        %8469 = vmatmul.f32.gmra.mxu0 %v8067
        %v8470 = vpop.f32.mrf.mxu0
        %v8471 = vadd.f32 0.0, %v8470
        %8472 = vmatmul.f32.gmra.mxu0 %v8070
        %v8473 = vpop.f32.mrf.mxu0
        %v8474 = vadd.f32 0.0, %v8473
        %8475 = vmatmul.f32.gmra.mxu0 %v8073
        %v8476 = vpop.f32.mrf.mxu0
        %v8477 = vadd.f32 0.0, %v8476
        %8478 = vmatmul.f32.gmra.mxu0 %v8076
        %v8479 = vpop.f32.mrf.mxu0
        %v8480 = vadd.f32 0.0, %v8479
        %8481 = vmatmul.f32.gmra.mxu0 %v8079
        %v8482 = vpop.f32.mrf.mxu0
        %v8483 = vadd.f32 0.0, %v8482
        %8484 = vmatmul.f32.gmra.mxu0 %v8082
        %v8485 = vpop.f32.mrf.mxu0
        %v8486 = vadd.f32 0.0, %v8485
        %8487 = vmatmul.f32.gmra.mxu0 %v8085
        %v8488 = vpop.f32.mrf.mxu0
        %v8489 = vadd.f32 0.0, %v8488
        %8490 = vmatmul.f32.gmra.mxu0 %v8088
        %v8491 = vpop.f32.mrf.mxu0
        %v8492 = vadd.f32 0.0, %v8491
        %8493 = vmatmul.f32.gmra.mxu0 %v8091
        %v8494 = vpop.f32.mrf.mxu0
        %v8495 = vadd.f32 0.0, %v8494
        %8496 = vmatmul.f32.gmra.mxu0 %v8094
        %v8497 = vpop.f32.mrf.mxu0
        %v8498 = vadd.f32 0.0, %v8497
        %8499 = vmatmul.f32.gmra.mxu0 %v8097
        %v8500 = vpop.f32.mrf.mxu0
        %v8501 = vadd.f32 0.0, %v8500
        %8502 = vmatmul.f32.gmra.mxu0 %v8100
        %v8503 = vpop.f32.mrf.mxu0
        %v8504 = vadd.f32 0.0, %v8503
        %8505 = vmatmul.f32.gmra.mxu0 %v8103
        %v8506 = vpop.f32.mrf.mxu0
        %v8507 = vadd.f32 0.0, %v8506
        %8508 = vmatmul.f32.gmra.mxu0 %v8106
        %v8509 = vpop.f32.mrf.mxu0
        %v8510 = vadd.f32 0.0, %v8509
        %8511 = vmatmul.f32.gmra.mxu0 %v8109
        %v8512 = vpop.f32.mrf.mxu0
        %v8513 = vadd.f32 0.0, %v8512
        %8514 = vdwg.mxu0
        %v8515 = vadd.f32 %v7883, %v8132
        %v8516 = vadd.f32 %v7884, %v8135
        %v8517 = vadd.f32 %v7885, %v8138
        %v8518 = vadd.f32 %v7886, %v8141
        %v8519 = vadd.f32 %v7887, %v8144
        %v8520 = vadd.f32 %v7888, %v8147
        %v8521 = vadd.f32 %v7889, %v8150
        %v8522 = vadd.f32 %v7890, %v8153
        %v8523 = vadd.f32 %v7891, %v8156
        %v8524 = vadd.f32 %v7892, %v8159
        %v8525 = vadd.f32 %v7893, %v8162
        %v8526 = vadd.f32 %v7894, %v8165
        %v8527 = vadd.f32 %v7895, %v8168
        %v8528 = vadd.f32 %v7896, %v8171
        %v8529 = vadd.f32 %v7897, %v8174
        %v8530 = vadd.f32 %v7898, %v8177
        %v8531 = vadd.f32 %v7899, %v8180
        %v8532 = vadd.f32 %v7900, %v8183
        %v8533 = vadd.f32 %v7901, %v8186
        %v8534 = vadd.f32 %v7902, %v8189
        %v8535 = vadd.f32 %v7903, %v8192
        %v8536 = vadd.f32 %v7904, %v8195
        %v8537 = vadd.f32 %v7905, %v8198
        %v8538 = vadd.f32 %v7906, %v8201
        %v8539 = vadd.f32 %v7907, %v8204
        %v8540 = vadd.f32 %v7908, %v8207
        %v8541 = vadd.f32 %v7909, %v8210
        %v8542 = vadd.f32 %v7910, %v8213
        %v8543 = vadd.f32 %v7911, %v8216
        %v8544 = vadd.f32 %v7912, %v8219
        %v8545 = vadd.f32 %v7913, %v8222
        %v8546 = vadd.f32 %v7914, %v8225
        %v8547 = vadd.f32 %v7915, %v8228
        %v8548 = vadd.f32 %v7916, %v8231
        %v8549 = vadd.f32 %v7917, %v8234
        %v8550 = vadd.f32 %v7918, %v8237
        %v8551 = vadd.f32 %v7919, %v8240
        %v8552 = vadd.f32 %v7920, %v8243
        %v8553 = vadd.f32 %v7921, %v8246
        %v8554 = vadd.f32 %v7922, %v8249
        %v8555 = vadd.f32 %v7923, %v8252
        %v8556 = vadd.f32 %v7924, %v8255
        %v8557 = vadd.f32 %v7925, %v8258
        %v8558 = vadd.f32 %v7926, %v8261
        %v8559 = vadd.f32 %v7927, %v8264
        %v8560 = vadd.f32 %v7928, %v8267
        %v8561 = vadd.f32 %v7929, %v8270
        %v8562 = vadd.f32 %v7930, %v8273
        %v8563 = vadd.f32 %v7931, %v8276
        %v8564 = vadd.f32 %v7932, %v8279
        %v8565 = vadd.f32 %v7933, %v8282
        %v8566 = vadd.f32 %v7934, %v8285
        %v8567 = vadd.f32 %v7935, %v8288
        %v8568 = vadd.f32 %v7936, %v8291
        %v8569 = vadd.f32 %v7937, %v8294
        %v8570 = vadd.f32 %v7938, %v8297
        %v8571 = vadd.f32 %v7939, %v8300
        %v8572 = vadd.f32 %v7940, %v8303
        %v8573 = vadd.f32 %v7941, %v8306
        %v8574 = vadd.f32 %v7942, %v8309
        %v8575 = vadd.f32 %v7943, %v8312
        %v8576 = vadd.f32 %v7944, %v8315
        %v8577 = vadd.f32 %v7945, %v8318
        %v8578 = vadd.f32 %v7946, %v8321
        %v8579 = vadd.f32 %v7947, %v8324
        %v8580 = vadd.f32 %v7948, %v8327
        %v8581 = vadd.f32 %v7949, %v8330
        %v8582 = vadd.f32 %v7950, %v8333
        %v8583 = vadd.f32 %v7951, %v8336
        %v8584 = vadd.f32 %v7952, %v8339
        %v8585 = vadd.f32 %v7953, %v8342
        %v8586 = vadd.f32 %v7954, %v8345
        %v8587 = vadd.f32 %v7955, %v8348
        %v8588 = vadd.f32 %v7956, %v8351
        %v8589 = vadd.f32 %v7957, %v8354
        %v8590 = vadd.f32 %v7958, %v8357
        %v8591 = vadd.f32 %v7959, %v8360
        %v8592 = vadd.f32 %v7960, %v8363
        %v8593 = vadd.f32 %v7961, %v8366
        %v8594 = vadd.f32 %v7962, %v8369
        %v8595 = vadd.f32 %v7963, %v8372
        %v8596 = vadd.f32 %v7964, %v8375
        %v8597 = vadd.f32 %v7965, %v8378
        %v8598 = vadd.f32 %v7966, %v8381
        %v8599 = vadd.f32 %v7967, %v8384
        %v8600 = vadd.f32 %v7968, %v8387
        %v8601 = vadd.f32 %v7969, %v8390
        %v8602 = vadd.f32 %v7970, %v8393
        %v8603 = vadd.f32 %v7971, %v8396
        %v8604 = vadd.f32 %v7972, %v8399
        %v8605 = vadd.f32 %v7973, %v8402
        %v8606 = vadd.f32 %v7974, %v8405
        %v8607 = vadd.f32 %v7975, %v8408
        %v8608 = vadd.f32 %v7976, %v8411
        %v8609 = vadd.f32 %v7977, %v8414
        %v8610 = vadd.f32 %v7978, %v8417
        %v8611 = vadd.f32 %v7979, %v8420
        %v8612 = vadd.f32 %v7980, %v8423
        %v8613 = vadd.f32 %v7981, %v8426
        %v8614 = vadd.f32 %v7982, %v8429
        %v8615 = vadd.f32 %v7983, %v8432
        %v8616 = vadd.f32 %v7984, %v8435
        %v8617 = vadd.f32 %v7985, %v8438
        %v8618 = vadd.f32 %v7986, %v8441
        %v8619 = vadd.f32 %v7987, %v8444
        %v8620 = vadd.f32 %v7988, %v8447
        %v8621 = vadd.f32 %v7989, %v8450
        %v8622 = vadd.f32 %v7990, %v8453
        %v8623 = vadd.f32 %v7991, %v8456
        %v8624 = vadd.f32 %v7992, %v8459
        %v8625 = vadd.f32 %v7993, %v8462
        %v8626 = vadd.f32 %v7994, %v8465
        %v8627 = vadd.f32 %v7995, %v8468
        %v8628 = vadd.f32 %v7996, %v8471
        %v8629 = vadd.f32 %v7997, %v8474
        %v8630 = vadd.f32 %v7998, %v8477
        %v8631 = vadd.f32 %v7999, %v8480
        %v8632 = vadd.f32 %v8000, %v8483
        %v8633 = vadd.f32 %v8001, %v8486
        %v8634 = vadd.f32 %v8002, %v8489
        %v8635 = vadd.f32 %v8003, %v8492
        %v8636 = vadd.f32 %v8004, %v8495
        %v8637 = vadd.f32 %v8005, %v8498
        %v8638 = vadd.f32 %v8006, %v8501
        %v8639 = vadd.f32 %v8007, %v8504
        %v8640 = vadd.f32 %v8008, %v8507
        %v8641 = vadd.f32 %v8009, %v8510
        %v8642 = vadd.f32 %v8010, %v8513
        %v8643 = vadd.f32 %v8515, %v3780
        %v8644 = vadd.f32 %v8516, %v3780
        %v8645 = vadd.f32 %v8517, %v3780
        %v8646 = vadd.f32 %v8518, %v3780
        %v8647 = vadd.f32 %v8519, %v3780
        %v8648 = vadd.f32 %v8520, %v3780
        %v8649 = vadd.f32 %v8521, %v3780
        %v8650 = vadd.f32 %v8522, %v3780
        %v8651 = vadd.f32 %v8523, %v3780
        %v8652 = vadd.f32 %v8524, %v3780
        %v8653 = vadd.f32 %v8525, %v3780
        %v8654 = vadd.f32 %v8526, %v3780
        %v8655 = vadd.f32 %v8527, %v3780
        %v8656 = vadd.f32 %v8528, %v3780
        %v8657 = vadd.f32 %v8529, %v3780
        %v8658 = vadd.f32 %v8530, %v3780
        %v8659 = vadd.f32 %v8531, %v3780
        %v8660 = vadd.f32 %v8532, %v3780
        %v8661 = vadd.f32 %v8533, %v3780
        %v8662 = vadd.f32 %v8534, %v3780
        %v8663 = vadd.f32 %v8535, %v3780
        %v8664 = vadd.f32 %v8536, %v3780
        %v8665 = vadd.f32 %v8537, %v3780
        %v8666 = vadd.f32 %v8538, %v3780
        %v8667 = vadd.f32 %v8539, %v3780
        %v8668 = vadd.f32 %v8540, %v3780
        %v8669 = vadd.f32 %v8541, %v3780
        %v8670 = vadd.f32 %v8542, %v3780
        %v8671 = vadd.f32 %v8543, %v3780
        %v8672 = vadd.f32 %v8544, %v3780
        %v8673 = vadd.f32 %v8545, %v3780
        %v8674 = vadd.f32 %v8546, %v3780
        %v8675 = vadd.f32 %v8547, %v3780
        %v8676 = vadd.f32 %v8548, %v3780
        %v8677 = vadd.f32 %v8549, %v3780
        %v8678 = vadd.f32 %v8550, %v3780
        %v8679 = vadd.f32 %v8551, %v3780
        %v8680 = vadd.f32 %v8552, %v3780
        %v8681 = vadd.f32 %v8553, %v3780
        %v8682 = vadd.f32 %v8554, %v3780
        %v8683 = vadd.f32 %v8555, %v3780
        %v8684 = vadd.f32 %v8556, %v3780
        %v8685 = vadd.f32 %v8557, %v3780
        %v8686 = vadd.f32 %v8558, %v3780
        %v8687 = vadd.f32 %v8559, %v3780
        %v8688 = vadd.f32 %v8560, %v3780
        %v8689 = vadd.f32 %v8561, %v3780
        %v8690 = vadd.f32 %v8562, %v3780
        %v8691 = vadd.f32 %v8563, %v3780
        %v8692 = vadd.f32 %v8564, %v3780
        %v8693 = vadd.f32 %v8565, %v3780
        %v8694 = vadd.f32 %v8566, %v3780
        %v8695 = vadd.f32 %v8567, %v3780
        %v8696 = vadd.f32 %v8568, %v3780
        %v8697 = vadd.f32 %v8569, %v3780
        %v8698 = vadd.f32 %v8570, %v3780
        %v8699 = vadd.f32 %v8571, %v3780
        %v8700 = vadd.f32 %v8572, %v3780
        %v8701 = vadd.f32 %v8573, %v3780
        %v8702 = vadd.f32 %v8574, %v3780
        %v8703 = vadd.f32 %v8575, %v3780
        %v8704 = vadd.f32 %v8576, %v3780
        %v8705 = vadd.f32 %v8577, %v3780
        %v8706 = vadd.f32 %v8578, %v3780
        %v8707 = vadd.f32 %v8579, %v3780
        %v8708 = vadd.f32 %v8580, %v3780
        %v8709 = vadd.f32 %v8581, %v3780
        %v8710 = vadd.f32 %v8582, %v3780
        %v8711 = vadd.f32 %v8583, %v3780
        %v8712 = vadd.f32 %v8584, %v3780
        %v8713 = vadd.f32 %v8585, %v3780
        %v8714 = vadd.f32 %v8586, %v3780
        %v8715 = vadd.f32 %v8587, %v3780
        %v8716 = vadd.f32 %v8588, %v3780
        %v8717 = vadd.f32 %v8589, %v3780
        %v8718 = vadd.f32 %v8590, %v3780
        %v8719 = vadd.f32 %v8591, %v3780
        %v8720 = vadd.f32 %v8592, %v3780
        %v8721 = vadd.f32 %v8593, %v3780
        %v8722 = vadd.f32 %v8594, %v3780
        %v8723 = vadd.f32 %v8595, %v3780
        %v8724 = vadd.f32 %v8596, %v3780
        %v8725 = vadd.f32 %v8597, %v3780
        %v8726 = vadd.f32 %v8598, %v3780
        %v8727 = vadd.f32 %v8599, %v3780
        %v8728 = vadd.f32 %v8600, %v3780
        %v8729 = vadd.f32 %v8601, %v3780
        %v8730 = vadd.f32 %v8602, %v3780
        %v8731 = vadd.f32 %v8603, %v3780
        %v8732 = vadd.f32 %v8604, %v3780
        %v8733 = vadd.f32 %v8605, %v3780
        %v8734 = vadd.f32 %v8606, %v3780
        %v8735 = vadd.f32 %v8607, %v3780
        %v8736 = vadd.f32 %v8608, %v3780
        %v8737 = vadd.f32 %v8609, %v3780
        %v8738 = vadd.f32 %v8610, %v3780
        %v8739 = vadd.f32 %v8611, %v3780
        %v8740 = vadd.f32 %v8612, %v3780
        %v8741 = vadd.f32 %v8613, %v3780
        %v8742 = vadd.f32 %v8614, %v3780
        %v8743 = vadd.f32 %v8615, %v3780
        %v8744 = vadd.f32 %v8616, %v3780
        %v8745 = vadd.f32 %v8617, %v3780
        %v8746 = vadd.f32 %v8618, %v3780
        %v8747 = vadd.f32 %v8619, %v3780
        %v8748 = vadd.f32 %v8620, %v3780
        %v8749 = vadd.f32 %v8621, %v3780
        %v8750 = vadd.f32 %v8622, %v3780
        %v8751 = vadd.f32 %v8623, %v3780
        %v8752 = vadd.f32 %v8624, %v3780
        %v8753 = vadd.f32 %v8625, %v3780
        %v8754 = vadd.f32 %v8626, %v3780
        %v8755 = vadd.f32 %v8627, %v3780
        %v8756 = vadd.f32 %v8628, %v3780
        %v8757 = vadd.f32 %v8629, %v3780
        %v8758 = vadd.f32 %v8630, %v3780
        %v8759 = vadd.f32 %v8631, %v3780
        %v8760 = vadd.f32 %v8632, %v3780
        %v8761 = vadd.f32 %v8633, %v3780
        %v8762 = vadd.f32 %v8634, %v3780
        %v8763 = vadd.f32 %v8635, %v3780
        %v8764 = vadd.f32 %v8636, %v3780
        %v8765 = vadd.f32 %v8637, %v3780
        %v8766 = vadd.f32 %v8638, %v3780
        %v8767 = vadd.f32 %v8639, %v3780
        %v8768 = vadd.f32 %v8640, %v3780
        %v8769 = vadd.f32 %v8641, %v3780
        %v8770 = vadd.f32 %v8642, %v3780
        %8771 = vst.msk [vmem:[%s491] sm:$0xff] %vm696, %v4189
        %8772 = vst.msk [vmem:[%s491 + $0x8] sm:$0xff] %vm696, %v4192
        %8773 = vst.msk [vmem:[%s491 + $0x10] sm:$0xff] %vm696, %v4195
        %8774 = vst.msk [vmem:[%s491 + $0x18] sm:$0xff] %vm696, %v4198
        %8775 = vst.msk [vmem:[%s491 + $0x20] sm:$0xff] %vm696, %v4201
        %8776 = vst.msk [vmem:[%s491 + $0x28] sm:$0xff] %vm696, %v4204
        %8777 = vst.msk [vmem:[%s491 + $0x30] sm:$0xff] %vm696, %v4207
        %8778 = vst.msk [vmem:[%s491 + $0x38] sm:$0xff] %vm696, %v4210
        %8779 = vst.msk [vmem:[%s491 + $0x40] sm:$0xff] %vm696, %v5486
        %8780 = vst.msk [vmem:[%s491 + $0x48] sm:$0xff] %vm696, %v5487
        %8781 = vst.msk [vmem:[%s491 + $0x50] sm:$0xff] %vm696, %v5488
        %8782 = vst.msk [vmem:[%s491 + $0x58] sm:$0xff] %vm696, %v5489
        %8783 = vst.msk [vmem:[%s491 + $0x60] sm:$0xff] %vm696, %v5490
        %8784 = vst.msk [vmem:[%s491 + $0x68] sm:$0xff] %vm696, %v5491
        %8785 = vst.msk [vmem:[%s491 + $0x70] sm:$0xff] %vm696, %v5492
        %8786 = vst.msk [vmem:[%s491 + $0x78] sm:$0xff] %vm696, %v5493
        %8787 = vst.msk [vmem:[%s491 + $0x80] sm:$0xff] %vm696, %v4213
        %8788 = vst.msk [vmem:[%s491 + $0x88] sm:$0xff] %vm696, %v4216
        %8789 = vst.msk [vmem:[%s491 + $0x90] sm:$0xff] %vm696, %v4219
        %8790 = vst.msk [vmem:[%s491 + $0x98] sm:$0xff] %vm696, %v4222
        %8791 = vst.msk [vmem:[%s491 + $0xa0] sm:$0xff] %vm696, %v4225
        %8792 = vst.msk [vmem:[%s491 + $0xa8] sm:$0xff] %vm696, %v4228
        %8793 = vst.msk [vmem:[%s491 + $0xb0] sm:$0xff] %vm696, %v4231
        %8794 = vst.msk [vmem:[%s491 + $0xb8] sm:$0xff] %vm696, %v4234
        %8795 = vst.msk [vmem:[%s491 + $0xc0] sm:$0xff] %vm696, %v5494
        %8796 = vst.msk [vmem:[%s491 + $0xc8] sm:$0xff] %vm696, %v5495
        %8797 = vst.msk [vmem:[%s491 + $0xd0] sm:$0xff] %vm696, %v5496
        %8798 = vst.msk [vmem:[%s491 + $0xd8] sm:$0xff] %vm696, %v5497
        %8799 = vst.msk [vmem:[%s491 + $0xe0] sm:$0xff] %vm696, %v5498
        %8800 = vst.msk [vmem:[%s491 + $0xe8] sm:$0xff] %vm696, %v5499
        %8801 = vst.msk [vmem:[%s491 + $0xf0] sm:$0xff] %vm696, %v5500
        %8802 = vst.msk [vmem:[%s491 + $0xf8] sm:$0xff] %vm696, %v5501
        %8803 = vst.msk [vmem:[%s491 + $0x100] sm:$0xff] %vm696, %v4237
        %8804 = vst.msk [vmem:[%s491 + $0x108] sm:$0xff] %vm696, %v4240
        %8805 = vst.msk [vmem:[%s491 + $0x110] sm:$0xff] %vm696, %v4243
        %8806 = vst.msk [vmem:[%s491 + $0x118] sm:$0xff] %vm696, %v4246
        %8807 = vst.msk [vmem:[%s491 + $0x120] sm:$0xff] %vm696, %v4249
        %8808 = vst.msk [vmem:[%s491 + $0x128] sm:$0xff] %vm696, %v4252
        %8809 = vst.msk [vmem:[%s491 + $0x130] sm:$0xff] %vm696, %v4255
        %8810 = vst.msk [vmem:[%s491 + $0x138] sm:$0xff] %vm696, %v4258
        %8811 = vst.msk [vmem:[%s491 + $0x140] sm:$0xff] %vm696, %v5502
        %8812 = vst.msk [vmem:[%s491 + $0x148] sm:$0xff] %vm696, %v5503
        %8813 = vst.msk [vmem:[%s491 + $0x150] sm:$0xff] %vm696, %v5504
        %8814 = vst.msk [vmem:[%s491 + $0x158] sm:$0xff] %vm696, %v5505
        %8815 = vst.msk [vmem:[%s491 + $0x160] sm:$0xff] %vm696, %v5506
        %8816 = vst.msk [vmem:[%s491 + $0x168] sm:$0xff] %vm696, %v5507
        %8817 = vst.msk [vmem:[%s491 + $0x170] sm:$0xff] %vm696, %v5508
        %8818 = vst.msk [vmem:[%s491 + $0x178] sm:$0xff] %vm696, %v5509
        %8819 = vst.msk [vmem:[%s491 + $0x180] sm:$0xff] %vm696, %v4261
        %8820 = vst.msk [vmem:[%s491 + $0x188] sm:$0xff] %vm696, %v4264
        %8821 = vst.msk [vmem:[%s491 + $0x190] sm:$0xff] %vm696, %v4267
        %8822 = vst.msk [vmem:[%s491 + $0x198] sm:$0xff] %vm696, %v4270
        %8823 = vst.msk [vmem:[%s491 + $0x1a0] sm:$0xff] %vm696, %v4273
        %8824 = vst.msk [vmem:[%s491 + $0x1a8] sm:$0xff] %vm696, %v4276
        %8825 = vst.msk [vmem:[%s491 + $0x1b0] sm:$0xff] %vm696, %v4279
        %8826 = vst.msk [vmem:[%s491 + $0x1b8] sm:$0xff] %vm696, %v4282
        %8827 = vst.msk [vmem:[%s491 + $0x1c0] sm:$0xff] %vm696, %v5510
        %8828 = vst.msk [vmem:[%s491 + $0x1c8] sm:$0xff] %vm696, %v5511
        %8829 = vst.msk [vmem:[%s491 + $0x1d0] sm:$0xff] %vm696, %v5512
        %8830 = vst.msk [vmem:[%s491 + $0x1d8] sm:$0xff] %vm696, %v5513
        %8831 = vst.msk [vmem:[%s491 + $0x1e0] sm:$0xff] %vm696, %v5514
        %8832 = vst.msk [vmem:[%s491 + $0x1e8] sm:$0xff] %vm696, %v5515
        %8833 = vst.msk [vmem:[%s491 + $0x1f0] sm:$0xff] %vm696, %v5516
        %8834 = vst.msk [vmem:[%s491 + $0x1f8] sm:$0xff] %vm696, %v5517
        %8835 = vst.msk [vmem:[%s491 + $0x200] sm:$0xff] %vm696, %v6528
        %8836 = vst.msk [vmem:[%s491 + $0x208] sm:$0xff] %vm696, %v6529
        %8837 = vst.msk [vmem:[%s491 + $0x210] sm:$0xff] %vm696, %v6530
        %8838 = vst.msk [vmem:[%s491 + $0x218] sm:$0xff] %vm696, %v6531
        %8839 = vst.msk [vmem:[%s491 + $0x220] sm:$0xff] %vm696, %v6532
        %8840 = vst.msk [vmem:[%s491 + $0x228] sm:$0xff] %vm696, %v6533
        %8841 = vst.msk [vmem:[%s491 + $0x230] sm:$0xff] %vm696, %v6534
        %8842 = vst.msk [vmem:[%s491 + $0x238] sm:$0xff] %vm696, %v6535
        %8843 = vst.msk [vmem:[%s491 + $0x240] sm:$0xff] %vm696, %v8643
        %8844 = vst.msk [vmem:[%s491 + $0x248] sm:$0xff] %vm696, %v8644
        %8845 = vst.msk [vmem:[%s491 + $0x250] sm:$0xff] %vm696, %v8645
        %8846 = vst.msk [vmem:[%s491 + $0x258] sm:$0xff] %vm696, %v8646
        %8847 = vst.msk [vmem:[%s491 + $0x260] sm:$0xff] %vm696, %v8647
        %8848 = vst.msk [vmem:[%s491 + $0x268] sm:$0xff] %vm696, %v8648
        %8849 = vst.msk [vmem:[%s491 + $0x270] sm:$0xff] %vm696, %v8649
        %8850 = vst.msk [vmem:[%s491 + $0x278] sm:$0xff] %vm696, %v8650
        %8851 = vst.msk [vmem:[%s491 + $0x280] sm:$0xff] %vm696, %v6536
        %8852 = vst.msk [vmem:[%s491 + $0x288] sm:$0xff] %vm696, %v6537
        %8853 = vst.msk [vmem:[%s491 + $0x290] sm:$0xff] %vm696, %v6538
        %8854 = vst.msk [vmem:[%s491 + $0x298] sm:$0xff] %vm696, %v6539
        %8855 = vst.msk [vmem:[%s491 + $0x2a0] sm:$0xff] %vm696, %v6540
        %8856 = vst.msk [vmem:[%s491 + $0x2a8] sm:$0xff] %vm696, %v6541
        %8857 = vst.msk [vmem:[%s491 + $0x2b0] sm:$0xff] %vm696, %v6542
        %8858 = vst.msk [vmem:[%s491 + $0x2b8] sm:$0xff] %vm696, %v6543
        %8859 = vst.msk [vmem:[%s491 + $0x2c0] sm:$0xff] %vm696, %v8651
        %8860 = vst.msk [vmem:[%s491 + $0x2c8] sm:$0xff] %vm696, %v8652
        %8861 = vst.msk [vmem:[%s491 + $0x2d0] sm:$0xff] %vm696, %v8653
        %8862 = vst.msk [vmem:[%s491 + $0x2d8] sm:$0xff] %vm696, %v8654
        %8863 = vst.msk [vmem:[%s491 + $0x2e0] sm:$0xff] %vm696, %v8655
        %8864 = vst.msk [vmem:[%s491 + $0x2e8] sm:$0xff] %vm696, %v8656
        %8865 = vst.msk [vmem:[%s491 + $0x2f0] sm:$0xff] %vm696, %v8657
        %8866 = vst.msk [vmem:[%s491 + $0x2f8] sm:$0xff] %vm696, %v8658
        %8867 = vst.msk [vmem:[%s491 + $0x300] sm:$0xff] %vm696, %v6544
        %8868 = vst.msk [vmem:[%s491 + $0x308] sm:$0xff] %vm696, %v6545
        %8869 = vst.msk [vmem:[%s491 + $0x310] sm:$0xff] %vm696, %v6546
        %8870 = vst.msk [vmem:[%s491 + $0x318] sm:$0xff] %vm696, %v6547
        %8871 = vst.msk [vmem:[%s491 + $0x320] sm:$0xff] %vm696, %v6548
        %8872 = vst.msk [vmem:[%s491 + $0x328] sm:$0xff] %vm696, %v6549
        %8873 = vst.msk [vmem:[%s491 + $0x330] sm:$0xff] %vm696, %v6550
        %8874 = vst.msk [vmem:[%s491 + $0x338] sm:$0xff] %vm696, %v6551
        %8875 = vst.msk [vmem:[%s491 + $0x340] sm:$0xff] %vm696, %v8659
        %8876 = vst.msk [vmem:[%s491 + $0x348] sm:$0xff] %vm696, %v8660
        %8877 = vst.msk [vmem:[%s491 + $0x350] sm:$0xff] %vm696, %v8661
        %8878 = vst.msk [vmem:[%s491 + $0x358] sm:$0xff] %vm696, %v8662
        %8879 = vst.msk [vmem:[%s491 + $0x360] sm:$0xff] %vm696, %v8663
        %8880 = vst.msk [vmem:[%s491 + $0x368] sm:$0xff] %vm696, %v8664
        %8881 = vst.msk [vmem:[%s491 + $0x370] sm:$0xff] %vm696, %v8665
        %8882 = vst.msk [vmem:[%s491 + $0x378] sm:$0xff] %vm696, %v8666
        %8883 = vst.msk [vmem:[%s491 + $0x380] sm:$0xff] %vm696, %v6552
        %8884 = vst.msk [vmem:[%s491 + $0x388] sm:$0xff] %vm696, %v6553
        %8885 = vst.msk [vmem:[%s491 + $0x390] sm:$0xff] %vm696, %v6554
        %8886 = vst.msk [vmem:[%s491 + $0x398] sm:$0xff] %vm696, %v6555
        %8887 = vst.msk [vmem:[%s491 + $0x3a0] sm:$0xff] %vm696, %v6556
        %8888 = vst.msk [vmem:[%s491 + $0x3a8] sm:$0xff] %vm696, %v6557
        %8889 = vst.msk [vmem:[%s491 + $0x3b0] sm:$0xff] %vm696, %v6558
        %8890 = vst.msk [vmem:[%s491 + $0x3b8] sm:$0xff] %vm696, %v6559
        %8891 = vst.msk [vmem:[%s491 + $0x3c0] sm:$0xff] %vm696, %v8667
        %8892 = vst.msk [vmem:[%s491 + $0x3c8] sm:$0xff] %vm696, %v8668
        %8893 = vst.msk [vmem:[%s491 + $0x3d0] sm:$0xff] %vm696, %v8669
        %8894 = vst.msk [vmem:[%s491 + $0x3d8] sm:$0xff] %vm696, %v8670
        %8895 = vst.msk [vmem:[%s491 + $0x3e0] sm:$0xff] %vm696, %v8671
        %8896 = vst.msk [vmem:[%s491 + $0x3e8] sm:$0xff] %vm696, %v8672
        %8897 = vst.msk [vmem:[%s491 + $0x3f0] sm:$0xff] %vm696, %v8673
        %8898 = vst.msk [vmem:[%s491 + $0x3f8] sm:$0xff] %vm696, %v8674
        %8899 = vst.msk [vmem:[%s491 + $0x400] sm:$0xff] %vm696, %v4285
        %8900 = vst.msk [vmem:[%s491 + $0x408] sm:$0xff] %vm696, %v4288
        %8901 = vst.msk [vmem:[%s491 + $0x410] sm:$0xff] %vm696, %v4291
        %8902 = vst.msk [vmem:[%s491 + $0x418] sm:$0xff] %vm696, %v4294
        %8903 = vst.msk [vmem:[%s491 + $0x420] sm:$0xff] %vm696, %v4297
        %8904 = vst.msk [vmem:[%s491 + $0x428] sm:$0xff] %vm696, %v4300
        %8905 = vst.msk [vmem:[%s491 + $0x430] sm:$0xff] %vm696, %v4303
        %8906 = vst.msk [vmem:[%s491 + $0x438] sm:$0xff] %vm696, %v4306
        %8907 = vst.msk [vmem:[%s491 + $0x440] sm:$0xff] %vm696, %v5518
        %8908 = vst.msk [vmem:[%s491 + $0x448] sm:$0xff] %vm696, %v5519
        %8909 = vst.msk [vmem:[%s491 + $0x450] sm:$0xff] %vm696, %v5520
        %8910 = vst.msk [vmem:[%s491 + $0x458] sm:$0xff] %vm696, %v5521
        %8911 = vst.msk [vmem:[%s491 + $0x460] sm:$0xff] %vm696, %v5522
        %8912 = vst.msk [vmem:[%s491 + $0x468] sm:$0xff] %vm696, %v5523
        %8913 = vst.msk [vmem:[%s491 + $0x470] sm:$0xff] %vm696, %v5524
        %8914 = vst.msk [vmem:[%s491 + $0x478] sm:$0xff] %vm696, %v5525
        %8915 = vst.msk [vmem:[%s491 + $0x480] sm:$0xff] %vm696, %v4309
        %8916 = vst.msk [vmem:[%s491 + $0x488] sm:$0xff] %vm696, %v4312
        %8917 = vst.msk [vmem:[%s491 + $0x490] sm:$0xff] %vm696, %v4315
        %8918 = vst.msk [vmem:[%s491 + $0x498] sm:$0xff] %vm696, %v4318
        %8919 = vst.msk [vmem:[%s491 + $0x4a0] sm:$0xff] %vm696, %v4321
        %8920 = vst.msk [vmem:[%s491 + $0x4a8] sm:$0xff] %vm696, %v4324
        %8921 = vst.msk [vmem:[%s491 + $0x4b0] sm:$0xff] %vm696, %v4327
        %8922 = vst.msk [vmem:[%s491 + $0x4b8] sm:$0xff] %vm696, %v4330
        %8923 = vst.msk [vmem:[%s491 + $0x4c0] sm:$0xff] %vm696, %v5526
        %8924 = vst.msk [vmem:[%s491 + $0x4c8] sm:$0xff] %vm696, %v5527
        %8925 = vst.msk [vmem:[%s491 + $0x4d0] sm:$0xff] %vm696, %v5528
        %8926 = vst.msk [vmem:[%s491 + $0x4d8] sm:$0xff] %vm696, %v5529
        %8927 = vst.msk [vmem:[%s491 + $0x4e0] sm:$0xff] %vm696, %v5530
        %8928 = vst.msk [vmem:[%s491 + $0x4e8] sm:$0xff] %vm696, %v5531
        %8929 = vst.msk [vmem:[%s491 + $0x4f0] sm:$0xff] %vm696, %v5532
        %8930 = vst.msk [vmem:[%s491 + $0x4f8] sm:$0xff] %vm696, %v5533
        %8931 = vst.msk [vmem:[%s491 + $0x500] sm:$0xff] %vm696, %v4333
        %8932 = vst.msk [vmem:[%s491 + $0x508] sm:$0xff] %vm696, %v4336
        %8933 = vst.msk [vmem:[%s491 + $0x510] sm:$0xff] %vm696, %v4339
        %8934 = vst.msk [vmem:[%s491 + $0x518] sm:$0xff] %vm696, %v4342
        %8935 = vst.msk [vmem:[%s491 + $0x520] sm:$0xff] %vm696, %v4345
        %8936 = vst.msk [vmem:[%s491 + $0x528] sm:$0xff] %vm696, %v4348
        %8937 = vst.msk [vmem:[%s491 + $0x530] sm:$0xff] %vm696, %v4351
        %8938 = vst.msk [vmem:[%s491 + $0x538] sm:$0xff] %vm696, %v4354
        %8939 = vst.msk [vmem:[%s491 + $0x540] sm:$0xff] %vm696, %v5534
        %8940 = vst.msk [vmem:[%s491 + $0x548] sm:$0xff] %vm696, %v5535
        %8941 = vst.msk [vmem:[%s491 + $0x550] sm:$0xff] %vm696, %v5536
        %8942 = vst.msk [vmem:[%s491 + $0x558] sm:$0xff] %vm696, %v5537
        %8943 = vst.msk [vmem:[%s491 + $0x560] sm:$0xff] %vm696, %v5538
        %8944 = vst.msk [vmem:[%s491 + $0x568] sm:$0xff] %vm696, %v5539
        %8945 = vst.msk [vmem:[%s491 + $0x570] sm:$0xff] %vm696, %v5540
        %8946 = vst.msk [vmem:[%s491 + $0x578] sm:$0xff] %vm696, %v5541
        %8947 = vst.msk [vmem:[%s491 + $0x580] sm:$0xff] %vm696, %v4357
        %8948 = vst.msk [vmem:[%s491 + $0x588] sm:$0xff] %vm696, %v4360
        %8949 = vst.msk [vmem:[%s491 + $0x590] sm:$0xff] %vm696, %v4363
        %8950 = vst.msk [vmem:[%s491 + $0x598] sm:$0xff] %vm696, %v4366
        %8951 = vst.msk [vmem:[%s491 + $0x5a0] sm:$0xff] %vm696, %v4369
        %8952 = vst.msk [vmem:[%s491 + $0x5a8] sm:$0xff] %vm696, %v4372
        %8953 = vst.msk [vmem:[%s491 + $0x5b0] sm:$0xff] %vm696, %v4375
        %8954 = vst.msk [vmem:[%s491 + $0x5b8] sm:$0xff] %vm696, %v4378
        %8955 = vst.msk [vmem:[%s491 + $0x5c0] sm:$0xff] %vm696, %v5542
        %8956 = vst.msk [vmem:[%s491 + $0x5c8] sm:$0xff] %vm696, %v5543
        %8957 = vst.msk [vmem:[%s491 + $0x5d0] sm:$0xff] %vm696, %v5544
        %8958 = vst.msk [vmem:[%s491 + $0x5d8] sm:$0xff] %vm696, %v5545
        %8959 = vst.msk [vmem:[%s491 + $0x5e0] sm:$0xff] %vm696, %v5546
        %8960 = vst.msk [vmem:[%s491 + $0x5e8] sm:$0xff] %vm696, %v5547
        %8961 = vst.msk [vmem:[%s491 + $0x5f0] sm:$0xff] %vm696, %v5548
        %8962 = vst.msk [vmem:[%s491 + $0x5f8] sm:$0xff] %vm696, %v5549
        %8963 = vst.msk [vmem:[%s491 + $0x600] sm:$0xff] %vm696, %v6560
        %8964 = vst.msk [vmem:[%s491 + $0x608] sm:$0xff] %vm696, %v6561
        %8965 = vst.msk [vmem:[%s491 + $0x610] sm:$0xff] %vm696, %v6562
        %8966 = vst.msk [vmem:[%s491 + $0x618] sm:$0xff] %vm696, %v6563
        %8967 = vst.msk [vmem:[%s491 + $0x620] sm:$0xff] %vm696, %v6564
        %8968 = vst.msk [vmem:[%s491 + $0x628] sm:$0xff] %vm696, %v6565
        %8969 = vst.msk [vmem:[%s491 + $0x630] sm:$0xff] %vm696, %v6566
        %8970 = vst.msk [vmem:[%s491 + $0x638] sm:$0xff] %vm696, %v6567
        %8971 = vst.msk [vmem:[%s491 + $0x640] sm:$0xff] %vm696, %v8675
        %8972 = vst.msk [vmem:[%s491 + $0x648] sm:$0xff] %vm696, %v8676
        %8973 = vst.msk [vmem:[%s491 + $0x650] sm:$0xff] %vm696, %v8677
        %8974 = vst.msk [vmem:[%s491 + $0x658] sm:$0xff] %vm696, %v8678
        %8975 = vst.msk [vmem:[%s491 + $0x660] sm:$0xff] %vm696, %v8679
        %8976 = vst.msk [vmem:[%s491 + $0x668] sm:$0xff] %vm696, %v8680
        %8977 = vst.msk [vmem:[%s491 + $0x670] sm:$0xff] %vm696, %v8681
        %8978 = vst.msk [vmem:[%s491 + $0x678] sm:$0xff] %vm696, %v8682
        %8979 = vst.msk [vmem:[%s491 + $0x680] sm:$0xff] %vm696, %v6568
        %8980 = vst.msk [vmem:[%s491 + $0x688] sm:$0xff] %vm696, %v6569
        %8981 = vst.msk [vmem:[%s491 + $0x690] sm:$0xff] %vm696, %v6570
        %8982 = vst.msk [vmem:[%s491 + $0x698] sm:$0xff] %vm696, %v6571
        %8983 = vst.msk [vmem:[%s491 + $0x6a0] sm:$0xff] %vm696, %v6572
        %8984 = vst.msk [vmem:[%s491 + $0x6a8] sm:$0xff] %vm696, %v6573
        %8985 = vst.msk [vmem:[%s491 + $0x6b0] sm:$0xff] %vm696, %v6574
        %8986 = vst.msk [vmem:[%s491 + $0x6b8] sm:$0xff] %vm696, %v6575
        %8987 = vst.msk [vmem:[%s491 + $0x6c0] sm:$0xff] %vm696, %v8683
        %8988 = vst.msk [vmem:[%s491 + $0x6c8] sm:$0xff] %vm696, %v8684
        %8989 = vst.msk [vmem:[%s491 + $0x6d0] sm:$0xff] %vm696, %v8685
        %8990 = vst.msk [vmem:[%s491 + $0x6d8] sm:$0xff] %vm696, %v8686
        %8991 = vst.msk [vmem:[%s491 + $0x6e0] sm:$0xff] %vm696, %v8687
        %8992 = vst.msk [vmem:[%s491 + $0x6e8] sm:$0xff] %vm696, %v8688
        %8993 = vst.msk [vmem:[%s491 + $0x6f0] sm:$0xff] %vm696, %v8689
        %8994 = vst.msk [vmem:[%s491 + $0x6f8] sm:$0xff] %vm696, %v8690
        %8995 = vst.msk [vmem:[%s491 + $0x700] sm:$0xff] %vm696, %v6576
        %8996 = vst.msk [vmem:[%s491 + $0x708] sm:$0xff] %vm696, %v6577
        %8997 = vst.msk [vmem:[%s491 + $0x710] sm:$0xff] %vm696, %v6578
        %8998 = vst.msk [vmem:[%s491 + $0x718] sm:$0xff] %vm696, %v6579
        %8999 = vst.msk [vmem:[%s491 + $0x720] sm:$0xff] %vm696, %v6580
        %9000 = vst.msk [vmem:[%s491 + $0x728] sm:$0xff] %vm696, %v6581
        %9001 = vst.msk [vmem:[%s491 + $0x730] sm:$0xff] %vm696, %v6582
        %9002 = vst.msk [vmem:[%s491 + $0x738] sm:$0xff] %vm696, %v6583
        %9003 = vst.msk [vmem:[%s491 + $0x740] sm:$0xff] %vm696, %v8691
        %9004 = vst.msk [vmem:[%s491 + $0x748] sm:$0xff] %vm696, %v8692
        %9005 = vst.msk [vmem:[%s491 + $0x750] sm:$0xff] %vm696, %v8693
        %9006 = vst.msk [vmem:[%s491 + $0x758] sm:$0xff] %vm696, %v8694
        %9007 = vst.msk [vmem:[%s491 + $0x760] sm:$0xff] %vm696, %v8695
        %9008 = vst.msk [vmem:[%s491 + $0x768] sm:$0xff] %vm696, %v8696
        %9009 = vst.msk [vmem:[%s491 + $0x770] sm:$0xff] %vm696, %v8697
        %9010 = vst.msk [vmem:[%s491 + $0x778] sm:$0xff] %vm696, %v8698
        %9011 = vst.msk [vmem:[%s491 + $0x780] sm:$0xff] %vm696, %v6584
        %9012 = vst.msk [vmem:[%s491 + $0x788] sm:$0xff] %vm696, %v6585
        %9013 = vst.msk [vmem:[%s491 + $0x790] sm:$0xff] %vm696, %v6586
        %9014 = vst.msk [vmem:[%s491 + $0x798] sm:$0xff] %vm696, %v6587
        %9015 = vst.msk [vmem:[%s491 + $0x7a0] sm:$0xff] %vm696, %v6588
        %9016 = vst.msk [vmem:[%s491 + $0x7a8] sm:$0xff] %vm696, %v6589
        %9017 = vst.msk [vmem:[%s491 + $0x7b0] sm:$0xff] %vm696, %v6590
        %9018 = vst.msk [vmem:[%s491 + $0x7b8] sm:$0xff] %vm696, %v6591
        %9019 = vst.msk [vmem:[%s491 + $0x7c0] sm:$0xff] %vm696, %v8699
        %9020 = vst.msk [vmem:[%s491 + $0x7c8] sm:$0xff] %vm696, %v8700
        %9021 = vst.msk [vmem:[%s491 + $0x7d0] sm:$0xff] %vm696, %v8701
        %9022 = vst.msk [vmem:[%s491 + $0x7d8] sm:$0xff] %vm696, %v8702
        %9023 = vst.msk [vmem:[%s491 + $0x7e0] sm:$0xff] %vm696, %v8703
        %9024 = vst.msk [vmem:[%s491 + $0x7e8] sm:$0xff] %vm696, %v8704
        %9025 = vst.msk [vmem:[%s491 + $0x7f0] sm:$0xff] %vm696, %v8705
        %9026 = vst.msk [vmem:[%s491 + $0x7f8] sm:$0xff] %vm696, %v8706
        %9027 = vst.msk [vmem:[%s491 + $0x800] sm:$0xff] %vm696, %v4381
        %9028 = vst.msk [vmem:[%s491 + $0x808] sm:$0xff] %vm696, %v4384
        %9029 = vst.msk [vmem:[%s491 + $0x810] sm:$0xff] %vm696, %v4387
        %9030 = vst.msk [vmem:[%s491 + $0x818] sm:$0xff] %vm696, %v4390
        %9031 = vst.msk [vmem:[%s491 + $0x820] sm:$0xff] %vm696, %v4393
        %9032 = vst.msk [vmem:[%s491 + $0x828] sm:$0xff] %vm696, %v4396
        %9033 = vst.msk [vmem:[%s491 + $0x830] sm:$0xff] %vm696, %v4399
        %9034 = vst.msk [vmem:[%s491 + $0x838] sm:$0xff] %vm696, %v4402
        %9035 = vst.msk [vmem:[%s491 + $0x840] sm:$0xff] %vm696, %v5550
        %9036 = vst.msk [vmem:[%s491 + $0x848] sm:$0xff] %vm696, %v5551
        %9037 = vst.msk [vmem:[%s491 + $0x850] sm:$0xff] %vm696, %v5552
        %9038 = vst.msk [vmem:[%s491 + $0x858] sm:$0xff] %vm696, %v5553
        %9039 = vst.msk [vmem:[%s491 + $0x860] sm:$0xff] %vm696, %v5554
        %9040 = vst.msk [vmem:[%s491 + $0x868] sm:$0xff] %vm696, %v5555
        %9041 = vst.msk [vmem:[%s491 + $0x870] sm:$0xff] %vm696, %v5556
        %9042 = vst.msk [vmem:[%s491 + $0x878] sm:$0xff] %vm696, %v5557
        %9043 = vst.msk [vmem:[%s491 + $0x880] sm:$0xff] %vm696, %v4405
        %9044 = vst.msk [vmem:[%s491 + $0x888] sm:$0xff] %vm696, %v4408
        %9045 = vst.msk [vmem:[%s491 + $0x890] sm:$0xff] %vm696, %v4411
        %9046 = vst.msk [vmem:[%s491 + $0x898] sm:$0xff] %vm696, %v4414
        %9047 = vst.msk [vmem:[%s491 + $0x8a0] sm:$0xff] %vm696, %v4417
        %9048 = vst.msk [vmem:[%s491 + $0x8a8] sm:$0xff] %vm696, %v4420
        %9049 = vst.msk [vmem:[%s491 + $0x8b0] sm:$0xff] %vm696, %v4423
        %9050 = vst.msk [vmem:[%s491 + $0x8b8] sm:$0xff] %vm696, %v4426
        %9051 = vst.msk [vmem:[%s491 + $0x8c0] sm:$0xff] %vm696, %v5558
        %9052 = vst.msk [vmem:[%s491 + $0x8c8] sm:$0xff] %vm696, %v5559
        %9053 = vst.msk [vmem:[%s491 + $0x8d0] sm:$0xff] %vm696, %v5560
        %9054 = vst.msk [vmem:[%s491 + $0x8d8] sm:$0xff] %vm696, %v5561
        %9055 = vst.msk [vmem:[%s491 + $0x8e0] sm:$0xff] %vm696, %v5562
        %9056 = vst.msk [vmem:[%s491 + $0x8e8] sm:$0xff] %vm696, %v5563
        %9057 = vst.msk [vmem:[%s491 + $0x8f0] sm:$0xff] %vm696, %v5564
        %9058 = vst.msk [vmem:[%s491 + $0x8f8] sm:$0xff] %vm696, %v5565
        %9059 = vst.msk [vmem:[%s491 + $0x900] sm:$0xff] %vm696, %v4429
        %9060 = vst.msk [vmem:[%s491 + $0x908] sm:$0xff] %vm696, %v4432
        %9061 = vst.msk [vmem:[%s491 + $0x910] sm:$0xff] %vm696, %v4435
        %9062 = vst.msk [vmem:[%s491 + $0x918] sm:$0xff] %vm696, %v4438
        %9063 = vst.msk [vmem:[%s491 + $0x920] sm:$0xff] %vm696, %v4441
        %9064 = vst.msk [vmem:[%s491 + $0x928] sm:$0xff] %vm696, %v4444
        %9065 = vst.msk [vmem:[%s491 + $0x930] sm:$0xff] %vm696, %v4447
        %9066 = vst.msk [vmem:[%s491 + $0x938] sm:$0xff] %vm696, %v4450
        %9067 = vst.msk [vmem:[%s491 + $0x940] sm:$0xff] %vm696, %v5566
        %9068 = vst.msk [vmem:[%s491 + $0x948] sm:$0xff] %vm696, %v5567
        %9069 = vst.msk [vmem:[%s491 + $0x950] sm:$0xff] %vm696, %v5568
        %9070 = vst.msk [vmem:[%s491 + $0x958] sm:$0xff] %vm696, %v5569
        %9071 = vst.msk [vmem:[%s491 + $0x960] sm:$0xff] %vm696, %v5570
        %9072 = vst.msk [vmem:[%s491 + $0x968] sm:$0xff] %vm696, %v5571
        %9073 = vst.msk [vmem:[%s491 + $0x970] sm:$0xff] %vm696, %v5572
        %9074 = vst.msk [vmem:[%s491 + $0x978] sm:$0xff] %vm696, %v5573
        %9075 = vst.msk [vmem:[%s491 + $0x980] sm:$0xff] %vm696, %v4453
        %9076 = vst.msk [vmem:[%s491 + $0x988] sm:$0xff] %vm696, %v4456
        %9077 = vst.msk [vmem:[%s491 + $0x990] sm:$0xff] %vm696, %v4459
        %9078 = vst.msk [vmem:[%s491 + $0x998] sm:$0xff] %vm696, %v4462
        %9079 = vst.msk [vmem:[%s491 + $0x9a0] sm:$0xff] %vm696, %v4465
        %9080 = vst.msk [vmem:[%s491 + $0x9a8] sm:$0xff] %vm696, %v4468
        %9081 = vst.msk [vmem:[%s491 + $0x9b0] sm:$0xff] %vm696, %v4471
        %9082 = vst.msk [vmem:[%s491 + $0x9b8] sm:$0xff] %vm696, %v4474
        %9083 = vst.msk [vmem:[%s491 + $0x9c0] sm:$0xff] %vm696, %v5574
        %9084 = vst.msk [vmem:[%s491 + $0x9c8] sm:$0xff] %vm696, %v5575
        %9085 = vst.msk [vmem:[%s491 + $0x9d0] sm:$0xff] %vm696, %v5576
        %9086 = vst.msk [vmem:[%s491 + $0x9d8] sm:$0xff] %vm696, %v5577
        %9087 = vst.msk [vmem:[%s491 + $0x9e0] sm:$0xff] %vm696, %v5578
        %9088 = vst.msk [vmem:[%s491 + $0x9e8] sm:$0xff] %vm696, %v5579
        %9089 = vst.msk [vmem:[%s491 + $0x9f0] sm:$0xff] %vm696, %v5580
        %9090 = vst.msk [vmem:[%s491 + $0x9f8] sm:$0xff] %vm696, %v5581
        %9091 = vst.msk [vmem:[%s491 + $0xa00] sm:$0xff] %vm696, %v6592
        %9092 = vst.msk [vmem:[%s491 + $0xa08] sm:$0xff] %vm696, %v6593
        %9093 = vst.msk [vmem:[%s491 + $0xa10] sm:$0xff] %vm696, %v6594
        %9094 = vst.msk [vmem:[%s491 + $0xa18] sm:$0xff] %vm696, %v6595
        %9095 = vst.msk [vmem:[%s491 + $0xa20] sm:$0xff] %vm696, %v6596
        %9096 = vst.msk [vmem:[%s491 + $0xa28] sm:$0xff] %vm696, %v6597
        %9097 = vst.msk [vmem:[%s491 + $0xa30] sm:$0xff] %vm696, %v6598
        %9098 = vst.msk [vmem:[%s491 + $0xa38] sm:$0xff] %vm696, %v6599
        %9099 = vst.msk [vmem:[%s491 + $0xa40] sm:$0xff] %vm696, %v8707
        %9100 = vst.msk [vmem:[%s491 + $0xa48] sm:$0xff] %vm696, %v8708
        %9101 = vst.msk [vmem:[%s491 + $0xa50] sm:$0xff] %vm696, %v8709
        %9102 = vst.msk [vmem:[%s491 + $0xa58] sm:$0xff] %vm696, %v8710
        %9103 = vst.msk [vmem:[%s491 + $0xa60] sm:$0xff] %vm696, %v8711
        %9104 = vst.msk [vmem:[%s491 + $0xa68] sm:$0xff] %vm696, %v8712
        %9105 = vst.msk [vmem:[%s491 + $0xa70] sm:$0xff] %vm696, %v8713
        %9106 = vst.msk [vmem:[%s491 + $0xa78] sm:$0xff] %vm696, %v8714
        %9107 = vst.msk [vmem:[%s491 + $0xa80] sm:$0xff] %vm696, %v6600
        %9108 = vst.msk [vmem:[%s491 + $0xa88] sm:$0xff] %vm696, %v6601
        %9109 = vst.msk [vmem:[%s491 + $0xa90] sm:$0xff] %vm696, %v6602
        %9110 = vst.msk [vmem:[%s491 + $0xa98] sm:$0xff] %vm696, %v6603
        %9111 = vst.msk [vmem:[%s491 + $0xaa0] sm:$0xff] %vm696, %v6604
        %9112 = vst.msk [vmem:[%s491 + $0xaa8] sm:$0xff] %vm696, %v6605
        %9113 = vst.msk [vmem:[%s491 + $0xab0] sm:$0xff] %vm696, %v6606
        %9114 = vst.msk [vmem:[%s491 + $0xab8] sm:$0xff] %vm696, %v6607
        %9115 = vst.msk [vmem:[%s491 + $0xac0] sm:$0xff] %vm696, %v8715
        %9116 = vst.msk [vmem:[%s491 + $0xac8] sm:$0xff] %vm696, %v8716
        %9117 = vst.msk [vmem:[%s491 + $0xad0] sm:$0xff] %vm696, %v8717
        %9118 = vst.msk [vmem:[%s491 + $0xad8] sm:$0xff] %vm696, %v8718
        %9119 = vst.msk [vmem:[%s491 + $0xae0] sm:$0xff] %vm696, %v8719
        %9120 = vst.msk [vmem:[%s491 + $0xae8] sm:$0xff] %vm696, %v8720
        %9121 = vst.msk [vmem:[%s491 + $0xaf0] sm:$0xff] %vm696, %v8721
        %9122 = vst.msk [vmem:[%s491 + $0xaf8] sm:$0xff] %vm696, %v8722
        %9123 = vst.msk [vmem:[%s491 + $0xb00] sm:$0xff] %vm696, %v6608
        %9124 = vst.msk [vmem:[%s491 + $0xb08] sm:$0xff] %vm696, %v6609
        %9125 = vst.msk [vmem:[%s491 + $0xb10] sm:$0xff] %vm696, %v6610
        %9126 = vst.msk [vmem:[%s491 + $0xb18] sm:$0xff] %vm696, %v6611
        %9127 = vst.msk [vmem:[%s491 + $0xb20] sm:$0xff] %vm696, %v6612
        %9128 = vst.msk [vmem:[%s491 + $0xb28] sm:$0xff] %vm696, %v6613
        %9129 = vst.msk [vmem:[%s491 + $0xb30] sm:$0xff] %vm696, %v6614
        %9130 = vst.msk [vmem:[%s491 + $0xb38] sm:$0xff] %vm696, %v6615
        %9131 = vst.msk [vmem:[%s491 + $0xb40] sm:$0xff] %vm696, %v8723
        %9132 = vst.msk [vmem:[%s491 + $0xb48] sm:$0xff] %vm696, %v8724
        %9133 = vst.msk [vmem:[%s491 + $0xb50] sm:$0xff] %vm696, %v8725
        %9134 = vst.msk [vmem:[%s491 + $0xb58] sm:$0xff] %vm696, %v8726
        %9135 = vst.msk [vmem:[%s491 + $0xb60] sm:$0xff] %vm696, %v8727
        %9136 = vst.msk [vmem:[%s491 + $0xb68] sm:$0xff] %vm696, %v8728
        %9137 = vst.msk [vmem:[%s491 + $0xb70] sm:$0xff] %vm696, %v8729
        %9138 = vst.msk [vmem:[%s491 + $0xb78] sm:$0xff] %vm696, %v8730
        %9139 = vst.msk [vmem:[%s491 + $0xb80] sm:$0xff] %vm696, %v6616
        %9140 = vst.msk [vmem:[%s491 + $0xb88] sm:$0xff] %vm696, %v6617
        %9141 = vst.msk [vmem:[%s491 + $0xb90] sm:$0xff] %vm696, %v6618
        %9142 = vst.msk [vmem:[%s491 + $0xb98] sm:$0xff] %vm696, %v6619
        %9143 = vst.msk [vmem:[%s491 + $0xba0] sm:$0xff] %vm696, %v6620
        %9144 = vst.msk [vmem:[%s491 + $0xba8] sm:$0xff] %vm696, %v6621
        %9145 = vst.msk [vmem:[%s491 + $0xbb0] sm:$0xff] %vm696, %v6622
        %9146 = vst.msk [vmem:[%s491 + $0xbb8] sm:$0xff] %vm696, %v6623
        %9147 = vst.msk [vmem:[%s491 + $0xbc0] sm:$0xff] %vm696, %v8731
        %9148 = vst.msk [vmem:[%s491 + $0xbc8] sm:$0xff] %vm696, %v8732
        %9149 = vst.msk [vmem:[%s491 + $0xbd0] sm:$0xff] %vm696, %v8733
        %9150 = vst.msk [vmem:[%s491 + $0xbd8] sm:$0xff] %vm696, %v8734
        %9151 = vst.msk [vmem:[%s491 + $0xbe0] sm:$0xff] %vm696, %v8735
        %9152 = vst.msk [vmem:[%s491 + $0xbe8] sm:$0xff] %vm696, %v8736
        %9153 = vst.msk [vmem:[%s491 + $0xbf0] sm:$0xff] %vm696, %v8737
        %9154 = vst.msk [vmem:[%s491 + $0xbf8] sm:$0xff] %vm696, %v8738
        %9155 = vst.msk [vmem:[%s491 + $0xc00] sm:$0xff] %vm696, %v4477
        %9156 = vst.msk [vmem:[%s491 + $0xc08] sm:$0xff] %vm696, %v4480
        %9157 = vst.msk [vmem:[%s491 + $0xc10] sm:$0xff] %vm696, %v4483
        %9158 = vst.msk [vmem:[%s491 + $0xc18] sm:$0xff] %vm696, %v4486
        %9159 = vst.msk [vmem:[%s491 + $0xc20] sm:$0xff] %vm696, %v4489
        %9160 = vst.msk [vmem:[%s491 + $0xc28] sm:$0xff] %vm696, %v4492
        %9161 = vst.msk [vmem:[%s491 + $0xc30] sm:$0xff] %vm696, %v4495
        %9162 = vst.msk [vmem:[%s491 + $0xc38] sm:$0xff] %vm696, %v4498
        %9163 = vst.msk [vmem:[%s491 + $0xc40] sm:$0xff] %vm696, %v5582
        %9164 = vst.msk [vmem:[%s491 + $0xc48] sm:$0xff] %vm696, %v5583
        %9165 = vst.msk [vmem:[%s491 + $0xc50] sm:$0xff] %vm696, %v5584
        %9166 = vst.msk [vmem:[%s491 + $0xc58] sm:$0xff] %vm696, %v5585
        %9167 = vst.msk [vmem:[%s491 + $0xc60] sm:$0xff] %vm696, %v5586
        %9168 = vst.msk [vmem:[%s491 + $0xc68] sm:$0xff] %vm696, %v5587
        %9169 = vst.msk [vmem:[%s491 + $0xc70] sm:$0xff] %vm696, %v5588
        %9170 = vst.msk [vmem:[%s491 + $0xc78] sm:$0xff] %vm696, %v5589
        %9171 = vst.msk [vmem:[%s491 + $0xc80] sm:$0xff] %vm696, %v4501
        %9172 = vst.msk [vmem:[%s491 + $0xc88] sm:$0xff] %vm696, %v4504
        %9173 = vst.msk [vmem:[%s491 + $0xc90] sm:$0xff] %vm696, %v4507
        %9174 = vst.msk [vmem:[%s491 + $0xc98] sm:$0xff] %vm696, %v4510
        %9175 = vst.msk [vmem:[%s491 + $0xca0] sm:$0xff] %vm696, %v4513
        %9176 = vst.msk [vmem:[%s491 + $0xca8] sm:$0xff] %vm696, %v4516
        %9177 = vst.msk [vmem:[%s491 + $0xcb0] sm:$0xff] %vm696, %v4519
        %9178 = vst.msk [vmem:[%s491 + $0xcb8] sm:$0xff] %vm696, %v4522
        %9179 = vst.msk [vmem:[%s491 + $0xcc0] sm:$0xff] %vm696, %v5590
        %9180 = vst.msk [vmem:[%s491 + $0xcc8] sm:$0xff] %vm696, %v5591
        %9181 = vst.msk [vmem:[%s491 + $0xcd0] sm:$0xff] %vm696, %v5592
        %9182 = vst.msk [vmem:[%s491 + $0xcd8] sm:$0xff] %vm696, %v5593
        %9183 = vst.msk [vmem:[%s491 + $0xce0] sm:$0xff] %vm696, %v5594
        %9184 = vst.msk [vmem:[%s491 + $0xce8] sm:$0xff] %vm696, %v5595
        %9185 = vst.msk [vmem:[%s491 + $0xcf0] sm:$0xff] %vm696, %v5596
        %9186 = vst.msk [vmem:[%s491 + $0xcf8] sm:$0xff] %vm696, %v5597
        %9187 = vst.msk [vmem:[%s491 + $0xd00] sm:$0xff] %vm696, %v4525
        %9188 = vst.msk [vmem:[%s491 + $0xd08] sm:$0xff] %vm696, %v4528
        %9189 = vst.msk [vmem:[%s491 + $0xd10] sm:$0xff] %vm696, %v4531
        %9190 = vst.msk [vmem:[%s491 + $0xd18] sm:$0xff] %vm696, %v4534
        %9191 = vst.msk [vmem:[%s491 + $0xd20] sm:$0xff] %vm696, %v4537
        %9192 = vst.msk [vmem:[%s491 + $0xd28] sm:$0xff] %vm696, %v4540
        %9193 = vst.msk [vmem:[%s491 + $0xd30] sm:$0xff] %vm696, %v4543
        %9194 = vst.msk [vmem:[%s491 + $0xd38] sm:$0xff] %vm696, %v4546
        %9195 = vst.msk [vmem:[%s491 + $0xd40] sm:$0xff] %vm696, %v5598
        %9196 = vst.msk [vmem:[%s491 + $0xd48] sm:$0xff] %vm696, %v5599
        %9197 = vst.msk [vmem:[%s491 + $0xd50] sm:$0xff] %vm696, %v5600
        %9198 = vst.msk [vmem:[%s491 + $0xd58] sm:$0xff] %vm696, %v5601
        %9199 = vst.msk [vmem:[%s491 + $0xd60] sm:$0xff] %vm696, %v5602
        %9200 = vst.msk [vmem:[%s491 + $0xd68] sm:$0xff] %vm696, %v5603
        %9201 = vst.msk [vmem:[%s491 + $0xd70] sm:$0xff] %vm696, %v5604
        %9202 = vst.msk [vmem:[%s491 + $0xd78] sm:$0xff] %vm696, %v5605
        %9203 = vst.msk [vmem:[%s491 + $0xd80] sm:$0xff] %vm696, %v4549
        %9204 = vst.msk [vmem:[%s491 + $0xd88] sm:$0xff] %vm696, %v4552
        %9205 = vst.msk [vmem:[%s491 + $0xd90] sm:$0xff] %vm696, %v4555
        %9206 = vst.msk [vmem:[%s491 + $0xd98] sm:$0xff] %vm696, %v4558
        %9207 = vst.msk [vmem:[%s491 + $0xda0] sm:$0xff] %vm696, %v4561
        %9208 = vst.msk [vmem:[%s491 + $0xda8] sm:$0xff] %vm696, %v4564
        %9209 = vst.msk [vmem:[%s491 + $0xdb0] sm:$0xff] %vm696, %v4567
        %9210 = vst.msk [vmem:[%s491 + $0xdb8] sm:$0xff] %vm696, %v4570
        %9211 = vst.msk [vmem:[%s491 + $0xdc0] sm:$0xff] %vm696, %v5606
        %9212 = vst.msk [vmem:[%s491 + $0xdc8] sm:$0xff] %vm696, %v5607
        %9213 = vst.msk [vmem:[%s491 + $0xdd0] sm:$0xff] %vm696, %v5608
        %9214 = vst.msk [vmem:[%s491 + $0xdd8] sm:$0xff] %vm696, %v5609
        %9215 = vst.msk [vmem:[%s491 + $0xde0] sm:$0xff] %vm696, %v5610
        %9216 = vst.msk [vmem:[%s491 + $0xde8] sm:$0xff] %vm696, %v5611
        %9217 = vst.msk [vmem:[%s491 + $0xdf0] sm:$0xff] %vm696, %v5612
        %9218 = vst.msk [vmem:[%s491 + $0xdf8] sm:$0xff] %vm696, %v5613
        %9219 = vst.msk [vmem:[%s491 + $0xe00] sm:$0xff] %vm696, %v6624
        %9220 = vst.msk [vmem:[%s491 + $0xe08] sm:$0xff] %vm696, %v6625
        %9221 = vst.msk [vmem:[%s491 + $0xe10] sm:$0xff] %vm696, %v6626
        %9222 = vst.msk [vmem:[%s491 + $0xe18] sm:$0xff] %vm696, %v6627
        %9223 = vst.msk [vmem:[%s491 + $0xe20] sm:$0xff] %vm696, %v6628
        %9224 = vst.msk [vmem:[%s491 + $0xe28] sm:$0xff] %vm696, %v6629
        %9225 = vst.msk [vmem:[%s491 + $0xe30] sm:$0xff] %vm696, %v6630
        %9226 = vst.msk [vmem:[%s491 + $0xe38] sm:$0xff] %vm696, %v6631
        %9227 = vst.msk [vmem:[%s491 + $0xe40] sm:$0xff] %vm696, %v8739
        %9228 = vst.msk [vmem:[%s491 + $0xe48] sm:$0xff] %vm696, %v8740
        %9229 = vst.msk [vmem:[%s491 + $0xe50] sm:$0xff] %vm696, %v8741
        %9230 = vst.msk [vmem:[%s491 + $0xe58] sm:$0xff] %vm696, %v8742
        %9231 = vst.msk [vmem:[%s491 + $0xe60] sm:$0xff] %vm696, %v8743
        %9232 = vst.msk [vmem:[%s491 + $0xe68] sm:$0xff] %vm696, %v8744
        %9233 = vst.msk [vmem:[%s491 + $0xe70] sm:$0xff] %vm696, %v8745
        %9234 = vst.msk [vmem:[%s491 + $0xe78] sm:$0xff] %vm696, %v8746
        %9235 = vst.msk [vmem:[%s491 + $0xe80] sm:$0xff] %vm696, %v6632
        %9236 = vst.msk [vmem:[%s491 + $0xe88] sm:$0xff] %vm696, %v6633
        %9237 = vst.msk [vmem:[%s491 + $0xe90] sm:$0xff] %vm696, %v6634
        %9238 = vst.msk [vmem:[%s491 + $0xe98] sm:$0xff] %vm696, %v6635
        %9239 = vst.msk [vmem:[%s491 + $0xea0] sm:$0xff] %vm696, %v6636
        %9240 = vst.msk [vmem:[%s491 + $0xea8] sm:$0xff] %vm696, %v6637
        %9241 = vst.msk [vmem:[%s491 + $0xeb0] sm:$0xff] %vm696, %v6638
        %9242 = vst.msk [vmem:[%s491 + $0xeb8] sm:$0xff] %vm696, %v6639
        %9243 = vst.msk [vmem:[%s491 + $0xec0] sm:$0xff] %vm696, %v8747
        %9244 = vst.msk [vmem:[%s491 + $0xec8] sm:$0xff] %vm696, %v8748
        %9245 = vst.msk [vmem:[%s491 + $0xed0] sm:$0xff] %vm696, %v8749
        %9246 = vst.msk [vmem:[%s491 + $0xed8] sm:$0xff] %vm696, %v8750
        %9247 = vst.msk [vmem:[%s491 + $0xee0] sm:$0xff] %vm696, %v8751
        %9248 = vst.msk [vmem:[%s491 + $0xee8] sm:$0xff] %vm696, %v8752
        %9249 = vst.msk [vmem:[%s491 + $0xef0] sm:$0xff] %vm696, %v8753
        %9250 = vst.msk [vmem:[%s491 + $0xef8] sm:$0xff] %vm696, %v8754
        %9251 = vst.msk [vmem:[%s491 + $0xf00] sm:$0xff] %vm696, %v6640
        %9252 = vst.msk [vmem:[%s491 + $0xf08] sm:$0xff] %vm696, %v6641
        %9253 = vst.msk [vmem:[%s491 + $0xf10] sm:$0xff] %vm696, %v6642
        %9254 = vst.msk [vmem:[%s491 + $0xf18] sm:$0xff] %vm696, %v6643
        %9255 = vst.msk [vmem:[%s491 + $0xf20] sm:$0xff] %vm696, %v6644
        %9256 = vst.msk [vmem:[%s491 + $0xf28] sm:$0xff] %vm696, %v6645
        %9257 = vst.msk [vmem:[%s491 + $0xf30] sm:$0xff] %vm696, %v6646
        %9258 = vst.msk [vmem:[%s491 + $0xf38] sm:$0xff] %vm696, %v6647
        %9259 = vst.msk [vmem:[%s491 + $0xf40] sm:$0xff] %vm696, %v8755
        %9260 = vst.msk [vmem:[%s491 + $0xf48] sm:$0xff] %vm696, %v8756
        %9261 = vst.msk [vmem:[%s491 + $0xf50] sm:$0xff] %vm696, %v8757
        %9262 = vst.msk [vmem:[%s491 + $0xf58] sm:$0xff] %vm696, %v8758
        %9263 = vst.msk [vmem:[%s491 + $0xf60] sm:$0xff] %vm696, %v8759
        %9264 = vst.msk [vmem:[%s491 + $0xf68] sm:$0xff] %vm696, %v8760
        %9265 = vst.msk [vmem:[%s491 + $0xf70] sm:$0xff] %vm696, %v8761
        %9266 = vst.msk [vmem:[%s491 + $0xf78] sm:$0xff] %vm696, %v8762
        %9267 = vst.msk [vmem:[%s491 + $0xf80] sm:$0xff] %vm696, %v6648
        %9268 = vst.msk [vmem:[%s491 + $0xf88] sm:$0xff] %vm696, %v6649
        %9269 = vst.msk [vmem:[%s491 + $0xf90] sm:$0xff] %vm696, %v6650
        %9270 = vst.msk [vmem:[%s491 + $0xf98] sm:$0xff] %vm696, %v6651
        %9271 = vst.msk [vmem:[%s491 + $0xfa0] sm:$0xff] %vm696, %v6652
        %9272 = vst.msk [vmem:[%s491 + $0xfa8] sm:$0xff] %vm696, %v6653
        %9273 = vst.msk [vmem:[%s491 + $0xfb0] sm:$0xff] %vm696, %v6654
        %9274 = vst.msk [vmem:[%s491 + $0xfb8] sm:$0xff] %vm696, %v6655
        %9275 = vst.msk [vmem:[%s491 + $0xfc0] sm:$0xff] %vm696, %v8763
        %9276 = vst.msk [vmem:[%s491 + $0xfc8] sm:$0xff] %vm696, %v8764
        %9277 = vst.msk [vmem:[%s491 + $0xfd0] sm:$0xff] %vm696, %v8765
        %9278 = vst.msk [vmem:[%s491 + $0xfd8] sm:$0xff] %vm696, %v8766
        %9279 = vst.msk [vmem:[%s491 + $0xfe0] sm:$0xff] %vm696, %v8767
        %9280 = vst.msk [vmem:[%s491 + $0xfe8] sm:$0xff] %vm696, %v8768
        %9281 = vst.msk [vmem:[%s491 + $0xff0] sm:$0xff] %vm696, %v8769
        %9282 = vst.msk [vmem:[%s491 + $0xff8] sm:$0xff] %vm696, %v8770
        %p9283 = scmp.lt.s32.totalorder %s28, 5
        %s9284 = scalar_select %p9283, %s28, 5
        %s9285 = smul.addr %s9284, 512
        %s9286 = smul.addr %s9285, 8
        %s9287 = scalar_lea.vmem %s10, %s9286
        // Predicated region
        $region93: #{model_forward.1} parent=59 // pred_check
          %p9288 = pneg %p261
        $region94: #{model_forward.1} parent=59 // pred_check_branch
          %9290 = sbr.rel (%p9288) target = $region96
        $region95: #{model_forward.1} parent=59 // pred_region
          _
        $region96: #{model_forward.1} parent=59 // pred_fallthru
          _
      $region60: #{model_forward.1} parent=5 // pred_fallthru
        _
      %p9291 = scmp.le.s32.totalorder 2, %s23
      // Predicated region
      $region97: #{model_forward.1} parent=5 // pred_check
        %p9292 = pneg %p9291
      $region98: #{model_forward.1} parent=5 // pred_check_branch
        %9294 = sbr.rel (%p9292) target = $region100
      $region99: #{model_forward.1} parent=5 // pred_region
        %s9295 = ssub.s32 %s23, 2
        // Predicated region
        $region101: #{model_forward.1} parent=99 // pred_check
          %p9296 = pneg %p267
        $region102: #{model_forward.1} parent=99 // pred_check_branch
          %9298 = sbr.rel (%p9296) target = $region104
        $region103: #{model_forward.1} parent=99 // pred_region
          %p9299 = scmp.lt.s32.totalorder %s29, 5
          %s9300 = scalar_select %p9299, %s29, 5
          %s9301 = smul.addr %s9300, 512
          %s9302 = smul.addr %s9301, 8
          %s9303 = scalar_lea.vmem %s10, %s9302
        $region104: #{model_forward.1} parent=99 // pred_fallthru
          _
      $region100: #{model_forward.1} parent=5 // pred_fallthru
        _
    $region6: #{model_forward.1} parent=1 // loop_footer
      %s27 = sadd.s32 1, %s23
    $region7: #{model_forward.1} parent=1 // loop_footer_branch
      %22 = sbr.rel target = $region3
    $region8: #{model_forward.1} parent=1 // loop_exit
      _
    %9304 = vsyncpa [#allocation3], 1
    %s9305 = scalar_lea.sflag [#allocation3], 1
    %9306 = vsyncpa %s9305, 1
    %9307 = vsyncpa [#allocation5], 1
    %9308 = vsyncpa [#allocation8], 1
    %9309 = vsyncpa [#allocation11], 1
    %9310 = vsyncpa [#allocation14], 1

</llo_original>
